<compile_context>
chip_gen: v6e
topology: v6e:2x2x1
jax: 0.10.0
libtpu: 0.0.40
codegen_flags: <defaults>
</compile_context>

<pallas_src>
import jax
import jax.numpy as jnp
import numpy as np
from jax.experimental import pallas as pl
from jax.experimental.pallas import tpu as pltpu

_HI = jax.lax.Precision.HIGHEST  # used by the plain-JAX reference only


# ----------------------------------------------------------------------------
# Banded-Toeplitz weight construction (wrapper / host side, plain numpy).
#
# Lane-folded layout: element (x, c) of an image row lives at lane x*C + c.
# A KHxKW SAME conv over the folded state becomes
#     out_rows (M, NG*W*Co) = A (M, KH*W*Ci) @ band (KH*W*Ci, NG*W*Co)
# where A = [slab(ky=0) | ... | slab(ky=KH-1)] is built from KH sublane-shifted
# row slabs of the H-padded state and the kx taps / x-boundary zeros are
# encoded in the banded matrix.  Output columns are gate-major: (gate, x, co).
# ----------------------------------------------------------------------------
def _band(weights_per_gate, Ci, Co, KH, KW, W):
    NG = len(weights_per_gate)
    PW = KW // 2
    mat = np.zeros((KH * W * Ci, NG * W * Co), np.float32)
    for g, wg in enumerate(weights_per_gate):
        if wg is None:
            continue
        wg = np.asarray(wg, np.float32)            # torch layout (Co, Ci, KH, KW)
        for ky in range(KH):
            for kx in range(KW):
                blk = wg[:, :, ky, kx].T           # (Ci, Co)
                for x_out in range(W):
                    x_in = x_out + kx - PW
                    if 0 <= x_in < W:              # missing taps == zero padding
                        r0 = ky * W * Ci + x_in * Ci
                        c0 = g * W * Co + x_out * Co
                        mat[r0:r0 + Ci, c0:c0 + Co] = blk
    return mat


def to_kernel_params(p, cin, cout, KH, KW, W):
    """PyTorch conv weights -> fused banded matmul weights (bf16 MXU operands)."""
    w1, b1, w2, b2, w3, b3 = (np.asarray(p[k]) for k in
                              ('w1', 'b1', 'w2', 'b2', 'w3', 'b3'))
    w1_i, w1_f = w1[:cout], w1[cout:]              # torch.split on output channels
    # gate order everywhere: i | f | g | o
    x_g = [w1_i[:, :cin], w1_f[:, :cin], w2[:, :cin], w3[:, :cin]]
    h_g = [w1_i[:, cin:cin + cout], w1_f[:, cin:cin + cout],
           w2[:, cin:cin + cout], w3[:, cin:cin + cout]]
    c_g = [w1_i[:, cin + cout:cin + 2 * cout],
           w1_f[:, cin + cout:cin + 2 * cout], None, None]   # peephole on c_{t-1}
    o_c = [w3[:, cin + cout:cin + 2 * cout]]                 # peephole on c_t (new)

    wx = _band(x_g, cin, cout, KH, KW, W)                    # (KH*W*Cin, 4*W*Cout)
    whc = np.concatenate([_band(h_g, cout, cout, KH, KW, W),
                          _band(c_g, cout, cout, KH, KW, W)], axis=0)
    wco = _band(o_c, cout, cout, KH, KW, W)                  # (KH*W*Cout, W*Cout)

    bx = np.zeros((1, 4 * W * cout), np.float32)
    for g, bg in enumerate([b1[:cout], b1[cout:], b2, b3]):
        bx[0, g * W * cout:(g + 1) * W * cout] = np.tile(np.asarray(bg), W)

    return dict(wx=jnp.asarray(wx, jnp.bfloat16),
                bx=jnp.asarray(bx, jnp.float32),
                whc=jnp.asarray(whc, jnp.bfloat16),
                wco=jnp.asarray(wco, jnp.bfloat16))


# ----------------------------------------------------------------------------
# Kernel 1: x-dependent gate pre-activations for all timesteps (parallel in T).
# ----------------------------------------------------------------------------
def make_xgate_kernel(Tb, N, H, WCin, C4W, KH):
    M = Tb * N * H

    def kernel(xp_ref, w_ref, b_ref, out_ref):
        # KH sublane-shifted, lane-dense row slabs of the H-padded input.
        a = jnp.concatenate(
            [xp_ref[:, :, ky:ky + H, :].reshape(M, WCin) for ky in range(KH)],
            axis=-1)                                          # (M, KH*W*Cin)
        y = jnp.dot(a.astype(jnp.bfloat16), w_ref[...],
                    preferred_element_type=jnp.float32) + b_ref[...]
        out_ref[...] = y.reshape(Tb, N, H, C4W)               # gate-major, 512 lanes

    return kernel


def _pick_time_block(T, bytes_per_step, budget=4 << 20):
    best = 1
    for d in range(1, T + 1):
        if T % d == 0 and d * bytes_per_step <= budget:
            best = d
    return best


def precompute_x_gates(x_fold, wx, bx, KH):
    """x_fold: (T, N, H, W*Cin) -> (T, N, H, 4*W*Cout) x-part of gates (+bias)."""
    T, N, H, WCin = x_fold.shape
    PH = KH // 2
    Hp = H + 2 * PH
    C4W = bx.shape[1]
    xpad = jnp.pad(x_fold, ((0, 0), (0, 0), (PH, PH), (0, 0)))
    Tb = _pick_time_block(T, 4 * N * (Hp * WCin + H * C4W))

    grid_spec = pltpu.PrefetchScalarGridSpec(
        num_scalar_prefetch=0,
        grid=(T // Tb,),
        in_specs=[
            pl.BlockSpec((Tb, N, Hp, WCin), lambda i: (i, 0, 0, 0)),
            pl.BlockSpec(wx.shape, lambda i: (0, 0)),
            pl.BlockSpec(bx.shape, lambda i: (0, 0)),
        ],
        out_specs=pl.BlockSpec((Tb, N, H, C4W), lambda i: (i, 0, 0, 0)),
    )
    return pl.pallas_call(
        make_xgate_kernel(Tb, N, H, WCin, C4W, KH),
        out_shape=jax.ShapeDtypeStruct((T, N, H, C4W), jnp.float32),
        grid_spec=grid_spec,
        compiler_params=pltpu.CompilerParams(dimension_semantics=("parallel",)),
    )(xpad, wx, bx)


# ----------------------------------------------------------------------------
# Kernel 2: the recurrence.  grid = (batch_tiles, T); folded h/c in VMEM.
# ----------------------------------------------------------------------------
def make_recurrent_kernel(bt, H, W, Cout, KH):
    PH = KH // 2
    WC = W * Cout
    M = bt * H

    def rows(st_ref):
        # (bt, H+2*PH, W*Cout) -> (bt*H, KH*W*Cout): ky slabs, lane-dense.
        return jnp.concatenate(
            [st_ref[:, ky:ky + H, :].reshape(M, WC) for ky in range(KH)], axis=-1)

    def mm(a, w_ref):
        return jnp.dot(a.astype(jnp.bfloat16), w_ref[...],
                       preferred_element_type=jnp.float32)

    def kernel(xg_ref, whc_ref, wco_ref, out_ref, hlast_ref, clast_ref, hst, cst):
        t = pl.program_id(1)

        @pl.when(t == 0)
        def _init():  # init_hidden: zero h/c; ky halo rows stay zero.
            hst[...] = jnp.zeros_like(hst)
            cst[...] = jnp.zeros_like(cst)

        xg = xg_ref[...].reshape(M, 4 * WC)            # x-part of i|f|g|o (+bias)
        # One fused matmul: h-part of all gates + c_old peephole for i|f.
        pre = xg + mm(jnp.concatenate([rows(hst), rows(cst)], axis=-1), whc_ref)

        i_g = jax.nn.sigmoid(pre[:, 0:WC])             # 128-lane-aligned gate planes
        f_g = jax.nn.sigmoid(pre[:, WC:2 * WC])
        g_g = jnp.tanh(pre[:, 2 * WC:3 * WC])

        c_old = cst[:, PH:PH + H, :].reshape(M, WC)
        c_new = f_g * c_old + i_g * g_g
        cst[:, PH:PH + H, :] = c_new.reshape(bt, H, WC)   # carried state = c_t

        # conv3's c-peephole uses the NEW cell state.
        o_g = jax.nn.sigmoid(pre[:, 3 * WC:4 * WC] + mm(rows(cst), wco_ref))
        h_new = o_g * jnp.tanh(c_new)
        hst[:, PH:PH + H, :] = h_new.reshape(bt, H, WC)

        out_ref[...] = h_new.reshape(bt, H, WC).astype(out_ref.dtype)

        # NOTE: h_last/c_last are only written at the final timestep; this is
        # correct because t is the innermost grid axis (writeback happens when
        # the batch block index changes / at grid end).  Keep t innermost.
        @pl.when(t == pl.num_programs(1) - 1)
        def _final():
            hlast_ref[...] = h_new.reshape(bt, H, WC)
            clast_ref[...] = c_new.reshape(bt, H, WC)

    return kernel


def run_layer(x_fold, kp, Cout, KH, KW, W, batch_tile):
    """x_fold: (T, N, H, W*Cin) -> (out_seq (T,N,H,W*Cout), h_last, c_last)."""
    T, N, H, _ = x_fold.shape
    assert N % batch_tile == 0
    bt = batch_tile
    NB = N // bt
    WC = W * Cout
    C4W = 4 * WC
    PH = KH // 2

    # Hoisted x convolutions (fully parallel, off the sequential critical path).
    xg = precompute_x_gates(x_fold, kp['wx'], kp['bx'], KH)   # (T, N, H, 4*W*Cout)

    grid_spec = pltpu.PrefetchScalarGridSpec(
        num_scalar_prefetch=0,
        grid=(NB, T),
        in_specs=[
            pl.BlockSpec((pl.Squeezed(), bt, H, C4W), lambda b, t: (t, b, 0, 0)),
            pl.BlockSpec(kp['whc'].shape, lambda b, t: (0, 0)),
            pl.BlockSpec(kp['wco'].shape, lambda b, t: (0, 0)),
        ],
        out_specs=[
            pl.BlockSpec((pl.Squeezed(), bt, H, WC), lambda b, t: (t, b, 0, 0)),
            pl.BlockSpec((bt, H, WC), lambda b, t: (b, 0, 0)),
            pl.BlockSpec((bt, H, WC), lambda b, t: (b, 0, 0)),
        ],
        scratch_shapes=[
            pltpu.VMEM((bt, H + 2 * PH, WC), jnp.float32),    # h, folded + ky halo
            pltpu.VMEM((bt, H + 2 * PH, WC), jnp.float32),    # c, folded + ky halo
        ],
    )
    out_shape = (
        jax.ShapeDtypeStruct((T, N, H, WC), jnp.float32),
        jax.ShapeDtypeStruct((N, H, WC), jnp.float32),
        jax.ShapeDtypeStruct((N, H, WC), jnp.float32),
    )
    return pl.pallas_call(
        make_recurrent_kernel(bt, H, W, Cout, KH),
        out_shape=out_shape,
        grid_spec=grid_spec,
        compiler_params=pltpu.CompilerParams(
            dimension_semantics=("parallel", "arbitrary")),   # batch ||, time seq
    )(xg, kp['whc'], kp['wco'])


# ----------------------------------------------------------------------------
# Generation-aware batch tiling and the full stacked forward.
# ----------------------------------------------------------------------------
def pick_batch_tile(B):
    # v7x has 2 TensorCores/chip: keep 2 batch tiles so the "parallel" grid
    # axis feeds both cores.  v5e/v6e have 1 TC: one big tile (bigger matmul M,
    # fewer grid-step overheads on the serial time loop).
    try:
        kind = jax.devices()[0].device_kind.lower()
    except Exception:
        kind = ""
    if (("v7" in kind) or ("7x" in kind)) and B % 2 == 0:
        return B // 2
    return B


def conv_lstm_forward(x, layer_params, out_channels, kernel_sizes,
                      batch_first=True, return_all_layers=False, batch_tile=None):
    """x: (B, T, C, H, W) if batch_first else (T, B, C, H, W)."""
    if not batch_first:
        x = jnp.transpose(x, (1, 0, 2, 3, 4))
    B, T, Cin, H, W = x.shape
    bt = pick_batch_tile(B) if batch_tile is None else batch_tile

    # Lane-folded layout used by every kernel: (T, B, H, W*C).
    cur = jnp.transpose(x, (1, 0, 3, 4, 2)).reshape(T, B, H, W * Cin)
    cur = cur.astype(jnp.float32)

    outs, lasts = [], []
    for l, Cout in enumerate(out_channels):
        KH, KW = kernel_sizes[l]
        out_seq, h_last, c_last = run_layer(cur, layer_params[l], Cout,
                                            KH, KW, W, bt)
        cur = out_seq                      # already the next layer's folded layout
        outs.append((out_seq, Cout))
        lasts.append((h_last, c_last, Cout))

    if not return_all_layers:
        outs, lasts = outs[-1:], lasts[-1:]

    layer_outputs = [jnp.transpose(o.reshape(T, B, H, W, c), (1, 0, 4, 2, 3))
                     for (o, c) in outs]
    last_states = [(jnp.transpose(h.reshape(B, H, W, c), (0, 3, 1, 2)),
                    jnp.transpose(cc.reshape(B, H, W, c), (0, 3, 1, 2)))
                   for (h, cc, c) in lasts]
    return layer_outputs, last_states


# ----------------------------------------------------------------------------
# Random parameters in the PyTorch layout.
# ----------------------------------------------------------------------------
def init_layer_params(key, cin, cout, KH, KW):
    ks = jax.random.split(key, 6)
    s = 0.1
    return dict(
        w1=jax.random.normal(ks[0], (2 * cout, cin + 2 * cout, KH, KW), jnp.float32) * s,
        b1=jax.random.normal(ks[1], (2 * cout,), jnp.float32) * s,
        w2=jax.random.normal(ks[2], (cout, cin + cout, KH, KW), jnp.float32) * s,
        b2=jax.random.normal(ks[3], (cout,), jnp.float32) * s,
        w3=jax.random.normal(ks[4], (cout, cin + 2 * cout, KH, KW), jnp.float32) * s,
        b3=jax.random.normal(ks[5], (cout,), jnp.float32) * s,
    )


# ----------------------------------------------------------------------------
# Plain-JAX f32 reference of the PyTorch forward (correctness check only).
# ----------------------------------------------------------------------------
def _ref_conv(x_nhwc, w_torch, b):
    w_hwio = jnp.transpose(w_torch, (2, 3, 1, 0))
    y = jax.lax.conv_general_dilated(
        x_nhwc, w_hwio, window_strides=(1, 1), padding='SAME',
        dimension_numbers=('NHWC', 'HWIO', 'NHWC'), precision=_HI)
    return y + b


def _ref_cell(x, h, c, p, cout):
    cc = _ref_conv(jnp.concatenate([x, h, c], -1), p['w1'], p['b1'])
    i = jax.nn.sigmoid(cc[..., :cout])
    f = jax.nn.sigmoid(cc[..., cout:])
    g = jnp.tanh(_ref_conv(jnp.concatenate([x, h], -1), p['w2'], p['b2']))
    c_new = f * c + i * g
    o = jax.nn.sigmoid(_ref_conv(jnp.concatenate([x, h, c_new], -1), p['w3'], p['b3']))
    return o * jnp.tanh(c_new), c_new


def _ref_forward(x, raw_params, out_channels, batch_first=True, return_all_layers=False):
    if not batch_first:
        x = jnp.transpose(x, (1, 0, 2, 3, 4))
    cur = jnp.transpose(x, (0, 1, 3, 4, 2)).astype(jnp.float32)   # (B, T, H, W, C)
    B, T, H, W = cur.shape[0], cur.shape[1], cur.shape[2], cur.shape[3]
    outs, lasts = [], []
    for l, cout in enumerate(out_channels):
        h = jnp.zeros((B, H, W, cout), jnp.float32)
        c = jnp.zeros_like(h)
        seq = []
        for t in range(T):
            h, c = _ref_cell(cur[:, t], h, c, raw_params[l], cout)
            seq.append(h)
        cur = jnp.stack(seq, axis=1)
        outs.append(jnp.transpose(cur, (0, 1, 4, 2, 3)))
        lasts.append((jnp.transpose(h, (0, 3, 1, 2)), jnp.transpose(c, (0, 3, 1, 2))))
    if not return_all_layers:
        outs = outs[-1:]
        lasts = lasts[-1:]
    return outs, lasts


if __name__ == "__main__":
    key = jax.random.PRNGKey(0)
    B, T, Cin, H, W = 2, 8, 4, 16, 16
    num_layers = 2
    out_channels = [8, 8]
    kernel_sizes = [(3, 3), (3, 3)]

    k_x, k_p = jax.random.split(key)
    x = jax.random.normal(k_x, (B, T, Cin, H, W), jnp.float32)  # (B,T,C,H,W)

    raw_params, kern_params = [], []
    pkeys = jax.random.split(k_p, num_layers)
    cin = Cin
    for l in range(num_layers):
        rp = init_layer_params(pkeys[l], cin, out_channels[l], *kernel_sizes[l])
        raw_params.append(rp)
        kern_params.append(to_kernel_params(rp, cin, out_channels[l],
                                            *kernel_sizes[l], W))
        cin = out_channels[l]

    fwd = jax.jit(lambda xx, pp: conv_lstm_forward(
        xx, pp, out_channels, kernel_sizes,
        batch_first=True, return_all_layers=False))
    layer_outputs, last_states = fwd(x, kern_params)
    jax.block_until_ready(layer_outputs[-1])
    jax.block_until_ready(last_states[-1][0])
    jax.block_until_ready(last_states[-1][1])

    # Correctness check against a plain-JAX f32 reference of the PyTorch forward.
    ref_outs, ref_lasts = _ref_forward(x, raw_params, out_channels,
                                       batch_first=True, return_all_layers=False)
    tol = dict(atol=3e-2, rtol=3e-2)      # bf16 MXU operands, f32 accumulation
    np.testing.assert_allclose(np.asarray(layer_outputs[-1]),
                               np.asarray(ref_outs[-1]), **tol)
    np.testing.assert_allclose(np.asarray(last_states[-1][0]),
                               np.asarray(ref_lasts[-1][0]), **tol)
    np.testing.assert_allclose(np.asarray(last_states[-1][1]),
                               np.asarray(ref_lasts[-1][1]), **tol)

    print("KERNEL_OK")
</pallas_src>

<mosaic_0001>
module attributes {stable_mosaic.version = 11 : i64} {
  func.func @kernel(%arg0: i32, %arg1: memref<8x2x18x64xf32, #tpu.memory_space<vmem>>, %arg2: memref<192x512xbf16, #tpu.memory_space<vmem>>, %arg3: memref<1x512xf32, #tpu.memory_space<vmem>>, %arg4: memref<8x2x16x512xf32, #tpu.memory_space<vmem>>) attributes {dimension_semantics = [#tpu.dimension_semantics<parallel>], iteration_bounds = array<i64: 1>, scalar_prefetch = 0 : i64, scratch_operands = 0 : i64, tpu.core_type = #tpu.core_type<tc>, window_params = [{transform_indices = @transform_0, window_bounds = array<i64: 8, 2, 18, 64>}, {pipeline_mode = #tpu.pipeline_mode<synchronous>, transform_indices = @transform_1, window_bounds = array<i64: 192, 512>}, {pipeline_mode = #tpu.pipeline_mode<synchronous>, transform_indices = @transform_2, window_bounds = array<i64: 1, 512>}, {transform_indices = @transform_3, window_bounds = array<i64: 8, 2, 16, 512>}]} {
    %c0 = arith.constant 0 : index
    %c0_0 = arith.constant 0 : index
    %c0_1 = arith.constant 0 : index
    %c0_2 = arith.constant 0 : index
    %0 = vector.load %arg1[%c0, %c0_0, %c0_1, %c0_2] : memref<8x2x18x64xf32, #tpu.memory_space<vmem>>, vector<8x2x16x64xf32>
    %1 = vector.shape_cast %0 : vector<8x2x16x64xf32> to vector<256x64xf32>
    %c0_3 = arith.constant 0 : index
    %c0_4 = arith.constant 0 : index
    %c1 = arith.constant 1 : index
    %c0_5 = arith.constant 0 : index
    %2 = vector.load %arg1[%c0_3, %c0_4, %c1, %c0_5] : memref<8x2x18x64xf32, #tpu.memory_space<vmem>>, vector<8x2x16x64xf32>
    %3 = vector.shape_cast %2 : vector<8x2x16x64xf32> to vector<256x64xf32>
    %c0_6 = arith.constant 0 : index
    %c0_7 = arith.constant 0 : index
    %c2 = arith.constant 2 : index
    %c0_8 = arith.constant 0 : index
    %4 = vector.load %arg1[%c0_6, %c0_7, %c2, %c0_8] : memref<8x2x18x64xf32, #tpu.memory_space<vmem>>, vector<8x2x16x64xf32>
    %5 = vector.shape_cast %4 : vector<8x2x16x64xf32> to vector<256x64xf32>
    %6 = tpu.concatenate %1, %3, %5 in 1 : vector<256x64xf32>, vector<256x64xf32>, vector<256x64xf32> -> vector<256x192xf32>
    %7 = arith.truncf %6 : vector<256x192xf32> to vector<256x192xbf16>
    %c0_9 = arith.constant 0 : index
    %c0_10 = arith.constant 0 : index
    %8 = vector.load %arg2[%c0_9, %c0_10] : memref<192x512xbf16, #tpu.memory_space<vmem>>, vector<192x512xbf16>
    %cst = arith.constant dense<0.000000e+00> : vector<256x512xf32>
    %9 = tpu.matmul %7, %8, %cst {dimension_numbers = #tpu.dot_dimension_numbers<[1], [0], [0], [1], [0, 0, 1, 1], [], []>} : vector<256x192xbf16>, vector<192x512xbf16>, vector<256x512xf32> -> vector<256x512xf32>
    %c0_11 = arith.constant 0 : index
    %c0_12 = arith.constant 0 : index
    %10 = vector.load %arg3[%c0_11, %c0_12] : memref<1x512xf32, #tpu.memory_space<vmem>>, vector<1x512xf32>
    %11 = vector.broadcast %10 : vector<1x512xf32> to vector<256x512xf32>
    %12 = arith.addf %9, %11 : vector<256x512xf32>
    %13 = vector.shape_cast %12 : vector<256x512xf32> to vector<8x2x16x512xf32>
    %c0_13 = arith.constant 0 : index
    %c0_14 = arith.constant 0 : index
    %c0_15 = arith.constant 0 : index
    %c0_16 = arith.constant 0 : index
    %14 = vector.load %arg4[%c0_13, %c0_14, %c0_15, %c0_16] : memref<8x2x16x512xf32, #tpu.memory_space<vmem>>, vector<8x2x16x512xf32>
    tpu.vector_store %arg4[%c0_13, %c0_14, %c0_15, %c0_16], %13 {strides = array<i32>} : memref<8x2x16x512xf32, #tpu.memory_space<vmem>>, vector<8x2x16x512xf32>,
    return
  }
  func.func @transform_0(%arg0: i32) -> (i32, i32, i32, i32) {
    %c0_i32 = arith.constant 0 : i32
    %c0_i32_0 = arith.constant 0 : i32
    %c0_i32_1 = arith.constant 0 : i32
    %c0_i32_2 = arith.constant 0 : i32
    return %arg0, %c0_i32, %c0_i32_0, %c0_i32_1 : i32, i32, i32, i32
  }
  func.func @transform_1(%arg0: i32) -> (i32, i32) {
    %c0_i32 = arith.constant 0 : i32
    %c0_i32_0 = arith.constant 0 : i32
    %c0_i32_1 = arith.constant 0 : i32
    return %c0_i32, %c0_i32_0 : i32, i32
  }
  func.func @transform_2(%arg0: i32) -> (i32, i32) {
    %c0_i32 = arith.constant 0 : i32
    %c0_i32_0 = arith.constant 0 : i32
    %c0_i32_1 = arith.constant 0 : i32
    return %c0_i32, %c0_i32_0 : i32, i32
  }
  func.func @transform_3(%arg0: i32) -> (i32, i32, i32, i32) {
    %c0_i32 = arith.constant 0 : i32
    %c0_i32_0 = arith.constant 0 : i32
    %c0_i32_1 = arith.constant 0 : i32
    %c0_i32_2 = arith.constant 0 : i32
    return %arg0, %c0_i32, %c0_i32_0, %c0_i32_1 : i32, i32, i32, i32
  }
}

module attributes {stable_mosaic.version = 11 : i64} {
  func.func @kernel(%arg0: i32, %arg1: i32, %arg2: memref<1x2x16x512xf32, #tpu.memory_space<vmem>>, %arg3: memref<768x512xbf16, #tpu.memory_space<vmem>>, %arg4: memref<384x128xbf16, #tpu.memory_space<vmem>>, %arg5: memref<1x2x16x128xf32, #tpu.memory_space<vmem>>, %arg6: memref<2x16x128xf32, #tpu.memory_space<vmem>>, %arg7: memref<2x16x128xf32, #tpu.memory_space<vmem>>, %arg8: memref<2x18x128xf32, #tpu.memory_space<vmem>>, %arg9: memref<2x18x128xf32, #tpu.memory_space<vmem>>) attributes {dimension_semantics = [#tpu.dimension_semantics<parallel>, #tpu.dimension_semantics<arbitrary>], iteration_bounds = array<i64: 1, 8>, scalar_prefetch = 0 : i64, scratch_operands = 2 : i64, tpu.core_type = #tpu.core_type<tc>, window_params = [{transform_indices = @transform_0, window_bounds = array<i64: 1, 2, 16, 512>}, {pipeline_mode = #tpu.pipeline_mode<synchronous>, transform_indices = @transform_1, window_bounds = array<i64: 768, 512>}, {pipeline_mode = #tpu.pipeline_mode<synchronous>, transform_indices = @transform_2, window_bounds = array<i64: 384, 128>}, {transform_indices = @transform_3, window_bounds = array<i64: 1, 2, 16, 128>}, {transform_indices = @transform_4, window_bounds = array<i64: 2, 16, 128>}, {transform_indices = @transform_5, window_bounds = array<i64: 2, 16, 128>}]} {
    %c0_i32 = arith.constant 0 : i32
    %0 = arith.cmpi eq, %arg1, %c0_i32 : i32
    %1 = arith.extui %0 : i1 to i32
    %c0_i32_0 = arith.constant 0 : i32
    %2 = arith.cmpi ne, %1, %c0_i32_0 : i32
    scf.if %2 {
      %cst_51 = arith.constant 0.000000e+00 : f32
      %74 = vector.broadcast %cst_51 : f32 to vector<2x18x128xf32>
      %c0_52 = arith.constant 0 : index
      %c0_53 = arith.constant 0 : index
      %c0_54 = arith.constant 0 : index
      %75 = vector.load %arg8[%c0_52, %c0_53, %c0_54] : memref<2x18x128xf32, #tpu.memory_space<vmem>>, vector<2x18x128xf32>
      tpu.vector_store %arg8[%c0_52, %c0_53, %c0_54], %74 {strides = array<i32>} : memref<2x18x128xf32, #tpu.memory_space<vmem>>, vector<2x18x128xf32>,
      %cst_55 = arith.constant 0.000000e+00 : f32
      %76 = vector.broadcast %cst_55 : f32 to vector<2x18x128xf32>
      %c0_56 = arith.constant 0 : index
      %c0_57 = arith.constant 0 : index
      %c0_58 = arith.constant 0 : index
      %77 = vector.load %arg9[%c0_56, %c0_57, %c0_58] : memref<2x18x128xf32, #tpu.memory_space<vmem>>, vector<2x18x128xf32>
      tpu.vector_store %arg9[%c0_56, %c0_57, %c0_58], %76 {strides = array<i32>} : memref<2x18x128xf32, #tpu.memory_space<vmem>>, vector<2x18x128xf32>,
    } else {
    }
    %c0 = arith.constant 0 : index
    %c0_1 = arith.constant 0 : index
    %c0_2 = arith.constant 0 : index
    %c0_3 = arith.constant 0 : index
    %3 = vector.load %arg2[%c0, %c0_1, %c0_2, %c0_3] : memref<1x2x16x512xf32, #tpu.memory_space<vmem>>, vector<1x2x16x512xf32>
    %4 = vector.shape_cast %3 : vector<1x2x16x512xf32> to vector<2x16x512xf32>
    %5 = vector.shape_cast %4 : vector<2x16x512xf32> to vector<32x512xf32>
    %c0_4 = arith.constant 0 : index
    %c0_5 = arith.constant 0 : index
    %c0_6 = arith.constant 0 : index
    %6 = vector.load %arg8[%c0_4, %c0_5, %c0_6] : memref<2x18x128xf32, #tpu.memory_space<vmem>>, vector<2x16x128xf32>
    %7 = vector.shape_cast %6 : vector<2x16x128xf32> to vector<32x128xf32>
    %c0_7 = arith.constant 0 : index
    %c1 = arith.constant 1 : index
    %c0_8 = arith.constant 0 : index
    %8 = vector.load %arg8[%c0_7, %c1, %c0_8] : memref<2x18x128xf32, #tpu.memory_space<vmem>>, vector<2x16x128xf32>
    %9 = vector.shape_cast %8 : vector<2x16x128xf32> to vector<32x128xf32>
    %c0_9 = arith.constant 0 : index
    %c2 = arith.constant 2 : index
    %c0_10 = arith.constant 0 : index
    %10 = vector.load %arg8[%c0_9, %c2, %c0_10] : memref<2x18x128xf32, #tpu.memory_space<vmem>>, vector<2x16x128xf32>
    %11 = vector.shape_cast %10 : vector<2x16x128xf32> to vector<32x128xf32>
    %12 = tpu.concatenate %7, %9, %11 in 1 : vector<32x128xf32>, vector<32x128xf32>, vector<32x128xf32> -> vector<32x384xf32>
    %c0_11 = arith.constant 0 : index
    %c0_12 = arith.constant 0 : index
    %c0_13 = arith.constant 0 : index
    %13 = vector.load %arg9[%c0_11, %c0_12, %c0_13] : memref<2x18x128xf32, #tpu.memory_space<vmem>>, vector<2x16x128xf32>
    %14 = vector.shape_cast %13 : vector<2x16x128xf32> to vector<32x128xf32>
    %c0_14 = arith.constant 0 : index
    %c1_15 = arith.constant 1 : index
    %c0_16 = arith.constant 0 : index
    %15 = vector.load %arg9[%c0_14, %c1_15, %c0_16] : memref<2x18x128xf32, #tpu.memory_space<vmem>>, vector<2x16x128xf32>
    %16 = vector.shape_cast %15 : vector<2x16x128xf32> to vector<32x128xf32>
    %c0_17 = arith.constant 0 : index
    %c2_18 = arith.constant 2 : index
    %c0_19 = arith.constant 0 : index
    %17 = vector.load %arg9[%c0_17, %c2_18, %c0_19] : memref<2x18x128xf32, #tpu.memory_space<vmem>>, vector<2x16x128xf32>
    %18 = vector.shape_cast %17 : vector<2x16x128xf32> to vector<32x128xf32>
    %19 = tpu.concatenate %14, %16, %18 in 1 : vector<32x128xf32>, vector<32x128xf32>, vector<32x128xf32> -> vector<32x384xf32>
    %20 = tpu.concatenate %12, %19 in 1 : vector<32x384xf32>, vector<32x384xf32> -> vector<32x768xf32>
    %21 = arith.truncf %20 : vector<32x768xf32> to vector<32x768xbf16>
    %c0_20 = arith.constant 0 : index
    %c0_21 = arith.constant 0 : index
    %22 = vector.load %arg3[%c0_20, %c0_21] : memref<768x512xbf16, #tpu.memory_space<vmem>>, vector<768x512xbf16>
    %cst = arith.constant dense<0.000000e+00> : vector<32x512xf32>
    %23 = tpu.matmul %21, %22, %cst {dimension_numbers = #tpu.dot_dimension_numbers<[1], [0], [0], [1], [0, 0, 1, 1], [], []>} : vector<32x768xbf16>, vector<768x512xbf16>, vector<32x512xf32> -> vector<32x512xf32>
    %24 = arith.addf %5, %23 : vector<32x512xf32>
    %25 = vector.extract_strided_slice %24 {offsets = [0, 0], sizes = [32, 128], strides = [1, 1]} : vector<32x512xf32> to vector<32x128xf32>
    %26 = arith.negf %25 : vector<32x128xf32>
    %27 = math.exp %26 : vector<32x128xf32>
    %cst_22 = arith.constant 1.000000e+00 : f32
    %28 = vector.broadcast %cst_22 : f32 to vector<32x128xf32>
    %29 = arith.addf %28, %27 : vector<32x128xf32>
    %30 = arith.divf %28, %29 : vector<32x128xf32>
    %31 = vector.extract_strided_slice %24 {offsets = [0, 128], sizes = [32, 128], strides = [1, 1]} : vector<32x512xf32> to vector<32x128xf32>
    %32 = arith.negf %31 : vector<32x128xf32>
    %33 = math.exp %32 : vector<32x128xf32>
    %cst_23 = arith.constant 1.000000e+00 : f32
    %34 = vector.broadcast %cst_23 : f32 to vector<32x128xf32>
    %35 = arith.addf %34, %33 : vector<32x128xf32>
    %36 = arith.divf %34, %35 : vector<32x128xf32>
    %37 = vector.extract_strided_slice %24 {offsets = [0, 256], sizes = [32, 128], strides = [1, 1]} : vector<32x512xf32> to vector<32x128xf32>
    %38 = math.tanh %37 : vector<32x128xf32>
    %c0_24 = arith.constant 0 : index
    %c1_25 = arith.constant 1 : index
    %c0_26 = arith.constant 0 : index
    %39 = vector.load %arg9[%c0_24, %c1_25, %c0_26] : memref<2x18x128xf32, #tpu.memory_space<vmem>>, vector<2x16x128xf32>
    %40 = vector.shape_cast %39 : vector<2x16x128xf32> to vector<32x128xf32>
    %41 = arith.mulf %36, %40 : vector<32x128xf32>
    %42 = arith.mulf %30, %38 : vector<32x128xf32>
    %43 = arith.addf %41, %42 : vector<32x128xf32>
    %44 = vector.shape_cast %43 : vector<32x128xf32> to vector<2x16x128xf32>
    %c0_27 = arith.constant 0 : index
    %c1_28 = arith.constant 1 : index
    %c0_29 = arith.constant 0 : index
    %45 = vector.load %arg9[%c0_27, %c1_28, %c0_29] : memref<2x18x128xf32, #tpu.memory_space<vmem>>, vector<2x16x128xf32>
    tpu.vector_store %arg9[%c0_27, %c1_28, %c0_29], %44 {strides = array<i32>} : memref<2x18x128xf32, #tpu.memory_space<vmem>>, vector<2x16x128xf32>,
    %46 = vector.extract_strided_slice %24 {offsets = [0, 384], sizes = [32, 128], strides = [1, 1]} : vector<32x512xf32> to vector<32x128xf32>
    %c0_30 = arith.constant 0 : index
    %c0_31 = arith.constant 0 : index
    %c0_32 = arith.constant 0 : index
    %47 = vector.load %arg9[%c0_30, %c0_31, %c0_32] : memref<2x18x128xf32, #tpu.memory_space<vmem>>, vector<2x16x128xf32>
    %48 = vector.shape_cast %47 : vector<2x16x128xf32> to vector<32x128xf32>
    %c0_33 = arith.constant 0 : index
    %c1_34 = arith.constant 1 : index
    %c0_35 = arith.constant 0 : index
    %49 = vector.load %arg9[%c0_33, %c1_34, %c0_35] : memref<2x18x128xf32, #tpu.memory_space<vmem>>, vector<2x16x128xf32>
    %50 = vector.shape_cast %49 : vector<2x16x128xf32> to vector<32x128xf32>
    %c0_36 = arith.constant 0 : index
    %c2_37 = arith.constant 2 : index
    %c0_38 = arith.constant 0 : index
    %51 = vector.load %arg9[%c0_36, %c2_37, %c0_38] : memref<2x18x128xf32, #tpu.memory_space<vmem>>, vector<2x16x128xf32>
    %52 = vector.shape_cast %51 : vector<2x16x128xf32> to vector<32x128xf32>
    %53 = tpu.concatenate %48, %50, %52 in 1 : vector<32x128xf32>, vector<32x128xf32>, vector<32x128xf32> -> vector<32x384xf32>
    %54 = arith.truncf %53 : vector<32x384xf32> to vector<32x384xbf16>
    %c0_39 = arith.constant 0 : index
    %c0_40 = arith.constant 0 : index
    %55 = vector.load %arg4[%c0_39, %c0_40] : memref<384x128xbf16, #tpu.memory_space<vmem>>, vector<384x128xbf16>
    %cst_41 = arith.constant dense<0.000000e+00> : vector<32x128xf32>
    %56 = tpu.matmul %54, %55, %cst_41 {dimension_numbers = #tpu.dot_dimension_numbers<[1], [0], [0], [1], [0, 0, 1, 1], [], []>} : vector<32x384xbf16>, vector<384x128xbf16>, vector<32x128xf32> -> vector<32x128xf32>
    %57 = arith.addf %46, %56 : vector<32x128xf32>
    %58 = arith.negf %57 : vector<32x128xf32>
    %59 = math.exp %58 : vector<32x128xf32>
    %cst_42 = arith.constant 1.000000e+00 : f32
    %60 = vector.broadcast %cst_42 : f32 to vector<32x128xf32>
    %61 = arith.addf %60, %59 : vector<32x128xf32>
    %62 = arith.divf %60, %61 : vector<32x128xf32>
    %63 = math.tanh %43 : vector<32x128xf32>
    %64 = arith.mulf %62, %63 : vector<32x128xf32>
    %65 = vector.shape_cast %64 : vector<32x128xf32> to vector<2x16x128xf32>
    %c0_43 = arith.constant 0 : index
    %c1_44 = arith.constant 1 : index
    %c0_45 = arith.constant 0 : index
    %66 = vector.load %arg8[%c0_43, %c1_44, %c0_45] : memref<2x18x128xf32, #tpu.memory_space<vmem>>, vector<2x16x128xf32>
    tpu.vector_store %arg8[%c0_43, %c1_44, %c0_45], %65 {strides = array<i32>} : memref<2x18x128xf32, #tpu.memory_space<vmem>>, vector<2x16x128xf32>,
    %67 = vector.shape_cast %64 : vector<32x128xf32> to vector<2x16x128xf32>
    %c0_46 = arith.constant 0 : index
    %c0_47 = arith.constant 0 : index
    %c0_48 = arith.constant 0 : index
    %c0_49 = arith.constant 0 : index
    %68 = vector.load %arg5[%c0_46, %c0_47, %c0_48, %c0_49] : memref<1x2x16x128xf32, #tpu.memory_space<vmem>>, vector<1x2x16x128xf32>
    %69 = vector.shape_cast %68 : vector<1x2x16x128xf32> to vector<2x16x128xf32>
    %70 = vector.shape_cast %67 : vector<2x16x128xf32> to vector<1x2x16x128xf32>
    tpu.vector_store %arg5[%c0_46, %c0_47, %c0_48, %c0_49], %70 {strides = array<i32>} : memref<1x2x16x128xf32, #tpu.memory_space<vmem>>, vector<1x2x16x128xf32>,
    %c7_i32 = arith.constant 7 : i32
    %71 = arith.cmpi eq, %arg1, %c7_i32 : i32
    %72 = arith.extui %71 : i1 to i32
    %c0_i32_50 = arith.constant 0 : i32
    %73 = arith.cmpi ne, %72, %c0_i32_50 : i32
    scf.if %73 {
      %74 = vector.shape_cast %64 : vector<32x128xf32> to vector<2x16x128xf32>
      %c0_51 = arith.constant 0 : index
      %c0_52 = arith.constant 0 : index
      %c0_53 = arith.constant 0 : index
      %75 = vector.load %arg6[%c0_51, %c0_52, %c0_53] : memref<2x16x128xf32, #tpu.memory_space<vmem>>, vector<2x16x128xf32>
      tpu.vector_store %arg6[%c0_51, %c0_52, %c0_53], %74 {strides = array<i32>} : memref<2x16x128xf32, #tpu.memory_space<vmem>>, vector<2x16x128xf32>,
      %76 = vector.shape_cast %43 : vector<32x128xf32> to vector<2x16x128xf32>
      %c0_54 = arith.constant 0 : index
      %c0_55 = arith.constant 0 : index
      %c0_56 = arith.constant 0 : index
      %77 = vector.load %arg7[%c0_54, %c0_55, %c0_56] : memref<2x16x128xf32, #tpu.memory_space<vmem>>, vector<2x16x128xf32>
      tpu.vector_store %arg7[%c0_54, %c0_55, %c0_56], %76 {strides = array<i32>} : memref<2x16x128xf32, #tpu.memory_space<vmem>>, vector<2x16x128xf32>,
    } else {
    }
    return
  }
  func.func @transform_0(%arg0: i32, %arg1: i32) -> (i32, i32, i32, i32) {
    %c0_i32 = arith.constant 0 : i32
    %c0_i32_0 = arith.constant 0 : i32
    %c0_i32_1 = arith.constant 0 : i32
    return %arg1, %arg0, %c0_i32, %c0_i32_0 : i32, i32, i32, i32
  }
  func.func @transform_1(%arg0: i32, %arg1: i32) -> (i32, i32) {
    %c0_i32 = arith.constant 0 : i32
    %c0_i32_0 = arith.constant 0 : i32
    %c0_i32_1 = arith.constant 0 : i32
    return %c0_i32, %c0_i32_0 : i32, i32
  }
  func.func @transform_2(%arg0: i32, %arg1: i32) -> (i32, i32) {
    %c0_i32 = arith.constant 0 : i32
    %c0_i32_0 = arith.constant 0 : i32
    %c0_i32_1 = arith.constant 0 : i32
    return %c0_i32, %c0_i32_0 : i32, i32
  }
  func.func @transform_3(%arg0: i32, %arg1: i32) -> (i32, i32, i32, i32) {
    %c0_i32 = arith.constant 0 : i32
    %c0_i32_0 = arith.constant 0 : i32
    %c0_i32_1 = arith.constant 0 : i32
    return %arg1, %arg0, %c0_i32, %c0_i32_0 : i32, i32, i32, i32
  }
  func.func @transform_4(%arg0: i32, %arg1: i32) -> (i32, i32, i32) {
    %c0_i32 = arith.constant 0 : i32
    %c0_i32_0 = arith.constant 0 : i32
    %c0_i32_1 = arith.constant 0 : i32
    return %arg0, %c0_i32, %c0_i32_0 : i32, i32, i32
  }
  func.func @transform_5(%arg0: i32, %arg1: i32) -> (i32, i32, i32) {
    %c0_i32 = arith.constant 0 : i32
    %c0_i32_0 = arith.constant 0 : i32
    %c0_i32_1 = arith.constant 0 : i32
    return %arg0, %c0_i32, %c0_i32_0 : i32, i32, i32
  }
}

module attributes {stable_mosaic.version = 11 : i64} {
  func.func @kernel(%arg0: i32, %arg1: memref<8x2x18x128xf32, #tpu.memory_space<vmem>>, %arg2: memref<384x512xbf16, #tpu.memory_space<vmem>>, %arg3: memref<1x512xf32, #tpu.memory_space<vmem>>, %arg4: memref<8x2x16x512xf32, #tpu.memory_space<vmem>>) attributes {dimension_semantics = [#tpu.dimension_semantics<parallel>], iteration_bounds = array<i64: 1>, scalar_prefetch = 0 : i64, scratch_operands = 0 : i64, tpu.core_type = #tpu.core_type<tc>, window_params = [{transform_indices = @transform_0, window_bounds = array<i64: 8, 2, 18, 128>}, {pipeline_mode = #tpu.pipeline_mode<synchronous>, transform_indices = @transform_1, window_bounds = array<i64: 384, 512>}, {pipeline_mode = #tpu.pipeline_mode<synchronous>, transform_indices = @transform_2, window_bounds = array<i64: 1, 512>}, {transform_indices = @transform_3, window_bounds = array<i64: 8, 2, 16, 512>}]} {
    %c0 = arith.constant 0 : index
    %c0_0 = arith.constant 0 : index
    %c0_1 = arith.constant 0 : index
    %c0_2 = arith.constant 0 : index
    %0 = vector.load %arg1[%c0, %c0_0, %c0_1, %c0_2] : memref<8x2x18x128xf32, #tpu.memory_space<vmem>>, vector<8x2x16x128xf32>
    %1 = vector.shape_cast %0 : vector<8x2x16x128xf32> to vector<256x128xf32>
    %c0_3 = arith.constant 0 : index
    %c0_4 = arith.constant 0 : index
    %c1 = arith.constant 1 : index
    %c0_5 = arith.constant 0 : index
    %2 = vector.load %arg1[%c0_3, %c0_4, %c1, %c0_5] : memref<8x2x18x128xf32, #tpu.memory_space<vmem>>, vector<8x2x16x128xf32>
    %3 = vector.shape_cast %2 : vector<8x2x16x128xf32> to vector<256x128xf32>
    %c0_6 = arith.constant 0 : index
    %c0_7 = arith.constant 0 : index
    %c2 = arith.constant 2 : index
    %c0_8 = arith.constant 0 : index
    %4 = vector.load %arg1[%c0_6, %c0_7, %c2, %c0_8] : memref<8x2x18x128xf32, #tpu.memory_space<vmem>>, vector<8x2x16x128xf32>
    %5 = vector.shape_cast %4 : vector<8x2x16x128xf32> to vector<256x128xf32>
    %6 = tpu.concatenate %1, %3, %5 in 1 : vector<256x128xf32>, vector<256x128xf32>, vector<256x128xf32> -> vector<256x384xf32>
    %7 = arith.truncf %6 : vector<256x384xf32> to vector<256x384xbf16>
    %c0_9 = arith.constant 0 : index
    %c0_10 = arith.constant 0 : index
    %8 = vector.load %arg2[%c0_9, %c0_10] : memref<384x512xbf16, #tpu.memory_space<vmem>>, vector<384x512xbf16>
    %cst = arith.constant dense<0.000000e+00> : vector<256x512xf32>
    %9 = tpu.matmul %7, %8, %cst {dimension_numbers = #tpu.dot_dimension_numbers<[1], [0], [0], [1], [0, 0, 1, 1], [], []>} : vector<256x384xbf16>, vector<384x512xbf16>, vector<256x512xf32> -> vector<256x512xf32>
    %c0_11 = arith.constant 0 : index
    %c0_12 = arith.constant 0 : index
    %10 = vector.load %arg3[%c0_11, %c0_12] : memref<1x512xf32, #tpu.memory_space<vmem>>, vector<1x512xf32>
    %11 = vector.broadcast %10 : vector<1x512xf32> to vector<256x512xf32>
    %12 = arith.addf %9, %11 : vector<256x512xf32>
    %13 = vector.shape_cast %12 : vector<256x512xf32> to vector<8x2x16x512xf32>
    %c0_13 = arith.constant 0 : index
    %c0_14 = arith.constant 0 : index
    %c0_15 = arith.constant 0 : index
    %c0_16 = arith.constant 0 : index
    %14 = vector.load %arg4[%c0_13, %c0_14, %c0_15, %c0_16] : memref<8x2x16x512xf32, #tpu.memory_space<vmem>>, vector<8x2x16x512xf32>
    tpu.vector_store %arg4[%c0_13, %c0_14, %c0_15, %c0_16], %13 {strides = array<i32>} : memref<8x2x16x512xf32, #tpu.memory_space<vmem>>, vector<8x2x16x512xf32>,
    return
  }
  func.func @transform_0(%arg0: i32) -> (i32, i32, i32, i32) {
    %c0_i32 = arith.constant 0 : i32
    %c0_i32_0 = arith.constant 0 : i32
    %c0_i32_1 = arith.constant 0 : i32
    %c0_i32_2 = arith.constant 0 : i32
    return %arg0, %c0_i32, %c0_i32_0, %c0_i32_1 : i32, i32, i32, i32
  }
  func.func @transform_1(%arg0: i32) -> (i32, i32) {
    %c0_i32 = arith.constant 0 : i32
    %c0_i32_0 = arith.constant 0 : i32
    %c0_i32_1 = arith.constant 0 : i32
    return %c0_i32, %c0_i32_0 : i32, i32
  }
  func.func @transform_2(%arg0: i32) -> (i32, i32) {
    %c0_i32 = arith.constant 0 : i32
    %c0_i32_0 = arith.constant 0 : i32
    %c0_i32_1 = arith.constant 0 : i32
    return %c0_i32, %c0_i32_0 : i32, i32
  }
  func.func @transform_3(%arg0: i32) -> (i32, i32, i32, i32) {
    %c0_i32 = arith.constant 0 : i32
    %c0_i32_0 = arith.constant 0 : i32
    %c0_i32_1 = arith.constant 0 : i32
    %c0_i32_2 = arith.constant 0 : i32
    return %arg0, %c0_i32, %c0_i32_0, %c0_i32_1 : i32, i32, i32, i32
  }
}

module attributes {stable_mosaic.version = 11 : i64} {
  func.func @kernel(%arg0: i32, %arg1: i32, %arg2: memref<1x2x16x512xf32, #tpu.memory_space<vmem>>, %arg3: memref<768x512xbf16, #tpu.memory_space<vmem>>, %arg4: memref<384x128xbf16, #tpu.memory_space<vmem>>, %arg5: memref<1x2x16x128xf32, #tpu.memory_space<vmem>>, %arg6: memref<2x16x128xf32, #tpu.memory_space<vmem>>, %arg7: memref<2x16x128xf32, #tpu.memory_space<vmem>>, %arg8: memref<2x18x128xf32, #tpu.memory_space<vmem>>, %arg9: memref<2x18x128xf32, #tpu.memory_space<vmem>>) attributes {dimension_semantics = [#tpu.dimension_semantics<parallel>, #tpu.dimension_semantics<arbitrary>], iteration_bounds = array<i64: 1, 8>, scalar_prefetch = 0 : i64, scratch_operands = 2 : i64, tpu.core_type = #tpu.core_type<tc>, window_params = [{transform_indices = @transform_0, window_bounds = array<i64: 1, 2, 16, 512>}, {pipeline_mode = #tpu.pipeline_mode<synchronous>, transform_indices = @transform_1, window_bounds = array<i64: 768, 512>}, {pipeline_mode = #tpu.pipeline_mode<synchronous>, transform_indices = @transform_2, window_bounds = array<i64: 384, 128>}, {transform_indices = @transform_3, window_bounds = array<i64: 1, 2, 16, 128>}, {transform_indices = @transform_4, window_bounds = array<i64: 2, 16, 128>}, {transform_indices = @transform_5, window_bounds = array<i64: 2, 16, 128>}]} {
    %c0_i32 = arith.constant 0 : i32
    %0 = arith.cmpi eq, %arg1, %c0_i32 : i32
    %1 = arith.extui %0 : i1 to i32
    %c0_i32_0 = arith.constant 0 : i32
    %2 = arith.cmpi ne, %1, %c0_i32_0 : i32
    scf.if %2 {
      %cst_51 = arith.constant 0.000000e+00 : f32
      %74 = vector.broadcast %cst_51 : f32 to vector<2x18x128xf32>
      %c0_52 = arith.constant 0 : index
      %c0_53 = arith.constant 0 : index
      %c0_54 = arith.constant 0 : index
      %75 = vector.load %arg8[%c0_52, %c0_53, %c0_54] : memref<2x18x128xf32, #tpu.memory_space<vmem>>, vector<2x18x128xf32>
      tpu.vector_store %arg8[%c0_52, %c0_53, %c0_54], %74 {strides = array<i32>} : memref<2x18x128xf32, #tpu.memory_space<vmem>>, vector<2x18x128xf32>,
      %cst_55 = arith.constant 0.000000e+00 : f32
      %76 = vector.broadcast %cst_55 : f32 to vector<2x18x128xf32>
      %c0_56 = arith.constant 0 : index
      %c0_57 = arith.constant 0 : index
      %c0_58 = arith.constant 0 : index
      %77 = vector.load %arg9[%c0_56, %c0_57, %c0_58] : memref<2x18x128xf32, #tpu.memory_space<vmem>>, vector<2x18x128xf32>
      tpu.vector_store %arg9[%c0_56, %c0_57, %c0_58], %76 {strides = array<i32>} : memref<2x18x128xf32, #tpu.memory_space<vmem>>, vector<2x18x128xf32>,
    } else {
    }
    %c0 = arith.constant 0 : index
    %c0_1 = arith.constant 0 : index
    %c0_2 = arith.constant 0 : index
    %c0_3 = arith.constant 0 : index
    %3 = vector.load %arg2[%c0, %c0_1, %c0_2, %c0_3] : memref<1x2x16x512xf32, #tpu.memory_space<vmem>>, vector<1x2x16x512xf32>
    %4 = vector.shape_cast %3 : vector<1x2x16x512xf32> to vector<2x16x512xf32>
    %5 = vector.shape_cast %4 : vector<2x16x512xf32> to vector<32x512xf32>
    %c0_4 = arith.constant 0 : index
    %c0_5 = arith.constant 0 : index
    %c0_6 = arith.constant 0 : index
    %6 = vector.load %arg8[%c0_4, %c0_5, %c0_6] : memref<2x18x128xf32, #tpu.memory_space<vmem>>, vector<2x16x128xf32>
    %7 = vector.shape_cast %6 : vector<2x16x128xf32> to vector<32x128xf32>
    %c0_7 = arith.constant 0 : index
    %c1 = arith.constant 1 : index
    %c0_8 = arith.constant 0 : index
    %8 = vector.load %arg8[%c0_7, %c1, %c0_8] : memref<2x18x128xf32, #tpu.memory_space<vmem>>, vector<2x16x128xf32>
    %9 = vector.shape_cast %8 : vector<2x16x128xf32> to vector<32x128xf32>
    %c0_9 = arith.constant 0 : index
    %c2 = arith.constant 2 : index
    %c0_10 = arith.constant 0 : index
    %10 = vector.load %arg8[%c0_9, %c2, %c0_10] : memref<2x18x128xf32, #tpu.memory_space<vmem>>, vector<2x16x128xf32>
    %11 = vector.shape_cast %10 : vector<2x16x128xf32> to vector<32x128xf32>
    %12 = tpu.concatenate %7, %9, %11 in 1 : vector<32x128xf32>, vector<32x128xf32>, vector<32x128xf32> -> vector<32x384xf32>
    %c0_11 = arith.constant 0 : index
    %c0_12 = arith.constant 0 : index
    %c0_13 = arith.constant 0 : index
    %13 = vector.load %arg9[%c0_11, %c0_12, %c0_13] : memref<2x18x128xf32, #tpu.memory_space<vmem>>, vector<2x16x128xf32>
    %14 = vector.shape_cast %13 : vector<2x16x128xf32> to vector<32x128xf32>
    %c0_14 = arith.constant 0 : index
    %c1_15 = arith.constant 1 : index
    %c0_16 = arith.constant 0 : index
    %15 = vector.load %arg9[%c0_14, %c1_15, %c0_16] : memref<2x18x128xf32, #tpu.memory_space<vmem>>, vector<2x16x128xf32>
    %16 = vector.shape_cast %15 : vector<2x16x128xf32> to vector<32x128xf32>
    %c0_17 = arith.constant 0 : index
    %c2_18 = arith.constant 2 : index
    %c0_19 = arith.constant 0 : index
    %17 = vector.load %arg9[%c0_17, %c2_18, %c0_19] : memref<2x18x128xf32, #tpu.memory_space<vmem>>, vector<2x16x128xf32>
    %18 = vector.shape_cast %17 : vector<2x16x128xf32> to vector<32x128xf32>
    %19 = tpu.concatenate %14, %16, %18 in 1 : vector<32x128xf32>, vector<32x128xf32>, vector<32x128xf32> -> vector<32x384xf32>
    %20 = tpu.concatenate %12, %19 in 1 : vector<32x384xf32>, vector<32x384xf32> -> vector<32x768xf32>
    %21 = arith.truncf %20 : vector<32x768xf32> to vector<32x768xbf16>
    %c0_20 = arith.constant 0 : index
    %c0_21 = arith.constant 0 : index
    %22 = vector.load %arg3[%c0_20, %c0_21] : memref<768x512xbf16, #tpu.memory_space<vmem>>, vector<768x512xbf16>
    %cst = arith.constant dense<0.000000e+00> : vector<32x512xf32>
    %23 = tpu.matmul %21, %22, %cst {dimension_numbers = #tpu.dot_dimension_numbers<[1], [0], [0], [1], [0, 0, 1, 1], [], []>} : vector<32x768xbf16>, vector<768x512xbf16>, vector<32x512xf32> -> vector<32x512xf32>
    %24 = arith.addf %5, %23 : vector<32x512xf32>
    %25 = vector.extract_strided_slice %24 {offsets = [0, 0], sizes = [32, 128], strides = [1, 1]} : vector<32x512xf32> to vector<32x128xf32>
    %26 = arith.negf %25 : vector<32x128xf32>
    %27 = math.exp %26 : vector<32x128xf32>
    %cst_22 = arith.constant 1.000000e+00 : f32
    %28 = vector.broadcast %cst_22 : f32 to vector<32x128xf32>
    %29 = arith.addf %28, %27 : vector<32x128xf32>
    %30 = arith.divf %28, %29 : vector<32x128xf32>
    %31 = vector.extract_strided_slice %24 {offsets = [0, 128], sizes = [32, 128], strides = [1, 1]} : vector<32x512xf32> to vector<32x128xf32>
    %32 = arith.negf %31 : vector<32x128xf32>
    %33 = math.exp %32 : vector<32x128xf32>
    %cst_23 = arith.constant 1.000000e+00 : f32
    %34 = vector.broadcast %cst_23 : f32 to vector<32x128xf32>
    %35 = arith.addf %34, %33 : vector<32x128xf32>
    %36 = arith.divf %34, %35 : vector<32x128xf32>
    %37 = vector.extract_strided_slice %24 {offsets = [0, 256], sizes = [32, 128], strides = [1, 1]} : vector<32x512xf32> to vector<32x128xf32>
    %38 = math.tanh %37 : vector<32x128xf32>
    %c0_24 = arith.constant 0 : index
    %c1_25 = arith.constant 1 : index
    %c0_26 = arith.constant 0 : index
    %39 = vector.load %arg9[%c0_24, %c1_25, %c0_26] : memref<2x18x128xf32, #tpu.memory_space<vmem>>, vector<2x16x128xf32>
    %40 = vector.shape_cast %39 : vector<2x16x128xf32> to vector<32x128xf32>
    %41 = arith.mulf %36, %40 : vector<32x128xf32>
    %42 = arith.mulf %30, %38 : vector<32x128xf32>
    %43 = arith.addf %41, %42 : vector<32x128xf32>
    %44 = vector.shape_cast %43 : vector<32x128xf32> to vector<2x16x128xf32>
    %c0_27 = arith.constant 0 : index
    %c1_28 = arith.constant 1 : index
    %c0_29 = arith.constant 0 : index
    %45 = vector.load %arg9[%c0_27, %c1_28, %c0_29] : memref<2x18x128xf32, #tpu.memory_space<vmem>>, vector<2x16x128xf32>
    tpu.vector_store %arg9[%c0_27, %c1_28, %c0_29], %44 {strides = array<i32>} : memref<2x18x128xf32, #tpu.memory_space<vmem>>, vector<2x16x128xf32>,
    %46 = vector.extract_strided_slice %24 {offsets = [0, 384], sizes = [32, 128], strides = [1, 1]} : vector<32x512xf32> to vector<32x128xf32>
    %c0_30 = arith.constant 0 : index
    %c0_31 = arith.constant 0 : index
    %c0_32 = arith.constant 0 : index
    %47 = vector.load %arg9[%c0_30, %c0_31, %c0_32] : memref<2x18x128xf32, #tpu.memory_space<vmem>>, vector<2x16x128xf32>
    %48 = vector.shape_cast %47 : vector<2x16x128xf32> to vector<32x128xf32>
    %c0_33 = arith.constant 0 : index
    %c1_34 = arith.constant 1 : index
    %c0_35 = arith.constant 0 : index
    %49 = vector.load %arg9[%c0_33, %c1_34, %c0_35] : memref<2x18x128xf32, #tpu.memory_space<vmem>>, vector<2x16x128xf32>
    %50 = vector.shape_cast %49 : vector<2x16x128xf32> to vector<32x128xf32>
    %c0_36 = arith.constant 0 : index
    %c2_37 = arith.constant 2 : index
    %c0_38 = arith.constant 0 : index
    %51 = vector.load %arg9[%c0_36, %c2_37, %c0_38] : memref<2x18x128xf32, #tpu.memory_space<vmem>>, vector<2x16x128xf32>
    %52 = vector.shape_cast %51 : vector<2x16x128xf32> to vector<32x128xf32>
    %53 = tpu.concatenate %48, %50, %52 in 1 : vector<32x128xf32>, vector<32x128xf32>, vector<32x128xf32> -> vector<32x384xf32>
    %54 = arith.truncf %53 : vector<32x384xf32> to vector<32x384xbf16>
    %c0_39 = arith.constant 0 : index
    %c0_40 = arith.constant 0 : index
    %55 = vector.load %arg4[%c0_39, %c0_40] : memref<384x128xbf16, #tpu.memory_space<vmem>>, vector<384x128xbf16>
    %cst_41 = arith.constant dense<0.000000e+00> : vector<32x128xf32>
    %56 = tpu.matmul %54, %55, %cst_41 {dimension_numbers = #tpu.dot_dimension_numbers<[1], [0], [0], [1], [0, 0, 1, 1], [], []>} : vector<32x384xbf16>, vector<384x128xbf16>, vector<32x128xf32> -> vector<32x128xf32>
    %57 = arith.addf %46, %56 : vector<32x128xf32>
    %58 = arith.negf %57 : vector<32x128xf32>
    %59 = math.exp %58 : vector<32x128xf32>
    %cst_42 = arith.constant 1.000000e+00 : f32
    %60 = vector.broadcast %cst_42 : f32 to vector<32x128xf32>
    %61 = arith.addf %60, %59 : vector<32x128xf32>
    %62 = arith.divf %60, %61 : vector<32x128xf32>
    %63 = math.tanh %43 : vector<32x128xf32>
    %64 = arith.mulf %62, %63 : vector<32x128xf32>
    %65 = vector.shape_cast %64 : vector<32x128xf32> to vector<2x16x128xf32>
    %c0_43 = arith.constant 0 : index
    %c1_44 = arith.constant 1 : index
    %c0_45 = arith.constant 0 : index
    %66 = vector.load %arg8[%c0_43, %c1_44, %c0_45] : memref<2x18x128xf32, #tpu.memory_space<vmem>>, vector<2x16x128xf32>
    tpu.vector_store %arg8[%c0_43, %c1_44, %c0_45], %65 {strides = array<i32>} : memref<2x18x128xf32, #tpu.memory_space<vmem>>, vector<2x16x128xf32>,
    %67 = vector.shape_cast %64 : vector<32x128xf32> to vector<2x16x128xf32>
    %c0_46 = arith.constant 0 : index
    %c0_47 = arith.constant 0 : index
    %c0_48 = arith.constant 0 : index
    %c0_49 = arith.constant 0 : index
    %68 = vector.load %arg5[%c0_46, %c0_47, %c0_48, %c0_49] : memref<1x2x16x128xf32, #tpu.memory_space<vmem>>, vector<1x2x16x128xf32>
    %69 = vector.shape_cast %68 : vector<1x2x16x128xf32> to vector<2x16x128xf32>
    %70 = vector.shape_cast %67 : vector<2x16x128xf32> to vector<1x2x16x128xf32>
    tpu.vector_store %arg5[%c0_46, %c0_47, %c0_48, %c0_49], %70 {strides = array<i32>} : memref<1x2x16x128xf32, #tpu.memory_space<vmem>>, vector<1x2x16x128xf32>,
    %c7_i32 = arith.constant 7 : i32
    %71 = arith.cmpi eq, %arg1, %c7_i32 : i32
    %72 = arith.extui %71 : i1 to i32
    %c0_i32_50 = arith.constant 0 : i32
    %73 = arith.cmpi ne, %72, %c0_i32_50 : i32
    scf.if %73 {
      %74 = vector.shape_cast %64 : vector<32x128xf32> to vector<2x16x128xf32>
      %c0_51 = arith.constant 0 : index
      %c0_52 = arith.constant 0 : index
      %c0_53 = arith.constant 0 : index
      %75 = vector.load %arg6[%c0_51, %c0_52, %c0_53] : memref<2x16x128xf32, #tpu.memory_space<vmem>>, vector<2x16x128xf32>
      tpu.vector_store %arg6[%c0_51, %c0_52, %c0_53], %74 {strides = array<i32>} : memref<2x16x128xf32, #tpu.memory_space<vmem>>, vector<2x16x128xf32>,
      %76 = vector.shape_cast %43 : vector<32x128xf32> to vector<2x16x128xf32>
      %c0_54 = arith.constant 0 : index
      %c0_55 = arith.constant 0 : index
      %c0_56 = arith.constant 0 : index
      %77 = vector.load %arg7[%c0_54, %c0_55, %c0_56] : memref<2x16x128xf32, #tpu.memory_space<vmem>>, vector<2x16x128xf32>
      tpu.vector_store %arg7[%c0_54, %c0_55, %c0_56], %76 {strides = array<i32>} : memref<2x16x128xf32, #tpu.memory_space<vmem>>, vector<2x16x128xf32>,
    } else {
    }
    return
  }
  func.func @transform_0(%arg0: i32, %arg1: i32) -> (i32, i32, i32, i32) {
    %c0_i32 = arith.constant 0 : i32
    %c0_i32_0 = arith.constant 0 : i32
    %c0_i32_1 = arith.constant 0 : i32
    return %arg1, %arg0, %c0_i32, %c0_i32_0 : i32, i32, i32, i32
  }
  func.func @transform_1(%arg0: i32, %arg1: i32) -> (i32, i32) {
    %c0_i32 = arith.constant 0 : i32
    %c0_i32_0 = arith.constant 0 : i32
    %c0_i32_1 = arith.constant 0 : i32
    return %c0_i32, %c0_i32_0 : i32, i32
  }
  func.func @transform_2(%arg0: i32, %arg1: i32) -> (i32, i32) {
    %c0_i32 = arith.constant 0 : i32
    %c0_i32_0 = arith.constant 0 : i32
    %c0_i32_1 = arith.constant 0 : i32
    return %c0_i32, %c0_i32_0 : i32, i32
  }
  func.func @transform_3(%arg0: i32, %arg1: i32) -> (i32, i32, i32, i32) {
    %c0_i32 = arith.constant 0 : i32
    %c0_i32_0 = arith.constant 0 : i32
    %c0_i32_1 = arith.constant 0 : i32
    return %arg1, %arg0, %c0_i32, %c0_i32_0 : i32, i32, i32, i32
  }
  func.func @transform_4(%arg0: i32, %arg1: i32) -> (i32, i32, i32) {
    %c0_i32 = arith.constant 0 : i32
    %c0_i32_0 = arith.constant 0 : i32
    %c0_i32_1 = arith.constant 0 : i32
    return %arg0, %c0_i32, %c0_i32_0 : i32, i32, i32
  }
  func.func @transform_5(%arg0: i32, %arg1: i32) -> (i32, i32, i32) {
    %c0_i32 = arith.constant 0 : i32
    %c0_i32_0 = arith.constant 0 : i32
    %c0_i32_1 = arith.constant 0 : i32
    return %arg0, %c0_i32, %c0_i32_0 : i32, i32, i32
  }
}

</mosaic_0001>

<llo_original>
// kernel: _lambda_.4
$region0: #{_lambda_.4}
  #allocation0 [shape = 'u32[]', space=smem, size = 0x4, offset = 0x4, fixed_abs, tag = 'smem constant byte address 0x4 - core index']
  #allocation1 [shape = 'u32[144,128]{1,0:T(1,128)}', space=vmem, size = 0x12000, scoped, tag = 'internal scratch']
  %s0 = inlined_call_operand.vmem [shape: f32[8,2,18,64], index: 0, kind: input, shape index: {}]
  %s1 = inlined_call_operand.vmem [shape: bf16[192,512], index: 1, kind: input, shape index: {}]
  %s2 = inlined_call_operand.vmem [shape: f32[1,512], index: 2, kind: input, shape index: {}]
  %s3 = inlined_call_operand.vmem [shape: f32[8,2,16,512], index: 3, kind: output, shape index: {}]
  %s4 = sld [smem:[#allocation0]]
  $region22: #{_lambda_.4} parent=0
    _
  %s6 = ssub.s32 1, %s4
  %s7 = scalar_select 0, %s6, %s4
  // Predicated region
  $region2: #{_lambda_.4} parent=0 // pred_check
    _
  $region3: #{_lambda_.4} parent=0 // pred_check_branch
    %9 = sbr.rel (0) target = $region5
  $region4: #{_lambda_.4} parent=0 // pred_region
    _
  $region5: #{_lambda_.4} parent=0 // pred_fallthru
    _
  // Predicated region
  $region6: #{_lambda_.4} parent=0 // pred_check
    _
  $region7: #{_lambda_.4} parent=0 // pred_check_branch
    %11 = sbr.rel (0) target = $region9
  $region8: #{_lambda_.4} parent=0 // pred_region
    _
  $region9: #{_lambda_.4} parent=0 // pred_fallthru
    _
  // Predicated region
  $region10: #{_lambda_.4} parent=0 // pred_check
    _
  $region11: #{_lambda_.4} parent=0 // pred_check_branch
    %13 = sbr.rel (0) target = $region13
  $region12: #{_lambda_.4} parent=0 // pred_region
    _
  $region13: #{_lambda_.4} parent=0 // pred_fallthru
    _
  %v15 = vld [vmem:[%s0] sm:$0xff]
  %v16 = vld [vmem:[%s0 + $0x8] sm:$0xff]
  %v17 = vld [vmem:[%s0 + $0x18] sm:$0xff]
  %v18 = vld [vmem:[%s0 + $0x20] sm:$0xff]
  %v19 = vld [vmem:[%s0 + $0x30] sm:$0xff]
  %v20 = vld [vmem:[%s0 + $0x38] sm:$0xff]
  %v21 = vld [vmem:[%s0 + $0x48] sm:$0xff]
  %v22 = vld [vmem:[%s0 + $0x50] sm:$0xff]
  %v23 = vld [vmem:[%s0 + $0x60] sm:$0xff]
  %v24 = vld [vmem:[%s0 + $0x68] sm:$0xff]
  %v25 = vld [vmem:[%s0 + $0x78] sm:$0xff]
  %v26 = vld [vmem:[%s0 + $0x80] sm:$0xff]
  %v27 = vld [vmem:[%s0 + $0x90] sm:$0xff]
  %v28 = vld [vmem:[%s0 + $0x98] sm:$0xff]
  %v29 = vld [vmem:[%s0 + $0xa8] sm:$0xff]
  %v30 = vld [vmem:[%s0 + $0xb0] sm:$0xff]
  %v31 = vld [vmem:[%s0 + $0xc0] sm:$0xff]
  %v32 = vld [vmem:[%s0 + $0xc8] sm:$0xff]
  %v33 = vld [vmem:[%s0 + $0xd8] sm:$0xff]
  %v34 = vld [vmem:[%s0 + $0xe0] sm:$0xff]
  %v35 = vld [vmem:[%s0 + $0xf0] sm:$0xff]
  %v36 = vld [vmem:[%s0 + $0xf8] sm:$0xff]
  %v37 = vld [vmem:[%s0 + $0x108] sm:$0xff]
  %v38 = vld [vmem:[%s0 + $0x110] sm:$0xff]
  %v39 = vld [vmem:[%s0 + $0x120] sm:$0xff]
  %v40 = vld [vmem:[%s0 + $0x128] sm:$0xff]
  %v41 = vld [vmem:[%s0 + $0x138] sm:$0xff]
  %v42 = vld [vmem:[%s0 + $0x140] sm:$0xff]
  %v43 = vld [vmem:[%s0 + $0x150] sm:$0xff]
  %v44 = vld [vmem:[%s0 + $0x158] sm:$0xff]
  %v45 = vld [vmem:[%s0 + $0x168] sm:$0xff]
  %v46 = vld [vmem:[%s0 + $0x170] sm:$0xff]
  %v47 = vld [vmem:[%s0 + $0x1] sm:$0xff]
  %v48 = vld [vmem:[%s0 + $0x9] sm:$0xff]
  %v49 = vld [vmem:[%s0 + $0x19] sm:$0xff]
  %v50 = vld [vmem:[%s0 + $0x21] sm:$0xff]
  %v51 = vld [vmem:[%s0 + $0x31] sm:$0xff]
  %v52 = vld [vmem:[%s0 + $0x39] sm:$0xff]
  %v53 = vld [vmem:[%s0 + $0x49] sm:$0xff]
  %v54 = vld [vmem:[%s0 + $0x51] sm:$0xff]
  %v55 = vld [vmem:[%s0 + $0x61] sm:$0xff]
  %v56 = vld [vmem:[%s0 + $0x69] sm:$0xff]
  %v57 = vld [vmem:[%s0 + $0x79] sm:$0xff]
  %v58 = vld [vmem:[%s0 + $0x81] sm:$0xff]
  %v59 = vld [vmem:[%s0 + $0x91] sm:$0xff]
  %v60 = vld [vmem:[%s0 + $0x99] sm:$0xff]
  %v61 = vld [vmem:[%s0 + $0xa9] sm:$0xff]
  %v62 = vld [vmem:[%s0 + $0xb1] sm:$0xff]
  %v63 = vld [vmem:[%s0 + $0xc1] sm:$0xff]
  %v64 = vld [vmem:[%s0 + $0xc9] sm:$0xff]
  %v65 = vld [vmem:[%s0 + $0xd9] sm:$0xff]
  %v66 = vld [vmem:[%s0 + $0xe1] sm:$0xff]
  %v67 = vld [vmem:[%s0 + $0xf1] sm:$0xff]
  %v68 = vld [vmem:[%s0 + $0xf9] sm:$0xff]
  %v69 = vld [vmem:[%s0 + $0x109] sm:$0xff]
  %v70 = vld [vmem:[%s0 + $0x111] sm:$0xff]
  %v71 = vld [vmem:[%s0 + $0x121] sm:$0xff]
  %v72 = vld [vmem:[%s0 + $0x129] sm:$0xff]
  %v73 = vld [vmem:[%s0 + $0x139] sm:$0xff]
  %v74 = vld [vmem:[%s0 + $0x141] sm:$0xff]
  %v75 = vld [vmem:[%s0 + $0x151] sm:$0xff]
  %v76 = vld [vmem:[%s0 + $0x159] sm:$0xff]
  %v77 = vld [vmem:[%s0 + $0x169] sm:$0xff]
  %v78 = vld [vmem:[%s0 + $0x171] sm:$0xff]
  %v79 = vld [vmem:[%s0 + $0x2] sm:$0xff]
  %v80 = vld [vmem:[%s0 + $0xa] sm:$0xff]
  %v81 = vld [vmem:[%s0 + $0x1a] sm:$0xff]
  %v82 = vld [vmem:[%s0 + $0x22] sm:$0xff]
  %v83 = vld [vmem:[%s0 + $0x32] sm:$0xff]
  %v84 = vld [vmem:[%s0 + $0x3a] sm:$0xff]
  %v85 = vld [vmem:[%s0 + $0x4a] sm:$0xff]
  %v86 = vld [vmem:[%s0 + $0x52] sm:$0xff]
  %v87 = vld [vmem:[%s0 + $0x62] sm:$0xff]
  %v88 = vld [vmem:[%s0 + $0x6a] sm:$0xff]
  %v89 = vld [vmem:[%s0 + $0x7a] sm:$0xff]
  %v90 = vld [vmem:[%s0 + $0x82] sm:$0xff]
  %v91 = vld [vmem:[%s0 + $0x92] sm:$0xff]
  %v92 = vld [vmem:[%s0 + $0x9a] sm:$0xff]
  %v93 = vld [vmem:[%s0 + $0xaa] sm:$0xff]
  %v94 = vld [vmem:[%s0 + $0xb2] sm:$0xff]
  %v95 = vld [vmem:[%s0 + $0xc2] sm:$0xff]
  %v96 = vld [vmem:[%s0 + $0xca] sm:$0xff]
  %v97 = vld [vmem:[%s0 + $0xda] sm:$0xff]
  %v98 = vld [vmem:[%s0 + $0xe2] sm:$0xff]
  %v99 = vld [vmem:[%s0 + $0xf2] sm:$0xff]
  %v100 = vld [vmem:[%s0 + $0xfa] sm:$0xff]
  %v101 = vld [vmem:[%s0 + $0x10a] sm:$0xff]
  %v102 = vld [vmem:[%s0 + $0x112] sm:$0xff]
  %v103 = vld [vmem:[%s0 + $0x122] sm:$0xff]
  %v104 = vld [vmem:[%s0 + $0x12a] sm:$0xff]
  %v105 = vld [vmem:[%s0 + $0x13a] sm:$0xff]
  %v106 = vld [vmem:[%s0 + $0x142] sm:$0xff]
  %v107 = vld [vmem:[%s0 + $0x152] sm:$0xff]
  %v108 = vld [vmem:[%s0 + $0x15a] sm:$0xff]
  %v109 = vld [vmem:[%s0 + $0x16a] sm:$0xff]
  %v110 = vld [vmem:[%s0 + $0x172] sm:$0xff]
  %143 = vrot.lane.b32.xlu0 %v47, 64
  %v144 = vpop.permute.xlu0 %143
  %145 = vrot.lane.b32.xlu0 %v48, 64
  %v146 = vpop.permute.xlu0 %145
  %147 = vrot.lane.b32.xlu0 %v49, 64
  %v148 = vpop.permute.xlu0 %147
  %149 = vrot.lane.b32.xlu0 %v50, 64
  %v150 = vpop.permute.xlu0 %149
  %151 = vrot.lane.b32.xlu0 %v51, 64
  %v152 = vpop.permute.xlu0 %151
  %153 = vrot.lane.b32.xlu0 %v52, 64
  %v154 = vpop.permute.xlu0 %153
  %155 = vrot.lane.b32.xlu0 %v53, 64
  %v156 = vpop.permute.xlu0 %155
  %157 = vrot.lane.b32.xlu0 %v54, 64
  %v158 = vpop.permute.xlu0 %157
  %159 = vrot.lane.b32.xlu0 %v55, 64
  %v160 = vpop.permute.xlu0 %159
  %161 = vrot.lane.b32.xlu0 %v56, 64
  %v162 = vpop.permute.xlu0 %161
  %163 = vrot.lane.b32.xlu0 %v57, 64
  %v164 = vpop.permute.xlu0 %163
  %165 = vrot.lane.b32.xlu0 %v58, 64
  %v166 = vpop.permute.xlu0 %165
  %167 = vrot.lane.b32.xlu0 %v59, 64
  %v168 = vpop.permute.xlu0 %167
  %169 = vrot.lane.b32.xlu0 %v60, 64
  %v170 = vpop.permute.xlu0 %169
  %171 = vrot.lane.b32.xlu0 %v61, 64
  %v172 = vpop.permute.xlu0 %171
  %173 = vrot.lane.b32.xlu0 %v62, 64
  %v174 = vpop.permute.xlu0 %173
  %175 = vrot.lane.b32.xlu0 %v63, 64
  %v176 = vpop.permute.xlu0 %175
  %177 = vrot.lane.b32.xlu0 %v64, 64
  %v178 = vpop.permute.xlu0 %177
  %179 = vrot.lane.b32.xlu0 %v65, 64
  %v180 = vpop.permute.xlu0 %179
  %181 = vrot.lane.b32.xlu0 %v66, 64
  %v182 = vpop.permute.xlu0 %181
  %183 = vrot.lane.b32.xlu0 %v67, 64
  %v184 = vpop.permute.xlu0 %183
  %185 = vrot.lane.b32.xlu0 %v68, 64
  %v186 = vpop.permute.xlu0 %185
  %187 = vrot.lane.b32.xlu0 %v69, 64
  %v188 = vpop.permute.xlu0 %187
  %189 = vrot.lane.b32.xlu0 %v70, 64
  %v190 = vpop.permute.xlu0 %189
  %191 = vrot.lane.b32.xlu0 %v71, 64
  %v192 = vpop.permute.xlu0 %191
  %193 = vrot.lane.b32.xlu0 %v72, 64
  %v194 = vpop.permute.xlu0 %193
  %195 = vrot.lane.b32.xlu0 %v73, 64
  %v196 = vpop.permute.xlu0 %195
  %197 = vrot.lane.b32.xlu0 %v74, 64
  %v198 = vpop.permute.xlu0 %197
  %199 = vrot.lane.b32.xlu0 %v75, 64
  %v200 = vpop.permute.xlu0 %199
  %201 = vrot.lane.b32.xlu0 %v76, 64
  %v202 = vpop.permute.xlu0 %201
  %203 = vrot.lane.b32.xlu0 %v77, 64
  %v204 = vpop.permute.xlu0 %203
  %205 = vrot.lane.b32.xlu0 %v78, 64
  %v206 = vpop.permute.xlu0 %205
  %vm239 = vcmask 523264
  %v240 = vsel %vm239, %v15, %v144
  %v241 = vsel %vm239, %v16, %v146
  %v242 = vsel %vm239, %v17, %v148
  %v243 = vsel %vm239, %v18, %v150
  %v244 = vsel %vm239, %v19, %v152
  %v245 = vsel %vm239, %v20, %v154
  %v246 = vsel %vm239, %v21, %v156
  %v247 = vsel %vm239, %v22, %v158
  %v248 = vsel %vm239, %v23, %v160
  %v249 = vsel %vm239, %v24, %v162
  %v250 = vsel %vm239, %v25, %v164
  %v251 = vsel %vm239, %v26, %v166
  %v252 = vsel %vm239, %v27, %v168
  %v253 = vsel %vm239, %v28, %v170
  %v254 = vsel %vm239, %v29, %v172
  %v255 = vsel %vm239, %v30, %v174
  %v256 = vsel %vm239, %v31, %v176
  %v257 = vsel %vm239, %v32, %v178
  %v258 = vsel %vm239, %v33, %v180
  %v259 = vsel %vm239, %v34, %v182
  %v260 = vsel %vm239, %v35, %v184
  %v261 = vsel %vm239, %v36, %v186
  %v262 = vsel %vm239, %v37, %v188
  %v263 = vsel %vm239, %v38, %v190
  %v264 = vsel %vm239, %v39, %v192
  %v265 = vsel %vm239, %v40, %v194
  %v266 = vsel %vm239, %v41, %v196
  %v267 = vsel %vm239, %v42, %v198
  %v268 = vsel %vm239, %v43, %v200
  %v269 = vsel %vm239, %v44, %v202
  %v270 = vsel %vm239, %v45, %v204
  %v271 = vsel %vm239, %v46, %v206
  %v272 = vpack.c.bf16 %v241, %v240
  %v273 = vpack.c.bf16 %v80, %v79
  %v274 = vpack.c.bf16 %v243, %v242
  %v275 = vpack.c.bf16 %v82, %v81
  %v276 = vpack.c.bf16 %v245, %v244
  %v277 = vpack.c.bf16 %v84, %v83
  %v278 = vpack.c.bf16 %v247, %v246
  %v279 = vpack.c.bf16 %v86, %v85
  %v280 = vpack.c.bf16 %v249, %v248
  %v281 = vpack.c.bf16 %v88, %v87
  %v282 = vpack.c.bf16 %v251, %v250
  %v283 = vpack.c.bf16 %v90, %v89
  %v284 = vpack.c.bf16 %v253, %v252
  %v285 = vpack.c.bf16 %v92, %v91
  %v286 = vpack.c.bf16 %v255, %v254
  %v287 = vpack.c.bf16 %v94, %v93
  %v288 = vpack.c.bf16 %v257, %v256
  %v289 = vpack.c.bf16 %v96, %v95
  %v290 = vpack.c.bf16 %v259, %v258
  %v291 = vpack.c.bf16 %v98, %v97
  %v292 = vpack.c.bf16 %v261, %v260
  %v293 = vpack.c.bf16 %v100, %v99
  %v294 = vpack.c.bf16 %v263, %v262
  %v295 = vpack.c.bf16 %v102, %v101
  %v296 = vpack.c.bf16 %v265, %v264
  %v297 = vpack.c.bf16 %v104, %v103
  %v298 = vpack.c.bf16 %v267, %v266
  %v299 = vpack.c.bf16 %v106, %v105
  %v300 = vpack.c.bf16 %v269, %v268
  %v301 = vpack.c.bf16 %v108, %v107
  %v302 = vpack.c.bf16 %v271, %v270
  %v303 = vpack.c.bf16 %v110, %v109
  %v304 = vld [vmem:[%s1] sm:$0xff]
  %v305 = vld [vmem:[%s1 + $0x8] sm:$0xff]
  %v306 = vld [vmem:[%s1 + $0x10] sm:$0xff]
  %v307 = vld [vmem:[%s1 + $0x18] sm:$0xff]
  %v308 = vld [vmem:[%s1 + $0x20] sm:$0xff]
  %v309 = vld [vmem:[%s1 + $0x28] sm:$0xff]
  %v310 = vld [vmem:[%s1 + $0x30] sm:$0xff]
  %v311 = vld [vmem:[%s1 + $0x38] sm:$0xff]
  %v312 = vld [vmem:[%s1 + $0x40] sm:$0xff]
  %v313 = vld [vmem:[%s1 + $0x48] sm:$0xff]
  %v314 = vld [vmem:[%s1 + $0x50] sm:$0xff]
  %v315 = vld [vmem:[%s1 + $0x58] sm:$0xff]
  %v316 = vld [vmem:[%s1 + $0x60] sm:$0xff]
  %v317 = vld [vmem:[%s1 + $0x68] sm:$0xff]
  %v318 = vld [vmem:[%s1 + $0x70] sm:$0xff]
  %v319 = vld [vmem:[%s1 + $0x78] sm:$0xff]
  %v320 = vld [vmem:[%s1 + $0x80] sm:$0xff]
  %v321 = vld [vmem:[%s1 + $0x88] sm:$0xff]
  %v322 = vld [vmem:[%s1 + $0x90] sm:$0xff]
  %v323 = vld [vmem:[%s1 + $0x98] sm:$0xff]
  %v324 = vld [vmem:[%s1 + $0xa0] sm:$0xff]
  %v325 = vld [vmem:[%s1 + $0xa8] sm:$0xff]
  %v326 = vld [vmem:[%s1 + $0xb0] sm:$0xff]
  %v327 = vld [vmem:[%s1 + $0xb8] sm:$0xff]
  %v328 = vld [vmem:[%s1 + $0xc0] sm:$0xff]
  %v329 = vld [vmem:[%s1 + $0xc8] sm:$0xff]
  %v330 = vld [vmem:[%s1 + $0xd0] sm:$0xff]
  %v331 = vld [vmem:[%s1 + $0xd8] sm:$0xff]
  %v332 = vld [vmem:[%s1 + $0xe0] sm:$0xff]
  %v333 = vld [vmem:[%s1 + $0xe8] sm:$0xff]
  %v334 = vld [vmem:[%s1 + $0xf0] sm:$0xff]
  %v335 = vld [vmem:[%s1 + $0xf8] sm:$0xff]
  %v336 = vld [vmem:[%s1 + $0x100] sm:$0xff]
  %v337 = vld [vmem:[%s1 + $0x108] sm:$0xff]
  %v338 = vld [vmem:[%s1 + $0x110] sm:$0xff]
  %v339 = vld [vmem:[%s1 + $0x118] sm:$0xff]
  %v340 = vld [vmem:[%s1 + $0x120] sm:$0xff]
  %v341 = vld [vmem:[%s1 + $0x128] sm:$0xff]
  %v342 = vld [vmem:[%s1 + $0x130] sm:$0xff]
  %v343 = vld [vmem:[%s1 + $0x138] sm:$0xff]
  %v344 = vld [vmem:[%s1 + $0x140] sm:$0xff]
  %v345 = vld [vmem:[%s1 + $0x148] sm:$0xff]
  %v346 = vld [vmem:[%s1 + $0x150] sm:$0xff]
  %v347 = vld [vmem:[%s1 + $0x158] sm:$0xff]
  %v348 = vld [vmem:[%s1 + $0x160] sm:$0xff]
  %v349 = vld [vmem:[%s1 + $0x168] sm:$0xff]
  %v350 = vld [vmem:[%s1 + $0x170] sm:$0xff]
  %v351 = vld [vmem:[%s1 + $0x178] sm:$0xff]
  %v352 = vld [vmem:[%s2] sm:$0xf]
  %v354 = vlaneseq
  %v355 = vshrl.u32 %v354, 7
  %v356 = vsub.s32 0, %v355
  %v357 = vrot.slane %v352, %v356
  %v358 = vlaneseq
  %v359 = vshrl.u32 %v358, 7
  %v360 = vsub.s32 1, %v359
  %v361 = vrot.slane %v352, %v360
  %v362 = vlaneseq
  %v363 = vshrl.u32 %v362, 7
  %v364 = vsub.s32 2, %v363
  %v365 = vrot.slane %v352, %v364
  %v366 = vlaneseq
  %v367 = vshrl.u32 %v366, 7
  %v368 = vsub.s32 3, %v367
  %v369 = vrot.slane %v352, %v368
  %v422 = vunpack.c.l.b16 %v304
  %v423 = vunpack.c.h.b16 %v304
  %v424 = vunpack.c.l.b16 %v305
  %v425 = vunpack.c.h.b16 %v305
  %v426 = vunpack.c.l.b16 %v306
  %v427 = vunpack.c.h.b16 %v306
  %v428 = vunpack.c.l.b16 %v307
  %v429 = vunpack.c.h.b16 %v307
  %v430 = vunpack.c.l.b16 %v308
  %v431 = vunpack.c.h.b16 %v308
  %v432 = vunpack.c.l.b16 %v309
  %v433 = vunpack.c.h.b16 %v309
  %v434 = vunpack.c.l.b16 %v310
  %v435 = vunpack.c.h.b16 %v310
  %v436 = vunpack.c.l.b16 %v311
  %v437 = vunpack.c.h.b16 %v311
  %v438 = vunpack.c.l.b16 %v312
  %v439 = vunpack.c.h.b16 %v312
  %v440 = vunpack.c.l.b16 %v313
  %v441 = vunpack.c.h.b16 %v313
  %v442 = vunpack.c.l.b16 %v314
  %v443 = vunpack.c.h.b16 %v314
  %v444 = vunpack.c.l.b16 %v315
  %v445 = vunpack.c.h.b16 %v315
  %v446 = vunpack.c.l.b16 %v316
  %v447 = vunpack.c.h.b16 %v316
  %v448 = vunpack.c.l.b16 %v317
  %v449 = vunpack.c.h.b16 %v317
  %v450 = vunpack.c.l.b16 %v318
  %v451 = vunpack.c.h.b16 %v318
  %v452 = vunpack.c.l.b16 %v319
  %v453 = vunpack.c.h.b16 %v319
  %v454 = vunpack.c.l.b16 %v320
  %v455 = vunpack.c.h.b16 %v320
  %v456 = vunpack.c.l.b16 %v321
  %v457 = vunpack.c.h.b16 %v321
  %v458 = vunpack.c.l.b16 %v322
  %v459 = vunpack.c.h.b16 %v322
  %v460 = vunpack.c.l.b16 %v323
  %v461 = vunpack.c.h.b16 %v323
  %v462 = vunpack.c.l.b16 %v324
  %v463 = vunpack.c.h.b16 %v324
  %v464 = vunpack.c.l.b16 %v325
  %v465 = vunpack.c.h.b16 %v325
  %v466 = vunpack.c.l.b16 %v326
  %v467 = vunpack.c.h.b16 %v326
  %v468 = vunpack.c.l.b16 %v327
  %v469 = vunpack.c.h.b16 %v327
  %v470 = vunpack.c.l.b16 %v328
  %v471 = vunpack.c.h.b16 %v328
  %v472 = vunpack.c.l.b16 %v329
  %v473 = vunpack.c.h.b16 %v329
  %v474 = vunpack.c.l.b16 %v330
  %v475 = vunpack.c.h.b16 %v330
  %v476 = vunpack.c.l.b16 %v331
  %v477 = vunpack.c.h.b16 %v331
  %v478 = vunpack.c.l.b16 %v332
  %v479 = vunpack.c.h.b16 %v332
  %v480 = vunpack.c.l.b16 %v333
  %v481 = vunpack.c.h.b16 %v333
  %v482 = vunpack.c.l.b16 %v334
  %v483 = vunpack.c.h.b16 %v334
  %v484 = vunpack.c.l.b16 %v335
  %v485 = vunpack.c.h.b16 %v335
  %v486 = vunpack.c.l.b16 %v336
  %v487 = vunpack.c.h.b16 %v336
  %v488 = vunpack.c.l.b16 %v337
  %v489 = vunpack.c.h.b16 %v337
  %v490 = vunpack.c.l.b16 %v338
  %v491 = vunpack.c.h.b16 %v338
  %v492 = vunpack.c.l.b16 %v339
  %v493 = vunpack.c.h.b16 %v339
  %v494 = vunpack.c.l.b16 %v340
  %v495 = vunpack.c.h.b16 %v340
  %v496 = vunpack.c.l.b16 %v341
  %v497 = vunpack.c.h.b16 %v341
  %v498 = vunpack.c.l.b16 %v342
  %v499 = vunpack.c.h.b16 %v342
  %v500 = vunpack.c.l.b16 %v343
  %v501 = vunpack.c.h.b16 %v343
  %v502 = vunpack.c.l.b16 %v344
  %v503 = vunpack.c.h.b16 %v344
  %v504 = vunpack.c.l.b16 %v345
  %v505 = vunpack.c.h.b16 %v345
  %v506 = vunpack.c.l.b16 %v346
  %v507 = vunpack.c.h.b16 %v346
  %v508 = vunpack.c.l.b16 %v347
  %v509 = vunpack.c.h.b16 %v347
  %v510 = vunpack.c.l.b16 %v348
  %v511 = vunpack.c.h.b16 %v348
  %v512 = vunpack.c.l.b16 %v349
  %v513 = vunpack.c.h.b16 %v349
  %v514 = vunpack.c.l.b16 %v350
  %v515 = vunpack.c.h.b16 %v350
  %v516 = vunpack.c.l.b16 %v351
  %v517 = vunpack.c.h.b16 %v351
  %v518 = vpack.c.b16 %v426, %v422
  %v519 = vpack.c.b16 %v427, %v423
  %v520 = vpack.c.b16 %v428, %v424
  %v521 = vpack.c.b16 %v429, %v425
  %v522 = vpack.c.b16 %v434, %v430
  %v523 = vpack.c.b16 %v435, %v431
  %v524 = vpack.c.b16 %v436, %v432
  %v525 = vpack.c.b16 %v437, %v433
  %v526 = vpack.c.b16 %v442, %v438
  %v527 = vpack.c.b16 %v443, %v439
  %v528 = vpack.c.b16 %v444, %v440
  %v529 = vpack.c.b16 %v445, %v441
  %v530 = vpack.c.b16 %v450, %v446
  %v531 = vpack.c.b16 %v451, %v447
  %v532 = vpack.c.b16 %v452, %v448
  %v533 = vpack.c.b16 %v453, %v449
  %v534 = vpack.c.b16 %v458, %v454
  %v535 = vpack.c.b16 %v459, %v455
  %v536 = vpack.c.b16 %v460, %v456
  %v537 = vpack.c.b16 %v461, %v457
  %v538 = vpack.c.b16 %v466, %v462
  %v539 = vpack.c.b16 %v467, %v463
  %v540 = vpack.c.b16 %v468, %v464
  %v541 = vpack.c.b16 %v469, %v465
  %v542 = vpack.c.b16 %v474, %v470
  %v543 = vpack.c.b16 %v475, %v471
  %v544 = vpack.c.b16 %v476, %v472
  %v545 = vpack.c.b16 %v477, %v473
  %v546 = vpack.c.b16 %v482, %v478
  %v547 = vpack.c.b16 %v483, %v479
  %v548 = vpack.c.b16 %v484, %v480
  %v549 = vpack.c.b16 %v485, %v481
  %v550 = vpack.c.b16 %v490, %v486
  %v551 = vpack.c.b16 %v491, %v487
  %v552 = vpack.c.b16 %v492, %v488
  %v553 = vpack.c.b16 %v493, %v489
  %v554 = vpack.c.b16 %v498, %v494
  %v555 = vpack.c.b16 %v499, %v495
  %v556 = vpack.c.b16 %v500, %v496
  %v557 = vpack.c.b16 %v501, %v497
  %v558 = vpack.c.b16 %v506, %v502
  %v559 = vpack.c.b16 %v507, %v503
  %v560 = vpack.c.b16 %v508, %v504
  %v561 = vpack.c.b16 %v509, %v505
  %v562 = vpack.c.b16 %v514, %v510
  %v563 = vpack.c.b16 %v515, %v511
  %v564 = vpack.c.b16 %v516, %v512
  %v565 = vpack.c.b16 %v517, %v513
  %v615 = vsel %vm239, %v273, 0
  %v618 = vsel %vm239, %v275, 0
  %v621 = vsel %vm239, %v277, 0
  %v624 = vsel %vm239, %v279, 0
  %v627 = vsel %vm239, %v281, 0
  %v630 = vsel %vm239, %v283, 0
  %v633 = vsel %vm239, %v285, 0
  %v636 = vsel %vm239, %v287, 0
  %v639 = vsel %vm239, %v289, 0
  %v642 = vsel %vm239, %v291, 0
  %v645 = vsel %vm239, %v293, 0
  %v648 = vsel %vm239, %v295, 0
  %v651 = vsel %vm239, %v297, 0
  %v654 = vsel %vm239, %v299, 0
  %v657 = vsel %vm239, %v301, 0
  %v660 = vsel %vm239, %v303, 0
  %662 = vmatprep.subr.bf16.mxu0 %v547
  %663 = vmatpush1.bf16.msra.mxu0 %v546
  %664 = vmatprep.subr.bf16.mxu0 %v543
  %665 = vmatpush1.bf16.msra.mxu0 %v542
  %666 = vmatprep.subr.bf16.mxu0 %v539
  %667 = vmatpush1.bf16.msra.mxu0 %v538
  %668 = vmatprep.subr.bf16.mxu0 %v535
  %669 = vmatpush1.bf16.msra.mxu0 %v534
  %670 = vmatprep.subr.bf16.mxu0 %v531
  %671 = vmatpush1.bf16.msra.mxu0 %v530
  %672 = vmatprep.subr.bf16.mxu0 %v527
  %673 = vmatpush1.bf16.msra.mxu0 %v526
  %674 = vmatprep.subr.bf16.mxu0 %v523
  %675 = vmatpush1.bf16.msra.mxu0 %v522
  %676 = vmatprep.subr.bf16.mxu0 %v519
  %677 = vmatpush1.bf16.msra.mxu0 %v518
  %678 = vmatprep.subr.bf16.mxu0 0
  %679 = vmatpush2.bf16.msra.mxu0 0
  %680 = vmatprep.subr.bf16.mxu0 0
  %681 = vmatpush2.bf16.msra.mxu0 0
  %682 = vmatprep.subr.bf16.mxu0 0
  %683 = vmatpush2.bf16.msra.mxu0 0
  %684 = vmatprep.subr.bf16.mxu0 0
  %685 = vmatpush2.bf16.msra.mxu0 0
  %686 = vmatprep.subr.bf16.mxu0 %v563
  %687 = vmatpush2.bf16.msra.mxu0 %v562
  %688 = vmatprep.subr.bf16.mxu0 %v559
  %689 = vmatpush2.bf16.msra.mxu0 %v558
  %690 = vmatprep.subr.bf16.mxu0 %v555
  %691 = vmatpush2.bf16.msra.mxu0 %v554
  %692 = vmatprep.subr.bf16.mxu0 %v551
  %693 = vmatpush2.bf16.msra.mxu0 %v550
  %694 = vmatprep.mubr.bf16.mxu0 %v615
  %695 = vmatmul.mubr.bf16.gmra.mxu0 %v272
  %v696 = vpop.f32.mrf.mxu0
  %v697 = vadd.f32 %v357, %v696
  %v698 = vpop.f32.mrf.mxu0
  %v699 = vadd.f32 %v361, %v698
  %v700 = vpop.f32.mrf.mxu0
  %v701 = vadd.f32 %v357, %v700
  %v702 = vpop.f32.mrf.mxu0
  %v703 = vadd.f32 %v361, %v702
  %704 = vmatprep.mubr.bf16.mxu0 %v618
  %705 = vmatmul.mubr.bf16.gmra.mxu0 %v274
  %v706 = vpop.f32.mrf.mxu0
  %v707 = vadd.f32 %v357, %v706
  %v708 = vpop.f32.mrf.mxu0
  %v709 = vadd.f32 %v361, %v708
  %v710 = vpop.f32.mrf.mxu0
  %v711 = vadd.f32 %v357, %v710
  %v712 = vpop.f32.mrf.mxu0
  %v713 = vadd.f32 %v361, %v712
  %714 = vmatprep.mubr.bf16.mxu0 %v621
  %715 = vmatmul.mubr.bf16.gmra.mxu0 %v276
  %v716 = vpop.f32.mrf.mxu0
  %v717 = vadd.f32 %v357, %v716
  %v718 = vpop.f32.mrf.mxu0
  %v719 = vadd.f32 %v361, %v718
  %v720 = vpop.f32.mrf.mxu0
  %v721 = vadd.f32 %v357, %v720
  %v722 = vpop.f32.mrf.mxu0
  %v723 = vadd.f32 %v361, %v722
  %724 = vmatprep.mubr.bf16.mxu0 %v624
  %725 = vmatmul.mubr.bf16.gmra.mxu0 %v278
  %v726 = vpop.f32.mrf.mxu0
  %v727 = vadd.f32 %v357, %v726
  %v728 = vpop.f32.mrf.mxu0
  %v729 = vadd.f32 %v361, %v728
  %v730 = vpop.f32.mrf.mxu0
  %v731 = vadd.f32 %v357, %v730
  %v732 = vpop.f32.mrf.mxu0
  %v733 = vadd.f32 %v361, %v732
  %734 = vmatprep.mubr.bf16.mxu0 %v627
  %735 = vmatmul.mubr.bf16.gmra.mxu0 %v280
  %v736 = vpop.f32.mrf.mxu0
  %v737 = vadd.f32 %v357, %v736
  %v738 = vpop.f32.mrf.mxu0
  %v739 = vadd.f32 %v361, %v738
  %v740 = vpop.f32.mrf.mxu0
  %v741 = vadd.f32 %v357, %v740
  %v742 = vpop.f32.mrf.mxu0
  %v743 = vadd.f32 %v361, %v742
  %744 = vmatprep.mubr.bf16.mxu0 %v630
  %745 = vmatmul.mubr.bf16.gmra.mxu0 %v282
  %v746 = vpop.f32.mrf.mxu0
  %v747 = vadd.f32 %v357, %v746
  %v748 = vpop.f32.mrf.mxu0
  %v749 = vadd.f32 %v361, %v748
  %v750 = vpop.f32.mrf.mxu0
  %v751 = vadd.f32 %v357, %v750
  %v752 = vpop.f32.mrf.mxu0
  %v753 = vadd.f32 %v361, %v752
  %754 = vmatprep.mubr.bf16.mxu0 %v633
  %755 = vmatmul.mubr.bf16.gmra.mxu0 %v284
  %v756 = vpop.f32.mrf.mxu0
  %v757 = vadd.f32 %v357, %v756
  %v758 = vpop.f32.mrf.mxu0
  %v759 = vadd.f32 %v361, %v758
  %v760 = vpop.f32.mrf.mxu0
  %v761 = vadd.f32 %v357, %v760
  %v762 = vpop.f32.mrf.mxu0
  %v763 = vadd.f32 %v361, %v762
  %764 = vmatprep.mubr.bf16.mxu0 %v636
  %765 = vmatmul.mubr.bf16.gmra.mxu0 %v286
  %v766 = vpop.f32.mrf.mxu0
  %v767 = vadd.f32 %v357, %v766
  %v768 = vpop.f32.mrf.mxu0
  %v769 = vadd.f32 %v361, %v768
  %v770 = vpop.f32.mrf.mxu0
  %v771 = vadd.f32 %v357, %v770
  %v772 = vpop.f32.mrf.mxu0
  %v773 = vadd.f32 %v361, %v772
  %774 = vmatprep.mubr.bf16.mxu0 %v639
  %775 = vmatmul.mubr.bf16.gmra.mxu0 %v288
  %v776 = vpop.f32.mrf.mxu0
  %v777 = vadd.f32 %v357, %v776
  %v778 = vpop.f32.mrf.mxu0
  %v779 = vadd.f32 %v361, %v778
  %v780 = vpop.f32.mrf.mxu0
  %v781 = vadd.f32 %v357, %v780
  %v782 = vpop.f32.mrf.mxu0
  %v783 = vadd.f32 %v361, %v782
  %784 = vmatprep.mubr.bf16.mxu0 %v642
  %785 = vmatmul.mubr.bf16.gmra.mxu0 %v290
  %v786 = vpop.f32.mrf.mxu0
  %v787 = vadd.f32 %v357, %v786
  %v788 = vpop.f32.mrf.mxu0
  %v789 = vadd.f32 %v361, %v788
  %v790 = vpop.f32.mrf.mxu0
  %v791 = vadd.f32 %v357, %v790
  %v792 = vpop.f32.mrf.mxu0
  %v793 = vadd.f32 %v361, %v792
  %794 = vmatprep.mubr.bf16.mxu0 %v645
  %795 = vmatmul.mubr.bf16.gmra.mxu0 %v292
  %v796 = vpop.f32.mrf.mxu0
  %v797 = vadd.f32 %v357, %v796
  %v798 = vpop.f32.mrf.mxu0
  %v799 = vadd.f32 %v361, %v798
  %v800 = vpop.f32.mrf.mxu0
  %v801 = vadd.f32 %v357, %v800
  %v802 = vpop.f32.mrf.mxu0
  %v803 = vadd.f32 %v361, %v802
  %804 = vmatprep.mubr.bf16.mxu0 %v648
  %805 = vmatmul.mubr.bf16.gmra.mxu0 %v294
  %v806 = vpop.f32.mrf.mxu0
  %v807 = vadd.f32 %v357, %v806
  %v808 = vpop.f32.mrf.mxu0
  %v809 = vadd.f32 %v361, %v808
  %v810 = vpop.f32.mrf.mxu0
  %v811 = vadd.f32 %v357, %v810
  %v812 = vpop.f32.mrf.mxu0
  %v813 = vadd.f32 %v361, %v812
  %814 = vmatprep.mubr.bf16.mxu0 %v651
  %815 = vmatmul.mubr.bf16.gmra.mxu0 %v296
  %v816 = vpop.f32.mrf.mxu0
  %v817 = vadd.f32 %v357, %v816
  %v818 = vpop.f32.mrf.mxu0
  %v819 = vadd.f32 %v361, %v818
  %v820 = vpop.f32.mrf.mxu0
  %v821 = vadd.f32 %v357, %v820
  %v822 = vpop.f32.mrf.mxu0
  %v823 = vadd.f32 %v361, %v822
  %824 = vmatprep.mubr.bf16.mxu0 %v654
  %825 = vmatmul.mubr.bf16.gmra.mxu0 %v298
  %v826 = vpop.f32.mrf.mxu0
  %v827 = vadd.f32 %v357, %v826
  %v828 = vpop.f32.mrf.mxu0
  %v829 = vadd.f32 %v361, %v828
  %v830 = vpop.f32.mrf.mxu0
  %v831 = vadd.f32 %v357, %v830
  %v832 = vpop.f32.mrf.mxu0
  %v833 = vadd.f32 %v361, %v832
  %834 = vmatprep.mubr.bf16.mxu0 %v657
  %835 = vmatmul.mubr.bf16.gmra.mxu0 %v300
  %v836 = vpop.f32.mrf.mxu0
  %v837 = vadd.f32 %v357, %v836
  %v838 = vpop.f32.mrf.mxu0
  %v839 = vadd.f32 %v361, %v838
  %v840 = vpop.f32.mrf.mxu0
  %v841 = vadd.f32 %v357, %v840
  %v842 = vpop.f32.mrf.mxu0
  %v843 = vadd.f32 %v361, %v842
  %844 = vmatprep.mubr.bf16.mxu0 %v660
  %845 = vmatmul.mubr.bf16.gmra.mxu0 %v302
  %v846 = vpop.f32.mrf.mxu0
  %v847 = vadd.f32 %v357, %v846
  %v848 = vpop.f32.mrf.mxu0
  %v849 = vadd.f32 %v361, %v848
  %v850 = vpop.f32.mrf.mxu0
  %v851 = vadd.f32 %v357, %v850
  %v852 = vpop.f32.mrf.mxu0
  %v853 = vadd.f32 %v361, %v852
  %854 = vdwg.mxu0
  %855 = vmatprep.subr.bf16.mxu0 %v549
  %856 = vmatpush1.bf16.msra.mxu0 %v548
  %857 = vmatprep.subr.bf16.mxu0 %v545
  %858 = vmatpush1.bf16.msra.mxu0 %v544
  %859 = vmatprep.subr.bf16.mxu0 %v541
  %860 = vmatpush1.bf16.msra.mxu0 %v540
  %861 = vmatprep.subr.bf16.mxu0 %v537
  %862 = vmatpush1.bf16.msra.mxu0 %v536
  %863 = vmatprep.subr.bf16.mxu0 %v533
  %864 = vmatpush1.bf16.msra.mxu0 %v532
  %865 = vmatprep.subr.bf16.mxu0 %v529
  %866 = vmatpush1.bf16.msra.mxu0 %v528
  %867 = vmatprep.subr.bf16.mxu0 %v525
  %868 = vmatpush1.bf16.msra.mxu0 %v524
  %869 = vmatprep.subr.bf16.mxu0 %v521
  %870 = vmatpush1.bf16.msra.mxu0 %v520
  %871 = vmatprep.subr.bf16.mxu0 0
  %872 = vmatpush2.bf16.msra.mxu0 0
  %873 = vmatprep.subr.bf16.mxu0 0
  %874 = vmatpush2.bf16.msra.mxu0 0
  %875 = vmatprep.subr.bf16.mxu0 0
  %876 = vmatpush2.bf16.msra.mxu0 0
  %877 = vmatprep.subr.bf16.mxu0 0
  %878 = vmatpush2.bf16.msra.mxu0 0
  %879 = vmatprep.subr.bf16.mxu0 %v565
  %880 = vmatpush2.bf16.msra.mxu0 %v564
  %881 = vmatprep.subr.bf16.mxu0 %v561
  %882 = vmatpush2.bf16.msra.mxu0 %v560
  %883 = vmatprep.subr.bf16.mxu0 %v557
  %884 = vmatpush2.bf16.msra.mxu0 %v556
  %885 = vmatprep.subr.bf16.mxu0 %v553
  %886 = vmatpush2.bf16.msra.mxu0 %v552
  %887 = vmatprep.mubr.bf16.mxu0 %v615
  %888 = vmatmul.mubr.bf16.gmra.mxu0 %v272
  %v889 = vpop.f32.mrf.mxu0
  %v890 = vadd.f32 %v365, %v889
  %v891 = vpop.f32.mrf.mxu0
  %v892 = vadd.f32 %v369, %v891
  %v893 = vpop.f32.mrf.mxu0
  %v894 = vadd.f32 %v365, %v893
  %v895 = vpop.f32.mrf.mxu0
  %v896 = vadd.f32 %v369, %v895
  %897 = vmatprep.mubr.bf16.mxu0 %v618
  %898 = vmatmul.mubr.bf16.gmra.mxu0 %v274
  %v899 = vpop.f32.mrf.mxu0
  %v900 = vadd.f32 %v365, %v899
  %v901 = vpop.f32.mrf.mxu0
  %v902 = vadd.f32 %v369, %v901
  %v903 = vpop.f32.mrf.mxu0
  %v904 = vadd.f32 %v365, %v903
  %v905 = vpop.f32.mrf.mxu0
  %v906 = vadd.f32 %v369, %v905
  %907 = vmatprep.mubr.bf16.mxu0 %v621
  %908 = vmatmul.mubr.bf16.gmra.mxu0 %v276
  %v909 = vpop.f32.mrf.mxu0
  %v910 = vadd.f32 %v365, %v909
  %v911 = vpop.f32.mrf.mxu0
  %v912 = vadd.f32 %v369, %v911
  %v913 = vpop.f32.mrf.mxu0
  %v914 = vadd.f32 %v365, %v913
  %v915 = vpop.f32.mrf.mxu0
  %v916 = vadd.f32 %v369, %v915
  %917 = vmatprep.mubr.bf16.mxu0 %v624
  %918 = vmatmul.mubr.bf16.gmra.mxu0 %v278
  %v919 = vpop.f32.mrf.mxu0
  %v920 = vadd.f32 %v365, %v919
  %v921 = vpop.f32.mrf.mxu0
  %v922 = vadd.f32 %v369, %v921
  %v923 = vpop.f32.mrf.mxu0
  %v924 = vadd.f32 %v365, %v923
  %v925 = vpop.f32.mrf.mxu0
  %v926 = vadd.f32 %v369, %v925
  %927 = vmatprep.mubr.bf16.mxu0 %v627
  %928 = vmatmul.mubr.bf16.gmra.mxu0 %v280
  %v929 = vpop.f32.mrf.mxu0
  %v930 = vadd.f32 %v365, %v929
  %v931 = vpop.f32.mrf.mxu0
  %v932 = vadd.f32 %v369, %v931
  %v933 = vpop.f32.mrf.mxu0
  %v934 = vadd.f32 %v365, %v933
  %v935 = vpop.f32.mrf.mxu0
  %v936 = vadd.f32 %v369, %v935
  %937 = vmatprep.mubr.bf16.mxu0 %v630
  %938 = vmatmul.mubr.bf16.gmra.mxu0 %v282
  %v939 = vpop.f32.mrf.mxu0
  %v940 = vadd.f32 %v365, %v939
  %v941 = vpop.f32.mrf.mxu0
  %v942 = vadd.f32 %v369, %v941
  %v943 = vpop.f32.mrf.mxu0
  %v944 = vadd.f32 %v365, %v943
  %v945 = vpop.f32.mrf.mxu0
  %v946 = vadd.f32 %v369, %v945
  %947 = vmatprep.mubr.bf16.mxu0 %v633
  %948 = vmatmul.mubr.bf16.gmra.mxu0 %v284
  %v949 = vpop.f32.mrf.mxu0
  %v950 = vadd.f32 %v365, %v949
  %v951 = vpop.f32.mrf.mxu0
  %v952 = vadd.f32 %v369, %v951
  %v953 = vpop.f32.mrf.mxu0
  %v954 = vadd.f32 %v365, %v953
  %v955 = vpop.f32.mrf.mxu0
  %v956 = vadd.f32 %v369, %v955
  %957 = vmatprep.mubr.bf16.mxu0 %v636
  %958 = vmatmul.mubr.bf16.gmra.mxu0 %v286
  %v959 = vpop.f32.mrf.mxu0
  %v960 = vadd.f32 %v365, %v959
  %v961 = vpop.f32.mrf.mxu0
  %v962 = vadd.f32 %v369, %v961
  %v963 = vpop.f32.mrf.mxu0
  %v964 = vadd.f32 %v365, %v963
  %v965 = vpop.f32.mrf.mxu0
  %v966 = vadd.f32 %v369, %v965
  %967 = vmatprep.mubr.bf16.mxu0 %v639
  %968 = vmatmul.mubr.bf16.gmra.mxu0 %v288
  %v969 = vpop.f32.mrf.mxu0
  %v970 = vadd.f32 %v365, %v969
  %v971 = vpop.f32.mrf.mxu0
  %v972 = vadd.f32 %v369, %v971
  %v973 = vpop.f32.mrf.mxu0
  %v974 = vadd.f32 %v365, %v973
  %v975 = vpop.f32.mrf.mxu0
  %v976 = vadd.f32 %v369, %v975
  %977 = vmatprep.mubr.bf16.mxu0 %v642
  %978 = vmatmul.mubr.bf16.gmra.mxu0 %v290
  %v979 = vpop.f32.mrf.mxu0
  %v980 = vadd.f32 %v365, %v979
  %v981 = vpop.f32.mrf.mxu0
  %v982 = vadd.f32 %v369, %v981
  %v983 = vpop.f32.mrf.mxu0
  %v984 = vadd.f32 %v365, %v983
  %v985 = vpop.f32.mrf.mxu0
  %v986 = vadd.f32 %v369, %v985
  %987 = vmatprep.mubr.bf16.mxu0 %v645
  %988 = vmatmul.mubr.bf16.gmra.mxu0 %v292
  %v989 = vpop.f32.mrf.mxu0
  %v990 = vadd.f32 %v365, %v989
  %v991 = vpop.f32.mrf.mxu0
  %v992 = vadd.f32 %v369, %v991
  %v993 = vpop.f32.mrf.mxu0
  %v994 = vadd.f32 %v365, %v993
  %v995 = vpop.f32.mrf.mxu0
  %v996 = vadd.f32 %v369, %v995
  %997 = vmatprep.mubr.bf16.mxu0 %v648
  %998 = vmatmul.mubr.bf16.gmra.mxu0 %v294
  %v999 = vpop.f32.mrf.mxu0
  %v1000 = vadd.f32 %v365, %v999
  %v1001 = vpop.f32.mrf.mxu0
  %v1002 = vadd.f32 %v369, %v1001
  %v1003 = vpop.f32.mrf.mxu0
  %v1004 = vadd.f32 %v365, %v1003
  %v1005 = vpop.f32.mrf.mxu0
  %v1006 = vadd.f32 %v369, %v1005
  %1007 = vmatprep.mubr.bf16.mxu0 %v651
  %1008 = vmatmul.mubr.bf16.gmra.mxu0 %v296
  %v1009 = vpop.f32.mrf.mxu0
  %v1010 = vadd.f32 %v365, %v1009
  %v1011 = vpop.f32.mrf.mxu0
  %v1012 = vadd.f32 %v369, %v1011
  %v1013 = vpop.f32.mrf.mxu0
  %v1014 = vadd.f32 %v365, %v1013
  %v1015 = vpop.f32.mrf.mxu0
  %v1016 = vadd.f32 %v369, %v1015
  %1017 = vmatprep.mubr.bf16.mxu0 %v654
  %1018 = vmatmul.mubr.bf16.gmra.mxu0 %v298
  %v1019 = vpop.f32.mrf.mxu0
  %v1020 = vadd.f32 %v365, %v1019
  %v1021 = vpop.f32.mrf.mxu0
  %v1022 = vadd.f32 %v369, %v1021
  %v1023 = vpop.f32.mrf.mxu0
  %v1024 = vadd.f32 %v365, %v1023
  %v1025 = vpop.f32.mrf.mxu0
  %v1026 = vadd.f32 %v369, %v1025
  %1027 = vmatprep.mubr.bf16.mxu0 %v657
  %1028 = vmatmul.mubr.bf16.gmra.mxu0 %v300
  %v1029 = vpop.f32.mrf.mxu0
  %v1030 = vadd.f32 %v365, %v1029
  %v1031 = vpop.f32.mrf.mxu0
  %v1032 = vadd.f32 %v369, %v1031
  %v1033 = vpop.f32.mrf.mxu0
  %v1034 = vadd.f32 %v365, %v1033
  %v1035 = vpop.f32.mrf.mxu0
  %v1036 = vadd.f32 %v369, %v1035
  %1037 = vmatprep.mubr.bf16.mxu0 %v660
  %1038 = vmatmul.mubr.bf16.gmra.mxu0 %v302
  %v1039 = vpop.f32.mrf.mxu0
  %v1040 = vadd.f32 %v365, %v1039
  %v1041 = vpop.f32.mrf.mxu0
  %v1042 = vadd.f32 %v369, %v1041
  %v1043 = vpop.f32.mrf.mxu0
  %v1044 = vadd.f32 %v365, %v1043
  %v1045 = vpop.f32.mrf.mxu0
  %v1046 = vadd.f32 %v369, %v1045
  %1047 = vdwg.mxu0
  %1048 = vst [vmem:[%s3] sm:$0xff] %v697
  %1049 = vst [vmem:[%s3 + $0x8] sm:$0xff] %v699
  %1050 = vst [vmem:[%s3 + $0x10] sm:$0xff] %v890
  %1051 = vst [vmem:[%s3 + $0x18] sm:$0xff] %v892
  %1052 = vst [vmem:[%s3 + $0x20] sm:$0xff] %v701
  %1053 = vst [vmem:[%s3 + $0x28] sm:$0xff] %v703
  %1054 = vst [vmem:[%s3 + $0x30] sm:$0xff] %v894
  %1055 = vst [vmem:[%s3 + $0x38] sm:$0xff] %v896
  %1056 = vst [vmem:[%s3 + $0x40] sm:$0xff] %v707
  %1057 = vst [vmem:[%s3 + $0x48] sm:$0xff] %v709
  %1058 = vst [vmem:[%s3 + $0x50] sm:$0xff] %v900
  %1059 = vst [vmem:[%s3 + $0x58] sm:$0xff] %v902
  %1060 = vst [vmem:[%s3 + $0x60] sm:$0xff] %v711
  %1061 = vst [vmem:[%s3 + $0x68] sm:$0xff] %v713
  %1062 = vst [vmem:[%s3 + $0x70] sm:$0xff] %v904
  %1063 = vst [vmem:[%s3 + $0x78] sm:$0xff] %v906
  %1064 = vst [vmem:[%s3 + $0x80] sm:$0xff] %v717
  %1065 = vst [vmem:[%s3 + $0x88] sm:$0xff] %v719
  %1066 = vst [vmem:[%s3 + $0x90] sm:$0xff] %v910
  %1067 = vst [vmem:[%s3 + $0x98] sm:$0xff] %v912
  %1068 = vst [vmem:[%s3 + $0xa0] sm:$0xff] %v721
  %1069 = vst [vmem:[%s3 + $0xa8] sm:$0xff] %v723
  %1070 = vst [vmem:[%s3 + $0xb0] sm:$0xff] %v914
  %1071 = vst [vmem:[%s3 + $0xb8] sm:$0xff] %v916
  %1072 = vst [vmem:[%s3 + $0xc0] sm:$0xff] %v727
  %1073 = vst [vmem:[%s3 + $0xc8] sm:$0xff] %v729
  %1074 = vst [vmem:[%s3 + $0xd0] sm:$0xff] %v920
  %1075 = vst [vmem:[%s3 + $0xd8] sm:$0xff] %v922
  %1076 = vst [vmem:[%s3 + $0xe0] sm:$0xff] %v731
  %1077 = vst [vmem:[%s3 + $0xe8] sm:$0xff] %v733
  %1078 = vst [vmem:[%s3 + $0xf0] sm:$0xff] %v924
  %1079 = vst [vmem:[%s3 + $0xf8] sm:$0xff] %v926
  %1080 = vst [vmem:[%s3 + $0x100] sm:$0xff] %v737
  %1081 = vst [vmem:[%s3 + $0x108] sm:$0xff] %v739
  %1082 = vst [vmem:[%s3 + $0x110] sm:$0xff] %v930
  %1083 = vst [vmem:[%s3 + $0x118] sm:$0xff] %v932
  %1084 = vst [vmem:[%s3 + $0x120] sm:$0xff] %v741
  %1085 = vst [vmem:[%s3 + $0x128] sm:$0xff] %v743
  %1086 = vst [vmem:[%s3 + $0x130] sm:$0xff] %v934
  %1087 = vst [vmem:[%s3 + $0x138] sm:$0xff] %v936
  %1088 = vst [vmem:[%s3 + $0x140] sm:$0xff] %v747
  %1089 = vst [vmem:[%s3 + $0x148] sm:$0xff] %v749
  %1090 = vst [vmem:[%s3 + $0x150] sm:$0xff] %v940
  %1091 = vst [vmem:[%s3 + $0x158] sm:$0xff] %v942
  %1092 = vst [vmem:[%s3 + $0x160] sm:$0xff] %v751
  %1093 = vst [vmem:[%s3 + $0x168] sm:$0xff] %v753
  %1094 = vst [vmem:[%s3 + $0x170] sm:$0xff] %v944
  %1095 = vst [vmem:[%s3 + $0x178] sm:$0xff] %v946
  %1096 = vst [vmem:[%s3 + $0x180] sm:$0xff] %v757
  %1097 = vst [vmem:[%s3 + $0x188] sm:$0xff] %v759
  %1098 = vst [vmem:[%s3 + $0x190] sm:$0xff] %v950
  %1099 = vst [vmem:[%s3 + $0x198] sm:$0xff] %v952
  %1100 = vst [vmem:[%s3 + $0x1a0] sm:$0xff] %v761
  %1101 = vst [vmem:[%s3 + $0x1a8] sm:$0xff] %v763
  %1102 = vst [vmem:[%s3 + $0x1b0] sm:$0xff] %v954
  %1103 = vst [vmem:[%s3 + $0x1b8] sm:$0xff] %v956
  %1104 = vst [vmem:[%s3 + $0x1c0] sm:$0xff] %v767
  %1105 = vst [vmem:[%s3 + $0x1c8] sm:$0xff] %v769
  %1106 = vst [vmem:[%s3 + $0x1d0] sm:$0xff] %v960
  %1107 = vst [vmem:[%s3 + $0x1d8] sm:$0xff] %v962
  %1108 = vst [vmem:[%s3 + $0x1e0] sm:$0xff] %v771
  %1109 = vst [vmem:[%s3 + $0x1e8] sm:$0xff] %v773
  %1110 = vst [vmem:[%s3 + $0x1f0] sm:$0xff] %v964
  %1111 = vst [vmem:[%s3 + $0x1f8] sm:$0xff] %v966
  %1112 = vst [vmem:[%s3 + $0x200] sm:$0xff] %v777
  %1113 = vst [vmem:[%s3 + $0x208] sm:$0xff] %v779
  %1114 = vst [vmem:[%s3 + $0x210] sm:$0xff] %v970
  %1115 = vst [vmem:[%s3 + $0x218] sm:$0xff] %v972
  %1116 = vst [vmem:[%s3 + $0x220] sm:$0xff] %v781
  %1117 = vst [vmem:[%s3 + $0x228] sm:$0xff] %v783
  %1118 = vst [vmem:[%s3 + $0x230] sm:$0xff] %v974
  %1119 = vst [vmem:[%s3 + $0x238] sm:$0xff] %v976
  %1120 = vst [vmem:[%s3 + $0x240] sm:$0xff] %v787
  %1121 = vst [vmem:[%s3 + $0x248] sm:$0xff] %v789
  %1122 = vst [vmem:[%s3 + $0x250] sm:$0xff] %v980
  %1123 = vst [vmem:[%s3 + $0x258] sm:$0xff] %v982
  %1124 = vst [vmem:[%s3 + $0x260] sm:$0xff] %v791
  %1125 = vst [vmem:[%s3 + $0x268] sm:$0xff] %v793
  %1126 = vst [vmem:[%s3 + $0x270] sm:$0xff] %v984
  %1127 = vst [vmem:[%s3 + $0x278] sm:$0xff] %v986
  %1128 = vst [vmem:[%s3 + $0x280] sm:$0xff] %v797
  %1129 = vst [vmem:[%s3 + $0x288] sm:$0xff] %v799
  %1130 = vst [vmem:[%s3 + $0x290] sm:$0xff] %v990
  %1131 = vst [vmem:[%s3 + $0x298] sm:$0xff] %v992
  %1132 = vst [vmem:[%s3 + $0x2a0] sm:$0xff] %v801
  %1133 = vst [vmem:[%s3 + $0x2a8] sm:$0xff] %v803
  %1134 = vst [vmem:[%s3 + $0x2b0] sm:$0xff] %v994
  %1135 = vst [vmem:[%s3 + $0x2b8] sm:$0xff] %v996
  %1136 = vst [vmem:[%s3 + $0x2c0] sm:$0xff] %v807
  %1137 = vst [vmem:[%s3 + $0x2c8] sm:$0xff] %v809
  %1138 = vst [vmem:[%s3 + $0x2d0] sm:$0xff] %v1000
  %1139 = vst [vmem:[%s3 + $0x2d8] sm:$0xff] %v1002
  %1140 = vst [vmem:[%s3 + $0x2e0] sm:$0xff] %v811
  %1141 = vst [vmem:[%s3 + $0x2e8] sm:$0xff] %v813
  %1142 = vst [vmem:[%s3 + $0x2f0] sm:$0xff] %v1004
  %1143 = vst [vmem:[%s3 + $0x2f8] sm:$0xff] %v1006
  %1144 = vst [vmem:[%s3 + $0x300] sm:$0xff] %v817
  %1145 = vst [vmem:[%s3 + $0x308] sm:$0xff] %v819
  %1146 = vst [vmem:[%s3 + $0x310] sm:$0xff] %v1010
  %1147 = vst [vmem:[%s3 + $0x318] sm:$0xff] %v1012
  %1148 = vst [vmem:[%s3 + $0x320] sm:$0xff] %v821
  %1149 = vst [vmem:[%s3 + $0x328] sm:$0xff] %v823
  %1150 = vst [vmem:[%s3 + $0x330] sm:$0xff] %v1014
  %1151 = vst [vmem:[%s3 + $0x338] sm:$0xff] %v1016
  %1152 = vst [vmem:[%s3 + $0x340] sm:$0xff] %v827
  %1153 = vst [vmem:[%s3 + $0x348] sm:$0xff] %v829
  %1154 = vst [vmem:[%s3 + $0x350] sm:$0xff] %v1020
  %1155 = vst [vmem:[%s3 + $0x358] sm:$0xff] %v1022
  %1156 = vst [vmem:[%s3 + $0x360] sm:$0xff] %v831
  %1157 = vst [vmem:[%s3 + $0x368] sm:$0xff] %v833
  %1158 = vst [vmem:[%s3 + $0x370] sm:$0xff] %v1024
  %1159 = vst [vmem:[%s3 + $0x378] sm:$0xff] %v1026
  %1160 = vst [vmem:[%s3 + $0x380] sm:$0xff] %v837
  %1161 = vst [vmem:[%s3 + $0x388] sm:$0xff] %v839
  %1162 = vst [vmem:[%s3 + $0x390] sm:$0xff] %v1030
  %1163 = vst [vmem:[%s3 + $0x398] sm:$0xff] %v1032
  %1164 = vst [vmem:[%s3 + $0x3a0] sm:$0xff] %v841
  %1165 = vst [vmem:[%s3 + $0x3a8] sm:$0xff] %v843
  %1166 = vst [vmem:[%s3 + $0x3b0] sm:$0xff] %v1034
  %1167 = vst [vmem:[%s3 + $0x3b8] sm:$0xff] %v1036
  %1168 = vst [vmem:[%s3 + $0x3c0] sm:$0xff] %v847
  %1169 = vst [vmem:[%s3 + $0x3c8] sm:$0xff] %v849
  %1170 = vst [vmem:[%s3 + $0x3d0] sm:$0xff] %v1040
  %1171 = vst [vmem:[%s3 + $0x3d8] sm:$0xff] %v1042
  %1172 = vst [vmem:[%s3 + $0x3e0] sm:$0xff] %v851
  %1173 = vst [vmem:[%s3 + $0x3e8] sm:$0xff] %v853
  %1174 = vst [vmem:[%s3 + $0x3f0] sm:$0xff] %v1044
  %1175 = vst [vmem:[%s3 + $0x3f8] sm:$0xff] %v1046
  // Predicated region
  $region14: #{_lambda_.4} parent=0 // pred_check
    _
  $region15: #{_lambda_.4} parent=0 // pred_check_branch
    %1177 = sbr.rel (0) target = $region17
  $region16: #{_lambda_.4} parent=0 // pred_region
    _
  $region17: #{_lambda_.4} parent=0 // pred_fallthru
    _
  // Predicated region
  $region18: #{_lambda_.4} parent=0 // pred_check
    _
  $region19: #{_lambda_.4} parent=0 // pred_check_branch
    %1179 = sbr.rel (0) target = $region21
  $region20: #{_lambda_.4} parent=0 // pred_region
    _
  $region21: #{_lambda_.4} parent=0 // pred_fallthru
    _

// kernel: _lambda_.5
$region0: #{_lambda_.5}
  #allocation0 [shape = 'u32[]', space=smem, size = 0x4, offset = 0x4, fixed_abs, tag = 'smem constant byte address 0x4 - core index']
  #allocation1 [shape = 'u32[144,128]{1,0:T(1,128)}', space=vmem, size = 0x12000, scoped, tag = 'internal scratch']
  #allocation2 [shape = 'f32[2,18,128]{2,1,0:T(8,128)}', space=vmem, size = 0x6000, scoped, tag = 'scratch operand']
  #allocation3 [shape = 'f32[2,18,128]{2,1,0:T(8,128)}', space=vmem, size = 0x6000, scoped, tag = 'scratch operand']
  %s0 = inlined_call_operand.vmem [shape: f32[8,2,16,512], index: 0, kind: input, shape index: {}]
  %s1 = inlined_call_operand.vmem [shape: bf16[768,512], index: 1, kind: input, shape index: {}]
  %s2 = inlined_call_operand.vmem [shape: bf16[384,128], index: 2, kind: input, shape index: {}]
  %s3 = inlined_call_operand.vmem [shape: f32[8,2,16,128], index: 3, kind: output, shape index: {0}]
  %s4 = inlined_call_operand.hbm [shape: f32[2,16,128], index: 4, kind: output, shape index: {1}]
  %s5 = inlined_call_operand.hbm [shape: f32[2,16,128], index: 5, kind: output, shape index: {2}]
  %6 = xla_tuple %s3, %s4, %s5
  %s7 = sld [smem:[#allocation0]]
  $region69: #{_lambda_.5} parent=0
    _
  %s9 = ssub.s32 1, %s7
  %s10 = scalar_select 0, %s9, %s7
  $region1: #{_lambda_.5} parent=0
    #allocation4 [shape = 'u8[16384]{0}', space=vmem, size = 0x4000, scoped, tag = 'output window, operand 1, single buffered']
    #allocation5 [shape = 's32[2]{0}', space=sflag, size = 0x8, scoped, tag = 'scoped memory for _lambda_.5']
    #allocation6 [shape = 'u8[16384]{0}', space=vmem, size = 0x4000, scoped, tag = 'output window, operand 2, single buffered']
    #allocation7 [shape = 's32[1]{0}', space=sflag, size = 0x4, scoped, tag = 'scoped memory for _lambda_.5']
    %11 = vsyncpa [#allocation5], 0
    %12 = vsyncpa [#allocation7], 0
    loop: start=0, step=1, limit=10
    $region2: #{_lambda_.5} parent=1 // loop_pre_header
      _
    $region3: #{_lambda_.5} parent=1 // loop_header
      %s14 = sphi 0, %s18
      %p15 = scmp.ge.s32.totalorder %s14, 10
      %s21 = sphi 0, %s33
      %s22 = sphi 0, %s29
      %s23 = sphi 0, %s21
      %s24 = sphi 0, %s22
      %s25 = sphi 0, %s23
      %s26 = sphi 0, %s24
      %s38 = sphi 0, %s40
      %s41 = sphi 0, %s38
      %s42 = sphi 0, %s41
      %s58 = sphi 0, %s42
      %s62 = sphi 0, %s62
      %s64 = sphi 0, %s62
      %s65 = sphi 0, %s64
      %s79 = sphi 0, %s65
      %s83 = sphi 0, %s83
      %s85 = sphi 0, %s83
      %s86 = sphi 0, %s85
      %s100 = sphi 0, %s86
      %s108 = sphi 0, %s110
      %s111 = sphi 0, %s108
      %s112 = sphi 0, %s111
      %s128 = sphi 0, %s112
      %s134 = sphi 0, %s136
      %s137 = sphi 0, %s134
      %s138 = sphi 0, %s137
      %s154 = sphi 0, %s138
      %s160 = sphi 0, %s162
      %s163 = sphi 0, %s160
      %s164 = sphi 0, %s163
      %s180 = sphi 0, %s164
    $region4: #{_lambda_.5} parent=1 // loop_header_branch
      %17 = sbr.rel (%p15) target = $region8
    $region5: #{_lambda_.5} parent=1 // loop_body
      %s19 = ssub.s32 %s14, 1
      %s20 = ssub.s32 %s14, 2
      %s27 = sadd.s32 1, %s22
      %p28 = scmp.ge.s32.totalorder %s27, 8
      %s29 = scalar_select %p28, 0, %s27
      %s30 = sadd.s32 1, %s21
      %s31 = scalar_select %p28, %s30, %s21
      %p32 = scmp.ge.s32.totalorder %s31, 1
      %s33 = scalar_select %p32, 0, %s31
      %s34 = ssub.s32 %s22, %s29
      %s35 = ssub.s32 %s21, %s33
      %s36 = sor.u32 %s34, %s35
      %p37 = scmp.eq.s32.totalorder %s36, 0
      %s39 = sadd.s32 %s38, 1
      %s40 = scalar_select %p37, %s38, %s39
      %p43 = pneg %p37
      %p44 = scmp.eq.s32.totalorder %s14, 7
      %p45 = por %p43, %p44
      %p46 = scmp.ne.s32.totalorder %s38, %s41
      %p47 = scmp.eq.s32.totalorder %s14, 0
      %p48 = por %p46, %p47
      %p49 = scmp.ne.s32.totalorder %s38, %s41
      %p50 = scmp.eq.s32.totalorder %s19, 7
      %p51 = por %p49, %p50
      %p52 = scmp.ne.s32.totalorder %s41, %s42
      %p53 = scmp.eq.s32.totalorder %s19, 0
      %p54 = por %p52, %p53
      %p55 = scmp.ne.s32.totalorder %s41, %s42
      %p56 = scmp.eq.s32.totalorder %s20, 7
      %p57 = por %p55, %p56
      %p59 = scmp.ne.s32.totalorder %s42, %s58
      %p60 = scmp.eq.s32.totalorder %s20, 0
      %p61 = por %p59, %p60
      %s63 = sadd.s32 %s62, 1
      %p66 = scmp.eq.s32.totalorder %s14, 7
      %p67 = scmp.ne.s32.totalorder %s62, %s64
      %p68 = scmp.eq.s32.totalorder %s14, 0
      %p69 = por %p67, %p68
      %p70 = scmp.ne.s32.totalorder %s62, %s64
      %p71 = scmp.eq.s32.totalorder %s19, 7
      %p72 = por %p70, %p71
      %p73 = scmp.ne.s32.totalorder %s64, %s65
      %p74 = scmp.eq.s32.totalorder %s19, 0
      %p75 = por %p73, %p74
      %p76 = scmp.ne.s32.totalorder %s64, %s65
      %p77 = scmp.eq.s32.totalorder %s20, 7
      %p78 = por %p76, %p77
      %p80 = scmp.ne.s32.totalorder %s65, %s79
      %p81 = scmp.eq.s32.totalorder %s20, 0
      %p82 = por %p80, %p81
      %s84 = sadd.s32 %s83, 1
      %p87 = scmp.eq.s32.totalorder %s14, 7
      %p88 = scmp.ne.s32.totalorder %s83, %s85
      %p89 = scmp.eq.s32.totalorder %s14, 0
      %p90 = por %p88, %p89
      %p91 = scmp.ne.s32.totalorder %s83, %s85
      %p92 = scmp.eq.s32.totalorder %s19, 7
      %p93 = por %p91, %p92
      %p94 = scmp.ne.s32.totalorder %s85, %s86
      %p95 = scmp.eq.s32.totalorder %s19, 0
      %p96 = por %p94, %p95
      %p97 = scmp.ne.s32.totalorder %s85, %s86
      %p98 = scmp.eq.s32.totalorder %s20, 7
      %p99 = por %p97, %p98
      %p101 = scmp.ne.s32.totalorder %s86, %s100
      %p102 = scmp.eq.s32.totalorder %s20, 0
      %p103 = por %p101, %p102
      %s104 = ssub.s32 %s22, %s29
      %s105 = ssub.s32 %s21, %s33
      %s106 = sor.u32 %s104, %s105
      %p107 = scmp.eq.s32.totalorder %s106, 0
      %s109 = sadd.s32 %s108, 1
      %s110 = scalar_select %p107, %s108, %s109
      %p113 = pneg %p107
      %p114 = scmp.eq.s32.totalorder %s14, 7
      %p115 = por %p113, %p114
      %p116 = scmp.ne.s32.totalorder %s108, %s111
      %p117 = scmp.eq.s32.totalorder %s14, 0
      %p118 = por %p116, %p117
      %p119 = scmp.ne.s32.totalorder %s108, %s111
      %p120 = scmp.eq.s32.totalorder %s19, 7
      %p121 = por %p119, %p120
      %p122 = scmp.ne.s32.totalorder %s111, %s112
      %p123 = scmp.eq.s32.totalorder %s19, 0
      %p124 = por %p122, %p123
      %p125 = scmp.ne.s32.totalorder %s111, %s112
      %p126 = scmp.eq.s32.totalorder %s20, 7
      %p127 = por %p125, %p126
      %p129 = scmp.ne.s32.totalorder %s112, %s128
      %p130 = scmp.eq.s32.totalorder %s20, 0
      %p131 = por %p129, %p130
      %s132 = ssub.s32 %s21, %s33
      %p133 = scmp.eq.s32.totalorder %s132, 0
      %s135 = sadd.s32 %s134, 1
      %s136 = scalar_select %p133, %s134, %s135
      %p139 = pneg %p133
      %p140 = scmp.eq.s32.totalorder %s14, 7
      %p141 = por %p139, %p140
      %p142 = scmp.ne.s32.totalorder %s134, %s137
      %p143 = scmp.eq.s32.totalorder %s14, 0
      %p144 = por %p142, %p143
      %p145 = scmp.ne.s32.totalorder %s134, %s137
      %p146 = scmp.eq.s32.totalorder %s19, 7
      %p147 = por %p145, %p146
      %p148 = scmp.ne.s32.totalorder %s137, %s138
      %p149 = scmp.eq.s32.totalorder %s19, 0
      %p150 = por %p148, %p149
      %p151 = scmp.ne.s32.totalorder %s137, %s138
      %p152 = scmp.eq.s32.totalorder %s20, 7
      %p153 = por %p151, %p152
      %p155 = scmp.ne.s32.totalorder %s138, %s154
      %p156 = scmp.eq.s32.totalorder %s20, 0
      %p157 = por %p155, %p156
      %s158 = ssub.s32 %s21, %s33
      %p159 = scmp.eq.s32.totalorder %s158, 0
      %s161 = sadd.s32 %s160, 1
      %s162 = scalar_select %p159, %s160, %s161
      %p165 = pneg %p159
      %p166 = scmp.eq.s32.totalorder %s14, 7
      %p167 = por %p165, %p166
      %p168 = scmp.ne.s32.totalorder %s160, %s163
      %p169 = scmp.eq.s32.totalorder %s14, 0
      %p170 = por %p168, %p169
      %p171 = scmp.ne.s32.totalorder %s160, %s163
      %p172 = scmp.eq.s32.totalorder %s19, 7
      %p173 = por %p171, %p172
      %p174 = scmp.ne.s32.totalorder %s163, %s164
      %p175 = scmp.eq.s32.totalorder %s19, 0
      %p176 = por %p174, %p175
      %p177 = scmp.ne.s32.totalorder %s163, %s164
      %p178 = scmp.eq.s32.totalorder %s20, 7
      %p179 = por %p177, %p178
      %p181 = scmp.ne.s32.totalorder %s164, %s180
      %p182 = scmp.eq.s32.totalorder %s20, 0
      %p183 = por %p181, %p182
      %p184 = scmp.le.s32.totalorder 1, %s14
      %p185 = scmp.lt.s32.totalorder %s14, 9
      %p186 = pnand %p184, %p185
      %p187 = pneg %p186
      // Predicated region
      $region9: #{_lambda_.5} parent=5 // pred_check
        _
      $region10: #{_lambda_.5} parent=5 // pred_check_branch
        %189 = sbr.rel (%p186) target = $region12
      $region11: #{_lambda_.5} parent=5 // pred_region
        %s190 = ssub.s32 %s14, 1
        // Predicated region
        $region13: #{_lambda_.5} parent=11 // pred_check
          %p191 = pneg %p75
        $region14: #{_lambda_.5} parent=11 // pred_check_branch
          %193 = sbr.rel (%p191) target = $region16
        $region15: #{_lambda_.5} parent=11 // pred_region
          _
        $region16: #{_lambda_.5} parent=11 // pred_fallthru
          _
        // Predicated region
        $region17: #{_lambda_.5} parent=11 // pred_check
          %p194 = pneg %p96
        $region18: #{_lambda_.5} parent=11 // pred_check_branch
          %196 = sbr.rel (%p194) target = $region20
        $region19: #{_lambda_.5} parent=11 // pred_region
          _
        $region20: #{_lambda_.5} parent=11 // pred_fallthru
          _
      $region12: #{_lambda_.5} parent=5 // pred_fallthru
        _
      %p197 = scmp.lt.s32.totalorder %s14, 8
      // Predicated region
      $region21: #{_lambda_.5} parent=5 // pred_check
        %p198 = pneg %p197
      $region22: #{_lambda_.5} parent=5 // pred_check_branch
        %200 = sbr.rel (%p198) target = $region24
      $region23: #{_lambda_.5} parent=5 // pred_region
        // Predicated region
        $region25: #{_lambda_.5} parent=23 // pred_check
          %p201 = pneg %p48
        $region26: #{_lambda_.5} parent=23 // pred_check_branch
          %203 = sbr.rel (%p201) target = $region28
        $region27: #{_lambda_.5} parent=23 // pred_region
          %s204 = smul.u32 2, %s21
          %p205 = scmp.lt.s32.totalorder %s22, 7
          %s206 = scalar_select %p205, %s22, 7
          %p207 = scmp.lt.s32.totalorder %s204, 1
          %s208 = scalar_select %p207, %s204, 1
          %s209 = smul.addr %s208, 8
          %s210 = smul.addr %s206, 16
          %s211 = sadd.s32 %s209, %s210
          %s212 = smul.addr %s211, 8
          %s213 = scalar_lea.vmem %s0, %s212
          %s214 = smul.u32 2, %s21
        $region28: #{_lambda_.5} parent=23 // pred_fallthru
          _
      $region24: #{_lambda_.5} parent=5 // pred_fallthru
        _
      %p215 = scmp.le.s32.totalorder 1, %s14
      %p216 = scmp.lt.s32.totalorder %s14, 9
      %p217 = pnand %p215, %p216
      %p218 = pneg %p217
      // Predicated region
      $region29: #{_lambda_.5} parent=5 // pred_check
        _
      $region30: #{_lambda_.5} parent=5 // pred_check_branch
        %220 = sbr.rel (%p217) target = $region32
      $region31: #{_lambda_.5} parent=5 // pred_region
        %s221 = ssub.s32 %s14, 1
        %s222 = smul.u32 2, %s23
        %p223 = scmp.lt.s32.totalorder %s24, 7
        %s224 = scalar_select %p223, %s24, 7
        %p225 = scmp.lt.s32.totalorder %s222, 1
        %s226 = scalar_select %p225, %s222, 1
        %s227 = smul.addr %s226, 8
        %s228 = smul.addr %s224, 16
        %s229 = sadd.s32 %s227, %s228
        %s230 = smul.addr %s229, 8
        %s231 = scalar_lea.vmem %s0, %s230
        %p232 = pneg %p54
        %p233 = pneg %p51
        %p234 = pneg %p75
        %p235 = pneg %p72
        %p236 = pneg %p96
        %p237 = pneg %p93
        %p238 = pneg %p124
        %p239 = pneg %p121
        %s240 = smul.u32 2, %s23
        %p241 = scmp.lt.s32.totalorder %s24, 7
        %s242 = scalar_select %p241, %s24, 7
        %p243 = scmp.lt.s32.totalorder %s240, 1
        %s244 = scalar_select %p243, %s240, 1
        %s245 = smul.addr %s244, 2
        %s246 = smul.addr %s242, 4
        %s247 = sadd.s32 %s245, %s246
        %s248 = smul.addr %s247, 8
        %s249 = scalar_lea.vmem %s3, %s248
        %p250 = pneg %p150
        %p251 = pneg %p147
        %p252 = pneg %p176
        %p253 = pneg %p173
        %s254 = smul.u32 2, %s23
        %p255 = scmp.lt.s32.totalorder %s24, 7
        %s256 = scalar_select %p255, %s24, 7
        %p257 = scmp.lt.s32.totalorder %s254, 1
        %s258 = scalar_select %p257, %s254, 1
        %s259 = smul.addr %s258, 8
        %s260 = smul.addr %s256, 16
        %s261 = sadd.s32 %s259, %s260
        %s262 = smul.addr %s261, 8
        %s263 = scalar_lea.vmem %s0, %s262
        %s264 = smul.u32 2, %s23
        %s265 = smul.u32 2, %s23
        %p266 = scmp.lt.s32.totalorder %s24, 7
        %s267 = scalar_select %p266, %s24, 7
        %p268 = scmp.lt.s32.totalorder %s265, 1
        %s269 = scalar_select %p268, %s265, 1
        %s270 = smul.addr %s269, 2
        %s271 = smul.addr %s267, 4
        %s272 = sadd.s32 %s270, %s271
        %s273 = smul.addr %s272, 8
        %s274 = scalar_lea.vmem %s3, %s273
        %s275 = smul.u32 2, %s23
        %s276 = smul.u32 2, %s23
        %s277 = smul.u32 2, %s23
        %p279 = scmp.eq.s32.totalorder %s24, 0
        // Predicated region
        $region33: #{_lambda_.5} parent=31 // pred_check
          %p280 = pneg %p279
        $region34: #{_lambda_.5} parent=31 // pred_check_branch
          %282 = sbr.rel (%p280) target = $region36
        $region35: #{_lambda_.5} parent=31 // pred_region
          %283 = vst [vmem:[#allocation2] sm:$0xff] 0.0
          %284 = vst [vmem:[#allocation2 + $0x8] sm:$0xff] 0.0
          %285 = vst [vmem:[#allocation2 + $0x10] sm:$0x3] 0.0
          %286 = vst [vmem:[#allocation2 + $0x18] sm:$0xff] 0.0
          %287 = vst [vmem:[#allocation2 + $0x20] sm:$0xff] 0.0
          %288 = vst [vmem:[#allocation2 + $0x28] sm:$0x3] 0.0
          %289 = vst [vmem:[#allocation3] sm:$0xff] 0.0
          %290 = vst [vmem:[#allocation3 + $0x8] sm:$0xff] 0.0
          %291 = vst [vmem:[#allocation3 + $0x10] sm:$0x3] 0.0
          %292 = vst [vmem:[#allocation3 + $0x18] sm:$0xff] 0.0
          %293 = vst [vmem:[#allocation3 + $0x20] sm:$0xff] 0.0
          %294 = vst [vmem:[#allocation3 + $0x28] sm:$0x3] 0.0
        $region36: #{_lambda_.5} parent=31 // pred_fallthru
          _
        %v295 = vld [vmem:[%s263] sm:$0xff]
        %v296 = vld [vmem:[%s263 + $0x8] sm:$0xff]
        %v297 = vld [vmem:[%s263 + $0x10] sm:$0xff]
        %v298 = vld [vmem:[%s263 + $0x18] sm:$0xff]
        %v299 = vld [vmem:[%s263 + $0x20] sm:$0xff]
        %v300 = vld [vmem:[%s263 + $0x28] sm:$0xff]
        %v301 = vld [vmem:[%s263 + $0x30] sm:$0xff]
        %v302 = vld [vmem:[%s263 + $0x38] sm:$0xff]
        %v303 = vld [vmem:[%s263 + $0x40] sm:$0xff]
        %v304 = vld [vmem:[%s263 + $0x48] sm:$0xff]
        %v305 = vld [vmem:[%s263 + $0x50] sm:$0xff]
        %v306 = vld [vmem:[%s263 + $0x58] sm:$0xff]
        %v307 = vld [vmem:[%s263 + $0x60] sm:$0xff]
        %v308 = vld [vmem:[%s263 + $0x68] sm:$0xff]
        %v309 = vld [vmem:[%s263 + $0x70] sm:$0xff]
        %v310 = vld [vmem:[%s263 + $0x78] sm:$0xff]
        %v311 = vld [vmem:[#allocation2] sm:$0xff]
        %v312 = vld [vmem:[#allocation2 + $0x8] sm:$0xff]
        %v313 = vld [vmem:[#allocation2 + $0x18] sm:$0xff]
        %v314 = vld [vmem:[#allocation2 + $0x20] sm:$0xff]
        %v315 = vld [vmem:[#allocation2 + $0x1] sm:$0xff]
        %v316 = vld [vmem:[#allocation2 + $0x9] sm:$0xff]
        %v317 = vld [vmem:[#allocation2 + $0x19] sm:$0xff]
        %v318 = vld [vmem:[#allocation2 + $0x21] sm:$0xff]
        %v319 = vld [vmem:[#allocation2 + $0x2] sm:$0xff]
        %v320 = vld [vmem:[#allocation2 + $0xa] sm:$0xff]
        %v321 = vld [vmem:[#allocation2 + $0x1a] sm:$0xff]
        %v322 = vld [vmem:[#allocation2 + $0x22] sm:$0xff]
        %v323 = vld [vmem:[#allocation3] sm:$0xff]
        %v324 = vld [vmem:[#allocation3 + $0x8] sm:$0xff]
        %v325 = vld [vmem:[#allocation3 + $0x18] sm:$0xff]
        %v326 = vld [vmem:[#allocation3 + $0x20] sm:$0xff]
        %v327 = vld [vmem:[#allocation3 + $0x1] sm:$0xff]
        %v328 = vld [vmem:[#allocation3 + $0x9] sm:$0xff]
        %v329 = vld [vmem:[#allocation3 + $0x19] sm:$0xff]
        %v330 = vld [vmem:[#allocation3 + $0x21] sm:$0xff]
        %v331 = vld [vmem:[#allocation3 + $0x2] sm:$0xff]
        %v332 = vld [vmem:[#allocation3 + $0xa] sm:$0xff]
        %v333 = vld [vmem:[#allocation3 + $0x1a] sm:$0xff]
        %v334 = vld [vmem:[#allocation3 + $0x22] sm:$0xff]
        %v335 = vpack.c.bf16 %v312, %v311
        %v336 = vpack.c.bf16 %v316, %v315
        %v337 = vpack.c.bf16 %v320, %v319
        %v338 = vpack.c.bf16 %v324, %v323
        %v339 = vpack.c.bf16 %v328, %v327
        %v340 = vpack.c.bf16 %v332, %v331
        %v341 = vpack.c.bf16 %v314, %v313
        %v342 = vpack.c.bf16 %v318, %v317
        %v343 = vpack.c.bf16 %v322, %v321
        %v344 = vpack.c.bf16 %v326, %v325
        %v345 = vpack.c.bf16 %v330, %v329
        %v346 = vpack.c.bf16 %v334, %v333
        %v347 = vld [vmem:[%s1] sm:$0xff]
        %v348 = vld [vmem:[%s1 + $0x8] sm:$0xff]
        %v349 = vld [vmem:[%s1 + $0x10] sm:$0xff]
        %v350 = vld [vmem:[%s1 + $0x18] sm:$0xff]
        %v351 = vld [vmem:[%s1 + $0x20] sm:$0xff]
        %v352 = vld [vmem:[%s1 + $0x28] sm:$0xff]
        %v353 = vld [vmem:[%s1 + $0x30] sm:$0xff]
        %v354 = vld [vmem:[%s1 + $0x38] sm:$0xff]
        %v355 = vld [vmem:[%s1 + $0x40] sm:$0xff]
        %v356 = vld [vmem:[%s1 + $0x48] sm:$0xff]
        %v357 = vld [vmem:[%s1 + $0x50] sm:$0xff]
        %v358 = vld [vmem:[%s1 + $0x58] sm:$0xff]
        %v359 = vld [vmem:[%s1 + $0x60] sm:$0xff]
        %v360 = vld [vmem:[%s1 + $0x68] sm:$0xff]
        %v361 = vld [vmem:[%s1 + $0x70] sm:$0xff]
        %v362 = vld [vmem:[%s1 + $0x78] sm:$0xff]
        %v363 = vld [vmem:[%s1 + $0x80] sm:$0xff]
        %v364 = vld [vmem:[%s1 + $0x88] sm:$0xff]
        %v365 = vld [vmem:[%s1 + $0x90] sm:$0xff]
        %v366 = vld [vmem:[%s1 + $0x98] sm:$0xff]
        %v367 = vld [vmem:[%s1 + $0xa0] sm:$0xff]
        %v368 = vld [vmem:[%s1 + $0xa8] sm:$0xff]
        %v369 = vld [vmem:[%s1 + $0xb0] sm:$0xff]
        %v370 = vld [vmem:[%s1 + $0xb8] sm:$0xff]
        %v371 = vld [vmem:[%s1 + $0xc0] sm:$0xff]
        %v372 = vld [vmem:[%s1 + $0xc8] sm:$0xff]
        %v373 = vld [vmem:[%s1 + $0xd0] sm:$0xff]
        %v374 = vld [vmem:[%s1 + $0xd8] sm:$0xff]
        %v375 = vld [vmem:[%s1 + $0xe0] sm:$0xff]
        %v376 = vld [vmem:[%s1 + $0xe8] sm:$0xff]
        %v377 = vld [vmem:[%s1 + $0xf0] sm:$0xff]
        %v378 = vld [vmem:[%s1 + $0xf8] sm:$0xff]
        %v379 = vld [vmem:[%s1 + $0x100] sm:$0xff]
        %v380 = vld [vmem:[%s1 + $0x108] sm:$0xff]
        %v381 = vld [vmem:[%s1 + $0x110] sm:$0xff]
        %v382 = vld [vmem:[%s1 + $0x118] sm:$0xff]
        %v383 = vld [vmem:[%s1 + $0x120] sm:$0xff]
        %v384 = vld [vmem:[%s1 + $0x128] sm:$0xff]
        %v385 = vld [vmem:[%s1 + $0x130] sm:$0xff]
        %v386 = vld [vmem:[%s1 + $0x138] sm:$0xff]
        %v387 = vld [vmem:[%s1 + $0x140] sm:$0xff]
        %v388 = vld [vmem:[%s1 + $0x148] sm:$0xff]
        %v389 = vld [vmem:[%s1 + $0x150] sm:$0xff]
        %v390 = vld [vmem:[%s1 + $0x158] sm:$0xff]
        %v391 = vld [vmem:[%s1 + $0x160] sm:$0xff]
        %v392 = vld [vmem:[%s1 + $0x168] sm:$0xff]
        %v393 = vld [vmem:[%s1 + $0x170] sm:$0xff]
        %v394 = vld [vmem:[%s1 + $0x178] sm:$0xff]
        %v395 = vld [vmem:[%s1 + $0x180] sm:$0xff]
        %v396 = vld [vmem:[%s1 + $0x188] sm:$0xff]
        %v397 = vld [vmem:[%s1 + $0x190] sm:$0xff]
        %v398 = vld [vmem:[%s1 + $0x198] sm:$0xff]
        %v399 = vld [vmem:[%s1 + $0x1a0] sm:$0xff]
        %v400 = vld [vmem:[%s1 + $0x1a8] sm:$0xff]
        %v401 = vld [vmem:[%s1 + $0x1b0] sm:$0xff]
        %v402 = vld [vmem:[%s1 + $0x1b8] sm:$0xff]
        %v403 = vld [vmem:[%s1 + $0x1c0] sm:$0xff]
        %v404 = vld [vmem:[%s1 + $0x1c8] sm:$0xff]
        %v405 = vld [vmem:[%s1 + $0x1d0] sm:$0xff]
        %v406 = vld [vmem:[%s1 + $0x1d8] sm:$0xff]
        %v407 = vld [vmem:[%s1 + $0x1e0] sm:$0xff]
        %v408 = vld [vmem:[%s1 + $0x1e8] sm:$0xff]
        %v409 = vld [vmem:[%s1 + $0x1f0] sm:$0xff]
        %v410 = vld [vmem:[%s1 + $0x1f8] sm:$0xff]
        %v411 = vld [vmem:[%s1 + $0x200] sm:$0xff]
        %v412 = vld [vmem:[%s1 + $0x208] sm:$0xff]
        %v413 = vld [vmem:[%s1 + $0x210] sm:$0xff]
        %v414 = vld [vmem:[%s1 + $0x218] sm:$0xff]
        %v415 = vld [vmem:[%s1 + $0x220] sm:$0xff]
        %v416 = vld [vmem:[%s1 + $0x228] sm:$0xff]
        %v417 = vld [vmem:[%s1 + $0x230] sm:$0xff]
        %v418 = vld [vmem:[%s1 + $0x238] sm:$0xff]
        %v419 = vld [vmem:[%s1 + $0x240] sm:$0xff]
        %v420 = vld [vmem:[%s1 + $0x248] sm:$0xff]
        %v421 = vld [vmem:[%s1 + $0x250] sm:$0xff]
        %v422 = vld [vmem:[%s1 + $0x258] sm:$0xff]
        %v423 = vld [vmem:[%s1 + $0x260] sm:$0xff]
        %v424 = vld [vmem:[%s1 + $0x268] sm:$0xff]
        %v425 = vld [vmem:[%s1 + $0x270] sm:$0xff]
        %v426 = vld [vmem:[%s1 + $0x278] sm:$0xff]
        %v427 = vld [vmem:[%s1 + $0x280] sm:$0xff]
        %v428 = vld [vmem:[%s1 + $0x288] sm:$0xff]
        %v429 = vld [vmem:[%s1 + $0x290] sm:$0xff]
        %v430 = vld [vmem:[%s1 + $0x298] sm:$0xff]
        %v431 = vld [vmem:[%s1 + $0x2a0] sm:$0xff]
        %v432 = vld [vmem:[%s1 + $0x2a8] sm:$0xff]
        %v433 = vld [vmem:[%s1 + $0x2b0] sm:$0xff]
        %v434 = vld [vmem:[%s1 + $0x2b8] sm:$0xff]
        %v435 = vld [vmem:[%s1 + $0x2c0] sm:$0xff]
        %v436 = vld [vmem:[%s1 + $0x2c8] sm:$0xff]
        %v437 = vld [vmem:[%s1 + $0x2d0] sm:$0xff]
        %v438 = vld [vmem:[%s1 + $0x2d8] sm:$0xff]
        %v439 = vld [vmem:[%s1 + $0x2e0] sm:$0xff]
        %v440 = vld [vmem:[%s1 + $0x2e8] sm:$0xff]
        %v441 = vld [vmem:[%s1 + $0x2f0] sm:$0xff]
        %v442 = vld [vmem:[%s1 + $0x2f8] sm:$0xff]
        %v443 = vld [vmem:[%s1 + $0x300] sm:$0xff]
        %v444 = vld [vmem:[%s1 + $0x308] sm:$0xff]
        %v445 = vld [vmem:[%s1 + $0x310] sm:$0xff]
        %v446 = vld [vmem:[%s1 + $0x318] sm:$0xff]
        %v447 = vld [vmem:[%s1 + $0x320] sm:$0xff]
        %v448 = vld [vmem:[%s1 + $0x328] sm:$0xff]
        %v449 = vld [vmem:[%s1 + $0x330] sm:$0xff]
        %v450 = vld [vmem:[%s1 + $0x338] sm:$0xff]
        %v451 = vld [vmem:[%s1 + $0x340] sm:$0xff]
        %v452 = vld [vmem:[%s1 + $0x348] sm:$0xff]
        %v453 = vld [vmem:[%s1 + $0x350] sm:$0xff]
        %v454 = vld [vmem:[%s1 + $0x358] sm:$0xff]
        %v455 = vld [vmem:[%s1 + $0x360] sm:$0xff]
        %v456 = vld [vmem:[%s1 + $0x368] sm:$0xff]
        %v457 = vld [vmem:[%s1 + $0x370] sm:$0xff]
        %v458 = vld [vmem:[%s1 + $0x378] sm:$0xff]
        %v459 = vld [vmem:[%s1 + $0x380] sm:$0xff]
        %v460 = vld [vmem:[%s1 + $0x388] sm:$0xff]
        %v461 = vld [vmem:[%s1 + $0x390] sm:$0xff]
        %v462 = vld [vmem:[%s1 + $0x398] sm:$0xff]
        %v463 = vld [vmem:[%s1 + $0x3a0] sm:$0xff]
        %v464 = vld [vmem:[%s1 + $0x3a8] sm:$0xff]
        %v465 = vld [vmem:[%s1 + $0x3b0] sm:$0xff]
        %v466 = vld [vmem:[%s1 + $0x3b8] sm:$0xff]
        %v467 = vld [vmem:[%s1 + $0x3c0] sm:$0xff]
        %v468 = vld [vmem:[%s1 + $0x3c8] sm:$0xff]
        %v469 = vld [vmem:[%s1 + $0x3d0] sm:$0xff]
        %v470 = vld [vmem:[%s1 + $0x3d8] sm:$0xff]
        %v471 = vld [vmem:[%s1 + $0x3e0] sm:$0xff]
        %v472 = vld [vmem:[%s1 + $0x3e8] sm:$0xff]
        %v473 = vld [vmem:[%s1 + $0x3f0] sm:$0xff]
        %v474 = vld [vmem:[%s1 + $0x3f8] sm:$0xff]
        %v475 = vld [vmem:[%s1 + $0x400] sm:$0xff]
        %v476 = vld [vmem:[%s1 + $0x408] sm:$0xff]
        %v477 = vld [vmem:[%s1 + $0x410] sm:$0xff]
        %v478 = vld [vmem:[%s1 + $0x418] sm:$0xff]
        %v479 = vld [vmem:[%s1 + $0x420] sm:$0xff]
        %v480 = vld [vmem:[%s1 + $0x428] sm:$0xff]
        %v481 = vld [vmem:[%s1 + $0x430] sm:$0xff]
        %v482 = vld [vmem:[%s1 + $0x438] sm:$0xff]
        %v483 = vld [vmem:[%s1 + $0x440] sm:$0xff]
        %v484 = vld [vmem:[%s1 + $0x448] sm:$0xff]
        %v485 = vld [vmem:[%s1 + $0x450] sm:$0xff]
        %v486 = vld [vmem:[%s1 + $0x458] sm:$0xff]
        %v487 = vld [vmem:[%s1 + $0x460] sm:$0xff]
        %v488 = vld [vmem:[%s1 + $0x468] sm:$0xff]
        %v489 = vld [vmem:[%s1 + $0x470] sm:$0xff]
        %v490 = vld [vmem:[%s1 + $0x478] sm:$0xff]
        %v491 = vld [vmem:[%s1 + $0x480] sm:$0xff]
        %v492 = vld [vmem:[%s1 + $0x488] sm:$0xff]
        %v493 = vld [vmem:[%s1 + $0x490] sm:$0xff]
        %v494 = vld [vmem:[%s1 + $0x498] sm:$0xff]
        %v495 = vld [vmem:[%s1 + $0x4a0] sm:$0xff]
        %v496 = vld [vmem:[%s1 + $0x4a8] sm:$0xff]
        %v497 = vld [vmem:[%s1 + $0x4b0] sm:$0xff]
        %v498 = vld [vmem:[%s1 + $0x4b8] sm:$0xff]
        %v499 = vld [vmem:[%s1 + $0x4c0] sm:$0xff]
        %v500 = vld [vmem:[%s1 + $0x4c8] sm:$0xff]
        %v501 = vld [vmem:[%s1 + $0x4d0] sm:$0xff]
        %v502 = vld [vmem:[%s1 + $0x4d8] sm:$0xff]
        %v503 = vld [vmem:[%s1 + $0x4e0] sm:$0xff]
        %v504 = vld [vmem:[%s1 + $0x4e8] sm:$0xff]
        %v505 = vld [vmem:[%s1 + $0x4f0] sm:$0xff]
        %v506 = vld [vmem:[%s1 + $0x4f8] sm:$0xff]
        %v507 = vld [vmem:[%s1 + $0x500] sm:$0xff]
        %v508 = vld [vmem:[%s1 + $0x508] sm:$0xff]
        %v509 = vld [vmem:[%s1 + $0x510] sm:$0xff]
        %v510 = vld [vmem:[%s1 + $0x518] sm:$0xff]
        %v511 = vld [vmem:[%s1 + $0x520] sm:$0xff]
        %v512 = vld [vmem:[%s1 + $0x528] sm:$0xff]
        %v513 = vld [vmem:[%s1 + $0x530] sm:$0xff]
        %v514 = vld [vmem:[%s1 + $0x538] sm:$0xff]
        %v515 = vld [vmem:[%s1 + $0x540] sm:$0xff]
        %v516 = vld [vmem:[%s1 + $0x548] sm:$0xff]
        %v517 = vld [vmem:[%s1 + $0x550] sm:$0xff]
        %v518 = vld [vmem:[%s1 + $0x558] sm:$0xff]
        %v519 = vld [vmem:[%s1 + $0x560] sm:$0xff]
        %v520 = vld [vmem:[%s1 + $0x568] sm:$0xff]
        %v521 = vld [vmem:[%s1 + $0x570] sm:$0xff]
        %v522 = vld [vmem:[%s1 + $0x578] sm:$0xff]
        %v523 = vld [vmem:[%s1 + $0x580] sm:$0xff]
        %v524 = vld [vmem:[%s1 + $0x588] sm:$0xff]
        %v525 = vld [vmem:[%s1 + $0x590] sm:$0xff]
        %v526 = vld [vmem:[%s1 + $0x598] sm:$0xff]
        %v527 = vld [vmem:[%s1 + $0x5a0] sm:$0xff]
        %v528 = vld [vmem:[%s1 + $0x5a8] sm:$0xff]
        %v529 = vld [vmem:[%s1 + $0x5b0] sm:$0xff]
        %v530 = vld [vmem:[%s1 + $0x5b8] sm:$0xff]
        %v531 = vld [vmem:[%s1 + $0x5c0] sm:$0xff]
        %v532 = vld [vmem:[%s1 + $0x5c8] sm:$0xff]
        %v533 = vld [vmem:[%s1 + $0x5d0] sm:$0xff]
        %v534 = vld [vmem:[%s1 + $0x5d8] sm:$0xff]
        %v535 = vld [vmem:[%s1 + $0x5e0] sm:$0xff]
        %v536 = vld [vmem:[%s1 + $0x5e8] sm:$0xff]
        %v537 = vld [vmem:[%s1 + $0x5f0] sm:$0xff]
        %v538 = vld [vmem:[%s1 + $0x5f8] sm:$0xff]
        %v731 = vunpack.c.l.b16 %v347
        %v732 = vunpack.c.h.b16 %v347
        %v733 = vunpack.c.l.b16 %v348
        %v734 = vunpack.c.h.b16 %v348
        %v735 = vunpack.c.l.b16 %v349
        %v736 = vunpack.c.h.b16 %v349
        %v737 = vunpack.c.l.b16 %v350
        %v738 = vunpack.c.h.b16 %v350
        %v739 = vunpack.c.l.b16 %v351
        %v740 = vunpack.c.h.b16 %v351
        %v741 = vunpack.c.l.b16 %v352
        %v742 = vunpack.c.h.b16 %v352
        %v743 = vunpack.c.l.b16 %v353
        %v744 = vunpack.c.h.b16 %v353
        %v745 = vunpack.c.l.b16 %v354
        %v746 = vunpack.c.h.b16 %v354
        %v747 = vunpack.c.l.b16 %v355
        %v748 = vunpack.c.h.b16 %v355
        %v749 = vunpack.c.l.b16 %v356
        %v750 = vunpack.c.h.b16 %v356
        %v751 = vunpack.c.l.b16 %v357
        %v752 = vunpack.c.h.b16 %v357
        %v753 = vunpack.c.l.b16 %v358
        %v754 = vunpack.c.h.b16 %v358
        %v755 = vunpack.c.l.b16 %v359
        %v756 = vunpack.c.h.b16 %v359
        %v757 = vunpack.c.l.b16 %v360
        %v758 = vunpack.c.h.b16 %v360
        %v759 = vunpack.c.l.b16 %v361
        %v760 = vunpack.c.h.b16 %v361
        %v761 = vunpack.c.l.b16 %v362
        %v762 = vunpack.c.h.b16 %v362
        %v763 = vunpack.c.l.b16 %v363
        %v764 = vunpack.c.h.b16 %v363
        %v765 = vunpack.c.l.b16 %v364
        %v766 = vunpack.c.h.b16 %v364
        %v767 = vunpack.c.l.b16 %v365
        %v768 = vunpack.c.h.b16 %v365
        %v769 = vunpack.c.l.b16 %v366
        %v770 = vunpack.c.h.b16 %v366
        %v771 = vunpack.c.l.b16 %v367
        %v772 = vunpack.c.h.b16 %v367
        %v773 = vunpack.c.l.b16 %v368
        %v774 = vunpack.c.h.b16 %v368
        %v775 = vunpack.c.l.b16 %v369
        %v776 = vunpack.c.h.b16 %v369
        %v777 = vunpack.c.l.b16 %v370
        %v778 = vunpack.c.h.b16 %v370
        %v779 = vunpack.c.l.b16 %v371
        %v780 = vunpack.c.h.b16 %v371
        %v781 = vunpack.c.l.b16 %v372
        %v782 = vunpack.c.h.b16 %v372
        %v783 = vunpack.c.l.b16 %v373
        %v784 = vunpack.c.h.b16 %v373
        %v785 = vunpack.c.l.b16 %v374
        %v786 = vunpack.c.h.b16 %v374
        %v787 = vunpack.c.l.b16 %v375
        %v788 = vunpack.c.h.b16 %v375
        %v789 = vunpack.c.l.b16 %v376
        %v790 = vunpack.c.h.b16 %v376
        %v791 = vunpack.c.l.b16 %v377
        %v792 = vunpack.c.h.b16 %v377
        %v793 = vunpack.c.l.b16 %v378
        %v794 = vunpack.c.h.b16 %v378
        %v795 = vunpack.c.l.b16 %v379
        %v796 = vunpack.c.h.b16 %v379
        %v797 = vunpack.c.l.b16 %v380
        %v798 = vunpack.c.h.b16 %v380
        %v799 = vunpack.c.l.b16 %v381
        %v800 = vunpack.c.h.b16 %v381
        %v801 = vunpack.c.l.b16 %v382
        %v802 = vunpack.c.h.b16 %v382
        %v803 = vunpack.c.l.b16 %v383
        %v804 = vunpack.c.h.b16 %v383
        %v805 = vunpack.c.l.b16 %v384
        %v806 = vunpack.c.h.b16 %v384
        %v807 = vunpack.c.l.b16 %v385
        %v808 = vunpack.c.h.b16 %v385
        %v809 = vunpack.c.l.b16 %v386
        %v810 = vunpack.c.h.b16 %v386
        %v811 = vunpack.c.l.b16 %v387
        %v812 = vunpack.c.h.b16 %v387
        %v813 = vunpack.c.l.b16 %v388
        %v814 = vunpack.c.h.b16 %v388
        %v815 = vunpack.c.l.b16 %v389
        %v816 = vunpack.c.h.b16 %v389
        %v817 = vunpack.c.l.b16 %v390
        %v818 = vunpack.c.h.b16 %v390
        %v819 = vunpack.c.l.b16 %v391
        %v820 = vunpack.c.h.b16 %v391
        %v821 = vunpack.c.l.b16 %v392
        %v822 = vunpack.c.h.b16 %v392
        %v823 = vunpack.c.l.b16 %v393
        %v824 = vunpack.c.h.b16 %v393
        %v825 = vunpack.c.l.b16 %v394
        %v826 = vunpack.c.h.b16 %v394
        %v827 = vunpack.c.l.b16 %v395
        %v828 = vunpack.c.h.b16 %v395
        %v829 = vunpack.c.l.b16 %v396
        %v830 = vunpack.c.h.b16 %v396
        %v831 = vunpack.c.l.b16 %v397
        %v832 = vunpack.c.h.b16 %v397
        %v833 = vunpack.c.l.b16 %v398
        %v834 = vunpack.c.h.b16 %v398
        %v835 = vunpack.c.l.b16 %v399
        %v836 = vunpack.c.h.b16 %v399
        %v837 = vunpack.c.l.b16 %v400
        %v838 = vunpack.c.h.b16 %v400
        %v839 = vunpack.c.l.b16 %v401
        %v840 = vunpack.c.h.b16 %v401
        %v841 = vunpack.c.l.b16 %v402
        %v842 = vunpack.c.h.b16 %v402
        %v843 = vunpack.c.l.b16 %v403
        %v844 = vunpack.c.h.b16 %v403
        %v845 = vunpack.c.l.b16 %v404
        %v846 = vunpack.c.h.b16 %v404
        %v847 = vunpack.c.l.b16 %v405
        %v848 = vunpack.c.h.b16 %v405
        %v849 = vunpack.c.l.b16 %v406
        %v850 = vunpack.c.h.b16 %v406
        %v851 = vunpack.c.l.b16 %v407
        %v852 = vunpack.c.h.b16 %v407
        %v853 = vunpack.c.l.b16 %v408
        %v854 = vunpack.c.h.b16 %v408
        %v855 = vunpack.c.l.b16 %v409
        %v856 = vunpack.c.h.b16 %v409
        %v857 = vunpack.c.l.b16 %v410
        %v858 = vunpack.c.h.b16 %v410
        %v859 = vunpack.c.l.b16 %v411
        %v860 = vunpack.c.h.b16 %v411
        %v861 = vunpack.c.l.b16 %v412
        %v862 = vunpack.c.h.b16 %v412
        %v863 = vunpack.c.l.b16 %v413
        %v864 = vunpack.c.h.b16 %v413
        %v865 = vunpack.c.l.b16 %v414
        %v866 = vunpack.c.h.b16 %v414
        %v867 = vunpack.c.l.b16 %v415
        %v868 = vunpack.c.h.b16 %v415
        %v869 = vunpack.c.l.b16 %v416
        %v870 = vunpack.c.h.b16 %v416
        %v871 = vunpack.c.l.b16 %v417
        %v872 = vunpack.c.h.b16 %v417
        %v873 = vunpack.c.l.b16 %v418
        %v874 = vunpack.c.h.b16 %v418
        %v875 = vunpack.c.l.b16 %v419
        %v876 = vunpack.c.h.b16 %v419
        %v877 = vunpack.c.l.b16 %v420
        %v878 = vunpack.c.h.b16 %v420
        %v879 = vunpack.c.l.b16 %v421
        %v880 = vunpack.c.h.b16 %v421
        %v881 = vunpack.c.l.b16 %v422
        %v882 = vunpack.c.h.b16 %v422
        %v883 = vunpack.c.l.b16 %v423
        %v884 = vunpack.c.h.b16 %v423
        %v885 = vunpack.c.l.b16 %v424
        %v886 = vunpack.c.h.b16 %v424
        %v887 = vunpack.c.l.b16 %v425
        %v888 = vunpack.c.h.b16 %v425
        %v889 = vunpack.c.l.b16 %v426
        %v890 = vunpack.c.h.b16 %v426
        %v891 = vunpack.c.l.b16 %v427
        %v892 = vunpack.c.h.b16 %v427
        %v893 = vunpack.c.l.b16 %v428
        %v894 = vunpack.c.h.b16 %v428
        %v895 = vunpack.c.l.b16 %v429
        %v896 = vunpack.c.h.b16 %v429
        %v897 = vunpack.c.l.b16 %v430
        %v898 = vunpack.c.h.b16 %v430
        %v899 = vunpack.c.l.b16 %v431
        %v900 = vunpack.c.h.b16 %v431
        %v901 = vunpack.c.l.b16 %v432
        %v902 = vunpack.c.h.b16 %v432
        %v903 = vunpack.c.l.b16 %v433
        %v904 = vunpack.c.h.b16 %v433
        %v905 = vunpack.c.l.b16 %v434
        %v906 = vunpack.c.h.b16 %v434
        %v907 = vunpack.c.l.b16 %v435
        %v908 = vunpack.c.h.b16 %v435
        %v909 = vunpack.c.l.b16 %v436
        %v910 = vunpack.c.h.b16 %v436
        %v911 = vunpack.c.l.b16 %v437
        %v912 = vunpack.c.h.b16 %v437
        %v913 = vunpack.c.l.b16 %v438
        %v914 = vunpack.c.h.b16 %v438
        %v915 = vunpack.c.l.b16 %v439
        %v916 = vunpack.c.h.b16 %v439
        %v917 = vunpack.c.l.b16 %v440
        %v918 = vunpack.c.h.b16 %v440
        %v919 = vunpack.c.l.b16 %v441
        %v920 = vunpack.c.h.b16 %v441
        %v921 = vunpack.c.l.b16 %v442
        %v922 = vunpack.c.h.b16 %v442
        %v923 = vunpack.c.l.b16 %v443
        %v924 = vunpack.c.h.b16 %v443
        %v925 = vunpack.c.l.b16 %v444
        %v926 = vunpack.c.h.b16 %v444
        %v927 = vunpack.c.l.b16 %v445
        %v928 = vunpack.c.h.b16 %v445
        %v929 = vunpack.c.l.b16 %v446
        %v930 = vunpack.c.h.b16 %v446
        %v931 = vunpack.c.l.b16 %v447
        %v932 = vunpack.c.h.b16 %v447
        %v933 = vunpack.c.l.b16 %v448
        %v934 = vunpack.c.h.b16 %v448
        %v935 = vunpack.c.l.b16 %v449
        %v936 = vunpack.c.h.b16 %v449
        %v937 = vunpack.c.l.b16 %v450
        %v938 = vunpack.c.h.b16 %v450
        %v939 = vunpack.c.l.b16 %v451
        %v940 = vunpack.c.h.b16 %v451
        %v941 = vunpack.c.l.b16 %v452
        %v942 = vunpack.c.h.b16 %v452
        %v943 = vunpack.c.l.b16 %v453
        %v944 = vunpack.c.h.b16 %v453
        %v945 = vunpack.c.l.b16 %v454
        %v946 = vunpack.c.h.b16 %v454
        %v947 = vunpack.c.l.b16 %v455
        %v948 = vunpack.c.h.b16 %v455
        %v949 = vunpack.c.l.b16 %v456
        %v950 = vunpack.c.h.b16 %v456
        %v951 = vunpack.c.l.b16 %v457
        %v952 = vunpack.c.h.b16 %v457
        %v953 = vunpack.c.l.b16 %v458
        %v954 = vunpack.c.h.b16 %v458
        %v955 = vunpack.c.l.b16 %v459
        %v956 = vunpack.c.h.b16 %v459
        %v957 = vunpack.c.l.b16 %v460
        %v958 = vunpack.c.h.b16 %v460
        %v959 = vunpack.c.l.b16 %v461
        %v960 = vunpack.c.h.b16 %v461
        %v961 = vunpack.c.l.b16 %v462
        %v962 = vunpack.c.h.b16 %v462
        %v963 = vunpack.c.l.b16 %v463
        %v964 = vunpack.c.h.b16 %v463
        %v965 = vunpack.c.l.b16 %v464
        %v966 = vunpack.c.h.b16 %v464
        %v967 = vunpack.c.l.b16 %v465
        %v968 = vunpack.c.h.b16 %v465
        %v969 = vunpack.c.l.b16 %v466
        %v970 = vunpack.c.h.b16 %v466
        %v971 = vunpack.c.l.b16 %v467
        %v972 = vunpack.c.h.b16 %v467
        %v973 = vunpack.c.l.b16 %v468
        %v974 = vunpack.c.h.b16 %v468
        %v975 = vunpack.c.l.b16 %v469
        %v976 = vunpack.c.h.b16 %v469
        %v977 = vunpack.c.l.b16 %v470
        %v978 = vunpack.c.h.b16 %v470
        %v979 = vunpack.c.l.b16 %v471
        %v980 = vunpack.c.h.b16 %v471
        %v981 = vunpack.c.l.b16 %v472
        %v982 = vunpack.c.h.b16 %v472
        %v983 = vunpack.c.l.b16 %v473
        %v984 = vunpack.c.h.b16 %v473
        %v985 = vunpack.c.l.b16 %v474
        %v986 = vunpack.c.h.b16 %v474
        %v987 = vunpack.c.l.b16 %v475
        %v988 = vunpack.c.h.b16 %v475
        %v989 = vunpack.c.l.b16 %v476
        %v990 = vunpack.c.h.b16 %v476
        %v991 = vunpack.c.l.b16 %v477
        %v992 = vunpack.c.h.b16 %v477
        %v993 = vunpack.c.l.b16 %v478
        %v994 = vunpack.c.h.b16 %v478
        %v995 = vunpack.c.l.b16 %v479
        %v996 = vunpack.c.h.b16 %v479
        %v997 = vunpack.c.l.b16 %v480
        %v998 = vunpack.c.h.b16 %v480
        %v999 = vunpack.c.l.b16 %v481
        %v1000 = vunpack.c.h.b16 %v481
        %v1001 = vunpack.c.l.b16 %v482
        %v1002 = vunpack.c.h.b16 %v482
        %v1003 = vunpack.c.l.b16 %v483
        %v1004 = vunpack.c.h.b16 %v483
        %v1005 = vunpack.c.l.b16 %v484
        %v1006 = vunpack.c.h.b16 %v484
        %v1007 = vunpack.c.l.b16 %v485
        %v1008 = vunpack.c.h.b16 %v485
        %v1009 = vunpack.c.l.b16 %v486
        %v1010 = vunpack.c.h.b16 %v486
        %v1011 = vunpack.c.l.b16 %v487
        %v1012 = vunpack.c.h.b16 %v487
        %v1013 = vunpack.c.l.b16 %v488
        %v1014 = vunpack.c.h.b16 %v488
        %v1015 = vunpack.c.l.b16 %v489
        %v1016 = vunpack.c.h.b16 %v489
        %v1017 = vunpack.c.l.b16 %v490
        %v1018 = vunpack.c.h.b16 %v490
        %v1019 = vunpack.c.l.b16 %v491
        %v1020 = vunpack.c.h.b16 %v491
        %v1021 = vunpack.c.l.b16 %v492
        %v1022 = vunpack.c.h.b16 %v492
        %v1023 = vunpack.c.l.b16 %v493
        %v1024 = vunpack.c.h.b16 %v493
        %v1025 = vunpack.c.l.b16 %v494
        %v1026 = vunpack.c.h.b16 %v494
        %v1027 = vunpack.c.l.b16 %v495
        %v1028 = vunpack.c.h.b16 %v495
        %v1029 = vunpack.c.l.b16 %v496
        %v1030 = vunpack.c.h.b16 %v496
        %v1031 = vunpack.c.l.b16 %v497
        %v1032 = vunpack.c.h.b16 %v497
        %v1033 = vunpack.c.l.b16 %v498
        %v1034 = vunpack.c.h.b16 %v498
        %v1035 = vunpack.c.l.b16 %v499
        %v1036 = vunpack.c.h.b16 %v499
        %v1037 = vunpack.c.l.b16 %v500
        %v1038 = vunpack.c.h.b16 %v500
        %v1039 = vunpack.c.l.b16 %v501
        %v1040 = vunpack.c.h.b16 %v501
        %v1041 = vunpack.c.l.b16 %v502
        %v1042 = vunpack.c.h.b16 %v502
        %v1043 = vunpack.c.l.b16 %v503
        %v1044 = vunpack.c.h.b16 %v503
        %v1045 = vunpack.c.l.b16 %v504
        %v1046 = vunpack.c.h.b16 %v504
        %v1047 = vunpack.c.l.b16 %v505
        %v1048 = vunpack.c.h.b16 %v505
        %v1049 = vunpack.c.l.b16 %v506
        %v1050 = vunpack.c.h.b16 %v506
        %v1051 = vunpack.c.l.b16 %v507
        %v1052 = vunpack.c.h.b16 %v507
        %v1053 = vunpack.c.l.b16 %v508
        %v1054 = vunpack.c.h.b16 %v508
        %v1055 = vunpack.c.l.b16 %v509
        %v1056 = vunpack.c.h.b16 %v509
        %v1057 = vunpack.c.l.b16 %v510
        %v1058 = vunpack.c.h.b16 %v510
        %v1059 = vunpack.c.l.b16 %v511
        %v1060 = vunpack.c.h.b16 %v511
        %v1061 = vunpack.c.l.b16 %v512
        %v1062 = vunpack.c.h.b16 %v512
        %v1063 = vunpack.c.l.b16 %v513
        %v1064 = vunpack.c.h.b16 %v513
        %v1065 = vunpack.c.l.b16 %v514
        %v1066 = vunpack.c.h.b16 %v514
        %v1067 = vunpack.c.l.b16 %v515
        %v1068 = vunpack.c.h.b16 %v515
        %v1069 = vunpack.c.l.b16 %v516
        %v1070 = vunpack.c.h.b16 %v516
        %v1071 = vunpack.c.l.b16 %v517
        %v1072 = vunpack.c.h.b16 %v517
        %v1073 = vunpack.c.l.b16 %v518
        %v1074 = vunpack.c.h.b16 %v518
        %v1075 = vunpack.c.l.b16 %v519
        %v1076 = vunpack.c.h.b16 %v519
        %v1077 = vunpack.c.l.b16 %v520
        %v1078 = vunpack.c.h.b16 %v520
        %v1079 = vunpack.c.l.b16 %v521
        %v1080 = vunpack.c.h.b16 %v521
        %v1081 = vunpack.c.l.b16 %v522
        %v1082 = vunpack.c.h.b16 %v522
        %v1083 = vunpack.c.l.b16 %v523
        %v1084 = vunpack.c.h.b16 %v523
        %v1085 = vunpack.c.l.b16 %v524
        %v1086 = vunpack.c.h.b16 %v524
        %v1087 = vunpack.c.l.b16 %v525
        %v1088 = vunpack.c.h.b16 %v525
        %v1089 = vunpack.c.l.b16 %v526
        %v1090 = vunpack.c.h.b16 %v526
        %v1091 = vunpack.c.l.b16 %v527
        %v1092 = vunpack.c.h.b16 %v527
        %v1093 = vunpack.c.l.b16 %v528
        %v1094 = vunpack.c.h.b16 %v528
        %v1095 = vunpack.c.l.b16 %v529
        %v1096 = vunpack.c.h.b16 %v529
        %v1097 = vunpack.c.l.b16 %v530
        %v1098 = vunpack.c.h.b16 %v530
        %v1099 = vunpack.c.l.b16 %v531
        %v1100 = vunpack.c.h.b16 %v531
        %v1101 = vunpack.c.l.b16 %v532
        %v1102 = vunpack.c.h.b16 %v532
        %v1103 = vunpack.c.l.b16 %v533
        %v1104 = vunpack.c.h.b16 %v533
        %v1105 = vunpack.c.l.b16 %v534
        %v1106 = vunpack.c.h.b16 %v534
        %v1107 = vunpack.c.l.b16 %v535
        %v1108 = vunpack.c.h.b16 %v535
        %v1109 = vunpack.c.l.b16 %v536
        %v1110 = vunpack.c.h.b16 %v536
        %v1111 = vunpack.c.l.b16 %v537
        %v1112 = vunpack.c.h.b16 %v537
        %v1113 = vunpack.c.l.b16 %v538
        %v1114 = vunpack.c.h.b16 %v538
        %v1115 = vpack.c.b16 %v735, %v731
        %v1116 = vpack.c.b16 %v736, %v732
        %v1117 = vpack.c.b16 %v737, %v733
        %v1118 = vpack.c.b16 %v738, %v734
        %v1119 = vpack.c.b16 %v743, %v739
        %v1120 = vpack.c.b16 %v744, %v740
        %v1121 = vpack.c.b16 %v745, %v741
        %v1122 = vpack.c.b16 %v746, %v742
        %v1123 = vpack.c.b16 %v751, %v747
        %v1124 = vpack.c.b16 %v752, %v748
        %v1125 = vpack.c.b16 %v753, %v749
        %v1126 = vpack.c.b16 %v754, %v750
        %v1127 = vpack.c.b16 %v759, %v755
        %v1128 = vpack.c.b16 %v760, %v756
        %v1129 = vpack.c.b16 %v761, %v757
        %v1130 = vpack.c.b16 %v762, %v758
        %v1131 = vpack.c.b16 %v767, %v763
        %v1132 = vpack.c.b16 %v768, %v764
        %v1133 = vpack.c.b16 %v769, %v765
        %v1134 = vpack.c.b16 %v770, %v766
        %v1135 = vpack.c.b16 %v775, %v771
        %v1136 = vpack.c.b16 %v776, %v772
        %v1137 = vpack.c.b16 %v777, %v773
        %v1138 = vpack.c.b16 %v778, %v774
        %v1139 = vpack.c.b16 %v783, %v779
        %v1140 = vpack.c.b16 %v784, %v780
        %v1141 = vpack.c.b16 %v785, %v781
        %v1142 = vpack.c.b16 %v786, %v782
        %v1143 = vpack.c.b16 %v791, %v787
        %v1144 = vpack.c.b16 %v792, %v788
        %v1145 = vpack.c.b16 %v793, %v789
        %v1146 = vpack.c.b16 %v794, %v790
        %v1147 = vpack.c.b16 %v799, %v795
        %v1148 = vpack.c.b16 %v800, %v796
        %v1149 = vpack.c.b16 %v801, %v797
        %v1150 = vpack.c.b16 %v802, %v798
        %v1151 = vpack.c.b16 %v807, %v803
        %v1152 = vpack.c.b16 %v808, %v804
        %v1153 = vpack.c.b16 %v809, %v805
        %v1154 = vpack.c.b16 %v810, %v806
        %v1155 = vpack.c.b16 %v815, %v811
        %v1156 = vpack.c.b16 %v816, %v812
        %v1157 = vpack.c.b16 %v817, %v813
        %v1158 = vpack.c.b16 %v818, %v814
        %v1159 = vpack.c.b16 %v823, %v819
        %v1160 = vpack.c.b16 %v824, %v820
        %v1161 = vpack.c.b16 %v825, %v821
        %v1162 = vpack.c.b16 %v826, %v822
        %v1163 = vpack.c.b16 %v831, %v827
        %v1164 = vpack.c.b16 %v832, %v828
        %v1165 = vpack.c.b16 %v833, %v829
        %v1166 = vpack.c.b16 %v834, %v830
        %v1167 = vpack.c.b16 %v839, %v835
        %v1168 = vpack.c.b16 %v840, %v836
        %v1169 = vpack.c.b16 %v841, %v837
        %v1170 = vpack.c.b16 %v842, %v838
        %v1171 = vpack.c.b16 %v847, %v843
        %v1172 = vpack.c.b16 %v848, %v844
        %v1173 = vpack.c.b16 %v849, %v845
        %v1174 = vpack.c.b16 %v850, %v846
        %v1175 = vpack.c.b16 %v855, %v851
        %v1176 = vpack.c.b16 %v856, %v852
        %v1177 = vpack.c.b16 %v857, %v853
        %v1178 = vpack.c.b16 %v858, %v854
        %v1179 = vpack.c.b16 %v863, %v859
        %v1180 = vpack.c.b16 %v864, %v860
        %v1181 = vpack.c.b16 %v865, %v861
        %v1182 = vpack.c.b16 %v866, %v862
        %v1183 = vpack.c.b16 %v871, %v867
        %v1184 = vpack.c.b16 %v872, %v868
        %v1185 = vpack.c.b16 %v873, %v869
        %v1186 = vpack.c.b16 %v874, %v870
        %v1187 = vpack.c.b16 %v879, %v875
        %v1188 = vpack.c.b16 %v880, %v876
        %v1189 = vpack.c.b16 %v881, %v877
        %v1190 = vpack.c.b16 %v882, %v878
        %v1191 = vpack.c.b16 %v887, %v883
        %v1192 = vpack.c.b16 %v888, %v884
        %v1193 = vpack.c.b16 %v889, %v885
        %v1194 = vpack.c.b16 %v890, %v886
        %v1195 = vpack.c.b16 %v895, %v891
        %v1196 = vpack.c.b16 %v896, %v892
        %v1197 = vpack.c.b16 %v897, %v893
        %v1198 = vpack.c.b16 %v898, %v894
        %v1199 = vpack.c.b16 %v903, %v899
        %v1200 = vpack.c.b16 %v904, %v900
        %v1201 = vpack.c.b16 %v905, %v901
        %v1202 = vpack.c.b16 %v906, %v902
        %v1203 = vpack.c.b16 %v911, %v907
        %v1204 = vpack.c.b16 %v912, %v908
        %v1205 = vpack.c.b16 %v913, %v909
        %v1206 = vpack.c.b16 %v914, %v910
        %v1207 = vpack.c.b16 %v919, %v915
        %v1208 = vpack.c.b16 %v920, %v916
        %v1209 = vpack.c.b16 %v921, %v917
        %v1210 = vpack.c.b16 %v922, %v918
        %v1211 = vpack.c.b16 %v927, %v923
        %v1212 = vpack.c.b16 %v928, %v924
        %v1213 = vpack.c.b16 %v929, %v925
        %v1214 = vpack.c.b16 %v930, %v926
        %v1215 = vpack.c.b16 %v935, %v931
        %v1216 = vpack.c.b16 %v936, %v932
        %v1217 = vpack.c.b16 %v937, %v933
        %v1218 = vpack.c.b16 %v938, %v934
        %v1219 = vpack.c.b16 %v943, %v939
        %v1220 = vpack.c.b16 %v944, %v940
        %v1221 = vpack.c.b16 %v945, %v941
        %v1222 = vpack.c.b16 %v946, %v942
        %v1223 = vpack.c.b16 %v951, %v947
        %v1224 = vpack.c.b16 %v952, %v948
        %v1225 = vpack.c.b16 %v953, %v949
        %v1226 = vpack.c.b16 %v954, %v950
        %v1227 = vpack.c.b16 %v959, %v955
        %v1228 = vpack.c.b16 %v960, %v956
        %v1229 = vpack.c.b16 %v961, %v957
        %v1230 = vpack.c.b16 %v962, %v958
        %v1231 = vpack.c.b16 %v967, %v963
        %v1232 = vpack.c.b16 %v968, %v964
        %v1233 = vpack.c.b16 %v969, %v965
        %v1234 = vpack.c.b16 %v970, %v966
        %v1235 = vpack.c.b16 %v975, %v971
        %v1236 = vpack.c.b16 %v976, %v972
        %v1237 = vpack.c.b16 %v977, %v973
        %v1238 = vpack.c.b16 %v978, %v974
        %v1239 = vpack.c.b16 %v983, %v979
        %v1240 = vpack.c.b16 %v984, %v980
        %v1241 = vpack.c.b16 %v985, %v981
        %v1242 = vpack.c.b16 %v986, %v982
        %v1243 = vpack.c.b16 %v991, %v987
        %v1244 = vpack.c.b16 %v992, %v988
        %v1245 = vpack.c.b16 %v993, %v989
        %v1246 = vpack.c.b16 %v994, %v990
        %v1247 = vpack.c.b16 %v999, %v995
        %v1248 = vpack.c.b16 %v1000, %v996
        %v1249 = vpack.c.b16 %v1001, %v997
        %v1250 = vpack.c.b16 %v1002, %v998
        %v1251 = vpack.c.b16 %v1007, %v1003
        %v1252 = vpack.c.b16 %v1008, %v1004
        %v1253 = vpack.c.b16 %v1009, %v1005
        %v1254 = vpack.c.b16 %v1010, %v1006
        %v1255 = vpack.c.b16 %v1015, %v1011
        %v1256 = vpack.c.b16 %v1016, %v1012
        %v1257 = vpack.c.b16 %v1017, %v1013
        %v1258 = vpack.c.b16 %v1018, %v1014
        %v1259 = vpack.c.b16 %v1023, %v1019
        %v1260 = vpack.c.b16 %v1024, %v1020
        %v1261 = vpack.c.b16 %v1025, %v1021
        %v1262 = vpack.c.b16 %v1026, %v1022
        %v1263 = vpack.c.b16 %v1031, %v1027
        %v1264 = vpack.c.b16 %v1032, %v1028
        %v1265 = vpack.c.b16 %v1033, %v1029
        %v1266 = vpack.c.b16 %v1034, %v1030
        %v1267 = vpack.c.b16 %v1039, %v1035
        %v1268 = vpack.c.b16 %v1040, %v1036
        %v1269 = vpack.c.b16 %v1041, %v1037
        %v1270 = vpack.c.b16 %v1042, %v1038
        %v1271 = vpack.c.b16 %v1047, %v1043
        %v1272 = vpack.c.b16 %v1048, %v1044
        %v1273 = vpack.c.b16 %v1049, %v1045
        %v1274 = vpack.c.b16 %v1050, %v1046
        %v1275 = vpack.c.b16 %v1055, %v1051
        %v1276 = vpack.c.b16 %v1056, %v1052
        %v1277 = vpack.c.b16 %v1057, %v1053
        %v1278 = vpack.c.b16 %v1058, %v1054
        %v1279 = vpack.c.b16 %v1063, %v1059
        %v1280 = vpack.c.b16 %v1064, %v1060
        %v1281 = vpack.c.b16 %v1065, %v1061
        %v1282 = vpack.c.b16 %v1066, %v1062
        %v1283 = vpack.c.b16 %v1071, %v1067
        %v1284 = vpack.c.b16 %v1072, %v1068
        %v1285 = vpack.c.b16 %v1073, %v1069
        %v1286 = vpack.c.b16 %v1074, %v1070
        %v1287 = vpack.c.b16 %v1079, %v1075
        %v1288 = vpack.c.b16 %v1080, %v1076
        %v1289 = vpack.c.b16 %v1081, %v1077
        %v1290 = vpack.c.b16 %v1082, %v1078
        %v1291 = vpack.c.b16 %v1087, %v1083
        %v1292 = vpack.c.b16 %v1088, %v1084
        %v1293 = vpack.c.b16 %v1089, %v1085
        %v1294 = vpack.c.b16 %v1090, %v1086
        %v1295 = vpack.c.b16 %v1095, %v1091
        %v1296 = vpack.c.b16 %v1096, %v1092
        %v1297 = vpack.c.b16 %v1097, %v1093
        %v1298 = vpack.c.b16 %v1098, %v1094
        %v1299 = vpack.c.b16 %v1103, %v1099
        %v1300 = vpack.c.b16 %v1104, %v1100
        %v1301 = vpack.c.b16 %v1105, %v1101
        %v1302 = vpack.c.b16 %v1106, %v1102
        %v1303 = vpack.c.b16 %v1111, %v1107
        %v1304 = vpack.c.b16 %v1112, %v1108
        %v1305 = vpack.c.b16 %v1113, %v1109
        %v1306 = vpack.c.b16 %v1114, %v1110
        %1499 = vmatprep.subr.bf16.mxu0 %v1144
        %1500 = vmatpush1.bf16.msra.mxu0 %v1143
        %1501 = vmatprep.subr.bf16.mxu0 %v1140
        %1502 = vmatpush1.bf16.msra.mxu0 %v1139
        %1503 = vmatprep.subr.bf16.mxu0 %v1136
        %1504 = vmatpush1.bf16.msra.mxu0 %v1135
        %1505 = vmatprep.subr.bf16.mxu0 %v1132
        %1506 = vmatpush1.bf16.msra.mxu0 %v1131
        %1507 = vmatprep.subr.bf16.mxu0 %v1128
        %1508 = vmatpush1.bf16.msra.mxu0 %v1127
        %1509 = vmatprep.subr.bf16.mxu0 %v1124
        %1510 = vmatpush1.bf16.msra.mxu0 %v1123
        %1511 = vmatprep.subr.bf16.mxu0 %v1120
        %1512 = vmatpush1.bf16.msra.mxu0 %v1119
        %1513 = vmatprep.subr.bf16.mxu0 %v1116
        %1514 = vmatpush1.bf16.msra.mxu0 %v1115
        %1515 = vmatprep.subr.bf16.mxu0 %v1176
        %1516 = vmatpush2.bf16.msra.mxu0 %v1175
        %1517 = vmatprep.subr.bf16.mxu0 %v1172
        %1518 = vmatpush2.bf16.msra.mxu0 %v1171
        %1519 = vmatprep.subr.bf16.mxu0 %v1168
        %1520 = vmatpush2.bf16.msra.mxu0 %v1167
        %1521 = vmatprep.subr.bf16.mxu0 %v1164
        %1522 = vmatpush2.bf16.msra.mxu0 %v1163
        %1523 = vmatprep.subr.bf16.mxu0 %v1160
        %1524 = vmatpush2.bf16.msra.mxu0 %v1159
        %1525 = vmatprep.subr.bf16.mxu0 %v1156
        %1526 = vmatpush2.bf16.msra.mxu0 %v1155
        %1527 = vmatprep.subr.bf16.mxu0 %v1152
        %1528 = vmatpush2.bf16.msra.mxu0 %v1151
        %1529 = vmatprep.subr.bf16.mxu0 %v1148
        %1530 = vmatpush2.bf16.msra.mxu0 %v1147
        %1531 = vmatprep.mubr.bf16.mxu0 %v336
        %1532 = vmatmul.mubr.bf16.gmra.mxu0 %v335
        %v1533 = vpop.f32.mrf.mxu0
        %v1534 = vadd.f32 0.0, %v1533
        %v1535 = vpop.f32.mrf.mxu0
        %v1536 = vadd.f32 0.0, %v1535
        %v1537 = vpop.f32.mrf.mxu0
        %v1538 = vadd.f32 0.0, %v1537
        %v1539 = vpop.f32.mrf.mxu0
        %v1540 = vadd.f32 0.0, %v1539
        %1541 = vmatprep.mubr.bf16.mxu0 %v342
        %1542 = vmatmul.mubr.bf16.gmra.mxu0 %v341
        %v1543 = vpop.f32.mrf.mxu0
        %v1544 = vadd.f32 0.0, %v1543
        %v1545 = vpop.f32.mrf.mxu0
        %v1546 = vadd.f32 0.0, %v1545
        %v1547 = vpop.f32.mrf.mxu0
        %v1548 = vadd.f32 0.0, %v1547
        %v1549 = vpop.f32.mrf.mxu0
        %v1550 = vadd.f32 0.0, %v1549
        %1551 = vdwg.mxu0
        %1552 = vmatprep.subr.bf16.mxu0 %v1208
        %1553 = vmatpush1.bf16.msra.mxu0 %v1207
        %1554 = vmatprep.subr.bf16.mxu0 %v1204
        %1555 = vmatpush1.bf16.msra.mxu0 %v1203
        %1556 = vmatprep.subr.bf16.mxu0 %v1200
        %1557 = vmatpush1.bf16.msra.mxu0 %v1199
        %1558 = vmatprep.subr.bf16.mxu0 %v1196
        %1559 = vmatpush1.bf16.msra.mxu0 %v1195
        %1560 = vmatprep.subr.bf16.mxu0 %v1192
        %1561 = vmatpush1.bf16.msra.mxu0 %v1191
        %1562 = vmatprep.subr.bf16.mxu0 %v1188
        %1563 = vmatpush1.bf16.msra.mxu0 %v1187
        %1564 = vmatprep.subr.bf16.mxu0 %v1184
        %1565 = vmatpush1.bf16.msra.mxu0 %v1183
        %1566 = vmatprep.subr.bf16.mxu0 %v1180
        %1567 = vmatpush1.bf16.msra.mxu0 %v1179
        %1568 = vmatprep.subr.bf16.mxu0 %v1240
        %1569 = vmatpush2.bf16.msra.mxu0 %v1239
        %1570 = vmatprep.subr.bf16.mxu0 %v1236
        %1571 = vmatpush2.bf16.msra.mxu0 %v1235
        %1572 = vmatprep.subr.bf16.mxu0 %v1232
        %1573 = vmatpush2.bf16.msra.mxu0 %v1231
        %1574 = vmatprep.subr.bf16.mxu0 %v1228
        %1575 = vmatpush2.bf16.msra.mxu0 %v1227
        %1576 = vmatprep.subr.bf16.mxu0 %v1224
        %1577 = vmatpush2.bf16.msra.mxu0 %v1223
        %1578 = vmatprep.subr.bf16.mxu0 %v1220
        %1579 = vmatpush2.bf16.msra.mxu0 %v1219
        %1580 = vmatprep.subr.bf16.mxu0 %v1216
        %1581 = vmatpush2.bf16.msra.mxu0 %v1215
        %1582 = vmatprep.subr.bf16.mxu0 %v1212
        %1583 = vmatpush2.bf16.msra.mxu0 %v1211
        %1584 = vmatprep.mubr.bf16.mxu0 %v338
        %1585 = vmatmul.mubr.bf16.gmra.mxu0 %v337
        %v1586 = vpop.f32.mrf.mxu0
        %v1587 = vadd.f32 %v1534, %v1586
        %v1588 = vpop.f32.mrf.mxu0
        %v1589 = vadd.f32 %v1536, %v1588
        %v1590 = vpop.f32.mrf.mxu0
        %v1591 = vadd.f32 %v1538, %v1590
        %v1592 = vpop.f32.mrf.mxu0
        %v1593 = vadd.f32 %v1540, %v1592
        %1594 = vmatprep.mubr.bf16.mxu0 %v344
        %1595 = vmatmul.mubr.bf16.gmra.mxu0 %v343
        %v1596 = vpop.f32.mrf.mxu0
        %v1597 = vadd.f32 %v1544, %v1596
        %v1598 = vpop.f32.mrf.mxu0
        %v1599 = vadd.f32 %v1546, %v1598
        %v1600 = vpop.f32.mrf.mxu0
        %v1601 = vadd.f32 %v1548, %v1600
        %v1602 = vpop.f32.mrf.mxu0
        %v1603 = vadd.f32 %v1550, %v1602
        %1604 = vdwg.mxu0
        %1605 = vmatprep.subr.bf16.mxu0 %v1272
        %1606 = vmatpush1.bf16.msra.mxu0 %v1271
        %1607 = vmatprep.subr.bf16.mxu0 %v1268
        %1608 = vmatpush1.bf16.msra.mxu0 %v1267
        %1609 = vmatprep.subr.bf16.mxu0 %v1264
        %1610 = vmatpush1.bf16.msra.mxu0 %v1263
        %1611 = vmatprep.subr.bf16.mxu0 %v1260
        %1612 = vmatpush1.bf16.msra.mxu0 %v1259
        %1613 = vmatprep.subr.bf16.mxu0 %v1256
        %1614 = vmatpush1.bf16.msra.mxu0 %v1255
        %1615 = vmatprep.subr.bf16.mxu0 %v1252
        %1616 = vmatpush1.bf16.msra.mxu0 %v1251
        %1617 = vmatprep.subr.bf16.mxu0 %v1248
        %1618 = vmatpush1.bf16.msra.mxu0 %v1247
        %1619 = vmatprep.subr.bf16.mxu0 %v1244
        %1620 = vmatpush1.bf16.msra.mxu0 %v1243
        %1621 = vmatprep.subr.bf16.mxu0 %v1304
        %1622 = vmatpush2.bf16.msra.mxu0 %v1303
        %1623 = vmatprep.subr.bf16.mxu0 %v1300
        %1624 = vmatpush2.bf16.msra.mxu0 %v1299
        %1625 = vmatprep.subr.bf16.mxu0 %v1296
        %1626 = vmatpush2.bf16.msra.mxu0 %v1295
        %1627 = vmatprep.subr.bf16.mxu0 %v1292
        %1628 = vmatpush2.bf16.msra.mxu0 %v1291
        %1629 = vmatprep.subr.bf16.mxu0 %v1288
        %1630 = vmatpush2.bf16.msra.mxu0 %v1287
        %1631 = vmatprep.subr.bf16.mxu0 %v1284
        %1632 = vmatpush2.bf16.msra.mxu0 %v1283
        %1633 = vmatprep.subr.bf16.mxu0 %v1280
        %1634 = vmatpush2.bf16.msra.mxu0 %v1279
        %1635 = vmatprep.subr.bf16.mxu0 %v1276
        %1636 = vmatpush2.bf16.msra.mxu0 %v1275
        %1637 = vmatprep.mubr.bf16.mxu0 %v340
        %1638 = vmatmul.mubr.bf16.gmra.mxu0 %v339
        %v1639 = vpop.f32.mrf.mxu0
        %v1640 = vadd.f32 %v1587, %v1639
        %v1641 = vpop.f32.mrf.mxu0
        %v1642 = vadd.f32 %v1589, %v1641
        %v1643 = vpop.f32.mrf.mxu0
        %v1644 = vadd.f32 %v1591, %v1643
        %v1645 = vpop.f32.mrf.mxu0
        %v1646 = vadd.f32 %v1593, %v1645
        %1647 = vmatprep.mubr.bf16.mxu0 %v346
        %1648 = vmatmul.mubr.bf16.gmra.mxu0 %v345
        %v1649 = vpop.f32.mrf.mxu0
        %v1650 = vadd.f32 %v1597, %v1649
        %v1651 = vpop.f32.mrf.mxu0
        %v1652 = vadd.f32 %v1599, %v1651
        %v1653 = vpop.f32.mrf.mxu0
        %v1654 = vadd.f32 %v1601, %v1653
        %v1655 = vpop.f32.mrf.mxu0
        %v1656 = vadd.f32 %v1603, %v1655
        %1657 = vdwg.mxu0
        %1658 = vmatprep.subr.bf16.mxu0 %v1146
        %1659 = vmatpush1.bf16.msra.mxu0 %v1145
        %1660 = vmatprep.subr.bf16.mxu0 %v1142
        %1661 = vmatpush1.bf16.msra.mxu0 %v1141
        %1662 = vmatprep.subr.bf16.mxu0 %v1138
        %1663 = vmatpush1.bf16.msra.mxu0 %v1137
        %1664 = vmatprep.subr.bf16.mxu0 %v1134
        %1665 = vmatpush1.bf16.msra.mxu0 %v1133
        %1666 = vmatprep.subr.bf16.mxu0 %v1130
        %1667 = vmatpush1.bf16.msra.mxu0 %v1129
        %1668 = vmatprep.subr.bf16.mxu0 %v1126
        %1669 = vmatpush1.bf16.msra.mxu0 %v1125
        %1670 = vmatprep.subr.bf16.mxu0 %v1122
        %1671 = vmatpush1.bf16.msra.mxu0 %v1121
        %1672 = vmatprep.subr.bf16.mxu0 %v1118
        %1673 = vmatpush1.bf16.msra.mxu0 %v1117
        %1674 = vmatprep.subr.bf16.mxu0 %v1178
        %1675 = vmatpush2.bf16.msra.mxu0 %v1177
        %1676 = vmatprep.subr.bf16.mxu0 %v1174
        %1677 = vmatpush2.bf16.msra.mxu0 %v1173
        %1678 = vmatprep.subr.bf16.mxu0 %v1170
        %1679 = vmatpush2.bf16.msra.mxu0 %v1169
        %1680 = vmatprep.subr.bf16.mxu0 %v1166
        %1681 = vmatpush2.bf16.msra.mxu0 %v1165
        %1682 = vmatprep.subr.bf16.mxu0 %v1162
        %1683 = vmatpush2.bf16.msra.mxu0 %v1161
        %1684 = vmatprep.subr.bf16.mxu0 %v1158
        %1685 = vmatpush2.bf16.msra.mxu0 %v1157
        %1686 = vmatprep.subr.bf16.mxu0 %v1154
        %1687 = vmatpush2.bf16.msra.mxu0 %v1153
        %1688 = vmatprep.subr.bf16.mxu0 %v1150
        %1689 = vmatpush2.bf16.msra.mxu0 %v1149
        %1690 = vmatprep.mubr.bf16.mxu0 %v336
        %1691 = vmatmul.mubr.bf16.gmra.mxu0 %v335
        %v1692 = vpop.f32.mrf.mxu0
        %v1693 = vadd.f32 0.0, %v1692
        %v1694 = vpop.f32.mrf.mxu0
        %v1695 = vadd.f32 0.0, %v1694
        %v1696 = vpop.f32.mrf.mxu0
        %v1697 = vadd.f32 0.0, %v1696
        %v1698 = vpop.f32.mrf.mxu0
        %v1699 = vadd.f32 0.0, %v1698
        %1700 = vmatprep.mubr.bf16.mxu0 %v342
        %1701 = vmatmul.mubr.bf16.gmra.mxu0 %v341
        %v1702 = vpop.f32.mrf.mxu0
        %v1703 = vadd.f32 0.0, %v1702
        %v1704 = vpop.f32.mrf.mxu0
        %v1705 = vadd.f32 0.0, %v1704
        %v1706 = vpop.f32.mrf.mxu0
        %v1707 = vadd.f32 0.0, %v1706
        %v1708 = vpop.f32.mrf.mxu0
        %v1709 = vadd.f32 0.0, %v1708
        %1710 = vdwg.mxu0
        %1711 = vmatprep.subr.bf16.mxu0 %v1210
        %1712 = vmatpush1.bf16.msra.mxu0 %v1209
        %1713 = vmatprep.subr.bf16.mxu0 %v1206
        %1714 = vmatpush1.bf16.msra.mxu0 %v1205
        %1715 = vmatprep.subr.bf16.mxu0 %v1202
        %1716 = vmatpush1.bf16.msra.mxu0 %v1201
        %1717 = vmatprep.subr.bf16.mxu0 %v1198
        %1718 = vmatpush1.bf16.msra.mxu0 %v1197
        %1719 = vmatprep.subr.bf16.mxu0 %v1194
        %1720 = vmatpush1.bf16.msra.mxu0 %v1193
        %1721 = vmatprep.subr.bf16.mxu0 %v1190
        %1722 = vmatpush1.bf16.msra.mxu0 %v1189
        %1723 = vmatprep.subr.bf16.mxu0 %v1186
        %1724 = vmatpush1.bf16.msra.mxu0 %v1185
        %1725 = vmatprep.subr.bf16.mxu0 %v1182
        %1726 = vmatpush1.bf16.msra.mxu0 %v1181
        %1727 = vmatprep.subr.bf16.mxu0 %v1242
        %1728 = vmatpush2.bf16.msra.mxu0 %v1241
        %1729 = vmatprep.subr.bf16.mxu0 %v1238
        %1730 = vmatpush2.bf16.msra.mxu0 %v1237
        %1731 = vmatprep.subr.bf16.mxu0 %v1234
        %1732 = vmatpush2.bf16.msra.mxu0 %v1233
        %1733 = vmatprep.subr.bf16.mxu0 %v1230
        %1734 = vmatpush2.bf16.msra.mxu0 %v1229
        %1735 = vmatprep.subr.bf16.mxu0 %v1226
        %1736 = vmatpush2.bf16.msra.mxu0 %v1225
        %1737 = vmatprep.subr.bf16.mxu0 %v1222
        %1738 = vmatpush2.bf16.msra.mxu0 %v1221
        %1739 = vmatprep.subr.bf16.mxu0 %v1218
        %1740 = vmatpush2.bf16.msra.mxu0 %v1217
        %1741 = vmatprep.subr.bf16.mxu0 %v1214
        %1742 = vmatpush2.bf16.msra.mxu0 %v1213
        %1743 = vmatprep.mubr.bf16.mxu0 %v338
        %1744 = vmatmul.mubr.bf16.gmra.mxu0 %v337
        %v1745 = vpop.f32.mrf.mxu0
        %v1746 = vadd.f32 %v1693, %v1745
        %v1747 = vpop.f32.mrf.mxu0
        %v1748 = vadd.f32 %v1695, %v1747
        %v1749 = vpop.f32.mrf.mxu0
        %v1750 = vadd.f32 %v1697, %v1749
        %v1751 = vpop.f32.mrf.mxu0
        %v1752 = vadd.f32 %v1699, %v1751
        %1753 = vmatprep.mubr.bf16.mxu0 %v344
        %1754 = vmatmul.mubr.bf16.gmra.mxu0 %v343
        %v1755 = vpop.f32.mrf.mxu0
        %v1756 = vadd.f32 %v1703, %v1755
        %v1757 = vpop.f32.mrf.mxu0
        %v1758 = vadd.f32 %v1705, %v1757
        %v1759 = vpop.f32.mrf.mxu0
        %v1760 = vadd.f32 %v1707, %v1759
        %v1761 = vpop.f32.mrf.mxu0
        %v1762 = vadd.f32 %v1709, %v1761
        %1763 = vdwg.mxu0
        %1764 = vmatprep.subr.bf16.mxu0 %v1274
        %1765 = vmatpush1.bf16.msra.mxu0 %v1273
        %1766 = vmatprep.subr.bf16.mxu0 %v1270
        %1767 = vmatpush1.bf16.msra.mxu0 %v1269
        %1768 = vmatprep.subr.bf16.mxu0 %v1266
        %1769 = vmatpush1.bf16.msra.mxu0 %v1265
        %1770 = vmatprep.subr.bf16.mxu0 %v1262
        %1771 = vmatpush1.bf16.msra.mxu0 %v1261
        %1772 = vmatprep.subr.bf16.mxu0 %v1258
        %1773 = vmatpush1.bf16.msra.mxu0 %v1257
        %1774 = vmatprep.subr.bf16.mxu0 %v1254
        %1775 = vmatpush1.bf16.msra.mxu0 %v1253
        %1776 = vmatprep.subr.bf16.mxu0 %v1250
        %1777 = vmatpush1.bf16.msra.mxu0 %v1249
        %1778 = vmatprep.subr.bf16.mxu0 %v1246
        %1779 = vmatpush1.bf16.msra.mxu0 %v1245
        %1780 = vmatprep.subr.bf16.mxu0 %v1306
        %1781 = vmatpush2.bf16.msra.mxu0 %v1305
        %1782 = vmatprep.subr.bf16.mxu0 %v1302
        %1783 = vmatpush2.bf16.msra.mxu0 %v1301
        %1784 = vmatprep.subr.bf16.mxu0 %v1298
        %1785 = vmatpush2.bf16.msra.mxu0 %v1297
        %1786 = vmatprep.subr.bf16.mxu0 %v1294
        %1787 = vmatpush2.bf16.msra.mxu0 %v1293
        %1788 = vmatprep.subr.bf16.mxu0 %v1290
        %1789 = vmatpush2.bf16.msra.mxu0 %v1289
        %1790 = vmatprep.subr.bf16.mxu0 %v1286
        %1791 = vmatpush2.bf16.msra.mxu0 %v1285
        %1792 = vmatprep.subr.bf16.mxu0 %v1282
        %1793 = vmatpush2.bf16.msra.mxu0 %v1281
        %1794 = vmatprep.subr.bf16.mxu0 %v1278
        %1795 = vmatpush2.bf16.msra.mxu0 %v1277
        %1796 = vmatprep.mubr.bf16.mxu0 %v340
        %1797 = vmatmul.mubr.bf16.gmra.mxu0 %v339
        %v1798 = vpop.f32.mrf.mxu0
        %v1799 = vadd.f32 %v1746, %v1798
        %v1800 = vpop.f32.mrf.mxu0
        %v1801 = vadd.f32 %v1748, %v1800
        %v1802 = vpop.f32.mrf.mxu0
        %v1803 = vadd.f32 %v1750, %v1802
        %v1804 = vpop.f32.mrf.mxu0
        %v1805 = vadd.f32 %v1752, %v1804
        %1806 = vmatprep.mubr.bf16.mxu0 %v346
        %1807 = vmatmul.mubr.bf16.gmra.mxu0 %v345
        %v1808 = vpop.f32.mrf.mxu0
        %v1809 = vadd.f32 %v1756, %v1808
        %v1810 = vpop.f32.mrf.mxu0
        %v1811 = vadd.f32 %v1758, %v1810
        %v1812 = vpop.f32.mrf.mxu0
        %v1813 = vadd.f32 %v1760, %v1812
        %v1814 = vpop.f32.mrf.mxu0
        %v1815 = vadd.f32 %v1762, %v1814
        %1816 = vdwg.mxu0
        %v1817 = vadd.f32 %v295, %v1640
        %v1818 = vadd.f32 %v296, %v1642
        %v1819 = vadd.f32 %v297, %v1799
        %v1820 = vadd.f32 %v298, %v1801
        %v1821 = vadd.f32 %v299, %v1644
        %v1822 = vadd.f32 %v300, %v1646
        %v1823 = vadd.f32 %v301, %v1803
        %v1824 = vadd.f32 %v302, %v1805
        %v1825 = vadd.f32 %v303, %v1650
        %v1826 = vadd.f32 %v304, %v1652
        %v1827 = vadd.f32 %v305, %v1809
        %v1828 = vadd.f32 %v306, %v1811
        %v1829 = vadd.f32 %v307, %v1654
        %v1830 = vadd.f32 %v308, %v1656
        %v1831 = vadd.f32 %v309, %v1813
        %v1832 = vadd.f32 %v310, %v1815
        %v1833 = vxor.u32 %v1817, 2147483648
        %v1834 = vxor.u32 %v1821, 2147483648
        %v1835 = vxor.u32 %v1825, 2147483648
        %v1836 = vxor.u32 %v1829, 2147483648
        %v1837 = vmul.f32 %v1833, 1.442695
        %v1838 = vpow.pop %v1837
        %v1839 = vmul.f32 %v1834, 1.442695
        %v1840 = vpow.pop %v1839
        %v1841 = vmul.f32 %v1835, 1.442695
        %v1842 = vpow.pop %v1841
        %v1843 = vmul.f32 %v1836, 1.442695
        %v1844 = vpow.pop %v1843
        %v1845 = vadd.f32 %v1838, 1.0
        %v1846 = vadd.f32 %v1840, 1.0
        %v1847 = vadd.f32 %v1842, 1.0
        %v1848 = vadd.f32 %v1844, 1.0
        %v1849 = vrcp.pop %v1845
        %v1850 = vmul.f32 1.0, %v1849
        %v1851 = vrcp.pop %v1846
        %v1852 = vmul.f32 1.0, %v1851
        %v1853 = vrcp.pop %v1847
        %v1854 = vmul.f32 1.0, %v1853
        %v1855 = vrcp.pop %v1848
        %v1856 = vmul.f32 1.0, %v1855
        %v1857 = vxor.u32 %v1818, 2147483648
        %v1858 = vxor.u32 %v1822, 2147483648
        %v1859 = vxor.u32 %v1826, 2147483648
        %v1860 = vxor.u32 %v1830, 2147483648
        %v1861 = vmul.f32 %v1857, 1.442695
        %v1862 = vpow.pop %v1861
        %v1863 = vmul.f32 %v1858, 1.442695
        %v1864 = vpow.pop %v1863
        %v1865 = vmul.f32 %v1859, 1.442695
        %v1866 = vpow.pop %v1865
        %v1867 = vmul.f32 %v1860, 1.442695
        %v1868 = vpow.pop %v1867
        %v1869 = vadd.f32 %v1862, 1.0
        %v1870 = vadd.f32 %v1864, 1.0
        %v1871 = vadd.f32 %v1866, 1.0
        %v1872 = vadd.f32 %v1868, 1.0
        %v1873 = vrcp.pop %v1869
        %v1874 = vmul.f32 1.0, %v1873
        %v1875 = vrcp.pop %v1870
        %v1876 = vmul.f32 1.0, %v1875
        %v1877 = vrcp.pop %v1871
        %v1878 = vmul.f32 1.0, %v1877
        %v1879 = vrcp.pop %v1872
        %v1880 = vmul.f32 1.0, %v1879
        %v1881 = vtanh.pop %v1819
        %v1882 = vtanh.pop %v1823
        %v1883 = vtanh.pop %v1827
        %v1884 = vtanh.pop %v1831
        %v1885 = vmul.f32 %v1874, %v327
        %v1886 = vmul.f32 %v1876, %v328
        %v1887 = vmul.f32 %v1878, %v329
        %v1888 = vmul.f32 %v1880, %v330
        %v1889 = vmul.f32 %v1850, %v1881
        %v1890 = vmul.f32 %v1852, %v1882
        %v1891 = vmul.f32 %v1854, %v1883
        %v1892 = vmul.f32 %v1856, %v1884
        %v1893 = vadd.f32 %v1885, %v1889
        %v1894 = vadd.f32 %v1886, %v1890
        %v1895 = vadd.f32 %v1887, %v1891
        %v1896 = vadd.f32 %v1888, %v1892
        %1897 = vst [vmem:[#allocation3 + $0x1] sm:$0xff] %v1893
        %1898 = vst [vmem:[#allocation3 + $0x9] sm:$0xff] %v1894
        %1899 = vst [vmem:[#allocation3 + $0x19] sm:$0xff] %v1895
        %1900 = vst [vmem:[#allocation3 + $0x21] sm:$0xff] %v1896
        %v1901 = vld [vmem:[#allocation3] sm:$0xff]
        %v1902 = vld [vmem:[#allocation3 + $0x8] sm:$0xff]
        %v1903 = vld [vmem:[#allocation3 + $0x18] sm:$0xff]
        %v1904 = vld [vmem:[#allocation3 + $0x20] sm:$0xff]
        %v1905 = vld [vmem:[#allocation3 + $0x1] sm:$0xff]
        %v1906 = vld [vmem:[#allocation3 + $0x9] sm:$0xff]
        %v1907 = vld [vmem:[#allocation3 + $0x19] sm:$0xff]
        %v1908 = vld [vmem:[#allocation3 + $0x21] sm:$0xff]
        %v1909 = vld [vmem:[#allocation3 + $0x2] sm:$0xff]
        %v1910 = vld [vmem:[#allocation3 + $0xa] sm:$0xff]
        %v1911 = vld [vmem:[#allocation3 + $0x1a] sm:$0xff]
        %v1912 = vld [vmem:[#allocation3 + $0x22] sm:$0xff]
        %v1913 = vpack.c.bf16 %v1902, %v1901
        %v1914 = vpack.c.bf16 %v1906, %v1905
        %v1915 = vpack.c.bf16 %v1910, %v1909
        %v1916 = vpack.c.bf16 %v1904, %v1903
        %v1917 = vpack.c.bf16 %v1908, %v1907
        %v1918 = vpack.c.bf16 %v1912, %v1911
        %v1919 = vld [vmem:[%s2] sm:$0xf]
        %v1920 = vld [vmem:[%s2 + $0x4] sm:$0xf]
        %v1921 = vld [vmem:[%s2 + $0x8] sm:$0xf]
        %v1922 = vld [vmem:[%s2 + $0xc] sm:$0xf]
        %v1923 = vld [vmem:[%s2 + $0x10] sm:$0xf]
        %v1924 = vld [vmem:[%s2 + $0x14] sm:$0xf]
        %v1925 = vld [vmem:[%s2 + $0x18] sm:$0xf]
        %v1926 = vld [vmem:[%s2 + $0x1c] sm:$0xf]
        %v1927 = vld [vmem:[%s2 + $0x20] sm:$0xf]
        %v1928 = vld [vmem:[%s2 + $0x24] sm:$0xf]
        %v1929 = vld [vmem:[%s2 + $0x28] sm:$0xf]
        %v1930 = vld [vmem:[%s2 + $0x2c] sm:$0xf]
        %v1931 = vld [vmem:[%s2 + $0x30] sm:$0xf]
        %v1932 = vld [vmem:[%s2 + $0x34] sm:$0xf]
        %v1933 = vld [vmem:[%s2 + $0x38] sm:$0xf]
        %v1934 = vld [vmem:[%s2 + $0x3c] sm:$0xf]
        %v1935 = vld [vmem:[%s2 + $0x40] sm:$0xf]
        %v1936 = vld [vmem:[%s2 + $0x44] sm:$0xf]
        %v1937 = vld [vmem:[%s2 + $0x48] sm:$0xf]
        %v1938 = vld [vmem:[%s2 + $0x4c] sm:$0xf]
        %v1939 = vld [vmem:[%s2 + $0x50] sm:$0xf]
        %v1940 = vld [vmem:[%s2 + $0x54] sm:$0xf]
        %v1941 = vld [vmem:[%s2 + $0x58] sm:$0xf]
        %v1942 = vld [vmem:[%s2 + $0x5c] sm:$0xf]
        %v1943 = vld [vmem:[%s2 + $0x60] sm:$0xf]
        %v1944 = vld [vmem:[%s2 + $0x64] sm:$0xf]
        %v1945 = vld [vmem:[%s2 + $0x68] sm:$0xf]
        %v1946 = vld [vmem:[%s2 + $0x6c] sm:$0xf]
        %v1947 = vld [vmem:[%s2 + $0x70] sm:$0xf]
        %v1948 = vld [vmem:[%s2 + $0x74] sm:$0xf]
        %v1949 = vld [vmem:[%s2 + $0x78] sm:$0xf]
        %v1950 = vld [vmem:[%s2 + $0x7c] sm:$0xf]
        %v1951 = vld [vmem:[%s2 + $0x80] sm:$0xf]
        %v1952 = vld [vmem:[%s2 + $0x84] sm:$0xf]
        %v1953 = vld [vmem:[%s2 + $0x88] sm:$0xf]
        %v1954 = vld [vmem:[%s2 + $0x8c] sm:$0xf]
        %v1955 = vld [vmem:[%s2 + $0x90] sm:$0xf]
        %v1956 = vld [vmem:[%s2 + $0x94] sm:$0xf]
        %v1957 = vld [vmem:[%s2 + $0x98] sm:$0xf]
        %v1958 = vld [vmem:[%s2 + $0x9c] sm:$0xf]
        %v1959 = vld [vmem:[%s2 + $0xa0] sm:$0xf]
        %v1960 = vld [vmem:[%s2 + $0xa4] sm:$0xf]
        %v1961 = vld [vmem:[%s2 + $0xa8] sm:$0xf]
        %v1962 = vld [vmem:[%s2 + $0xac] sm:$0xf]
        %v1963 = vld [vmem:[%s2 + $0xb0] sm:$0xf]
        %v1964 = vld [vmem:[%s2 + $0xb4] sm:$0xf]
        %v1965 = vld [vmem:[%s2 + $0xb8] sm:$0xf]
        %v1966 = vld [vmem:[%s2 + $0xbc] sm:$0xf]
        %v2015 = vunpack.c.l.b16 %v1919
        %v2016 = vunpack.c.l.b16 %v1920
        %v2017 = vunpack.c.l.b16 %v1921
        %v2018 = vunpack.c.l.b16 %v1922
        %v2019 = vunpack.c.l.b16 %v1923
        %v2020 = vunpack.c.l.b16 %v1924
        %v2021 = vunpack.c.l.b16 %v1925
        %v2022 = vunpack.c.l.b16 %v1926
        %v2023 = vunpack.c.l.b16 %v1927
        %v2024 = vunpack.c.l.b16 %v1928
        %v2025 = vunpack.c.l.b16 %v1929
        %v2026 = vunpack.c.l.b16 %v1930
        %v2027 = vunpack.c.l.b16 %v1931
        %v2028 = vunpack.c.l.b16 %v1932
        %v2029 = vunpack.c.l.b16 %v1933
        %v2030 = vunpack.c.l.b16 %v1934
        %v2031 = vunpack.c.l.b16 %v1935
        %v2032 = vunpack.c.l.b16 %v1936
        %v2033 = vunpack.c.l.b16 %v1937
        %v2034 = vunpack.c.l.b16 %v1938
        %v2035 = vunpack.c.l.b16 %v1939
        %v2036 = vunpack.c.l.b16 %v1940
        %v2037 = vunpack.c.l.b16 %v1941
        %v2038 = vunpack.c.l.b16 %v1942
        %v2039 = vunpack.c.l.b16 %v1943
        %v2040 = vunpack.c.l.b16 %v1944
        %v2041 = vunpack.c.l.b16 %v1945
        %v2042 = vunpack.c.l.b16 %v1946
        %v2043 = vunpack.c.l.b16 %v1947
        %v2044 = vunpack.c.l.b16 %v1948
        %v2045 = vunpack.c.l.b16 %v1949
        %v2046 = vunpack.c.l.b16 %v1950
        %v2047 = vunpack.c.l.b16 %v1951
        %v2048 = vunpack.c.l.b16 %v1952
        %v2049 = vunpack.c.l.b16 %v1953
        %v2050 = vunpack.c.l.b16 %v1954
        %v2051 = vunpack.c.l.b16 %v1955
        %v2052 = vunpack.c.l.b16 %v1956
        %v2053 = vunpack.c.l.b16 %v1957
        %v2054 = vunpack.c.l.b16 %v1958
        %v2055 = vunpack.c.l.b16 %v1959
        %v2056 = vunpack.c.l.b16 %v1960
        %v2057 = vunpack.c.l.b16 %v1961
        %v2058 = vunpack.c.l.b16 %v1962
        %v2059 = vunpack.c.l.b16 %v1963
        %v2060 = vunpack.c.l.b16 %v1964
        %v2061 = vunpack.c.l.b16 %v1965
        %v2062 = vunpack.c.l.b16 %v1966
        %v2063 = vpack.c.b16 %v2016, %v2015
        %v2064 = vpack.c.b16 %v2018, %v2017
        %v2065 = vpack.c.b16 %v2020, %v2019
        %v2066 = vpack.c.b16 %v2022, %v2021
        %v2067 = vpack.c.b16 %v2024, %v2023
        %v2068 = vpack.c.b16 %v2026, %v2025
        %v2069 = vpack.c.b16 %v2028, %v2027
        %v2070 = vpack.c.b16 %v2030, %v2029
        %v2071 = vpack.c.b16 %v2032, %v2031
        %v2072 = vpack.c.b16 %v2034, %v2033
        %v2073 = vpack.c.b16 %v2036, %v2035
        %v2074 = vpack.c.b16 %v2038, %v2037
        %v2075 = vpack.c.b16 %v2040, %v2039
        %v2076 = vpack.c.b16 %v2042, %v2041
        %v2077 = vpack.c.b16 %v2044, %v2043
        %v2078 = vpack.c.b16 %v2046, %v2045
        %v2079 = vpack.c.b16 %v2048, %v2047
        %v2080 = vpack.c.b16 %v2050, %v2049
        %v2081 = vpack.c.b16 %v2052, %v2051
        %v2082 = vpack.c.b16 %v2054, %v2053
        %v2083 = vpack.c.b16 %v2056, %v2055
        %v2084 = vpack.c.b16 %v2058, %v2057
        %v2085 = vpack.c.b16 %v2060, %v2059
        %v2086 = vpack.c.b16 %v2062, %v2061
        %2111 = vmatprep.subr.bf16.mxu0 0
        %2112 = vmatpush1.bf16.msra.mxu0 %v2070
        %2113 = vmatprep.subr.bf16.mxu0 0
        %2114 = vmatpush1.bf16.msra.mxu0 %v2069
        %2115 = vmatprep.subr.bf16.mxu0 0
        %2116 = vmatpush1.bf16.msra.mxu0 %v2068
        %2117 = vmatprep.subr.bf16.mxu0 0
        %2118 = vmatpush1.bf16.msra.mxu0 %v2067
        %2119 = vmatprep.subr.bf16.mxu0 0
        %2120 = vmatpush1.bf16.msra.mxu0 %v2066
        %2121 = vmatprep.subr.bf16.mxu0 0
        %2122 = vmatpush1.bf16.msra.mxu0 %v2065
        %2123 = vmatprep.subr.bf16.mxu0 0
        %2124 = vmatpush1.bf16.msra.mxu0 %v2064
        %2125 = vmatprep.subr.bf16.mxu0 0
        %2126 = vmatpush1.bf16.msra.mxu0 %v2063
        %2127 = vmatprep.subr.bf16.mxu0 0
        %2128 = vmatpush2.bf16.msra.mxu0 %v2078
        %2129 = vmatprep.subr.bf16.mxu0 0
        %2130 = vmatpush2.bf16.msra.mxu0 %v2077
        %2131 = vmatprep.subr.bf16.mxu0 0
        %2132 = vmatpush2.bf16.msra.mxu0 %v2076
        %2133 = vmatprep.subr.bf16.mxu0 0
        %2134 = vmatpush2.bf16.msra.mxu0 %v2075
        %2135 = vmatprep.subr.bf16.mxu0 0
        %2136 = vmatpush2.bf16.msra.mxu0 %v2074
        %2137 = vmatprep.subr.bf16.mxu0 0
        %2138 = vmatpush2.bf16.msra.mxu0 %v2073
        %2139 = vmatprep.subr.bf16.mxu0 0
        %2140 = vmatpush2.bf16.msra.mxu0 %v2072
        %2141 = vmatprep.subr.bf16.mxu0 0
        %2142 = vmatpush2.bf16.msra.mxu0 %v2071
        %2143 = vmatprep.mubr.bf16.mxu0 %v1914
        %2144 = vmatmul.mubr.bf16.gmra.mxu0 %v1913
        %v2145 = vpop.f32.mrf.mxu0
        %v2146 = vadd.f32 0.0, %v2145
        %v2147 = vpop.f32.mrf.mxu0
        %v2148 = vpop.f32.mrf.mxu0
        %v2149 = vadd.f32 0.0, %v2148
        %v2150 = vpop.f32.mrf.mxu0
        %2151 = vmatprep.mubr.bf16.mxu0 %v1917
        %2152 = vmatmul.mubr.bf16.gmra.mxu0 %v1916
        %v2153 = vpop.f32.mrf.mxu0
        %v2154 = vadd.f32 0.0, %v2153
        %v2155 = vpop.f32.mrf.mxu0
        %v2156 = vpop.f32.mrf.mxu0
        %v2157 = vadd.f32 0.0, %v2156
        %v2158 = vpop.f32.mrf.mxu0
        %2159 = vdwg.mxu0
        %2160 = vmatprep.subr.bf16.mxu0 0
        %2161 = vmatpush1.bf16.msra.mxu0 %v2086
        %2162 = vmatprep.subr.bf16.mxu0 0
        %2163 = vmatpush1.bf16.msra.mxu0 %v2085
        %2164 = vmatprep.subr.bf16.mxu0 0
        %2165 = vmatpush1.bf16.msra.mxu0 %v2084
        %2166 = vmatprep.subr.bf16.mxu0 0
        %2167 = vmatpush1.bf16.msra.mxu0 %v2083
        %2168 = vmatprep.subr.bf16.mxu0 0
        %2169 = vmatpush1.bf16.msra.mxu0 %v2082
        %2170 = vmatprep.subr.bf16.mxu0 0
        %2171 = vmatpush1.bf16.msra.mxu0 %v2081
        %2172 = vmatprep.subr.bf16.mxu0 0
        %2173 = vmatpush1.bf16.msra.mxu0 %v2080
        %2174 = vmatprep.subr.bf16.mxu0 0
        %2175 = vmatpush1.bf16.msra.mxu0 %v2079
        %2176 = vmatprep.subr.bf16.mxu0 0
        %2177 = vmatpush2.bf16.msra.mxu0 0
        %2178 = vmatprep.subr.bf16.mxu0 0
        %2179 = vmatpush2.bf16.msra.mxu0 0
        %2180 = vmatprep.subr.bf16.mxu0 0
        %2181 = vmatpush2.bf16.msra.mxu0 0
        %2182 = vmatprep.subr.bf16.mxu0 0
        %2183 = vmatpush2.bf16.msra.mxu0 0
        %2184 = vmatprep.subr.bf16.mxu0 0
        %2185 = vmatpush2.bf16.msra.mxu0 0
        %2186 = vmatprep.subr.bf16.mxu0 0
        %2187 = vmatpush2.bf16.msra.mxu0 0
        %2188 = vmatprep.subr.bf16.mxu0 0
        %2189 = vmatpush2.bf16.msra.mxu0 0
        %2190 = vmatprep.subr.bf16.mxu0 0
        %2191 = vmatpush2.bf16.msra.mxu0 0
        %2192 = vmatprep.mubr.bf16.mxu0 0
        %2193 = vmatmul.mubr.bf16.gmra.mxu0 %v1915
        %v2194 = vpop.f32.mrf.mxu0
        %v2195 = vadd.f32 %v2146, %v2194
        %v2196 = vpop.f32.mrf.mxu0
        %v2197 = vpop.f32.mrf.mxu0
        %v2198 = vadd.f32 %v2149, %v2197
        %v2199 = vpop.f32.mrf.mxu0
        %2200 = vmatprep.mubr.bf16.mxu0 0
        %2201 = vmatmul.mubr.bf16.gmra.mxu0 %v1918
        %v2202 = vpop.f32.mrf.mxu0
        %v2203 = vadd.f32 %v2154, %v2202
        %v2204 = vpop.f32.mrf.mxu0
        %v2205 = vpop.f32.mrf.mxu0
        %v2206 = vadd.f32 %v2157, %v2205
        %v2207 = vpop.f32.mrf.mxu0
        %2208 = vdwg.mxu0
        %v2209 = vadd.f32 %v1820, %v2195
        %v2210 = vadd.f32 %v1824, %v2198
        %v2211 = vadd.f32 %v1828, %v2203
        %v2212 = vadd.f32 %v1832, %v2206
        %v2213 = vxor.u32 %v2209, 2147483648
        %v2214 = vxor.u32 %v2210, 2147483648
        %v2215 = vxor.u32 %v2211, 2147483648
        %v2216 = vxor.u32 %v2212, 2147483648
        %v2217 = vmul.f32 %v2213, 1.442695
        %v2218 = vpow.pop %v2217
        %v2219 = vmul.f32 %v2214, 1.442695
        %v2220 = vpow.pop %v2219
        %v2221 = vmul.f32 %v2215, 1.442695
        %v2222 = vpow.pop %v2221
        %v2223 = vmul.f32 %v2216, 1.442695
        %v2224 = vpow.pop %v2223
        %v2225 = vadd.f32 %v2218, 1.0
        %v2226 = vadd.f32 %v2220, 1.0
        %v2227 = vadd.f32 %v2222, 1.0
        %v2228 = vadd.f32 %v2224, 1.0
        %v2229 = vrcp.pop %v2225
        %v2230 = vmul.f32 1.0, %v2229
        %v2231 = vrcp.pop %v2226
        %v2232 = vmul.f32 1.0, %v2231
        %v2233 = vrcp.pop %v2227
        %v2234 = vmul.f32 1.0, %v2233
        %v2235 = vrcp.pop %v2228
        %v2236 = vmul.f32 1.0, %v2235
        %v2237 = vtanh.pop %v1893
        %v2238 = vtanh.pop %v1894
        %v2239 = vtanh.pop %v1895
        %v2240 = vtanh.pop %v1896
        %v2241 = vmul.f32 %v2230, %v2237
        %v2242 = vmul.f32 %v2232, %v2238
        %v2243 = vmul.f32 %v2234, %v2239
        %v2244 = vmul.f32 %v2236, %v2240
        %2245 = vst [vmem:[#allocation2 + $0x1] sm:$0xff] %v2241
        %2246 = vst [vmem:[#allocation2 + $0x9] sm:$0xff] %v2242
        %2247 = vst [vmem:[#allocation2 + $0x19] sm:$0xff] %v2243
        %2248 = vst [vmem:[#allocation2 + $0x21] sm:$0xff] %v2244
        %2249 = vst [vmem:[%s274] sm:$0xff] %v2241
        %2250 = vst [vmem:[%s274 + $0x8] sm:$0xff] %v2242
        %2251 = vst [vmem:[%s274 + $0x10] sm:$0xff] %v2243
        %2252 = vst [vmem:[%s274 + $0x18] sm:$0xff] %v2244
        %p2253 = scmp.eq.s32.totalorder %s24, 7
        // Predicated region
        $region37: #{_lambda_.5} parent=31 // pred_check
          %p2254 = pneg %p2253
        $region38: #{_lambda_.5} parent=31 // pred_check_branch
          %2256 = sbr.rel (%p2254) target = $region40
        $region39: #{_lambda_.5} parent=31 // pred_region
          %2257 = vst [vmem:[#allocation4] sm:$0xff] %v2241
          %2258 = vst [vmem:[#allocation4 + $0x8] sm:$0xff] %v2242
          %2259 = vst [vmem:[#allocation4 + $0x10] sm:$0xff] %v2243
          %2260 = vst [vmem:[#allocation4 + $0x18] sm:$0xff] %v2244
          %2261 = vst [vmem:[#allocation6] sm:$0xff] %v1893
          %2262 = vst [vmem:[#allocation6 + $0x8] sm:$0xff] %v1894
          %2263 = vst [vmem:[#allocation6 + $0x10] sm:$0xff] %v1895
          %2264 = vst [vmem:[#allocation6 + $0x18] sm:$0xff] %v1896
        $region40: #{_lambda_.5} parent=31 // pred_fallthru
          _
        %s2265 = smul.u32 2, %s23
        %p2266 = scmp.lt.s32.totalorder %s24, 7
        %s2267 = scalar_select %p2266, %s24, 7
        %p2268 = scmp.lt.s32.totalorder %s2265, 1
        %s2269 = scalar_select %p2268, %s2265, 1
        %s2270 = smul.addr %s2269, 2
        %s2271 = smul.addr %s2267, 4
        %s2272 = sadd.s32 %s2270, %s2271
        %s2273 = smul.addr %s2272, 8
        %s2274 = scalar_lea.vmem %s3, %s2273
        // Predicated region
        $region41: #{_lambda_.5} parent=31 // pred_check
          %p2275 = pneg %p121
        $region42: #{_lambda_.5} parent=31 // pred_check_branch
          %2277 = sbr.rel (%p2275) target = $region44
        $region43: #{_lambda_.5} parent=31 // pred_region
          %s2278 = smul.u32 2, %s23
        $region44: #{_lambda_.5} parent=31 // pred_fallthru
          _
        // Predicated region
        $region45: #{_lambda_.5} parent=31 // pred_check
          %p2279 = pneg %p147
        $region46: #{_lambda_.5} parent=31 // pred_check_branch
          %2281 = sbr.rel (%p2279) target = $region48
        $region47: #{_lambda_.5} parent=31 // pred_region
          %s2282 = smul.u32 2, %s23
          %s2284 = ssub.s32 512, 512
          %2285 = vsyncadd [#allocation5], %s2284
          %s2286 = smul.addr %s2282, 2
          %s2287 = smul.addr %s2286, 128
          %s2288 = scalar_lea.hbm %s4, %s2287
          %s2289 = sshll.u32 [#allocation4], 4
          %s2290 = int_to_ptr.vmem [resolvable:$true] %s2289
          %2295 = dma.vmem_to_hbm [thread:$0]  %s2290, 512, %s2288, [#allocation5], 128, 128, 8
        $region48: #{_lambda_.5} parent=31 // pred_fallthru
          _
        // Predicated region
        $region49: #{_lambda_.5} parent=31 // pred_check
          %p2296 = pneg %p173
        $region50: #{_lambda_.5} parent=31 // pred_check_branch
          %2298 = sbr.rel (%p2296) target = $region52
        $region51: #{_lambda_.5} parent=31 // pred_region
          %s2299 = smul.u32 2, %s23
          %s2301 = ssub.s32 512, 512
          %2302 = vsyncadd [#allocation7], %s2301
          %s2303 = smul.addr %s2299, 2
          %s2304 = smul.addr %s2303, 128
          %s2305 = scalar_lea.hbm %s5, %s2304
          %s2306 = sshll.u32 [#allocation6], 4
          %s2307 = int_to_ptr.vmem [resolvable:$true] %s2306
          %2312 = dma.vmem_to_hbm [thread:$0]  %s2307, 512, %s2305, [#allocation7], 128, 128, 8
        $region52: #{_lambda_.5} parent=31 // pred_fallthru
          _
        // Predicated region
        $region53: #{_lambda_.5} parent=31 // pred_check
          %p2313 = pneg %p147
        $region54: #{_lambda_.5} parent=31 // pred_check_branch
          %2315 = sbr.rel (%p2313) target = $region56
        $region55: #{_lambda_.5} parent=31 // pred_region
          %2316 = dma.done [#allocation5], 512
        $region56: #{_lambda_.5} parent=31 // pred_fallthru
          _
        // Predicated region
        $region57: #{_lambda_.5} parent=31 // pred_check
          %p2317 = pneg %p173
        $region58: #{_lambda_.5} parent=31 // pred_check_branch
          %2319 = sbr.rel (%p2317) target = $region60
        $region59: #{_lambda_.5} parent=31 // pred_region
          %2320 = dma.done [#allocation7], 512
        $region60: #{_lambda_.5} parent=31 // pred_fallthru
          _
      $region32: #{_lambda_.5} parent=5 // pred_fallthru
        _
      %p2321 = scmp.le.s32.totalorder 2, %s14
      // Predicated region
      $region61: #{_lambda_.5} parent=5 // pred_check
        %p2322 = pneg %p2321
      $region62: #{_lambda_.5} parent=5 // pred_check_branch
        %2324 = sbr.rel (%p2322) target = $region64
      $region63: #{_lambda_.5} parent=5 // pred_region
        %s2325 = ssub.s32 %s14, 2
        // Predicated region
        $region65: #{_lambda_.5} parent=63 // pred_check
          %p2326 = pneg %p127
        $region66: #{_lambda_.5} parent=63 // pred_check_branch
          %2328 = sbr.rel (%p2326) target = $region68
        $region67: #{_lambda_.5} parent=63 // pred_region
          %s2329 = smul.u32 2, %s25
          %p2330 = scmp.lt.s32.totalorder %s26, 7
          %s2331 = scalar_select %p2330, %s26, 7
          %p2332 = scmp.lt.s32.totalorder %s2329, 1
          %s2333 = scalar_select %p2332, %s2329, 1
          %s2334 = smul.addr %s2333, 2
          %s2335 = smul.addr %s2331, 4
          %s2336 = sadd.s32 %s2334, %s2335
          %s2337 = smul.addr %s2336, 8
          %s2338 = scalar_lea.vmem %s3, %s2337
        $region68: #{_lambda_.5} parent=63 // pred_fallthru
          _
      $region64: #{_lambda_.5} parent=5 // pred_fallthru
        _
    $region6: #{_lambda_.5} parent=1 // loop_footer
      %s18 = sadd.s32 1, %s14
    $region7: #{_lambda_.5} parent=1 // loop_footer_branch
      %13 = sbr.rel target = $region3
    $region8: #{_lambda_.5} parent=1 // loop_exit
      _
    %2339 = vsyncpa [#allocation5], 1
    %s2340 = scalar_lea.sflag [#allocation5], 1
    %2341 = vsyncpa %s2340, 1
    %2342 = vsyncpa [#allocation7], 1

// kernel: _lambda_.6
$region0: #{_lambda_.6}
  #allocation0 [shape = 'u32[]', space=smem, size = 0x4, offset = 0x4, fixed_abs, tag = 'smem constant byte address 0x4 - core index']
  #allocation1 [shape = 'u32[144,128]{1,0:T(1,128)}', space=vmem, size = 0x12000, scoped, tag = 'internal scratch']
  %s0 = inlined_call_operand.vmem [shape: f32[8,2,18,128], index: 0, kind: input, shape index: {}]
  %s1 = inlined_call_operand.vmem [shape: bf16[384,512], index: 1, kind: input, shape index: {}]
  %s2 = inlined_call_operand.vmem [shape: f32[1,512], index: 2, kind: input, shape index: {}]
  %s3 = inlined_call_operand.vmem [shape: f32[8,2,16,512], index: 3, kind: output, shape index: {}]
  %s4 = sld [smem:[#allocation0]]
  $region22: #{_lambda_.6} parent=0
    _
  %s6 = ssub.s32 1, %s4
  %s7 = scalar_select 0, %s6, %s4
  // Predicated region
  $region2: #{_lambda_.6} parent=0 // pred_check
    _
  $region3: #{_lambda_.6} parent=0 // pred_check_branch
    %9 = sbr.rel (0) target = $region5
  $region4: #{_lambda_.6} parent=0 // pred_region
    _
  $region5: #{_lambda_.6} parent=0 // pred_fallthru
    _
  // Predicated region
  $region6: #{_lambda_.6} parent=0 // pred_check
    _
  $region7: #{_lambda_.6} parent=0 // pred_check_branch
    %11 = sbr.rel (0) target = $region9
  $region8: #{_lambda_.6} parent=0 // pred_region
    _
  $region9: #{_lambda_.6} parent=0 // pred_fallthru
    _
  // Predicated region
  $region10: #{_lambda_.6} parent=0 // pred_check
    _
  $region11: #{_lambda_.6} parent=0 // pred_check_branch
    %13 = sbr.rel (0) target = $region13
  $region12: #{_lambda_.6} parent=0 // pred_region
    _
  $region13: #{_lambda_.6} parent=0 // pred_fallthru
    _
  %v15 = vld [vmem:[%s0] sm:$0xff]
  %v16 = vld [vmem:[%s0 + $0x8] sm:$0xff]
  %v17 = vld [vmem:[%s0 + $0x18] sm:$0xff]
  %v18 = vld [vmem:[%s0 + $0x20] sm:$0xff]
  %v19 = vld [vmem:[%s0 + $0x30] sm:$0xff]
  %v20 = vld [vmem:[%s0 + $0x38] sm:$0xff]
  %v21 = vld [vmem:[%s0 + $0x48] sm:$0xff]
  %v22 = vld [vmem:[%s0 + $0x50] sm:$0xff]
  %v23 = vld [vmem:[%s0 + $0x60] sm:$0xff]
  %v24 = vld [vmem:[%s0 + $0x68] sm:$0xff]
  %v25 = vld [vmem:[%s0 + $0x78] sm:$0xff]
  %v26 = vld [vmem:[%s0 + $0x80] sm:$0xff]
  %v27 = vld [vmem:[%s0 + $0x90] sm:$0xff]
  %v28 = vld [vmem:[%s0 + $0x98] sm:$0xff]
  %v29 = vld [vmem:[%s0 + $0xa8] sm:$0xff]
  %v30 = vld [vmem:[%s0 + $0xb0] sm:$0xff]
  %v31 = vld [vmem:[%s0 + $0xc0] sm:$0xff]
  %v32 = vld [vmem:[%s0 + $0xc8] sm:$0xff]
  %v33 = vld [vmem:[%s0 + $0xd8] sm:$0xff]
  %v34 = vld [vmem:[%s0 + $0xe0] sm:$0xff]
  %v35 = vld [vmem:[%s0 + $0xf0] sm:$0xff]
  %v36 = vld [vmem:[%s0 + $0xf8] sm:$0xff]
  %v37 = vld [vmem:[%s0 + $0x108] sm:$0xff]
  %v38 = vld [vmem:[%s0 + $0x110] sm:$0xff]
  %v39 = vld [vmem:[%s0 + $0x120] sm:$0xff]
  %v40 = vld [vmem:[%s0 + $0x128] sm:$0xff]
  %v41 = vld [vmem:[%s0 + $0x138] sm:$0xff]
  %v42 = vld [vmem:[%s0 + $0x140] sm:$0xff]
  %v43 = vld [vmem:[%s0 + $0x150] sm:$0xff]
  %v44 = vld [vmem:[%s0 + $0x158] sm:$0xff]
  %v45 = vld [vmem:[%s0 + $0x168] sm:$0xff]
  %v46 = vld [vmem:[%s0 + $0x170] sm:$0xff]
  %v47 = vld [vmem:[%s0 + $0x1] sm:$0xff]
  %v48 = vld [vmem:[%s0 + $0x9] sm:$0xff]
  %v49 = vld [vmem:[%s0 + $0x19] sm:$0xff]
  %v50 = vld [vmem:[%s0 + $0x21] sm:$0xff]
  %v51 = vld [vmem:[%s0 + $0x31] sm:$0xff]
  %v52 = vld [vmem:[%s0 + $0x39] sm:$0xff]
  %v53 = vld [vmem:[%s0 + $0x49] sm:$0xff]
  %v54 = vld [vmem:[%s0 + $0x51] sm:$0xff]
  %v55 = vld [vmem:[%s0 + $0x61] sm:$0xff]
  %v56 = vld [vmem:[%s0 + $0x69] sm:$0xff]
  %v57 = vld [vmem:[%s0 + $0x79] sm:$0xff]
  %v58 = vld [vmem:[%s0 + $0x81] sm:$0xff]
  %v59 = vld [vmem:[%s0 + $0x91] sm:$0xff]
  %v60 = vld [vmem:[%s0 + $0x99] sm:$0xff]
  %v61 = vld [vmem:[%s0 + $0xa9] sm:$0xff]
  %v62 = vld [vmem:[%s0 + $0xb1] sm:$0xff]
  %v63 = vld [vmem:[%s0 + $0xc1] sm:$0xff]
  %v64 = vld [vmem:[%s0 + $0xc9] sm:$0xff]
  %v65 = vld [vmem:[%s0 + $0xd9] sm:$0xff]
  %v66 = vld [vmem:[%s0 + $0xe1] sm:$0xff]
  %v67 = vld [vmem:[%s0 + $0xf1] sm:$0xff]
  %v68 = vld [vmem:[%s0 + $0xf9] sm:$0xff]
  %v69 = vld [vmem:[%s0 + $0x109] sm:$0xff]
  %v70 = vld [vmem:[%s0 + $0x111] sm:$0xff]
  %v71 = vld [vmem:[%s0 + $0x121] sm:$0xff]
  %v72 = vld [vmem:[%s0 + $0x129] sm:$0xff]
  %v73 = vld [vmem:[%s0 + $0x139] sm:$0xff]
  %v74 = vld [vmem:[%s0 + $0x141] sm:$0xff]
  %v75 = vld [vmem:[%s0 + $0x151] sm:$0xff]
  %v76 = vld [vmem:[%s0 + $0x159] sm:$0xff]
  %v77 = vld [vmem:[%s0 + $0x169] sm:$0xff]
  %v78 = vld [vmem:[%s0 + $0x171] sm:$0xff]
  %v79 = vld [vmem:[%s0 + $0x2] sm:$0xff]
  %v80 = vld [vmem:[%s0 + $0xa] sm:$0xff]
  %v81 = vld [vmem:[%s0 + $0x1a] sm:$0xff]
  %v82 = vld [vmem:[%s0 + $0x22] sm:$0xff]
  %v83 = vld [vmem:[%s0 + $0x32] sm:$0xff]
  %v84 = vld [vmem:[%s0 + $0x3a] sm:$0xff]
  %v85 = vld [vmem:[%s0 + $0x4a] sm:$0xff]
  %v86 = vld [vmem:[%s0 + $0x52] sm:$0xff]
  %v87 = vld [vmem:[%s0 + $0x62] sm:$0xff]
  %v88 = vld [vmem:[%s0 + $0x6a] sm:$0xff]
  %v89 = vld [vmem:[%s0 + $0x7a] sm:$0xff]
  %v90 = vld [vmem:[%s0 + $0x82] sm:$0xff]
  %v91 = vld [vmem:[%s0 + $0x92] sm:$0xff]
  %v92 = vld [vmem:[%s0 + $0x9a] sm:$0xff]
  %v93 = vld [vmem:[%s0 + $0xaa] sm:$0xff]
  %v94 = vld [vmem:[%s0 + $0xb2] sm:$0xff]
  %v95 = vld [vmem:[%s0 + $0xc2] sm:$0xff]
  %v96 = vld [vmem:[%s0 + $0xca] sm:$0xff]
  %v97 = vld [vmem:[%s0 + $0xda] sm:$0xff]
  %v98 = vld [vmem:[%s0 + $0xe2] sm:$0xff]
  %v99 = vld [vmem:[%s0 + $0xf2] sm:$0xff]
  %v100 = vld [vmem:[%s0 + $0xfa] sm:$0xff]
  %v101 = vld [vmem:[%s0 + $0x10a] sm:$0xff]
  %v102 = vld [vmem:[%s0 + $0x112] sm:$0xff]
  %v103 = vld [vmem:[%s0 + $0x122] sm:$0xff]
  %v104 = vld [vmem:[%s0 + $0x12a] sm:$0xff]
  %v105 = vld [vmem:[%s0 + $0x13a] sm:$0xff]
  %v106 = vld [vmem:[%s0 + $0x142] sm:$0xff]
  %v107 = vld [vmem:[%s0 + $0x152] sm:$0xff]
  %v108 = vld [vmem:[%s0 + $0x15a] sm:$0xff]
  %v109 = vld [vmem:[%s0 + $0x16a] sm:$0xff]
  %v110 = vld [vmem:[%s0 + $0x172] sm:$0xff]
  %v111 = vpack.c.bf16 %v16, %v15
  %v112 = vpack.c.bf16 %v48, %v47
  %v113 = vpack.c.bf16 %v80, %v79
  %v114 = vpack.c.bf16 %v18, %v17
  %v115 = vpack.c.bf16 %v50, %v49
  %v116 = vpack.c.bf16 %v82, %v81
  %v117 = vpack.c.bf16 %v20, %v19
  %v118 = vpack.c.bf16 %v52, %v51
  %v119 = vpack.c.bf16 %v84, %v83
  %v120 = vpack.c.bf16 %v22, %v21
  %v121 = vpack.c.bf16 %v54, %v53
  %v122 = vpack.c.bf16 %v86, %v85
  %v123 = vpack.c.bf16 %v24, %v23
  %v124 = vpack.c.bf16 %v56, %v55
  %v125 = vpack.c.bf16 %v88, %v87
  %v126 = vpack.c.bf16 %v26, %v25
  %v127 = vpack.c.bf16 %v58, %v57
  %v128 = vpack.c.bf16 %v90, %v89
  %v129 = vpack.c.bf16 %v28, %v27
  %v130 = vpack.c.bf16 %v60, %v59
  %v131 = vpack.c.bf16 %v92, %v91
  %v132 = vpack.c.bf16 %v30, %v29
  %v133 = vpack.c.bf16 %v62, %v61
  %v134 = vpack.c.bf16 %v94, %v93
  %v135 = vpack.c.bf16 %v32, %v31
  %v136 = vpack.c.bf16 %v64, %v63
  %v137 = vpack.c.bf16 %v96, %v95
  %v138 = vpack.c.bf16 %v34, %v33
  %v139 = vpack.c.bf16 %v66, %v65
  %v140 = vpack.c.bf16 %v98, %v97
  %v141 = vpack.c.bf16 %v36, %v35
  %v142 = vpack.c.bf16 %v68, %v67
  %v143 = vpack.c.bf16 %v100, %v99
  %v144 = vpack.c.bf16 %v38, %v37
  %v145 = vpack.c.bf16 %v70, %v69
  %v146 = vpack.c.bf16 %v102, %v101
  %v147 = vpack.c.bf16 %v40, %v39
  %v148 = vpack.c.bf16 %v72, %v71
  %v149 = vpack.c.bf16 %v104, %v103
  %v150 = vpack.c.bf16 %v42, %v41
  %v151 = vpack.c.bf16 %v74, %v73
  %v152 = vpack.c.bf16 %v106, %v105
  %v153 = vpack.c.bf16 %v44, %v43
  %v154 = vpack.c.bf16 %v76, %v75
  %v155 = vpack.c.bf16 %v108, %v107
  %v156 = vpack.c.bf16 %v46, %v45
  %v157 = vpack.c.bf16 %v78, %v77
  %v158 = vpack.c.bf16 %v110, %v109
  %v159 = vld [vmem:[%s1] sm:$0xff]
  %v160 = vld [vmem:[%s1 + $0x8] sm:$0xff]
  %v161 = vld [vmem:[%s1 + $0x10] sm:$0xff]
  %v162 = vld [vmem:[%s1 + $0x18] sm:$0xff]
  %v163 = vld [vmem:[%s1 + $0x20] sm:$0xff]
  %v164 = vld [vmem:[%s1 + $0x28] sm:$0xff]
  %v165 = vld [vmem:[%s1 + $0x30] sm:$0xff]
  %v166 = vld [vmem:[%s1 + $0x38] sm:$0xff]
  %v167 = vld [vmem:[%s1 + $0x40] sm:$0xff]
  %v168 = vld [vmem:[%s1 + $0x48] sm:$0xff]
  %v169 = vld [vmem:[%s1 + $0x50] sm:$0xff]
  %v170 = vld [vmem:[%s1 + $0x58] sm:$0xff]
  %v171 = vld [vmem:[%s1 + $0x60] sm:$0xff]
  %v172 = vld [vmem:[%s1 + $0x68] sm:$0xff]
  %v173 = vld [vmem:[%s1 + $0x70] sm:$0xff]
  %v174 = vld [vmem:[%s1 + $0x78] sm:$0xff]
  %v175 = vld [vmem:[%s1 + $0x80] sm:$0xff]
  %v176 = vld [vmem:[%s1 + $0x88] sm:$0xff]
  %v177 = vld [vmem:[%s1 + $0x90] sm:$0xff]
  %v178 = vld [vmem:[%s1 + $0x98] sm:$0xff]
  %v179 = vld [vmem:[%s1 + $0xa0] sm:$0xff]
  %v180 = vld [vmem:[%s1 + $0xa8] sm:$0xff]
  %v181 = vld [vmem:[%s1 + $0xb0] sm:$0xff]
  %v182 = vld [vmem:[%s1 + $0xb8] sm:$0xff]
  %v183 = vld [vmem:[%s1 + $0xc0] sm:$0xff]
  %v184 = vld [vmem:[%s1 + $0xc8] sm:$0xff]
  %v185 = vld [vmem:[%s1 + $0xd0] sm:$0xff]
  %v186 = vld [vmem:[%s1 + $0xd8] sm:$0xff]
  %v187 = vld [vmem:[%s1 + $0xe0] sm:$0xff]
  %v188 = vld [vmem:[%s1 + $0xe8] sm:$0xff]
  %v189 = vld [vmem:[%s1 + $0xf0] sm:$0xff]
  %v190 = vld [vmem:[%s1 + $0xf8] sm:$0xff]
  %v191 = vld [vmem:[%s1 + $0x100] sm:$0xff]
  %v192 = vld [vmem:[%s1 + $0x108] sm:$0xff]
  %v193 = vld [vmem:[%s1 + $0x110] sm:$0xff]
  %v194 = vld [vmem:[%s1 + $0x118] sm:$0xff]
  %v195 = vld [vmem:[%s1 + $0x120] sm:$0xff]
  %v196 = vld [vmem:[%s1 + $0x128] sm:$0xff]
  %v197 = vld [vmem:[%s1 + $0x130] sm:$0xff]
  %v198 = vld [vmem:[%s1 + $0x138] sm:$0xff]
  %v199 = vld [vmem:[%s1 + $0x140] sm:$0xff]
  %v200 = vld [vmem:[%s1 + $0x148] sm:$0xff]
  %v201 = vld [vmem:[%s1 + $0x150] sm:$0xff]
  %v202 = vld [vmem:[%s1 + $0x158] sm:$0xff]
  %v203 = vld [vmem:[%s1 + $0x160] sm:$0xff]
  %v204 = vld [vmem:[%s1 + $0x168] sm:$0xff]
  %v205 = vld [vmem:[%s1 + $0x170] sm:$0xff]
  %v206 = vld [vmem:[%s1 + $0x178] sm:$0xff]
  %v207 = vld [vmem:[%s1 + $0x180] sm:$0xff]
  %v208 = vld [vmem:[%s1 + $0x188] sm:$0xff]
  %v209 = vld [vmem:[%s1 + $0x190] sm:$0xff]
  %v210 = vld [vmem:[%s1 + $0x198] sm:$0xff]
  %v211 = vld [vmem:[%s1 + $0x1a0] sm:$0xff]
  %v212 = vld [vmem:[%s1 + $0x1a8] sm:$0xff]
  %v213 = vld [vmem:[%s1 + $0x1b0] sm:$0xff]
  %v214 = vld [vmem:[%s1 + $0x1b8] sm:$0xff]
  %v215 = vld [vmem:[%s1 + $0x1c0] sm:$0xff]
  %v216 = vld [vmem:[%s1 + $0x1c8] sm:$0xff]
  %v217 = vld [vmem:[%s1 + $0x1d0] sm:$0xff]
  %v218 = vld [vmem:[%s1 + $0x1d8] sm:$0xff]
  %v219 = vld [vmem:[%s1 + $0x1e0] sm:$0xff]
  %v220 = vld [vmem:[%s1 + $0x1e8] sm:$0xff]
  %v221 = vld [vmem:[%s1 + $0x1f0] sm:$0xff]
  %v222 = vld [vmem:[%s1 + $0x1f8] sm:$0xff]
  %v223 = vld [vmem:[%s1 + $0x200] sm:$0xff]
  %v224 = vld [vmem:[%s1 + $0x208] sm:$0xff]
  %v225 = vld [vmem:[%s1 + $0x210] sm:$0xff]
  %v226 = vld [vmem:[%s1 + $0x218] sm:$0xff]
  %v227 = vld [vmem:[%s1 + $0x220] sm:$0xff]
  %v228 = vld [vmem:[%s1 + $0x228] sm:$0xff]
  %v229 = vld [vmem:[%s1 + $0x230] sm:$0xff]
  %v230 = vld [vmem:[%s1 + $0x238] sm:$0xff]
  %v231 = vld [vmem:[%s1 + $0x240] sm:$0xff]
  %v232 = vld [vmem:[%s1 + $0x248] sm:$0xff]
  %v233 = vld [vmem:[%s1 + $0x250] sm:$0xff]
  %v234 = vld [vmem:[%s1 + $0x258] sm:$0xff]
  %v235 = vld [vmem:[%s1 + $0x260] sm:$0xff]
  %v236 = vld [vmem:[%s1 + $0x268] sm:$0xff]
  %v237 = vld [vmem:[%s1 + $0x270] sm:$0xff]
  %v238 = vld [vmem:[%s1 + $0x278] sm:$0xff]
  %v239 = vld [vmem:[%s1 + $0x280] sm:$0xff]
  %v240 = vld [vmem:[%s1 + $0x288] sm:$0xff]
  %v241 = vld [vmem:[%s1 + $0x290] sm:$0xff]
  %v242 = vld [vmem:[%s1 + $0x298] sm:$0xff]
  %v243 = vld [vmem:[%s1 + $0x2a0] sm:$0xff]
  %v244 = vld [vmem:[%s1 + $0x2a8] sm:$0xff]
  %v245 = vld [vmem:[%s1 + $0x2b0] sm:$0xff]
  %v246 = vld [vmem:[%s1 + $0x2b8] sm:$0xff]
  %v247 = vld [vmem:[%s1 + $0x2c0] sm:$0xff]
  %v248 = vld [vmem:[%s1 + $0x2c8] sm:$0xff]
  %v249 = vld [vmem:[%s1 + $0x2d0] sm:$0xff]
  %v250 = vld [vmem:[%s1 + $0x2d8] sm:$0xff]
  %v251 = vld [vmem:[%s1 + $0x2e0] sm:$0xff]
  %v252 = vld [vmem:[%s1 + $0x2e8] sm:$0xff]
  %v253 = vld [vmem:[%s1 + $0x2f0] sm:$0xff]
  %v254 = vld [vmem:[%s1 + $0x2f8] sm:$0xff]
  %v255 = vld [vmem:[%s2] sm:$0xf]
  %v257 = vlaneseq
  %v258 = vshrl.u32 %v257, 7
  %v259 = vsub.s32 0, %v258
  %v260 = vrot.slane %v255, %v259
  %v261 = vlaneseq
  %v262 = vshrl.u32 %v261, 7
  %v263 = vsub.s32 1, %v262
  %v264 = vrot.slane %v255, %v263
  %v265 = vlaneseq
  %v266 = vshrl.u32 %v265, 7
  %v267 = vsub.s32 2, %v266
  %v268 = vrot.slane %v255, %v267
  %v269 = vlaneseq
  %v270 = vshrl.u32 %v269, 7
  %v271 = vsub.s32 3, %v270
  %v272 = vrot.slane %v255, %v271
  %v373 = vunpack.c.l.b16 %v159
  %v374 = vunpack.c.h.b16 %v159
  %v375 = vunpack.c.l.b16 %v160
  %v376 = vunpack.c.h.b16 %v160
  %v377 = vunpack.c.l.b16 %v161
  %v378 = vunpack.c.h.b16 %v161
  %v379 = vunpack.c.l.b16 %v162
  %v380 = vunpack.c.h.b16 %v162
  %v381 = vunpack.c.l.b16 %v163
  %v382 = vunpack.c.h.b16 %v163
  %v383 = vunpack.c.l.b16 %v164
  %v384 = vunpack.c.h.b16 %v164
  %v385 = vunpack.c.l.b16 %v165
  %v386 = vunpack.c.h.b16 %v165
  %v387 = vunpack.c.l.b16 %v166
  %v388 = vunpack.c.h.b16 %v166
  %v389 = vunpack.c.l.b16 %v167
  %v390 = vunpack.c.h.b16 %v167
  %v391 = vunpack.c.l.b16 %v168
  %v392 = vunpack.c.h.b16 %v168
  %v393 = vunpack.c.l.b16 %v169
  %v394 = vunpack.c.h.b16 %v169
  %v395 = vunpack.c.l.b16 %v170
  %v396 = vunpack.c.h.b16 %v170
  %v397 = vunpack.c.l.b16 %v171
  %v398 = vunpack.c.h.b16 %v171
  %v399 = vunpack.c.l.b16 %v172
  %v400 = vunpack.c.h.b16 %v172
  %v401 = vunpack.c.l.b16 %v173
  %v402 = vunpack.c.h.b16 %v173
  %v403 = vunpack.c.l.b16 %v174
  %v404 = vunpack.c.h.b16 %v174
  %v405 = vunpack.c.l.b16 %v175
  %v406 = vunpack.c.h.b16 %v175
  %v407 = vunpack.c.l.b16 %v176
  %v408 = vunpack.c.h.b16 %v176
  %v409 = vunpack.c.l.b16 %v177
  %v410 = vunpack.c.h.b16 %v177
  %v411 = vunpack.c.l.b16 %v178
  %v412 = vunpack.c.h.b16 %v178
  %v413 = vunpack.c.l.b16 %v179
  %v414 = vunpack.c.h.b16 %v179
  %v415 = vunpack.c.l.b16 %v180
  %v416 = vunpack.c.h.b16 %v180
  %v417 = vunpack.c.l.b16 %v181
  %v418 = vunpack.c.h.b16 %v181
  %v419 = vunpack.c.l.b16 %v182
  %v420 = vunpack.c.h.b16 %v182
  %v421 = vunpack.c.l.b16 %v183
  %v422 = vunpack.c.h.b16 %v183
  %v423 = vunpack.c.l.b16 %v184
  %v424 = vunpack.c.h.b16 %v184
  %v425 = vunpack.c.l.b16 %v185
  %v426 = vunpack.c.h.b16 %v185
  %v427 = vunpack.c.l.b16 %v186
  %v428 = vunpack.c.h.b16 %v186
  %v429 = vunpack.c.l.b16 %v187
  %v430 = vunpack.c.h.b16 %v187
  %v431 = vunpack.c.l.b16 %v188
  %v432 = vunpack.c.h.b16 %v188
  %v433 = vunpack.c.l.b16 %v189
  %v434 = vunpack.c.h.b16 %v189
  %v435 = vunpack.c.l.b16 %v190
  %v436 = vunpack.c.h.b16 %v190
  %v437 = vunpack.c.l.b16 %v191
  %v438 = vunpack.c.h.b16 %v191
  %v439 = vunpack.c.l.b16 %v192
  %v440 = vunpack.c.h.b16 %v192
  %v441 = vunpack.c.l.b16 %v193
  %v442 = vunpack.c.h.b16 %v193
  %v443 = vunpack.c.l.b16 %v194
  %v444 = vunpack.c.h.b16 %v194
  %v445 = vunpack.c.l.b16 %v195
  %v446 = vunpack.c.h.b16 %v195
  %v447 = vunpack.c.l.b16 %v196
  %v448 = vunpack.c.h.b16 %v196
  %v449 = vunpack.c.l.b16 %v197
  %v450 = vunpack.c.h.b16 %v197
  %v451 = vunpack.c.l.b16 %v198
  %v452 = vunpack.c.h.b16 %v198
  %v453 = vunpack.c.l.b16 %v199
  %v454 = vunpack.c.h.b16 %v199
  %v455 = vunpack.c.l.b16 %v200
  %v456 = vunpack.c.h.b16 %v200
  %v457 = vunpack.c.l.b16 %v201
  %v458 = vunpack.c.h.b16 %v201
  %v459 = vunpack.c.l.b16 %v202
  %v460 = vunpack.c.h.b16 %v202
  %v461 = vunpack.c.l.b16 %v203
  %v462 = vunpack.c.h.b16 %v203
  %v463 = vunpack.c.l.b16 %v204
  %v464 = vunpack.c.h.b16 %v204
  %v465 = vunpack.c.l.b16 %v205
  %v466 = vunpack.c.h.b16 %v205
  %v467 = vunpack.c.l.b16 %v206
  %v468 = vunpack.c.h.b16 %v206
  %v469 = vunpack.c.l.b16 %v207
  %v470 = vunpack.c.h.b16 %v207
  %v471 = vunpack.c.l.b16 %v208
  %v472 = vunpack.c.h.b16 %v208
  %v473 = vunpack.c.l.b16 %v209
  %v474 = vunpack.c.h.b16 %v209
  %v475 = vunpack.c.l.b16 %v210
  %v476 = vunpack.c.h.b16 %v210
  %v477 = vunpack.c.l.b16 %v211
  %v478 = vunpack.c.h.b16 %v211
  %v479 = vunpack.c.l.b16 %v212
  %v480 = vunpack.c.h.b16 %v212
  %v481 = vunpack.c.l.b16 %v213
  %v482 = vunpack.c.h.b16 %v213
  %v483 = vunpack.c.l.b16 %v214
  %v484 = vunpack.c.h.b16 %v214
  %v485 = vunpack.c.l.b16 %v215
  %v486 = vunpack.c.h.b16 %v215
  %v487 = vunpack.c.l.b16 %v216
  %v488 = vunpack.c.h.b16 %v216
  %v489 = vunpack.c.l.b16 %v217
  %v490 = vunpack.c.h.b16 %v217
  %v491 = vunpack.c.l.b16 %v218
  %v492 = vunpack.c.h.b16 %v218
  %v493 = vunpack.c.l.b16 %v219
  %v494 = vunpack.c.h.b16 %v219
  %v495 = vunpack.c.l.b16 %v220
  %v496 = vunpack.c.h.b16 %v220
  %v497 = vunpack.c.l.b16 %v221
  %v498 = vunpack.c.h.b16 %v221
  %v499 = vunpack.c.l.b16 %v222
  %v500 = vunpack.c.h.b16 %v222
  %v501 = vunpack.c.l.b16 %v223
  %v502 = vunpack.c.h.b16 %v223
  %v503 = vunpack.c.l.b16 %v224
  %v504 = vunpack.c.h.b16 %v224
  %v505 = vunpack.c.l.b16 %v225
  %v506 = vunpack.c.h.b16 %v225
  %v507 = vunpack.c.l.b16 %v226
  %v508 = vunpack.c.h.b16 %v226
  %v509 = vunpack.c.l.b16 %v227
  %v510 = vunpack.c.h.b16 %v227
  %v511 = vunpack.c.l.b16 %v228
  %v512 = vunpack.c.h.b16 %v228
  %v513 = vunpack.c.l.b16 %v229
  %v514 = vunpack.c.h.b16 %v229
  %v515 = vunpack.c.l.b16 %v230
  %v516 = vunpack.c.h.b16 %v230
  %v517 = vunpack.c.l.b16 %v231
  %v518 = vunpack.c.h.b16 %v231
  %v519 = vunpack.c.l.b16 %v232
  %v520 = vunpack.c.h.b16 %v232
  %v521 = vunpack.c.l.b16 %v233
  %v522 = vunpack.c.h.b16 %v233
  %v523 = vunpack.c.l.b16 %v234
  %v524 = vunpack.c.h.b16 %v234
  %v525 = vunpack.c.l.b16 %v235
  %v526 = vunpack.c.h.b16 %v235
  %v527 = vunpack.c.l.b16 %v236
  %v528 = vunpack.c.h.b16 %v236
  %v529 = vunpack.c.l.b16 %v237
  %v530 = vunpack.c.h.b16 %v237
  %v531 = vunpack.c.l.b16 %v238
  %v532 = vunpack.c.h.b16 %v238
  %v533 = vunpack.c.l.b16 %v239
  %v534 = vunpack.c.h.b16 %v239
  %v535 = vunpack.c.l.b16 %v240
  %v536 = vunpack.c.h.b16 %v240
  %v537 = vunpack.c.l.b16 %v241
  %v538 = vunpack.c.h.b16 %v241
  %v539 = vunpack.c.l.b16 %v242
  %v540 = vunpack.c.h.b16 %v242
  %v541 = vunpack.c.l.b16 %v243
  %v542 = vunpack.c.h.b16 %v243
  %v543 = vunpack.c.l.b16 %v244
  %v544 = vunpack.c.h.b16 %v244
  %v545 = vunpack.c.l.b16 %v245
  %v546 = vunpack.c.h.b16 %v245
  %v547 = vunpack.c.l.b16 %v246
  %v548 = vunpack.c.h.b16 %v246
  %v549 = vunpack.c.l.b16 %v247
  %v550 = vunpack.c.h.b16 %v247
  %v551 = vunpack.c.l.b16 %v248
  %v552 = vunpack.c.h.b16 %v248
  %v553 = vunpack.c.l.b16 %v249
  %v554 = vunpack.c.h.b16 %v249
  %v555 = vunpack.c.l.b16 %v250
  %v556 = vunpack.c.h.b16 %v250
  %v557 = vunpack.c.l.b16 %v251
  %v558 = vunpack.c.h.b16 %v251
  %v559 = vunpack.c.l.b16 %v252
  %v560 = vunpack.c.h.b16 %v252
  %v561 = vunpack.c.l.b16 %v253
  %v562 = vunpack.c.h.b16 %v253
  %v563 = vunpack.c.l.b16 %v254
  %v564 = vunpack.c.h.b16 %v254
  %v565 = vpack.c.b16 %v377, %v373
  %v566 = vpack.c.b16 %v378, %v374
  %v567 = vpack.c.b16 %v379, %v375
  %v568 = vpack.c.b16 %v380, %v376
  %v569 = vpack.c.b16 %v385, %v381
  %v570 = vpack.c.b16 %v386, %v382
  %v571 = vpack.c.b16 %v387, %v383
  %v572 = vpack.c.b16 %v388, %v384
  %v573 = vpack.c.b16 %v393, %v389
  %v574 = vpack.c.b16 %v394, %v390
  %v575 = vpack.c.b16 %v395, %v391
  %v576 = vpack.c.b16 %v396, %v392
  %v577 = vpack.c.b16 %v401, %v397
  %v578 = vpack.c.b16 %v402, %v398
  %v579 = vpack.c.b16 %v403, %v399
  %v580 = vpack.c.b16 %v404, %v400
  %v581 = vpack.c.b16 %v409, %v405
  %v582 = vpack.c.b16 %v410, %v406
  %v583 = vpack.c.b16 %v411, %v407
  %v584 = vpack.c.b16 %v412, %v408
  %v585 = vpack.c.b16 %v417, %v413
  %v586 = vpack.c.b16 %v418, %v414
  %v587 = vpack.c.b16 %v419, %v415
  %v588 = vpack.c.b16 %v420, %v416
  %v589 = vpack.c.b16 %v425, %v421
  %v590 = vpack.c.b16 %v426, %v422
  %v591 = vpack.c.b16 %v427, %v423
  %v592 = vpack.c.b16 %v428, %v424
  %v593 = vpack.c.b16 %v433, %v429
  %v594 = vpack.c.b16 %v434, %v430
  %v595 = vpack.c.b16 %v435, %v431
  %v596 = vpack.c.b16 %v436, %v432
  %v597 = vpack.c.b16 %v441, %v437
  %v598 = vpack.c.b16 %v442, %v438
  %v599 = vpack.c.b16 %v443, %v439
  %v600 = vpack.c.b16 %v444, %v440
  %v601 = vpack.c.b16 %v449, %v445
  %v602 = vpack.c.b16 %v450, %v446
  %v603 = vpack.c.b16 %v451, %v447
  %v604 = vpack.c.b16 %v452, %v448
  %v605 = vpack.c.b16 %v457, %v453
  %v606 = vpack.c.b16 %v458, %v454
  %v607 = vpack.c.b16 %v459, %v455
  %v608 = vpack.c.b16 %v460, %v456
  %v609 = vpack.c.b16 %v465, %v461
  %v610 = vpack.c.b16 %v466, %v462
  %v611 = vpack.c.b16 %v467, %v463
  %v612 = vpack.c.b16 %v468, %v464
  %v613 = vpack.c.b16 %v473, %v469
  %v614 = vpack.c.b16 %v474, %v470
  %v615 = vpack.c.b16 %v475, %v471
  %v616 = vpack.c.b16 %v476, %v472
  %v617 = vpack.c.b16 %v481, %v477
  %v618 = vpack.c.b16 %v482, %v478
  %v619 = vpack.c.b16 %v483, %v479
  %v620 = vpack.c.b16 %v484, %v480
  %v621 = vpack.c.b16 %v489, %v485
  %v622 = vpack.c.b16 %v490, %v486
  %v623 = vpack.c.b16 %v491, %v487
  %v624 = vpack.c.b16 %v492, %v488
  %v625 = vpack.c.b16 %v497, %v493
  %v626 = vpack.c.b16 %v498, %v494
  %v627 = vpack.c.b16 %v499, %v495
  %v628 = vpack.c.b16 %v500, %v496
  %v629 = vpack.c.b16 %v505, %v501
  %v630 = vpack.c.b16 %v506, %v502
  %v631 = vpack.c.b16 %v507, %v503
  %v632 = vpack.c.b16 %v508, %v504
  %v633 = vpack.c.b16 %v513, %v509
  %v634 = vpack.c.b16 %v514, %v510
  %v635 = vpack.c.b16 %v515, %v511
  %v636 = vpack.c.b16 %v516, %v512
  %v637 = vpack.c.b16 %v521, %v517
  %v638 = vpack.c.b16 %v522, %v518
  %v639 = vpack.c.b16 %v523, %v519
  %v640 = vpack.c.b16 %v524, %v520
  %v641 = vpack.c.b16 %v529, %v525
  %v642 = vpack.c.b16 %v530, %v526
  %v643 = vpack.c.b16 %v531, %v527
  %v644 = vpack.c.b16 %v532, %v528
  %v645 = vpack.c.b16 %v537, %v533
  %v646 = vpack.c.b16 %v538, %v534
  %v647 = vpack.c.b16 %v539, %v535
  %v648 = vpack.c.b16 %v540, %v536
  %v649 = vpack.c.b16 %v545, %v541
  %v650 = vpack.c.b16 %v546, %v542
  %v651 = vpack.c.b16 %v547, %v543
  %v652 = vpack.c.b16 %v548, %v544
  %v653 = vpack.c.b16 %v553, %v549
  %v654 = vpack.c.b16 %v554, %v550
  %v655 = vpack.c.b16 %v555, %v551
  %v656 = vpack.c.b16 %v556, %v552
  %v657 = vpack.c.b16 %v561, %v557
  %v658 = vpack.c.b16 %v562, %v558
  %v659 = vpack.c.b16 %v563, %v559
  %v660 = vpack.c.b16 %v564, %v560
  %757 = vmatprep.subr.bf16.mxu0 %v594
  %758 = vmatpush1.bf16.msra.mxu0 %v593
  %759 = vmatprep.subr.bf16.mxu0 %v590
  %760 = vmatpush1.bf16.msra.mxu0 %v589
  %761 = vmatprep.subr.bf16.mxu0 %v586
  %762 = vmatpush1.bf16.msra.mxu0 %v585
  %763 = vmatprep.subr.bf16.mxu0 %v582
  %764 = vmatpush1.bf16.msra.mxu0 %v581
  %765 = vmatprep.subr.bf16.mxu0 %v578
  %766 = vmatpush1.bf16.msra.mxu0 %v577
  %767 = vmatprep.subr.bf16.mxu0 %v574
  %768 = vmatpush1.bf16.msra.mxu0 %v573
  %769 = vmatprep.subr.bf16.mxu0 %v570
  %770 = vmatpush1.bf16.msra.mxu0 %v569
  %771 = vmatprep.subr.bf16.mxu0 %v566
  %772 = vmatpush1.bf16.msra.mxu0 %v565
  %773 = vmatprep.subr.bf16.mxu0 %v626
  %774 = vmatpush2.bf16.msra.mxu0 %v625
  %775 = vmatprep.subr.bf16.mxu0 %v622
  %776 = vmatpush2.bf16.msra.mxu0 %v621
  %777 = vmatprep.subr.bf16.mxu0 %v618
  %778 = vmatpush2.bf16.msra.mxu0 %v617
  %779 = vmatprep.subr.bf16.mxu0 %v614
  %780 = vmatpush2.bf16.msra.mxu0 %v613
  %781 = vmatprep.subr.bf16.mxu0 %v610
  %782 = vmatpush2.bf16.msra.mxu0 %v609
  %783 = vmatprep.subr.bf16.mxu0 %v606
  %784 = vmatpush2.bf16.msra.mxu0 %v605
  %785 = vmatprep.subr.bf16.mxu0 %v602
  %786 = vmatpush2.bf16.msra.mxu0 %v601
  %787 = vmatprep.subr.bf16.mxu0 %v598
  %788 = vmatpush2.bf16.msra.mxu0 %v597
  %789 = vmatprep.mubr.bf16.mxu0 %v112
  %790 = vmatmul.mubr.bf16.gmra.mxu0 %v111
  %v791 = vpop.f32.mrf.mxu0
  %v792 = vadd.f32 %v260, %v791
  %v793 = vpop.f32.mrf.mxu0
  %v794 = vadd.f32 %v264, %v793
  %v795 = vpop.f32.mrf.mxu0
  %v796 = vadd.f32 %v260, %v795
  %v797 = vpop.f32.mrf.mxu0
  %v798 = vadd.f32 %v264, %v797
  %799 = vmatprep.mubr.bf16.mxu0 %v115
  %800 = vmatmul.mubr.bf16.gmra.mxu0 %v114
  %v801 = vpop.f32.mrf.mxu0
  %v802 = vadd.f32 %v260, %v801
  %v803 = vpop.f32.mrf.mxu0
  %v804 = vadd.f32 %v264, %v803
  %v805 = vpop.f32.mrf.mxu0
  %v806 = vadd.f32 %v260, %v805
  %v807 = vpop.f32.mrf.mxu0
  %v808 = vadd.f32 %v264, %v807
  %809 = vmatprep.mubr.bf16.mxu0 %v118
  %810 = vmatmul.mubr.bf16.gmra.mxu0 %v117
  %v811 = vpop.f32.mrf.mxu0
  %v812 = vadd.f32 %v260, %v811
  %v813 = vpop.f32.mrf.mxu0
  %v814 = vadd.f32 %v264, %v813
  %v815 = vpop.f32.mrf.mxu0
  %v816 = vadd.f32 %v260, %v815
  %v817 = vpop.f32.mrf.mxu0
  %v818 = vadd.f32 %v264, %v817
  %819 = vmatprep.mubr.bf16.mxu0 %v121
  %820 = vmatmul.mubr.bf16.gmra.mxu0 %v120
  %v821 = vpop.f32.mrf.mxu0
  %v822 = vadd.f32 %v260, %v821
  %v823 = vpop.f32.mrf.mxu0
  %v824 = vadd.f32 %v264, %v823
  %v825 = vpop.f32.mrf.mxu0
  %v826 = vadd.f32 %v260, %v825
  %v827 = vpop.f32.mrf.mxu0
  %v828 = vadd.f32 %v264, %v827
  %829 = vmatprep.mubr.bf16.mxu0 %v124
  %830 = vmatmul.mubr.bf16.gmra.mxu0 %v123
  %v831 = vpop.f32.mrf.mxu0
  %v832 = vadd.f32 %v260, %v831
  %v833 = vpop.f32.mrf.mxu0
  %v834 = vadd.f32 %v264, %v833
  %v835 = vpop.f32.mrf.mxu0
  %v836 = vadd.f32 %v260, %v835
  %v837 = vpop.f32.mrf.mxu0
  %v838 = vadd.f32 %v264, %v837
  %839 = vmatprep.mubr.bf16.mxu0 %v127
  %840 = vmatmul.mubr.bf16.gmra.mxu0 %v126
  %v841 = vpop.f32.mrf.mxu0
  %v842 = vadd.f32 %v260, %v841
  %v843 = vpop.f32.mrf.mxu0
  %v844 = vadd.f32 %v264, %v843
  %v845 = vpop.f32.mrf.mxu0
  %v846 = vadd.f32 %v260, %v845
  %v847 = vpop.f32.mrf.mxu0
  %v848 = vadd.f32 %v264, %v847
  %849 = vmatprep.mubr.bf16.mxu0 %v130
  %850 = vmatmul.mubr.bf16.gmra.mxu0 %v129
  %v851 = vpop.f32.mrf.mxu0
  %v852 = vadd.f32 %v260, %v851
  %v853 = vpop.f32.mrf.mxu0
  %v854 = vadd.f32 %v264, %v853
  %v855 = vpop.f32.mrf.mxu0
  %v856 = vadd.f32 %v260, %v855
  %v857 = vpop.f32.mrf.mxu0
  %v858 = vadd.f32 %v264, %v857
  %859 = vmatprep.mubr.bf16.mxu0 %v133
  %860 = vmatmul.mubr.bf16.gmra.mxu0 %v132
  %v861 = vpop.f32.mrf.mxu0
  %v862 = vadd.f32 %v260, %v861
  %v863 = vpop.f32.mrf.mxu0
  %v864 = vadd.f32 %v264, %v863
  %v865 = vpop.f32.mrf.mxu0
  %v866 = vadd.f32 %v260, %v865
  %v867 = vpop.f32.mrf.mxu0
  %v868 = vadd.f32 %v264, %v867
  %869 = vmatprep.mubr.bf16.mxu0 %v136
  %870 = vmatmul.mubr.bf16.gmra.mxu0 %v135
  %v871 = vpop.f32.mrf.mxu0
  %v872 = vadd.f32 %v260, %v871
  %v873 = vpop.f32.mrf.mxu0
  %v874 = vadd.f32 %v264, %v873
  %v875 = vpop.f32.mrf.mxu0
  %v876 = vadd.f32 %v260, %v875
  %v877 = vpop.f32.mrf.mxu0
  %v878 = vadd.f32 %v264, %v877
  %879 = vmatprep.mubr.bf16.mxu0 %v139
  %880 = vmatmul.mubr.bf16.gmra.mxu0 %v138
  %v881 = vpop.f32.mrf.mxu0
  %v882 = vadd.f32 %v260, %v881
  %v883 = vpop.f32.mrf.mxu0
  %v884 = vadd.f32 %v264, %v883
  %v885 = vpop.f32.mrf.mxu0
  %v886 = vadd.f32 %v260, %v885
  %v887 = vpop.f32.mrf.mxu0
  %v888 = vadd.f32 %v264, %v887
  %889 = vmatprep.mubr.bf16.mxu0 %v142
  %890 = vmatmul.mubr.bf16.gmra.mxu0 %v141
  %v891 = vpop.f32.mrf.mxu0
  %v892 = vadd.f32 %v260, %v891
  %v893 = vpop.f32.mrf.mxu0
  %v894 = vadd.f32 %v264, %v893
  %v895 = vpop.f32.mrf.mxu0
  %v896 = vadd.f32 %v260, %v895
  %v897 = vpop.f32.mrf.mxu0
  %v898 = vadd.f32 %v264, %v897
  %899 = vmatprep.mubr.bf16.mxu0 %v145
  %900 = vmatmul.mubr.bf16.gmra.mxu0 %v144
  %v901 = vpop.f32.mrf.mxu0
  %v902 = vadd.f32 %v260, %v901
  %v903 = vpop.f32.mrf.mxu0
  %v904 = vadd.f32 %v264, %v903
  %v905 = vpop.f32.mrf.mxu0
  %v906 = vadd.f32 %v260, %v905
  %v907 = vpop.f32.mrf.mxu0
  %v908 = vadd.f32 %v264, %v907
  %909 = vmatprep.mubr.bf16.mxu0 %v148
  %910 = vmatmul.mubr.bf16.gmra.mxu0 %v147
  %v911 = vpop.f32.mrf.mxu0
  %v912 = vadd.f32 %v260, %v911
  %v913 = vpop.f32.mrf.mxu0
  %v914 = vadd.f32 %v264, %v913
  %v915 = vpop.f32.mrf.mxu0
  %v916 = vadd.f32 %v260, %v915
  %v917 = vpop.f32.mrf.mxu0
  %v918 = vadd.f32 %v264, %v917
  %919 = vmatprep.mubr.bf16.mxu0 %v151
  %920 = vmatmul.mubr.bf16.gmra.mxu0 %v150
  %v921 = vpop.f32.mrf.mxu0
  %v922 = vadd.f32 %v260, %v921
  %v923 = vpop.f32.mrf.mxu0
  %v924 = vadd.f32 %v264, %v923
  %v925 = vpop.f32.mrf.mxu0
  %v926 = vadd.f32 %v260, %v925
  %v927 = vpop.f32.mrf.mxu0
  %v928 = vadd.f32 %v264, %v927
  %929 = vmatprep.mubr.bf16.mxu0 %v154
  %930 = vmatmul.mubr.bf16.gmra.mxu0 %v153
  %v931 = vpop.f32.mrf.mxu0
  %v932 = vadd.f32 %v260, %v931
  %v933 = vpop.f32.mrf.mxu0
  %v934 = vadd.f32 %v264, %v933
  %v935 = vpop.f32.mrf.mxu0
  %v936 = vadd.f32 %v260, %v935
  %v937 = vpop.f32.mrf.mxu0
  %v938 = vadd.f32 %v264, %v937
  %939 = vmatprep.mubr.bf16.mxu0 %v157
  %940 = vmatmul.mubr.bf16.gmra.mxu0 %v156
  %v941 = vpop.f32.mrf.mxu0
  %v942 = vadd.f32 %v260, %v941
  %v943 = vpop.f32.mrf.mxu0
  %v944 = vadd.f32 %v264, %v943
  %v945 = vpop.f32.mrf.mxu0
  %v946 = vadd.f32 %v260, %v945
  %v947 = vpop.f32.mrf.mxu0
  %v948 = vadd.f32 %v264, %v947
  %949 = vdwg.mxu0
  %950 = vmatprep.subr.bf16.mxu0 %v658
  %951 = vmatpush1.bf16.msra.mxu0 %v657
  %952 = vmatprep.subr.bf16.mxu0 %v654
  %953 = vmatpush1.bf16.msra.mxu0 %v653
  %954 = vmatprep.subr.bf16.mxu0 %v650
  %955 = vmatpush1.bf16.msra.mxu0 %v649
  %956 = vmatprep.subr.bf16.mxu0 %v646
  %957 = vmatpush1.bf16.msra.mxu0 %v645
  %958 = vmatprep.subr.bf16.mxu0 %v642
  %959 = vmatpush1.bf16.msra.mxu0 %v641
  %960 = vmatprep.subr.bf16.mxu0 %v638
  %961 = vmatpush1.bf16.msra.mxu0 %v637
  %962 = vmatprep.subr.bf16.mxu0 %v634
  %963 = vmatpush1.bf16.msra.mxu0 %v633
  %964 = vmatprep.subr.bf16.mxu0 %v630
  %965 = vmatpush1.bf16.msra.mxu0 %v629
  %966 = vmatprep.subr.bf16.mxu0 0
  %967 = vmatpush2.bf16.msra.mxu0 0
  %968 = vmatprep.subr.bf16.mxu0 0
  %969 = vmatpush2.bf16.msra.mxu0 0
  %970 = vmatprep.subr.bf16.mxu0 0
  %971 = vmatpush2.bf16.msra.mxu0 0
  %972 = vmatprep.subr.bf16.mxu0 0
  %973 = vmatpush2.bf16.msra.mxu0 0
  %974 = vmatprep.subr.bf16.mxu0 0
  %975 = vmatpush2.bf16.msra.mxu0 0
  %976 = vmatprep.subr.bf16.mxu0 0
  %977 = vmatpush2.bf16.msra.mxu0 0
  %978 = vmatprep.subr.bf16.mxu0 0
  %979 = vmatpush2.bf16.msra.mxu0 0
  %980 = vmatprep.subr.bf16.mxu0 0
  %981 = vmatpush2.bf16.msra.mxu0 0
  %982 = vmatprep.mubr.bf16.mxu0 0
  %983 = vmatmul.mubr.bf16.gmra.mxu0 %v113
  %v984 = vpop.f32.mrf.mxu0
  %v985 = vadd.f32 %v792, %v984
  %v986 = vpop.f32.mrf.mxu0
  %v987 = vadd.f32 %v794, %v986
  %v988 = vpop.f32.mrf.mxu0
  %v989 = vadd.f32 %v796, %v988
  %v990 = vpop.f32.mrf.mxu0
  %v991 = vadd.f32 %v798, %v990
  %992 = vmatprep.mubr.bf16.mxu0 0
  %993 = vmatmul.mubr.bf16.gmra.mxu0 %v116
  %v994 = vpop.f32.mrf.mxu0
  %v995 = vadd.f32 %v802, %v994
  %v996 = vpop.f32.mrf.mxu0
  %v997 = vadd.f32 %v804, %v996
  %v998 = vpop.f32.mrf.mxu0
  %v999 = vadd.f32 %v806, %v998
  %v1000 = vpop.f32.mrf.mxu0
  %v1001 = vadd.f32 %v808, %v1000
  %1002 = vmatprep.mubr.bf16.mxu0 0
  %1003 = vmatmul.mubr.bf16.gmra.mxu0 %v119
  %v1004 = vpop.f32.mrf.mxu0
  %v1005 = vadd.f32 %v812, %v1004
  %v1006 = vpop.f32.mrf.mxu0
  %v1007 = vadd.f32 %v814, %v1006
  %v1008 = vpop.f32.mrf.mxu0
  %v1009 = vadd.f32 %v816, %v1008
  %v1010 = vpop.f32.mrf.mxu0
  %v1011 = vadd.f32 %v818, %v1010
  %1012 = vmatprep.mubr.bf16.mxu0 0
  %1013 = vmatmul.mubr.bf16.gmra.mxu0 %v122
  %v1014 = vpop.f32.mrf.mxu0
  %v1015 = vadd.f32 %v822, %v1014
  %v1016 = vpop.f32.mrf.mxu0
  %v1017 = vadd.f32 %v824, %v1016
  %v1018 = vpop.f32.mrf.mxu0
  %v1019 = vadd.f32 %v826, %v1018
  %v1020 = vpop.f32.mrf.mxu0
  %v1021 = vadd.f32 %v828, %v1020
  %1022 = vmatprep.mubr.bf16.mxu0 0
  %1023 = vmatmul.mubr.bf16.gmra.mxu0 %v125
  %v1024 = vpop.f32.mrf.mxu0
  %v1025 = vadd.f32 %v832, %v1024
  %v1026 = vpop.f32.mrf.mxu0
  %v1027 = vadd.f32 %v834, %v1026
  %v1028 = vpop.f32.mrf.mxu0
  %v1029 = vadd.f32 %v836, %v1028
  %v1030 = vpop.f32.mrf.mxu0
  %v1031 = vadd.f32 %v838, %v1030
  %1032 = vmatprep.mubr.bf16.mxu0 0
  %1033 = vmatmul.mubr.bf16.gmra.mxu0 %v128
  %v1034 = vpop.f32.mrf.mxu0
  %v1035 = vadd.f32 %v842, %v1034
  %v1036 = vpop.f32.mrf.mxu0
  %v1037 = vadd.f32 %v844, %v1036
  %v1038 = vpop.f32.mrf.mxu0
  %v1039 = vadd.f32 %v846, %v1038
  %v1040 = vpop.f32.mrf.mxu0
  %v1041 = vadd.f32 %v848, %v1040
  %1042 = vmatprep.mubr.bf16.mxu0 0
  %1043 = vmatmul.mubr.bf16.gmra.mxu0 %v131
  %v1044 = vpop.f32.mrf.mxu0
  %v1045 = vadd.f32 %v852, %v1044
  %v1046 = vpop.f32.mrf.mxu0
  %v1047 = vadd.f32 %v854, %v1046
  %v1048 = vpop.f32.mrf.mxu0
  %v1049 = vadd.f32 %v856, %v1048
  %v1050 = vpop.f32.mrf.mxu0
  %v1051 = vadd.f32 %v858, %v1050
  %1052 = vmatprep.mubr.bf16.mxu0 0
  %1053 = vmatmul.mubr.bf16.gmra.mxu0 %v134
  %v1054 = vpop.f32.mrf.mxu0
  %v1055 = vadd.f32 %v862, %v1054
  %v1056 = vpop.f32.mrf.mxu0
  %v1057 = vadd.f32 %v864, %v1056
  %v1058 = vpop.f32.mrf.mxu0
  %v1059 = vadd.f32 %v866, %v1058
  %v1060 = vpop.f32.mrf.mxu0
  %v1061 = vadd.f32 %v868, %v1060
  %1062 = vmatprep.mubr.bf16.mxu0 0
  %1063 = vmatmul.mubr.bf16.gmra.mxu0 %v137
  %v1064 = vpop.f32.mrf.mxu0
  %v1065 = vadd.f32 %v872, %v1064
  %v1066 = vpop.f32.mrf.mxu0
  %v1067 = vadd.f32 %v874, %v1066
  %v1068 = vpop.f32.mrf.mxu0
  %v1069 = vadd.f32 %v876, %v1068
  %v1070 = vpop.f32.mrf.mxu0
  %v1071 = vadd.f32 %v878, %v1070
  %1072 = vmatprep.mubr.bf16.mxu0 0
  %1073 = vmatmul.mubr.bf16.gmra.mxu0 %v140
  %v1074 = vpop.f32.mrf.mxu0
  %v1075 = vadd.f32 %v882, %v1074
  %v1076 = vpop.f32.mrf.mxu0
  %v1077 = vadd.f32 %v884, %v1076
  %v1078 = vpop.f32.mrf.mxu0
  %v1079 = vadd.f32 %v886, %v1078
  %v1080 = vpop.f32.mrf.mxu0
  %v1081 = vadd.f32 %v888, %v1080
  %1082 = vmatprep.mubr.bf16.mxu0 0
  %1083 = vmatmul.mubr.bf16.gmra.mxu0 %v143
  %v1084 = vpop.f32.mrf.mxu0
  %v1085 = vadd.f32 %v892, %v1084
  %v1086 = vpop.f32.mrf.mxu0
  %v1087 = vadd.f32 %v894, %v1086
  %v1088 = vpop.f32.mrf.mxu0
  %v1089 = vadd.f32 %v896, %v1088
  %v1090 = vpop.f32.mrf.mxu0
  %v1091 = vadd.f32 %v898, %v1090
  %1092 = vmatprep.mubr.bf16.mxu0 0
  %1093 = vmatmul.mubr.bf16.gmra.mxu0 %v146
  %v1094 = vpop.f32.mrf.mxu0
  %v1095 = vadd.f32 %v902, %v1094
  %v1096 = vpop.f32.mrf.mxu0
  %v1097 = vadd.f32 %v904, %v1096
  %v1098 = vpop.f32.mrf.mxu0
  %v1099 = vadd.f32 %v906, %v1098
  %v1100 = vpop.f32.mrf.mxu0
  %v1101 = vadd.f32 %v908, %v1100
  %1102 = vmatprep.mubr.bf16.mxu0 0
  %1103 = vmatmul.mubr.bf16.gmra.mxu0 %v149
  %v1104 = vpop.f32.mrf.mxu0
  %v1105 = vadd.f32 %v912, %v1104
  %v1106 = vpop.f32.mrf.mxu0
  %v1107 = vadd.f32 %v914, %v1106
  %v1108 = vpop.f32.mrf.mxu0
  %v1109 = vadd.f32 %v916, %v1108
  %v1110 = vpop.f32.mrf.mxu0
  %v1111 = vadd.f32 %v918, %v1110
  %1112 = vmatprep.mubr.bf16.mxu0 0
  %1113 = vmatmul.mubr.bf16.gmra.mxu0 %v152
  %v1114 = vpop.f32.mrf.mxu0
  %v1115 = vadd.f32 %v922, %v1114
  %v1116 = vpop.f32.mrf.mxu0
  %v1117 = vadd.f32 %v924, %v1116
  %v1118 = vpop.f32.mrf.mxu0
  %v1119 = vadd.f32 %v926, %v1118
  %v1120 = vpop.f32.mrf.mxu0
  %v1121 = vadd.f32 %v928, %v1120
  %1122 = vmatprep.mubr.bf16.mxu0 0
  %1123 = vmatmul.mubr.bf16.gmra.mxu0 %v155
  %v1124 = vpop.f32.mrf.mxu0
  %v1125 = vadd.f32 %v932, %v1124
  %v1126 = vpop.f32.mrf.mxu0
  %v1127 = vadd.f32 %v934, %v1126
  %v1128 = vpop.f32.mrf.mxu0
  %v1129 = vadd.f32 %v936, %v1128
  %v1130 = vpop.f32.mrf.mxu0
  %v1131 = vadd.f32 %v938, %v1130
  %1132 = vmatprep.mubr.bf16.mxu0 0
  %1133 = vmatmul.mubr.bf16.gmra.mxu0 %v158
  %v1134 = vpop.f32.mrf.mxu0
  %v1135 = vadd.f32 %v942, %v1134
  %v1136 = vpop.f32.mrf.mxu0
  %v1137 = vadd.f32 %v944, %v1136
  %v1138 = vpop.f32.mrf.mxu0
  %v1139 = vadd.f32 %v946, %v1138
  %v1140 = vpop.f32.mrf.mxu0
  %v1141 = vadd.f32 %v948, %v1140
  %1142 = vdwg.mxu0
  %1143 = vmatprep.subr.bf16.mxu0 %v596
  %1144 = vmatpush1.bf16.msra.mxu0 %v595
  %1145 = vmatprep.subr.bf16.mxu0 %v592
  %1146 = vmatpush1.bf16.msra.mxu0 %v591
  %1147 = vmatprep.subr.bf16.mxu0 %v588
  %1148 = vmatpush1.bf16.msra.mxu0 %v587
  %1149 = vmatprep.subr.bf16.mxu0 %v584
  %1150 = vmatpush1.bf16.msra.mxu0 %v583
  %1151 = vmatprep.subr.bf16.mxu0 %v580
  %1152 = vmatpush1.bf16.msra.mxu0 %v579
  %1153 = vmatprep.subr.bf16.mxu0 %v576
  %1154 = vmatpush1.bf16.msra.mxu0 %v575
  %1155 = vmatprep.subr.bf16.mxu0 %v572
  %1156 = vmatpush1.bf16.msra.mxu0 %v571
  %1157 = vmatprep.subr.bf16.mxu0 %v568
  %1158 = vmatpush1.bf16.msra.mxu0 %v567
  %1159 = vmatprep.subr.bf16.mxu0 %v628
  %1160 = vmatpush2.bf16.msra.mxu0 %v627
  %1161 = vmatprep.subr.bf16.mxu0 %v624
  %1162 = vmatpush2.bf16.msra.mxu0 %v623
  %1163 = vmatprep.subr.bf16.mxu0 %v620
  %1164 = vmatpush2.bf16.msra.mxu0 %v619
  %1165 = vmatprep.subr.bf16.mxu0 %v616
  %1166 = vmatpush2.bf16.msra.mxu0 %v615
  %1167 = vmatprep.subr.bf16.mxu0 %v612
  %1168 = vmatpush2.bf16.msra.mxu0 %v611
  %1169 = vmatprep.subr.bf16.mxu0 %v608
  %1170 = vmatpush2.bf16.msra.mxu0 %v607
  %1171 = vmatprep.subr.bf16.mxu0 %v604
  %1172 = vmatpush2.bf16.msra.mxu0 %v603
  %1173 = vmatprep.subr.bf16.mxu0 %v600
  %1174 = vmatpush2.bf16.msra.mxu0 %v599
  %1175 = vmatprep.mubr.bf16.mxu0 %v112
  %1176 = vmatmul.mubr.bf16.gmra.mxu0 %v111
  %v1177 = vpop.f32.mrf.mxu0
  %v1178 = vadd.f32 %v268, %v1177
  %v1179 = vpop.f32.mrf.mxu0
  %v1180 = vadd.f32 %v272, %v1179
  %v1181 = vpop.f32.mrf.mxu0
  %v1182 = vadd.f32 %v268, %v1181
  %v1183 = vpop.f32.mrf.mxu0
  %v1184 = vadd.f32 %v272, %v1183
  %1185 = vmatprep.mubr.bf16.mxu0 %v115
  %1186 = vmatmul.mubr.bf16.gmra.mxu0 %v114
  %v1187 = vpop.f32.mrf.mxu0
  %v1188 = vadd.f32 %v268, %v1187
  %v1189 = vpop.f32.mrf.mxu0
  %v1190 = vadd.f32 %v272, %v1189
  %v1191 = vpop.f32.mrf.mxu0
  %v1192 = vadd.f32 %v268, %v1191
  %v1193 = vpop.f32.mrf.mxu0
  %v1194 = vadd.f32 %v272, %v1193
  %1195 = vmatprep.mubr.bf16.mxu0 %v118
  %1196 = vmatmul.mubr.bf16.gmra.mxu0 %v117
  %v1197 = vpop.f32.mrf.mxu0
  %v1198 = vadd.f32 %v268, %v1197
  %v1199 = vpop.f32.mrf.mxu0
  %v1200 = vadd.f32 %v272, %v1199
  %v1201 = vpop.f32.mrf.mxu0
  %v1202 = vadd.f32 %v268, %v1201
  %v1203 = vpop.f32.mrf.mxu0
  %v1204 = vadd.f32 %v272, %v1203
  %1205 = vmatprep.mubr.bf16.mxu0 %v121
  %1206 = vmatmul.mubr.bf16.gmra.mxu0 %v120
  %v1207 = vpop.f32.mrf.mxu0
  %v1208 = vadd.f32 %v268, %v1207
  %v1209 = vpop.f32.mrf.mxu0
  %v1210 = vadd.f32 %v272, %v1209
  %v1211 = vpop.f32.mrf.mxu0
  %v1212 = vadd.f32 %v268, %v1211
  %v1213 = vpop.f32.mrf.mxu0
  %v1214 = vadd.f32 %v272, %v1213
  %1215 = vmatprep.mubr.bf16.mxu0 %v124
  %1216 = vmatmul.mubr.bf16.gmra.mxu0 %v123
  %v1217 = vpop.f32.mrf.mxu0
  %v1218 = vadd.f32 %v268, %v1217
  %v1219 = vpop.f32.mrf.mxu0
  %v1220 = vadd.f32 %v272, %v1219
  %v1221 = vpop.f32.mrf.mxu0
  %v1222 = vadd.f32 %v268, %v1221
  %v1223 = vpop.f32.mrf.mxu0
  %v1224 = vadd.f32 %v272, %v1223
  %1225 = vmatprep.mubr.bf16.mxu0 %v127
  %1226 = vmatmul.mubr.bf16.gmra.mxu0 %v126
  %v1227 = vpop.f32.mrf.mxu0
  %v1228 = vadd.f32 %v268, %v1227
  %v1229 = vpop.f32.mrf.mxu0
  %v1230 = vadd.f32 %v272, %v1229
  %v1231 = vpop.f32.mrf.mxu0
  %v1232 = vadd.f32 %v268, %v1231
  %v1233 = vpop.f32.mrf.mxu0
  %v1234 = vadd.f32 %v272, %v1233
  %1235 = vmatprep.mubr.bf16.mxu0 %v130
  %1236 = vmatmul.mubr.bf16.gmra.mxu0 %v129
  %v1237 = vpop.f32.mrf.mxu0
  %v1238 = vadd.f32 %v268, %v1237
  %v1239 = vpop.f32.mrf.mxu0
  %v1240 = vadd.f32 %v272, %v1239
  %v1241 = vpop.f32.mrf.mxu0
  %v1242 = vadd.f32 %v268, %v1241
  %v1243 = vpop.f32.mrf.mxu0
  %v1244 = vadd.f32 %v272, %v1243
  %1245 = vmatprep.mubr.bf16.mxu0 %v133
  %1246 = vmatmul.mubr.bf16.gmra.mxu0 %v132
  %v1247 = vpop.f32.mrf.mxu0
  %v1248 = vadd.f32 %v268, %v1247
  %v1249 = vpop.f32.mrf.mxu0
  %v1250 = vadd.f32 %v272, %v1249
  %v1251 = vpop.f32.mrf.mxu0
  %v1252 = vadd.f32 %v268, %v1251
  %v1253 = vpop.f32.mrf.mxu0
  %v1254 = vadd.f32 %v272, %v1253
  %1255 = vmatprep.mubr.bf16.mxu0 %v136
  %1256 = vmatmul.mubr.bf16.gmra.mxu0 %v135
  %v1257 = vpop.f32.mrf.mxu0
  %v1258 = vadd.f32 %v268, %v1257
  %v1259 = vpop.f32.mrf.mxu0
  %v1260 = vadd.f32 %v272, %v1259
  %v1261 = vpop.f32.mrf.mxu0
  %v1262 = vadd.f32 %v268, %v1261
  %v1263 = vpop.f32.mrf.mxu0
  %v1264 = vadd.f32 %v272, %v1263
  %1265 = vmatprep.mubr.bf16.mxu0 %v139
  %1266 = vmatmul.mubr.bf16.gmra.mxu0 %v138
  %v1267 = vpop.f32.mrf.mxu0
  %v1268 = vadd.f32 %v268, %v1267
  %v1269 = vpop.f32.mrf.mxu0
  %v1270 = vadd.f32 %v272, %v1269
  %v1271 = vpop.f32.mrf.mxu0
  %v1272 = vadd.f32 %v268, %v1271
  %v1273 = vpop.f32.mrf.mxu0
  %v1274 = vadd.f32 %v272, %v1273
  %1275 = vmatprep.mubr.bf16.mxu0 %v142
  %1276 = vmatmul.mubr.bf16.gmra.mxu0 %v141
  %v1277 = vpop.f32.mrf.mxu0
  %v1278 = vadd.f32 %v268, %v1277
  %v1279 = vpop.f32.mrf.mxu0
  %v1280 = vadd.f32 %v272, %v1279
  %v1281 = vpop.f32.mrf.mxu0
  %v1282 = vadd.f32 %v268, %v1281
  %v1283 = vpop.f32.mrf.mxu0
  %v1284 = vadd.f32 %v272, %v1283
  %1285 = vmatprep.mubr.bf16.mxu0 %v145
  %1286 = vmatmul.mubr.bf16.gmra.mxu0 %v144
  %v1287 = vpop.f32.mrf.mxu0
  %v1288 = vadd.f32 %v268, %v1287
  %v1289 = vpop.f32.mrf.mxu0
  %v1290 = vadd.f32 %v272, %v1289
  %v1291 = vpop.f32.mrf.mxu0
  %v1292 = vadd.f32 %v268, %v1291
  %v1293 = vpop.f32.mrf.mxu0
  %v1294 = vadd.f32 %v272, %v1293
  %1295 = vmatprep.mubr.bf16.mxu0 %v148
  %1296 = vmatmul.mubr.bf16.gmra.mxu0 %v147
  %v1297 = vpop.f32.mrf.mxu0
  %v1298 = vadd.f32 %v268, %v1297
  %v1299 = vpop.f32.mrf.mxu0
  %v1300 = vadd.f32 %v272, %v1299
  %v1301 = vpop.f32.mrf.mxu0
  %v1302 = vadd.f32 %v268, %v1301
  %v1303 = vpop.f32.mrf.mxu0
  %v1304 = vadd.f32 %v272, %v1303
  %1305 = vmatprep.mubr.bf16.mxu0 %v151
  %1306 = vmatmul.mubr.bf16.gmra.mxu0 %v150
  %v1307 = vpop.f32.mrf.mxu0
  %v1308 = vadd.f32 %v268, %v1307
  %v1309 = vpop.f32.mrf.mxu0
  %v1310 = vadd.f32 %v272, %v1309
  %v1311 = vpop.f32.mrf.mxu0
  %v1312 = vadd.f32 %v268, %v1311
  %v1313 = vpop.f32.mrf.mxu0
  %v1314 = vadd.f32 %v272, %v1313
  %1315 = vmatprep.mubr.bf16.mxu0 %v154
  %1316 = vmatmul.mubr.bf16.gmra.mxu0 %v153
  %v1317 = vpop.f32.mrf.mxu0
  %v1318 = vadd.f32 %v268, %v1317
  %v1319 = vpop.f32.mrf.mxu0
  %v1320 = vadd.f32 %v272, %v1319
  %v1321 = vpop.f32.mrf.mxu0
  %v1322 = vadd.f32 %v268, %v1321
  %v1323 = vpop.f32.mrf.mxu0
  %v1324 = vadd.f32 %v272, %v1323
  %1325 = vmatprep.mubr.bf16.mxu0 %v157
  %1326 = vmatmul.mubr.bf16.gmra.mxu0 %v156
  %v1327 = vpop.f32.mrf.mxu0
  %v1328 = vadd.f32 %v268, %v1327
  %v1329 = vpop.f32.mrf.mxu0
  %v1330 = vadd.f32 %v272, %v1329
  %v1331 = vpop.f32.mrf.mxu0
  %v1332 = vadd.f32 %v268, %v1331
  %v1333 = vpop.f32.mrf.mxu0
  %v1334 = vadd.f32 %v272, %v1333
  %1335 = vdwg.mxu0
  %1336 = vmatprep.subr.bf16.mxu0 %v660
  %1337 = vmatpush1.bf16.msra.mxu0 %v659
  %1338 = vmatprep.subr.bf16.mxu0 %v656
  %1339 = vmatpush1.bf16.msra.mxu0 %v655
  %1340 = vmatprep.subr.bf16.mxu0 %v652
  %1341 = vmatpush1.bf16.msra.mxu0 %v651
  %1342 = vmatprep.subr.bf16.mxu0 %v648
  %1343 = vmatpush1.bf16.msra.mxu0 %v647
  %1344 = vmatprep.subr.bf16.mxu0 %v644
  %1345 = vmatpush1.bf16.msra.mxu0 %v643
  %1346 = vmatprep.subr.bf16.mxu0 %v640
  %1347 = vmatpush1.bf16.msra.mxu0 %v639
  %1348 = vmatprep.subr.bf16.mxu0 %v636
  %1349 = vmatpush1.bf16.msra.mxu0 %v635
  %1350 = vmatprep.subr.bf16.mxu0 %v632
  %1351 = vmatpush1.bf16.msra.mxu0 %v631
  %1352 = vmatprep.subr.bf16.mxu0 0
  %1353 = vmatpush2.bf16.msra.mxu0 0
  %1354 = vmatprep.subr.bf16.mxu0 0
  %1355 = vmatpush2.bf16.msra.mxu0 0
  %1356 = vmatprep.subr.bf16.mxu0 0
  %1357 = vmatpush2.bf16.msra.mxu0 0
  %1358 = vmatprep.subr.bf16.mxu0 0
  %1359 = vmatpush2.bf16.msra.mxu0 0
  %1360 = vmatprep.subr.bf16.mxu0 0
  %1361 = vmatpush2.bf16.msra.mxu0 0
  %1362 = vmatprep.subr.bf16.mxu0 0
  %1363 = vmatpush2.bf16.msra.mxu0 0
  %1364 = vmatprep.subr.bf16.mxu0 0
  %1365 = vmatpush2.bf16.msra.mxu0 0
  %1366 = vmatprep.subr.bf16.mxu0 0
  %1367 = vmatpush2.bf16.msra.mxu0 0
  %1368 = vmatprep.mubr.bf16.mxu0 0
  %1369 = vmatmul.mubr.bf16.gmra.mxu0 %v113
  %v1370 = vpop.f32.mrf.mxu0
  %v1371 = vadd.f32 %v1178, %v1370
  %v1372 = vpop.f32.mrf.mxu0
  %v1373 = vadd.f32 %v1180, %v1372
  %v1374 = vpop.f32.mrf.mxu0
  %v1375 = vadd.f32 %v1182, %v1374
  %v1376 = vpop.f32.mrf.mxu0
  %v1377 = vadd.f32 %v1184, %v1376
  %1378 = vmatprep.mubr.bf16.mxu0 0
  %1379 = vmatmul.mubr.bf16.gmra.mxu0 %v116
  %v1380 = vpop.f32.mrf.mxu0
  %v1381 = vadd.f32 %v1188, %v1380
  %v1382 = vpop.f32.mrf.mxu0
  %v1383 = vadd.f32 %v1190, %v1382
  %v1384 = vpop.f32.mrf.mxu0
  %v1385 = vadd.f32 %v1192, %v1384
  %v1386 = vpop.f32.mrf.mxu0
  %v1387 = vadd.f32 %v1194, %v1386
  %1388 = vmatprep.mubr.bf16.mxu0 0
  %1389 = vmatmul.mubr.bf16.gmra.mxu0 %v119
  %v1390 = vpop.f32.mrf.mxu0
  %v1391 = vadd.f32 %v1198, %v1390
  %v1392 = vpop.f32.mrf.mxu0
  %v1393 = vadd.f32 %v1200, %v1392
  %v1394 = vpop.f32.mrf.mxu0
  %v1395 = vadd.f32 %v1202, %v1394
  %v1396 = vpop.f32.mrf.mxu0
  %v1397 = vadd.f32 %v1204, %v1396
  %1398 = vmatprep.mubr.bf16.mxu0 0
  %1399 = vmatmul.mubr.bf16.gmra.mxu0 %v122
  %v1400 = vpop.f32.mrf.mxu0
  %v1401 = vadd.f32 %v1208, %v1400
  %v1402 = vpop.f32.mrf.mxu0
  %v1403 = vadd.f32 %v1210, %v1402
  %v1404 = vpop.f32.mrf.mxu0
  %v1405 = vadd.f32 %v1212, %v1404
  %v1406 = vpop.f32.mrf.mxu0
  %v1407 = vadd.f32 %v1214, %v1406
  %1408 = vmatprep.mubr.bf16.mxu0 0
  %1409 = vmatmul.mubr.bf16.gmra.mxu0 %v125
  %v1410 = vpop.f32.mrf.mxu0
  %v1411 = vadd.f32 %v1218, %v1410
  %v1412 = vpop.f32.mrf.mxu0
  %v1413 = vadd.f32 %v1220, %v1412
  %v1414 = vpop.f32.mrf.mxu0
  %v1415 = vadd.f32 %v1222, %v1414
  %v1416 = vpop.f32.mrf.mxu0
  %v1417 = vadd.f32 %v1224, %v1416
  %1418 = vmatprep.mubr.bf16.mxu0 0
  %1419 = vmatmul.mubr.bf16.gmra.mxu0 %v128
  %v1420 = vpop.f32.mrf.mxu0
  %v1421 = vadd.f32 %v1228, %v1420
  %v1422 = vpop.f32.mrf.mxu0
  %v1423 = vadd.f32 %v1230, %v1422
  %v1424 = vpop.f32.mrf.mxu0
  %v1425 = vadd.f32 %v1232, %v1424
  %v1426 = vpop.f32.mrf.mxu0
  %v1427 = vadd.f32 %v1234, %v1426
  %1428 = vmatprep.mubr.bf16.mxu0 0
  %1429 = vmatmul.mubr.bf16.gmra.mxu0 %v131
  %v1430 = vpop.f32.mrf.mxu0
  %v1431 = vadd.f32 %v1238, %v1430
  %v1432 = vpop.f32.mrf.mxu0
  %v1433 = vadd.f32 %v1240, %v1432
  %v1434 = vpop.f32.mrf.mxu0
  %v1435 = vadd.f32 %v1242, %v1434
  %v1436 = vpop.f32.mrf.mxu0
  %v1437 = vadd.f32 %v1244, %v1436
  %1438 = vmatprep.mubr.bf16.mxu0 0
  %1439 = vmatmul.mubr.bf16.gmra.mxu0 %v134
  %v1440 = vpop.f32.mrf.mxu0
  %v1441 = vadd.f32 %v1248, %v1440
  %v1442 = vpop.f32.mrf.mxu0
  %v1443 = vadd.f32 %v1250, %v1442
  %v1444 = vpop.f32.mrf.mxu0
  %v1445 = vadd.f32 %v1252, %v1444
  %v1446 = vpop.f32.mrf.mxu0
  %v1447 = vadd.f32 %v1254, %v1446
  %1448 = vmatprep.mubr.bf16.mxu0 0
  %1449 = vmatmul.mubr.bf16.gmra.mxu0 %v137
  %v1450 = vpop.f32.mrf.mxu0
  %v1451 = vadd.f32 %v1258, %v1450
  %v1452 = vpop.f32.mrf.mxu0
  %v1453 = vadd.f32 %v1260, %v1452
  %v1454 = vpop.f32.mrf.mxu0
  %v1455 = vadd.f32 %v1262, %v1454
  %v1456 = vpop.f32.mrf.mxu0
  %v1457 = vadd.f32 %v1264, %v1456
  %1458 = vmatprep.mubr.bf16.mxu0 0
  %1459 = vmatmul.mubr.bf16.gmra.mxu0 %v140
  %v1460 = vpop.f32.mrf.mxu0
  %v1461 = vadd.f32 %v1268, %v1460
  %v1462 = vpop.f32.mrf.mxu0
  %v1463 = vadd.f32 %v1270, %v1462
  %v1464 = vpop.f32.mrf.mxu0
  %v1465 = vadd.f32 %v1272, %v1464
  %v1466 = vpop.f32.mrf.mxu0
  %v1467 = vadd.f32 %v1274, %v1466
  %1468 = vmatprep.mubr.bf16.mxu0 0
  %1469 = vmatmul.mubr.bf16.gmra.mxu0 %v143
  %v1470 = vpop.f32.mrf.mxu0
  %v1471 = vadd.f32 %v1278, %v1470
  %v1472 = vpop.f32.mrf.mxu0
  %v1473 = vadd.f32 %v1280, %v1472
  %v1474 = vpop.f32.mrf.mxu0
  %v1475 = vadd.f32 %v1282, %v1474
  %v1476 = vpop.f32.mrf.mxu0
  %v1477 = vadd.f32 %v1284, %v1476
  %1478 = vmatprep.mubr.bf16.mxu0 0
  %1479 = vmatmul.mubr.bf16.gmra.mxu0 %v146
  %v1480 = vpop.f32.mrf.mxu0
  %v1481 = vadd.f32 %v1288, %v1480
  %v1482 = vpop.f32.mrf.mxu0
  %v1483 = vadd.f32 %v1290, %v1482
  %v1484 = vpop.f32.mrf.mxu0
  %v1485 = vadd.f32 %v1292, %v1484
  %v1486 = vpop.f32.mrf.mxu0
  %v1487 = vadd.f32 %v1294, %v1486
  %1488 = vmatprep.mubr.bf16.mxu0 0
  %1489 = vmatmul.mubr.bf16.gmra.mxu0 %v149
  %v1490 = vpop.f32.mrf.mxu0
  %v1491 = vadd.f32 %v1298, %v1490
  %v1492 = vpop.f32.mrf.mxu0
  %v1493 = vadd.f32 %v1300, %v1492
  %v1494 = vpop.f32.mrf.mxu0
  %v1495 = vadd.f32 %v1302, %v1494
  %v1496 = vpop.f32.mrf.mxu0
  %v1497 = vadd.f32 %v1304, %v1496
  %1498 = vmatprep.mubr.bf16.mxu0 0
  %1499 = vmatmul.mubr.bf16.gmra.mxu0 %v152
  %v1500 = vpop.f32.mrf.mxu0
  %v1501 = vadd.f32 %v1308, %v1500
  %v1502 = vpop.f32.mrf.mxu0
  %v1503 = vadd.f32 %v1310, %v1502
  %v1504 = vpop.f32.mrf.mxu0
  %v1505 = vadd.f32 %v1312, %v1504
  %v1506 = vpop.f32.mrf.mxu0
  %v1507 = vadd.f32 %v1314, %v1506
  %1508 = vmatprep.mubr.bf16.mxu0 0
  %1509 = vmatmul.mubr.bf16.gmra.mxu0 %v155
  %v1510 = vpop.f32.mrf.mxu0
  %v1511 = vadd.f32 %v1318, %v1510
  %v1512 = vpop.f32.mrf.mxu0
  %v1513 = vadd.f32 %v1320, %v1512
  %v1514 = vpop.f32.mrf.mxu0
  %v1515 = vadd.f32 %v1322, %v1514
  %v1516 = vpop.f32.mrf.mxu0
  %v1517 = vadd.f32 %v1324, %v1516
  %1518 = vmatprep.mubr.bf16.mxu0 0
  %1519 = vmatmul.mubr.bf16.gmra.mxu0 %v158
  %v1520 = vpop.f32.mrf.mxu0
  %v1521 = vadd.f32 %v1328, %v1520
  %v1522 = vpop.f32.mrf.mxu0
  %v1523 = vadd.f32 %v1330, %v1522
  %v1524 = vpop.f32.mrf.mxu0
  %v1525 = vadd.f32 %v1332, %v1524
  %v1526 = vpop.f32.mrf.mxu0
  %v1527 = vadd.f32 %v1334, %v1526
  %1528 = vdwg.mxu0
  %1529 = vst [vmem:[%s3] sm:$0xff] %v985
  %1530 = vst [vmem:[%s3 + $0x8] sm:$0xff] %v987
  %1531 = vst [vmem:[%s3 + $0x10] sm:$0xff] %v1371
  %1532 = vst [vmem:[%s3 + $0x18] sm:$0xff] %v1373
  %1533 = vst [vmem:[%s3 + $0x20] sm:$0xff] %v989
  %1534 = vst [vmem:[%s3 + $0x28] sm:$0xff] %v991
  %1535 = vst [vmem:[%s3 + $0x30] sm:$0xff] %v1375
  %1536 = vst [vmem:[%s3 + $0x38] sm:$0xff] %v1377
  %1537 = vst [vmem:[%s3 + $0x40] sm:$0xff] %v995
  %1538 = vst [vmem:[%s3 + $0x48] sm:$0xff] %v997
  %1539 = vst [vmem:[%s3 + $0x50] sm:$0xff] %v1381
  %1540 = vst [vmem:[%s3 + $0x58] sm:$0xff] %v1383
  %1541 = vst [vmem:[%s3 + $0x60] sm:$0xff] %v999
  %1542 = vst [vmem:[%s3 + $0x68] sm:$0xff] %v1001
  %1543 = vst [vmem:[%s3 + $0x70] sm:$0xff] %v1385
  %1544 = vst [vmem:[%s3 + $0x78] sm:$0xff] %v1387
  %1545 = vst [vmem:[%s3 + $0x80] sm:$0xff] %v1005
  %1546 = vst [vmem:[%s3 + $0x88] sm:$0xff] %v1007
  %1547 = vst [vmem:[%s3 + $0x90] sm:$0xff] %v1391
  %1548 = vst [vmem:[%s3 + $0x98] sm:$0xff] %v1393
  %1549 = vst [vmem:[%s3 + $0xa0] sm:$0xff] %v1009
  %1550 = vst [vmem:[%s3 + $0xa8] sm:$0xff] %v1011
  %1551 = vst [vmem:[%s3 + $0xb0] sm:$0xff] %v1395
  %1552 = vst [vmem:[%s3 + $0xb8] sm:$0xff] %v1397
  %1553 = vst [vmem:[%s3 + $0xc0] sm:$0xff] %v1015
  %1554 = vst [vmem:[%s3 + $0xc8] sm:$0xff] %v1017
  %1555 = vst [vmem:[%s3 + $0xd0] sm:$0xff] %v1401
  %1556 = vst [vmem:[%s3 + $0xd8] sm:$0xff] %v1403
  %1557 = vst [vmem:[%s3 + $0xe0] sm:$0xff] %v1019
  %1558 = vst [vmem:[%s3 + $0xe8] sm:$0xff] %v1021
  %1559 = vst [vmem:[%s3 + $0xf0] sm:$0xff] %v1405
  %1560 = vst [vmem:[%s3 + $0xf8] sm:$0xff] %v1407
  %1561 = vst [vmem:[%s3 + $0x100] sm:$0xff] %v1025
  %1562 = vst [vmem:[%s3 + $0x108] sm:$0xff] %v1027
  %1563 = vst [vmem:[%s3 + $0x110] sm:$0xff] %v1411
  %1564 = vst [vmem:[%s3 + $0x118] sm:$0xff] %v1413
  %1565 = vst [vmem:[%s3 + $0x120] sm:$0xff] %v1029
  %1566 = vst [vmem:[%s3 + $0x128] sm:$0xff] %v1031
  %1567 = vst [vmem:[%s3 + $0x130] sm:$0xff] %v1415
  %1568 = vst [vmem:[%s3 + $0x138] sm:$0xff] %v1417
  %1569 = vst [vmem:[%s3 + $0x140] sm:$0xff] %v1035
  %1570 = vst [vmem:[%s3 + $0x148] sm:$0xff] %v1037
  %1571 = vst [vmem:[%s3 + $0x150] sm:$0xff] %v1421
  %1572 = vst [vmem:[%s3 + $0x158] sm:$0xff] %v1423
  %1573 = vst [vmem:[%s3 + $0x160] sm:$0xff] %v1039
  %1574 = vst [vmem:[%s3 + $0x168] sm:$0xff] %v1041
  %1575 = vst [vmem:[%s3 + $0x170] sm:$0xff] %v1425
  %1576 = vst [vmem:[%s3 + $0x178] sm:$0xff] %v1427
  %1577 = vst [vmem:[%s3 + $0x180] sm:$0xff] %v1045
  %1578 = vst [vmem:[%s3 + $0x188] sm:$0xff] %v1047
  %1579 = vst [vmem:[%s3 + $0x190] sm:$0xff] %v1431
  %1580 = vst [vmem:[%s3 + $0x198] sm:$0xff] %v1433
  %1581 = vst [vmem:[%s3 + $0x1a0] sm:$0xff] %v1049
  %1582 = vst [vmem:[%s3 + $0x1a8] sm:$0xff] %v1051
  %1583 = vst [vmem:[%s3 + $0x1b0] sm:$0xff] %v1435
  %1584 = vst [vmem:[%s3 + $0x1b8] sm:$0xff] %v1437
  %1585 = vst [vmem:[%s3 + $0x1c0] sm:$0xff] %v1055
  %1586 = vst [vmem:[%s3 + $0x1c8] sm:$0xff] %v1057
  %1587 = vst [vmem:[%s3 + $0x1d0] sm:$0xff] %v1441
  %1588 = vst [vmem:[%s3 + $0x1d8] sm:$0xff] %v1443
  %1589 = vst [vmem:[%s3 + $0x1e0] sm:$0xff] %v1059
  %1590 = vst [vmem:[%s3 + $0x1e8] sm:$0xff] %v1061
  %1591 = vst [vmem:[%s3 + $0x1f0] sm:$0xff] %v1445
  %1592 = vst [vmem:[%s3 + $0x1f8] sm:$0xff] %v1447
  %1593 = vst [vmem:[%s3 + $0x200] sm:$0xff] %v1065
  %1594 = vst [vmem:[%s3 + $0x208] sm:$0xff] %v1067
  %1595 = vst [vmem:[%s3 + $0x210] sm:$0xff] %v1451
  %1596 = vst [vmem:[%s3 + $0x218] sm:$0xff] %v1453
  %1597 = vst [vmem:[%s3 + $0x220] sm:$0xff] %v1069
  %1598 = vst [vmem:[%s3 + $0x228] sm:$0xff] %v1071
  %1599 = vst [vmem:[%s3 + $0x230] sm:$0xff] %v1455
  %1600 = vst [vmem:[%s3 + $0x238] sm:$0xff] %v1457
  %1601 = vst [vmem:[%s3 + $0x240] sm:$0xff] %v1075
  %1602 = vst [vmem:[%s3 + $0x248] sm:$0xff] %v1077
  %1603 = vst [vmem:[%s3 + $0x250] sm:$0xff] %v1461
  %1604 = vst [vmem:[%s3 + $0x258] sm:$0xff] %v1463
  %1605 = vst [vmem:[%s3 + $0x260] sm:$0xff] %v1079
  %1606 = vst [vmem:[%s3 + $0x268] sm:$0xff] %v1081
  %1607 = vst [vmem:[%s3 + $0x270] sm:$0xff] %v1465
  %1608 = vst [vmem:[%s3 + $0x278] sm:$0xff] %v1467
  %1609 = vst [vmem:[%s3 + $0x280] sm:$0xff] %v1085
  %1610 = vst [vmem:[%s3 + $0x288] sm:$0xff] %v1087
  %1611 = vst [vmem:[%s3 + $0x290] sm:$0xff] %v1471
  %1612 = vst [vmem:[%s3 + $0x298] sm:$0xff] %v1473
  %1613 = vst [vmem:[%s3 + $0x2a0] sm:$0xff] %v1089
  %1614 = vst [vmem:[%s3 + $0x2a8] sm:$0xff] %v1091
  %1615 = vst [vmem:[%s3 + $0x2b0] sm:$0xff] %v1475
  %1616 = vst [vmem:[%s3 + $0x2b8] sm:$0xff] %v1477
  %1617 = vst [vmem:[%s3 + $0x2c0] sm:$0xff] %v1095
  %1618 = vst [vmem:[%s3 + $0x2c8] sm:$0xff] %v1097
  %1619 = vst [vmem:[%s3 + $0x2d0] sm:$0xff] %v1481
  %1620 = vst [vmem:[%s3 + $0x2d8] sm:$0xff] %v1483
  %1621 = vst [vmem:[%s3 + $0x2e0] sm:$0xff] %v1099
  %1622 = vst [vmem:[%s3 + $0x2e8] sm:$0xff] %v1101
  %1623 = vst [vmem:[%s3 + $0x2f0] sm:$0xff] %v1485
  %1624 = vst [vmem:[%s3 + $0x2f8] sm:$0xff] %v1487
  %1625 = vst [vmem:[%s3 + $0x300] sm:$0xff] %v1105
  %1626 = vst [vmem:[%s3 + $0x308] sm:$0xff] %v1107
  %1627 = vst [vmem:[%s3 + $0x310] sm:$0xff] %v1491
  %1628 = vst [vmem:[%s3 + $0x318] sm:$0xff] %v1493
  %1629 = vst [vmem:[%s3 + $0x320] sm:$0xff] %v1109
  %1630 = vst [vmem:[%s3 + $0x328] sm:$0xff] %v1111
  %1631 = vst [vmem:[%s3 + $0x330] sm:$0xff] %v1495
  %1632 = vst [vmem:[%s3 + $0x338] sm:$0xff] %v1497
  %1633 = vst [vmem:[%s3 + $0x340] sm:$0xff] %v1115
  %1634 = vst [vmem:[%s3 + $0x348] sm:$0xff] %v1117
  %1635 = vst [vmem:[%s3 + $0x350] sm:$0xff] %v1501
  %1636 = vst [vmem:[%s3 + $0x358] sm:$0xff] %v1503
  %1637 = vst [vmem:[%s3 + $0x360] sm:$0xff] %v1119
  %1638 = vst [vmem:[%s3 + $0x368] sm:$0xff] %v1121
  %1639 = vst [vmem:[%s3 + $0x370] sm:$0xff] %v1505
  %1640 = vst [vmem:[%s3 + $0x378] sm:$0xff] %v1507
  %1641 = vst [vmem:[%s3 + $0x380] sm:$0xff] %v1125
  %1642 = vst [vmem:[%s3 + $0x388] sm:$0xff] %v1127
  %1643 = vst [vmem:[%s3 + $0x390] sm:$0xff] %v1511
  %1644 = vst [vmem:[%s3 + $0x398] sm:$0xff] %v1513
  %1645 = vst [vmem:[%s3 + $0x3a0] sm:$0xff] %v1129
  %1646 = vst [vmem:[%s3 + $0x3a8] sm:$0xff] %v1131
  %1647 = vst [vmem:[%s3 + $0x3b0] sm:$0xff] %v1515
  %1648 = vst [vmem:[%s3 + $0x3b8] sm:$0xff] %v1517
  %1649 = vst [vmem:[%s3 + $0x3c0] sm:$0xff] %v1135
  %1650 = vst [vmem:[%s3 + $0x3c8] sm:$0xff] %v1137
  %1651 = vst [vmem:[%s3 + $0x3d0] sm:$0xff] %v1521
  %1652 = vst [vmem:[%s3 + $0x3d8] sm:$0xff] %v1523
  %1653 = vst [vmem:[%s3 + $0x3e0] sm:$0xff] %v1139
  %1654 = vst [vmem:[%s3 + $0x3e8] sm:$0xff] %v1141
  %1655 = vst [vmem:[%s3 + $0x3f0] sm:$0xff] %v1525
  %1656 = vst [vmem:[%s3 + $0x3f8] sm:$0xff] %v1527
  // Predicated region
  $region14: #{_lambda_.6} parent=0 // pred_check
    _
  $region15: #{_lambda_.6} parent=0 // pred_check_branch
    %1658 = sbr.rel (0) target = $region17
  $region16: #{_lambda_.6} parent=0 // pred_region
    _
  $region17: #{_lambda_.6} parent=0 // pred_fallthru
    _
  // Predicated region
  $region18: #{_lambda_.6} parent=0 // pred_check
    _
  $region19: #{_lambda_.6} parent=0 // pred_check_branch
    %1660 = sbr.rel (0) target = $region21
  $region20: #{_lambda_.6} parent=0 // pred_region
    _
  $region21: #{_lambda_.6} parent=0 // pred_fallthru
    _

// kernel: _lambda_.7
$region0: #{_lambda_.7}
  #allocation0 [shape = 'u32[]', space=smem, size = 0x4, offset = 0x4, fixed_abs, tag = 'smem constant byte address 0x4 - core index']
  #allocation1 [shape = 'u32[144,128]{1,0:T(1,128)}', space=vmem, size = 0x12000, scoped, tag = 'internal scratch']
  #allocation2 [shape = 'f32[2,18,128]{2,1,0:T(8,128)}', space=vmem, size = 0x6000, scoped, tag = 'scratch operand']
  #allocation3 [shape = 'f32[2,18,128]{2,1,0:T(8,128)}', space=vmem, size = 0x6000, scoped, tag = 'scratch operand']
  %s0 = inlined_call_operand.vmem [shape: f32[8,2,16,512], index: 0, kind: input, shape index: {}]
  %s1 = inlined_call_operand.vmem [shape: bf16[768,512], index: 1, kind: input, shape index: {}]
  %s2 = inlined_call_operand.vmem [shape: bf16[384,128], index: 2, kind: input, shape index: {}]
  %s3 = inlined_call_operand.vmem [shape: f32[8,2,16,128], index: 3, kind: output, shape index: {0}]
  %s4 = inlined_call_operand.vmem [shape: f32[2,16,128], index: 4, kind: output, shape index: {1}]
  %s5 = inlined_call_operand.vmem [shape: f32[2,16,128], index: 5, kind: output, shape index: {2}]
  %6 = xla_tuple %s3, %s4, %s5
  %s7 = sld [smem:[#allocation0]]
  $region69: #{_lambda_.7} parent=0
    _
  %s9 = ssub.s32 1, %s7
  %s10 = scalar_select 0, %s9, %s7
  loop: start=0, step=1, limit=10
  $region2: #{_lambda_.7} parent=0 // loop_pre_header
    _
  $region3: #{_lambda_.7} parent=0 // loop_header
    %s12 = sphi 0, %s16
    %p13 = scmp.ge.s32.totalorder %s12, 10
    %s19 = sphi 0, %s31
    %s20 = sphi 0, %s27
    %s21 = sphi 0, %s19
    %s22 = sphi 0, %s20
    %s23 = sphi 0, %s21
    %s24 = sphi 0, %s22
    %s36 = sphi 0, %s38
    %s39 = sphi 0, %s36
    %s40 = sphi 0, %s39
    %s56 = sphi 0, %s40
    %s60 = sphi 0, %s60
    %s62 = sphi 0, %s60
    %s63 = sphi 0, %s62
    %s77 = sphi 0, %s63
    %s81 = sphi 0, %s81
    %s83 = sphi 0, %s81
    %s84 = sphi 0, %s83
    %s98 = sphi 0, %s84
    %s106 = sphi 0, %s108
    %s109 = sphi 0, %s106
    %s110 = sphi 0, %s109
    %s126 = sphi 0, %s110
    %s132 = sphi 0, %s134
    %s135 = sphi 0, %s132
    %s136 = sphi 0, %s135
    %s152 = sphi 0, %s136
    %s158 = sphi 0, %s160
    %s161 = sphi 0, %s158
    %s162 = sphi 0, %s161
    %s178 = sphi 0, %s162
  $region4: #{_lambda_.7} parent=0 // loop_header_branch
    %15 = sbr.rel (%p13) target = $region8
  $region5: #{_lambda_.7} parent=0 // loop_body
    %s17 = ssub.s32 %s12, 1
    %s18 = ssub.s32 %s12, 2
    %s25 = sadd.s32 1, %s20
    %p26 = scmp.ge.s32.totalorder %s25, 8
    %s27 = scalar_select %p26, 0, %s25
    %s28 = sadd.s32 1, %s19
    %s29 = scalar_select %p26, %s28, %s19
    %p30 = scmp.ge.s32.totalorder %s29, 1
    %s31 = scalar_select %p30, 0, %s29
    %s32 = ssub.s32 %s20, %s27
    %s33 = ssub.s32 %s19, %s31
    %s34 = sor.u32 %s32, %s33
    %p35 = scmp.eq.s32.totalorder %s34, 0
    %s37 = sadd.s32 %s36, 1
    %s38 = scalar_select %p35, %s36, %s37
    %p41 = pneg %p35
    %p42 = scmp.eq.s32.totalorder %s12, 7
    %p43 = por %p41, %p42
    %p44 = scmp.ne.s32.totalorder %s36, %s39
    %p45 = scmp.eq.s32.totalorder %s12, 0
    %p46 = por %p44, %p45
    %p47 = scmp.ne.s32.totalorder %s36, %s39
    %p48 = scmp.eq.s32.totalorder %s17, 7
    %p49 = por %p47, %p48
    %p50 = scmp.ne.s32.totalorder %s39, %s40
    %p51 = scmp.eq.s32.totalorder %s17, 0
    %p52 = por %p50, %p51
    %p53 = scmp.ne.s32.totalorder %s39, %s40
    %p54 = scmp.eq.s32.totalorder %s18, 7
    %p55 = por %p53, %p54
    %p57 = scmp.ne.s32.totalorder %s40, %s56
    %p58 = scmp.eq.s32.totalorder %s18, 0
    %p59 = por %p57, %p58
    %s61 = sadd.s32 %s60, 1
    %p64 = scmp.eq.s32.totalorder %s12, 7
    %p65 = scmp.ne.s32.totalorder %s60, %s62
    %p66 = scmp.eq.s32.totalorder %s12, 0
    %p67 = por %p65, %p66
    %p68 = scmp.ne.s32.totalorder %s60, %s62
    %p69 = scmp.eq.s32.totalorder %s17, 7
    %p70 = por %p68, %p69
    %p71 = scmp.ne.s32.totalorder %s62, %s63
    %p72 = scmp.eq.s32.totalorder %s17, 0
    %p73 = por %p71, %p72
    %p74 = scmp.ne.s32.totalorder %s62, %s63
    %p75 = scmp.eq.s32.totalorder %s18, 7
    %p76 = por %p74, %p75
    %p78 = scmp.ne.s32.totalorder %s63, %s77
    %p79 = scmp.eq.s32.totalorder %s18, 0
    %p80 = por %p78, %p79
    %s82 = sadd.s32 %s81, 1
    %p85 = scmp.eq.s32.totalorder %s12, 7
    %p86 = scmp.ne.s32.totalorder %s81, %s83
    %p87 = scmp.eq.s32.totalorder %s12, 0
    %p88 = por %p86, %p87
    %p89 = scmp.ne.s32.totalorder %s81, %s83
    %p90 = scmp.eq.s32.totalorder %s17, 7
    %p91 = por %p89, %p90
    %p92 = scmp.ne.s32.totalorder %s83, %s84
    %p93 = scmp.eq.s32.totalorder %s17, 0
    %p94 = por %p92, %p93
    %p95 = scmp.ne.s32.totalorder %s83, %s84
    %p96 = scmp.eq.s32.totalorder %s18, 7
    %p97 = por %p95, %p96
    %p99 = scmp.ne.s32.totalorder %s84, %s98
    %p100 = scmp.eq.s32.totalorder %s18, 0
    %p101 = por %p99, %p100
    %s102 = ssub.s32 %s20, %s27
    %s103 = ssub.s32 %s19, %s31
    %s104 = sor.u32 %s102, %s103
    %p105 = scmp.eq.s32.totalorder %s104, 0
    %s107 = sadd.s32 %s106, 1
    %s108 = scalar_select %p105, %s106, %s107
    %p111 = pneg %p105
    %p112 = scmp.eq.s32.totalorder %s12, 7
    %p113 = por %p111, %p112
    %p114 = scmp.ne.s32.totalorder %s106, %s109
    %p115 = scmp.eq.s32.totalorder %s12, 0
    %p116 = por %p114, %p115
    %p117 = scmp.ne.s32.totalorder %s106, %s109
    %p118 = scmp.eq.s32.totalorder %s17, 7
    %p119 = por %p117, %p118
    %p120 = scmp.ne.s32.totalorder %s109, %s110
    %p121 = scmp.eq.s32.totalorder %s17, 0
    %p122 = por %p120, %p121
    %p123 = scmp.ne.s32.totalorder %s109, %s110
    %p124 = scmp.eq.s32.totalorder %s18, 7
    %p125 = por %p123, %p124
    %p127 = scmp.ne.s32.totalorder %s110, %s126
    %p128 = scmp.eq.s32.totalorder %s18, 0
    %p129 = por %p127, %p128
    %s130 = ssub.s32 %s19, %s31
    %p131 = scmp.eq.s32.totalorder %s130, 0
    %s133 = sadd.s32 %s132, 1
    %s134 = scalar_select %p131, %s132, %s133
    %p137 = pneg %p131
    %p138 = scmp.eq.s32.totalorder %s12, 7
    %p139 = por %p137, %p138
    %p140 = scmp.ne.s32.totalorder %s132, %s135
    %p141 = scmp.eq.s32.totalorder %s12, 0
    %p142 = por %p140, %p141
    %p143 = scmp.ne.s32.totalorder %s132, %s135
    %p144 = scmp.eq.s32.totalorder %s17, 7
    %p145 = por %p143, %p144
    %p146 = scmp.ne.s32.totalorder %s135, %s136
    %p147 = scmp.eq.s32.totalorder %s17, 0
    %p148 = por %p146, %p147
    %p149 = scmp.ne.s32.totalorder %s135, %s136
    %p150 = scmp.eq.s32.totalorder %s18, 7
    %p151 = por %p149, %p150
    %p153 = scmp.ne.s32.totalorder %s136, %s152
    %p154 = scmp.eq.s32.totalorder %s18, 0
    %p155 = por %p153, %p154
    %s156 = ssub.s32 %s19, %s31
    %p157 = scmp.eq.s32.totalorder %s156, 0
    %s159 = sadd.s32 %s158, 1
    %s160 = scalar_select %p157, %s158, %s159
    %p163 = pneg %p157
    %p164 = scmp.eq.s32.totalorder %s12, 7
    %p165 = por %p163, %p164
    %p166 = scmp.ne.s32.totalorder %s158, %s161
    %p167 = scmp.eq.s32.totalorder %s12, 0
    %p168 = por %p166, %p167
    %p169 = scmp.ne.s32.totalorder %s158, %s161
    %p170 = scmp.eq.s32.totalorder %s17, 7
    %p171 = por %p169, %p170
    %p172 = scmp.ne.s32.totalorder %s161, %s162
    %p173 = scmp.eq.s32.totalorder %s17, 0
    %p174 = por %p172, %p173
    %p175 = scmp.ne.s32.totalorder %s161, %s162
    %p176 = scmp.eq.s32.totalorder %s18, 7
    %p177 = por %p175, %p176
    %p179 = scmp.ne.s32.totalorder %s162, %s178
    %p180 = scmp.eq.s32.totalorder %s18, 0
    %p181 = por %p179, %p180
    %p182 = scmp.le.s32.totalorder 1, %s12
    %p183 = scmp.lt.s32.totalorder %s12, 9
    %p184 = pnand %p182, %p183
    %p185 = pneg %p184
    // Predicated region
    $region9: #{_lambda_.7} parent=5 // pred_check
      _
    $region10: #{_lambda_.7} parent=5 // pred_check_branch
      %187 = sbr.rel (%p184) target = $region12
    $region11: #{_lambda_.7} parent=5 // pred_region
      %s188 = ssub.s32 %s12, 1
      // Predicated region
      $region13: #{_lambda_.7} parent=11 // pred_check
        %p189 = pneg %p73
      $region14: #{_lambda_.7} parent=11 // pred_check_branch
        %191 = sbr.rel (%p189) target = $region16
      $region15: #{_lambda_.7} parent=11 // pred_region
        _
      $region16: #{_lambda_.7} parent=11 // pred_fallthru
        _
      // Predicated region
      $region17: #{_lambda_.7} parent=11 // pred_check
        %p192 = pneg %p94
      $region18: #{_lambda_.7} parent=11 // pred_check_branch
        %194 = sbr.rel (%p192) target = $region20
      $region19: #{_lambda_.7} parent=11 // pred_region
        _
      $region20: #{_lambda_.7} parent=11 // pred_fallthru
        _
    $region12: #{_lambda_.7} parent=5 // pred_fallthru
      _
    %p195 = scmp.lt.s32.totalorder %s12, 8
    // Predicated region
    $region21: #{_lambda_.7} parent=5 // pred_check
      %p196 = pneg %p195
    $region22: #{_lambda_.7} parent=5 // pred_check_branch
      %198 = sbr.rel (%p196) target = $region24
    $region23: #{_lambda_.7} parent=5 // pred_region
      // Predicated region
      $region25: #{_lambda_.7} parent=23 // pred_check
        %p199 = pneg %p46
      $region26: #{_lambda_.7} parent=23 // pred_check_branch
        %201 = sbr.rel (%p199) target = $region28
      $region27: #{_lambda_.7} parent=23 // pred_region
        %s202 = smul.u32 2, %s19
        %p203 = scmp.lt.s32.totalorder %s20, 7
        %s204 = scalar_select %p203, %s20, 7
        %p205 = scmp.lt.s32.totalorder %s202, 1
        %s206 = scalar_select %p205, %s202, 1
        %s207 = smul.addr %s206, 8
        %s208 = smul.addr %s204, 16
        %s209 = sadd.s32 %s207, %s208
        %s210 = smul.addr %s209, 8
        %s211 = scalar_lea.vmem %s0, %s210
        %s212 = smul.u32 2, %s19
      $region28: #{_lambda_.7} parent=23 // pred_fallthru
        _
    $region24: #{_lambda_.7} parent=5 // pred_fallthru
      _
    %p213 = scmp.le.s32.totalorder 1, %s12
    %p214 = scmp.lt.s32.totalorder %s12, 9
    %p215 = pnand %p213, %p214
    %p216 = pneg %p215
    // Predicated region
    $region29: #{_lambda_.7} parent=5 // pred_check
      _
    $region30: #{_lambda_.7} parent=5 // pred_check_branch
      %218 = sbr.rel (%p215) target = $region32
    $region31: #{_lambda_.7} parent=5 // pred_region
      %s219 = ssub.s32 %s12, 1
      %s220 = smul.u32 2, %s21
      %p221 = scmp.lt.s32.totalorder %s22, 7
      %s222 = scalar_select %p221, %s22, 7
      %p223 = scmp.lt.s32.totalorder %s220, 1
      %s224 = scalar_select %p223, %s220, 1
      %s225 = smul.addr %s224, 8
      %s226 = smul.addr %s222, 16
      %s227 = sadd.s32 %s225, %s226
      %s228 = smul.addr %s227, 8
      %s229 = scalar_lea.vmem %s0, %s228
      %p230 = pneg %p52
      %p231 = pneg %p49
      %p232 = pneg %p73
      %p233 = pneg %p70
      %p234 = pneg %p94
      %p235 = pneg %p91
      %p236 = pneg %p122
      %p237 = pneg %p119
      %s238 = smul.u32 2, %s21
      %p239 = scmp.lt.s32.totalorder %s22, 7
      %s240 = scalar_select %p239, %s22, 7
      %p241 = scmp.lt.s32.totalorder %s238, 1
      %s242 = scalar_select %p241, %s238, 1
      %s243 = smul.addr %s242, 2
      %s244 = smul.addr %s240, 4
      %s245 = sadd.s32 %s243, %s244
      %s246 = smul.addr %s245, 8
      %s247 = scalar_lea.vmem %s3, %s246
      %p248 = pneg %p148
      %p249 = pneg %p145
      %s250 = smul.u32 2, %s21
      %p251 = scmp.lt.s32.totalorder %s250, 1
      %s252 = scalar_select %p251, %s250, 1
      %s253 = smul.addr %s252, 2
      %s254 = smul.addr %s253, 8
      %s255 = scalar_lea.vmem %s4, %s254
      %p256 = pneg %p174
      %p257 = pneg %p171
      %s258 = smul.u32 2, %s21
      %p259 = scmp.lt.s32.totalorder %s258, 1
      %s260 = scalar_select %p259, %s258, 1
      %s261 = smul.addr %s260, 2
      %s262 = smul.addr %s261, 8
      %s263 = scalar_lea.vmem %s5, %s262
      %s264 = smul.u32 2, %s21
      %p265 = scmp.lt.s32.totalorder %s22, 7
      %s266 = scalar_select %p265, %s22, 7
      %p267 = scmp.lt.s32.totalorder %s264, 1
      %s268 = scalar_select %p267, %s264, 1
      %s269 = smul.addr %s268, 8
      %s270 = smul.addr %s266, 16
      %s271 = sadd.s32 %s269, %s270
      %s272 = smul.addr %s271, 8
      %s273 = scalar_lea.vmem %s0, %s272
      %s274 = smul.u32 2, %s21
      %s275 = smul.u32 2, %s21
      %p276 = scmp.lt.s32.totalorder %s22, 7
      %s277 = scalar_select %p276, %s22, 7
      %p278 = scmp.lt.s32.totalorder %s275, 1
      %s279 = scalar_select %p278, %s275, 1
      %s280 = smul.addr %s279, 2
      %s281 = smul.addr %s277, 4
      %s282 = sadd.s32 %s280, %s281
      %s283 = smul.addr %s282, 8
      %s284 = scalar_lea.vmem %s3, %s283
      %s285 = smul.u32 2, %s21
      %s286 = smul.u32 2, %s21
      %p287 = scmp.lt.s32.totalorder %s286, 1
      %s288 = scalar_select %p287, %s286, 1
      %s289 = smul.addr %s288, 2
      %s290 = smul.addr %s289, 8
      %s291 = scalar_lea.vmem %s4, %s290
      %s292 = smul.u32 2, %s21
      %s293 = smul.u32 2, %s21
      %p294 = scmp.lt.s32.totalorder %s293, 1
      %s295 = scalar_select %p294, %s293, 1
      %s296 = smul.addr %s295, 2
      %s297 = smul.addr %s296, 8
      %s298 = scalar_lea.vmem %s5, %s297
      %s299 = smul.u32 2, %s21
      %p301 = scmp.eq.s32.totalorder %s22, 0
      // Predicated region
      $region33: #{_lambda_.7} parent=31 // pred_check
        %p302 = pneg %p301
      $region34: #{_lambda_.7} parent=31 // pred_check_branch
        %304 = sbr.rel (%p302) target = $region36
      $region35: #{_lambda_.7} parent=31 // pred_region
        %305 = vst [vmem:[#allocation2] sm:$0xff] 0.0
        %306 = vst [vmem:[#allocation2 + $0x8] sm:$0xff] 0.0
        %307 = vst [vmem:[#allocation2 + $0x10] sm:$0x3] 0.0
        %308 = vst [vmem:[#allocation2 + $0x18] sm:$0xff] 0.0
        %309 = vst [vmem:[#allocation2 + $0x20] sm:$0xff] 0.0
        %310 = vst [vmem:[#allocation2 + $0x28] sm:$0x3] 0.0
        %311 = vst [vmem:[#allocation3] sm:$0xff] 0.0
        %312 = vst [vmem:[#allocation3 + $0x8] sm:$0xff] 0.0
        %313 = vst [vmem:[#allocation3 + $0x10] sm:$0x3] 0.0
        %314 = vst [vmem:[#allocation3 + $0x18] sm:$0xff] 0.0
        %315 = vst [vmem:[#allocation3 + $0x20] sm:$0xff] 0.0
        %316 = vst [vmem:[#allocation3 + $0x28] sm:$0x3] 0.0
      $region36: #{_lambda_.7} parent=31 // pred_fallthru
        _
      %v317 = vld [vmem:[%s273] sm:$0xff]
      %v318 = vld [vmem:[%s273 + $0x8] sm:$0xff]
      %v319 = vld [vmem:[%s273 + $0x10] sm:$0xff]
      %v320 = vld [vmem:[%s273 + $0x18] sm:$0xff]
      %v321 = vld [vmem:[%s273 + $0x20] sm:$0xff]
      %v322 = vld [vmem:[%s273 + $0x28] sm:$0xff]
      %v323 = vld [vmem:[%s273 + $0x30] sm:$0xff]
      %v324 = vld [vmem:[%s273 + $0x38] sm:$0xff]
      %v325 = vld [vmem:[%s273 + $0x40] sm:$0xff]
      %v326 = vld [vmem:[%s273 + $0x48] sm:$0xff]
      %v327 = vld [vmem:[%s273 + $0x50] sm:$0xff]
      %v328 = vld [vmem:[%s273 + $0x58] sm:$0xff]
      %v329 = vld [vmem:[%s273 + $0x60] sm:$0xff]
      %v330 = vld [vmem:[%s273 + $0x68] sm:$0xff]
      %v331 = vld [vmem:[%s273 + $0x70] sm:$0xff]
      %v332 = vld [vmem:[%s273 + $0x78] sm:$0xff]
      %v333 = vld [vmem:[#allocation2] sm:$0xff]
      %v334 = vld [vmem:[#allocation2 + $0x8] sm:$0xff]
      %v335 = vld [vmem:[#allocation2 + $0x18] sm:$0xff]
      %v336 = vld [vmem:[#allocation2 + $0x20] sm:$0xff]
      %v337 = vld [vmem:[#allocation2 + $0x1] sm:$0xff]
      %v338 = vld [vmem:[#allocation2 + $0x9] sm:$0xff]
      %v339 = vld [vmem:[#allocation2 + $0x19] sm:$0xff]
      %v340 = vld [vmem:[#allocation2 + $0x21] sm:$0xff]
      %v341 = vld [vmem:[#allocation2 + $0x2] sm:$0xff]
      %v342 = vld [vmem:[#allocation2 + $0xa] sm:$0xff]
      %v343 = vld [vmem:[#allocation2 + $0x1a] sm:$0xff]
      %v344 = vld [vmem:[#allocation2 + $0x22] sm:$0xff]
      %v345 = vld [vmem:[#allocation3] sm:$0xff]
      %v346 = vld [vmem:[#allocation3 + $0x8] sm:$0xff]
      %v347 = vld [vmem:[#allocation3 + $0x18] sm:$0xff]
      %v348 = vld [vmem:[#allocation3 + $0x20] sm:$0xff]
      %v349 = vld [vmem:[#allocation3 + $0x1] sm:$0xff]
      %v350 = vld [vmem:[#allocation3 + $0x9] sm:$0xff]
      %v351 = vld [vmem:[#allocation3 + $0x19] sm:$0xff]
      %v352 = vld [vmem:[#allocation3 + $0x21] sm:$0xff]
      %v353 = vld [vmem:[#allocation3 + $0x2] sm:$0xff]
      %v354 = vld [vmem:[#allocation3 + $0xa] sm:$0xff]
      %v355 = vld [vmem:[#allocation3 + $0x1a] sm:$0xff]
      %v356 = vld [vmem:[#allocation3 + $0x22] sm:$0xff]
      %v357 = vpack.c.bf16 %v334, %v333
      %v358 = vpack.c.bf16 %v338, %v337
      %v359 = vpack.c.bf16 %v342, %v341
      %v360 = vpack.c.bf16 %v346, %v345
      %v361 = vpack.c.bf16 %v350, %v349
      %v362 = vpack.c.bf16 %v354, %v353
      %v363 = vpack.c.bf16 %v336, %v335
      %v364 = vpack.c.bf16 %v340, %v339
      %v365 = vpack.c.bf16 %v344, %v343
      %v366 = vpack.c.bf16 %v348, %v347
      %v367 = vpack.c.bf16 %v352, %v351
      %v368 = vpack.c.bf16 %v356, %v355
      %v369 = vld [vmem:[%s1] sm:$0xff]
      %v370 = vld [vmem:[%s1 + $0x8] sm:$0xff]
      %v371 = vld [vmem:[%s1 + $0x10] sm:$0xff]
      %v372 = vld [vmem:[%s1 + $0x18] sm:$0xff]
      %v373 = vld [vmem:[%s1 + $0x20] sm:$0xff]
      %v374 = vld [vmem:[%s1 + $0x28] sm:$0xff]
      %v375 = vld [vmem:[%s1 + $0x30] sm:$0xff]
      %v376 = vld [vmem:[%s1 + $0x38] sm:$0xff]
      %v377 = vld [vmem:[%s1 + $0x40] sm:$0xff]
      %v378 = vld [vmem:[%s1 + $0x48] sm:$0xff]
      %v379 = vld [vmem:[%s1 + $0x50] sm:$0xff]
      %v380 = vld [vmem:[%s1 + $0x58] sm:$0xff]
      %v381 = vld [vmem:[%s1 + $0x60] sm:$0xff]
      %v382 = vld [vmem:[%s1 + $0x68] sm:$0xff]
      %v383 = vld [vmem:[%s1 + $0x70] sm:$0xff]
      %v384 = vld [vmem:[%s1 + $0x78] sm:$0xff]
      %v385 = vld [vmem:[%s1 + $0x80] sm:$0xff]
      %v386 = vld [vmem:[%s1 + $0x88] sm:$0xff]
      %v387 = vld [vmem:[%s1 + $0x90] sm:$0xff]
      %v388 = vld [vmem:[%s1 + $0x98] sm:$0xff]
      %v389 = vld [vmem:[%s1 + $0xa0] sm:$0xff]
      %v390 = vld [vmem:[%s1 + $0xa8] sm:$0xff]
      %v391 = vld [vmem:[%s1 + $0xb0] sm:$0xff]
      %v392 = vld [vmem:[%s1 + $0xb8] sm:$0xff]
      %v393 = vld [vmem:[%s1 + $0xc0] sm:$0xff]
      %v394 = vld [vmem:[%s1 + $0xc8] sm:$0xff]
      %v395 = vld [vmem:[%s1 + $0xd0] sm:$0xff]
      %v396 = vld [vmem:[%s1 + $0xd8] sm:$0xff]
      %v397 = vld [vmem:[%s1 + $0xe0] sm:$0xff]
      %v398 = vld [vmem:[%s1 + $0xe8] sm:$0xff]
      %v399 = vld [vmem:[%s1 + $0xf0] sm:$0xff]
      %v400 = vld [vmem:[%s1 + $0xf8] sm:$0xff]
      %v401 = vld [vmem:[%s1 + $0x100] sm:$0xff]
      %v402 = vld [vmem:[%s1 + $0x108] sm:$0xff]
      %v403 = vld [vmem:[%s1 + $0x110] sm:$0xff]
      %v404 = vld [vmem:[%s1 + $0x118] sm:$0xff]
      %v405 = vld [vmem:[%s1 + $0x120] sm:$0xff]
      %v406 = vld [vmem:[%s1 + $0x128] sm:$0xff]
      %v407 = vld [vmem:[%s1 + $0x130] sm:$0xff]
      %v408 = vld [vmem:[%s1 + $0x138] sm:$0xff]
      %v409 = vld [vmem:[%s1 + $0x140] sm:$0xff]
      %v410 = vld [vmem:[%s1 + $0x148] sm:$0xff]
      %v411 = vld [vmem:[%s1 + $0x150] sm:$0xff]
      %v412 = vld [vmem:[%s1 + $0x158] sm:$0xff]
      %v413 = vld [vmem:[%s1 + $0x160] sm:$0xff]
      %v414 = vld [vmem:[%s1 + $0x168] sm:$0xff]
      %v415 = vld [vmem:[%s1 + $0x170] sm:$0xff]
      %v416 = vld [vmem:[%s1 + $0x178] sm:$0xff]
      %v417 = vld [vmem:[%s1 + $0x180] sm:$0xff]
      %v418 = vld [vmem:[%s1 + $0x188] sm:$0xff]
      %v419 = vld [vmem:[%s1 + $0x190] sm:$0xff]
      %v420 = vld [vmem:[%s1 + $0x198] sm:$0xff]
      %v421 = vld [vmem:[%s1 + $0x1a0] sm:$0xff]
      %v422 = vld [vmem:[%s1 + $0x1a8] sm:$0xff]
      %v423 = vld [vmem:[%s1 + $0x1b0] sm:$0xff]
      %v424 = vld [vmem:[%s1 + $0x1b8] sm:$0xff]
      %v425 = vld [vmem:[%s1 + $0x1c0] sm:$0xff]
      %v426 = vld [vmem:[%s1 + $0x1c8] sm:$0xff]
      %v427 = vld [vmem:[%s1 + $0x1d0] sm:$0xff]
      %v428 = vld [vmem:[%s1 + $0x1d8] sm:$0xff]
      %v429 = vld [vmem:[%s1 + $0x1e0] sm:$0xff]
      %v430 = vld [vmem:[%s1 + $0x1e8] sm:$0xff]
      %v431 = vld [vmem:[%s1 + $0x1f0] sm:$0xff]
      %v432 = vld [vmem:[%s1 + $0x1f8] sm:$0xff]
      %v433 = vld [vmem:[%s1 + $0x200] sm:$0xff]
      %v434 = vld [vmem:[%s1 + $0x208] sm:$0xff]
      %v435 = vld [vmem:[%s1 + $0x210] sm:$0xff]
      %v436 = vld [vmem:[%s1 + $0x218] sm:$0xff]
      %v437 = vld [vmem:[%s1 + $0x220] sm:$0xff]
      %v438 = vld [vmem:[%s1 + $0x228] sm:$0xff]
      %v439 = vld [vmem:[%s1 + $0x230] sm:$0xff]
      %v440 = vld [vmem:[%s1 + $0x238] sm:$0xff]
      %v441 = vld [vmem:[%s1 + $0x240] sm:$0xff]
      %v442 = vld [vmem:[%s1 + $0x248] sm:$0xff]
      %v443 = vld [vmem:[%s1 + $0x250] sm:$0xff]
      %v444 = vld [vmem:[%s1 + $0x258] sm:$0xff]
      %v445 = vld [vmem:[%s1 + $0x260] sm:$0xff]
      %v446 = vld [vmem:[%s1 + $0x268] sm:$0xff]
      %v447 = vld [vmem:[%s1 + $0x270] sm:$0xff]
      %v448 = vld [vmem:[%s1 + $0x278] sm:$0xff]
      %v449 = vld [vmem:[%s1 + $0x280] sm:$0xff]
      %v450 = vld [vmem:[%s1 + $0x288] sm:$0xff]
      %v451 = vld [vmem:[%s1 + $0x290] sm:$0xff]
      %v452 = vld [vmem:[%s1 + $0x298] sm:$0xff]
      %v453 = vld [vmem:[%s1 + $0x2a0] sm:$0xff]
      %v454 = vld [vmem:[%s1 + $0x2a8] sm:$0xff]
      %v455 = vld [vmem:[%s1 + $0x2b0] sm:$0xff]
      %v456 = vld [vmem:[%s1 + $0x2b8] sm:$0xff]
      %v457 = vld [vmem:[%s1 + $0x2c0] sm:$0xff]
      %v458 = vld [vmem:[%s1 + $0x2c8] sm:$0xff]
      %v459 = vld [vmem:[%s1 + $0x2d0] sm:$0xff]
      %v460 = vld [vmem:[%s1 + $0x2d8] sm:$0xff]
      %v461 = vld [vmem:[%s1 + $0x2e0] sm:$0xff]
      %v462 = vld [vmem:[%s1 + $0x2e8] sm:$0xff]
      %v463 = vld [vmem:[%s1 + $0x2f0] sm:$0xff]
      %v464 = vld [vmem:[%s1 + $0x2f8] sm:$0xff]
      %v465 = vld [vmem:[%s1 + $0x300] sm:$0xff]
      %v466 = vld [vmem:[%s1 + $0x308] sm:$0xff]
      %v467 = vld [vmem:[%s1 + $0x310] sm:$0xff]
      %v468 = vld [vmem:[%s1 + $0x318] sm:$0xff]
      %v469 = vld [vmem:[%s1 + $0x320] sm:$0xff]
      %v470 = vld [vmem:[%s1 + $0x328] sm:$0xff]
      %v471 = vld [vmem:[%s1 + $0x330] sm:$0xff]
      %v472 = vld [vmem:[%s1 + $0x338] sm:$0xff]
      %v473 = vld [vmem:[%s1 + $0x340] sm:$0xff]
      %v474 = vld [vmem:[%s1 + $0x348] sm:$0xff]
      %v475 = vld [vmem:[%s1 + $0x350] sm:$0xff]
      %v476 = vld [vmem:[%s1 + $0x358] sm:$0xff]
      %v477 = vld [vmem:[%s1 + $0x360] sm:$0xff]
      %v478 = vld [vmem:[%s1 + $0x368] sm:$0xff]
      %v479 = vld [vmem:[%s1 + $0x370] sm:$0xff]
      %v480 = vld [vmem:[%s1 + $0x378] sm:$0xff]
      %v481 = vld [vmem:[%s1 + $0x380] sm:$0xff]
      %v482 = vld [vmem:[%s1 + $0x388] sm:$0xff]
      %v483 = vld [vmem:[%s1 + $0x390] sm:$0xff]
      %v484 = vld [vmem:[%s1 + $0x398] sm:$0xff]
      %v485 = vld [vmem:[%s1 + $0x3a0] sm:$0xff]
      %v486 = vld [vmem:[%s1 + $0x3a8] sm:$0xff]
      %v487 = vld [vmem:[%s1 + $0x3b0] sm:$0xff]
      %v488 = vld [vmem:[%s1 + $0x3b8] sm:$0xff]
      %v489 = vld [vmem:[%s1 + $0x3c0] sm:$0xff]
      %v490 = vld [vmem:[%s1 + $0x3c8] sm:$0xff]
      %v491 = vld [vmem:[%s1 + $0x3d0] sm:$0xff]
      %v492 = vld [vmem:[%s1 + $0x3d8] sm:$0xff]
      %v493 = vld [vmem:[%s1 + $0x3e0] sm:$0xff]
      %v494 = vld [vmem:[%s1 + $0x3e8] sm:$0xff]
      %v495 = vld [vmem:[%s1 + $0x3f0] sm:$0xff]
      %v496 = vld [vmem:[%s1 + $0x3f8] sm:$0xff]
      %v497 = vld [vmem:[%s1 + $0x400] sm:$0xff]
      %v498 = vld [vmem:[%s1 + $0x408] sm:$0xff]
      %v499 = vld [vmem:[%s1 + $0x410] sm:$0xff]
      %v500 = vld [vmem:[%s1 + $0x418] sm:$0xff]
      %v501 = vld [vmem:[%s1 + $0x420] sm:$0xff]
      %v502 = vld [vmem:[%s1 + $0x428] sm:$0xff]
      %v503 = vld [vmem:[%s1 + $0x430] sm:$0xff]
      %v504 = vld [vmem:[%s1 + $0x438] sm:$0xff]
      %v505 = vld [vmem:[%s1 + $0x440] sm:$0xff]
      %v506 = vld [vmem:[%s1 + $0x448] sm:$0xff]
      %v507 = vld [vmem:[%s1 + $0x450] sm:$0xff]
      %v508 = vld [vmem:[%s1 + $0x458] sm:$0xff]
      %v509 = vld [vmem:[%s1 + $0x460] sm:$0xff]
      %v510 = vld [vmem:[%s1 + $0x468] sm:$0xff]
      %v511 = vld [vmem:[%s1 + $0x470] sm:$0xff]
      %v512 = vld [vmem:[%s1 + $0x478] sm:$0xff]
      %v513 = vld [vmem:[%s1 + $0x480] sm:$0xff]
      %v514 = vld [vmem:[%s1 + $0x488] sm:$0xff]
      %v515 = vld [vmem:[%s1 + $0x490] sm:$0xff]
      %v516 = vld [vmem:[%s1 + $0x498] sm:$0xff]
      %v517 = vld [vmem:[%s1 + $0x4a0] sm:$0xff]
      %v518 = vld [vmem:[%s1 + $0x4a8] sm:$0xff]
      %v519 = vld [vmem:[%s1 + $0x4b0] sm:$0xff]
      %v520 = vld [vmem:[%s1 + $0x4b8] sm:$0xff]
      %v521 = vld [vmem:[%s1 + $0x4c0] sm:$0xff]
      %v522 = vld [vmem:[%s1 + $0x4c8] sm:$0xff]
      %v523 = vld [vmem:[%s1 + $0x4d0] sm:$0xff]
      %v524 = vld [vmem:[%s1 + $0x4d8] sm:$0xff]
      %v525 = vld [vmem:[%s1 + $0x4e0] sm:$0xff]
      %v526 = vld [vmem:[%s1 + $0x4e8] sm:$0xff]
      %v527 = vld [vmem:[%s1 + $0x4f0] sm:$0xff]
      %v528 = vld [vmem:[%s1 + $0x4f8] sm:$0xff]
      %v529 = vld [vmem:[%s1 + $0x500] sm:$0xff]
      %v530 = vld [vmem:[%s1 + $0x508] sm:$0xff]
      %v531 = vld [vmem:[%s1 + $0x510] sm:$0xff]
      %v532 = vld [vmem:[%s1 + $0x518] sm:$0xff]
      %v533 = vld [vmem:[%s1 + $0x520] sm:$0xff]
      %v534 = vld [vmem:[%s1 + $0x528] sm:$0xff]
      %v535 = vld [vmem:[%s1 + $0x530] sm:$0xff]
      %v536 = vld [vmem:[%s1 + $0x538] sm:$0xff]
      %v537 = vld [vmem:[%s1 + $0x540] sm:$0xff]
      %v538 = vld [vmem:[%s1 + $0x548] sm:$0xff]
      %v539 = vld [vmem:[%s1 + $0x550] sm:$0xff]
      %v540 = vld [vmem:[%s1 + $0x558] sm:$0xff]
      %v541 = vld [vmem:[%s1 + $0x560] sm:$0xff]
      %v542 = vld [vmem:[%s1 + $0x568] sm:$0xff]
      %v543 = vld [vmem:[%s1 + $0x570] sm:$0xff]
      %v544 = vld [vmem:[%s1 + $0x578] sm:$0xff]
      %v545 = vld [vmem:[%s1 + $0x580] sm:$0xff]
      %v546 = vld [vmem:[%s1 + $0x588] sm:$0xff]
      %v547 = vld [vmem:[%s1 + $0x590] sm:$0xff]
      %v548 = vld [vmem:[%s1 + $0x598] sm:$0xff]
      %v549 = vld [vmem:[%s1 + $0x5a0] sm:$0xff]
      %v550 = vld [vmem:[%s1 + $0x5a8] sm:$0xff]
      %v551 = vld [vmem:[%s1 + $0x5b0] sm:$0xff]
      %v552 = vld [vmem:[%s1 + $0x5b8] sm:$0xff]
      %v553 = vld [vmem:[%s1 + $0x5c0] sm:$0xff]
      %v554 = vld [vmem:[%s1 + $0x5c8] sm:$0xff]
      %v555 = vld [vmem:[%s1 + $0x5d0] sm:$0xff]
      %v556 = vld [vmem:[%s1 + $0x5d8] sm:$0xff]
      %v557 = vld [vmem:[%s1 + $0x5e0] sm:$0xff]
      %v558 = vld [vmem:[%s1 + $0x5e8] sm:$0xff]
      %v559 = vld [vmem:[%s1 + $0x5f0] sm:$0xff]
      %v560 = vld [vmem:[%s1 + $0x5f8] sm:$0xff]
      %v753 = vunpack.c.l.b16 %v369
      %v754 = vunpack.c.h.b16 %v369
      %v755 = vunpack.c.l.b16 %v370
      %v756 = vunpack.c.h.b16 %v370
      %v757 = vunpack.c.l.b16 %v371
      %v758 = vunpack.c.h.b16 %v371
      %v759 = vunpack.c.l.b16 %v372
      %v760 = vunpack.c.h.b16 %v372
      %v761 = vunpack.c.l.b16 %v373
      %v762 = vunpack.c.h.b16 %v373
      %v763 = vunpack.c.l.b16 %v374
      %v764 = vunpack.c.h.b16 %v374
      %v765 = vunpack.c.l.b16 %v375
      %v766 = vunpack.c.h.b16 %v375
      %v767 = vunpack.c.l.b16 %v376
      %v768 = vunpack.c.h.b16 %v376
      %v769 = vunpack.c.l.b16 %v377
      %v770 = vunpack.c.h.b16 %v377
      %v771 = vunpack.c.l.b16 %v378
      %v772 = vunpack.c.h.b16 %v378
      %v773 = vunpack.c.l.b16 %v379
      %v774 = vunpack.c.h.b16 %v379
      %v775 = vunpack.c.l.b16 %v380
      %v776 = vunpack.c.h.b16 %v380
      %v777 = vunpack.c.l.b16 %v381
      %v778 = vunpack.c.h.b16 %v381
      %v779 = vunpack.c.l.b16 %v382
      %v780 = vunpack.c.h.b16 %v382
      %v781 = vunpack.c.l.b16 %v383
      %v782 = vunpack.c.h.b16 %v383
      %v783 = vunpack.c.l.b16 %v384
      %v784 = vunpack.c.h.b16 %v384
      %v785 = vunpack.c.l.b16 %v385
      %v786 = vunpack.c.h.b16 %v385
      %v787 = vunpack.c.l.b16 %v386
      %v788 = vunpack.c.h.b16 %v386
      %v789 = vunpack.c.l.b16 %v387
      %v790 = vunpack.c.h.b16 %v387
      %v791 = vunpack.c.l.b16 %v388
      %v792 = vunpack.c.h.b16 %v388
      %v793 = vunpack.c.l.b16 %v389
      %v794 = vunpack.c.h.b16 %v389
      %v795 = vunpack.c.l.b16 %v390
      %v796 = vunpack.c.h.b16 %v390
      %v797 = vunpack.c.l.b16 %v391
      %v798 = vunpack.c.h.b16 %v391
      %v799 = vunpack.c.l.b16 %v392
      %v800 = vunpack.c.h.b16 %v392
      %v801 = vunpack.c.l.b16 %v393
      %v802 = vunpack.c.h.b16 %v393
      %v803 = vunpack.c.l.b16 %v394
      %v804 = vunpack.c.h.b16 %v394
      %v805 = vunpack.c.l.b16 %v395
      %v806 = vunpack.c.h.b16 %v395
      %v807 = vunpack.c.l.b16 %v396
      %v808 = vunpack.c.h.b16 %v396
      %v809 = vunpack.c.l.b16 %v397
      %v810 = vunpack.c.h.b16 %v397
      %v811 = vunpack.c.l.b16 %v398
      %v812 = vunpack.c.h.b16 %v398
      %v813 = vunpack.c.l.b16 %v399
      %v814 = vunpack.c.h.b16 %v399
      %v815 = vunpack.c.l.b16 %v400
      %v816 = vunpack.c.h.b16 %v400
      %v817 = vunpack.c.l.b16 %v401
      %v818 = vunpack.c.h.b16 %v401
      %v819 = vunpack.c.l.b16 %v402
      %v820 = vunpack.c.h.b16 %v402
      %v821 = vunpack.c.l.b16 %v403
      %v822 = vunpack.c.h.b16 %v403
      %v823 = vunpack.c.l.b16 %v404
      %v824 = vunpack.c.h.b16 %v404
      %v825 = vunpack.c.l.b16 %v405
      %v826 = vunpack.c.h.b16 %v405
      %v827 = vunpack.c.l.b16 %v406
      %v828 = vunpack.c.h.b16 %v406
      %v829 = vunpack.c.l.b16 %v407
      %v830 = vunpack.c.h.b16 %v407
      %v831 = vunpack.c.l.b16 %v408
      %v832 = vunpack.c.h.b16 %v408
      %v833 = vunpack.c.l.b16 %v409
      %v834 = vunpack.c.h.b16 %v409
      %v835 = vunpack.c.l.b16 %v410
      %v836 = vunpack.c.h.b16 %v410
      %v837 = vunpack.c.l.b16 %v411
      %v838 = vunpack.c.h.b16 %v411
      %v839 = vunpack.c.l.b16 %v412
      %v840 = vunpack.c.h.b16 %v412
      %v841 = vunpack.c.l.b16 %v413
      %v842 = vunpack.c.h.b16 %v413
      %v843 = vunpack.c.l.b16 %v414
      %v844 = vunpack.c.h.b16 %v414
      %v845 = vunpack.c.l.b16 %v415
      %v846 = vunpack.c.h.b16 %v415
      %v847 = vunpack.c.l.b16 %v416
      %v848 = vunpack.c.h.b16 %v416
      %v849 = vunpack.c.l.b16 %v417
      %v850 = vunpack.c.h.b16 %v417
      %v851 = vunpack.c.l.b16 %v418
      %v852 = vunpack.c.h.b16 %v418
      %v853 = vunpack.c.l.b16 %v419
      %v854 = vunpack.c.h.b16 %v419
      %v855 = vunpack.c.l.b16 %v420
      %v856 = vunpack.c.h.b16 %v420
      %v857 = vunpack.c.l.b16 %v421
      %v858 = vunpack.c.h.b16 %v421
      %v859 = vunpack.c.l.b16 %v422
      %v860 = vunpack.c.h.b16 %v422
      %v861 = vunpack.c.l.b16 %v423
      %v862 = vunpack.c.h.b16 %v423
      %v863 = vunpack.c.l.b16 %v424
      %v864 = vunpack.c.h.b16 %v424
      %v865 = vunpack.c.l.b16 %v425
      %v866 = vunpack.c.h.b16 %v425
      %v867 = vunpack.c.l.b16 %v426
      %v868 = vunpack.c.h.b16 %v426
      %v869 = vunpack.c.l.b16 %v427
      %v870 = vunpack.c.h.b16 %v427
      %v871 = vunpack.c.l.b16 %v428
      %v872 = vunpack.c.h.b16 %v428
      %v873 = vunpack.c.l.b16 %v429
      %v874 = vunpack.c.h.b16 %v429
      %v875 = vunpack.c.l.b16 %v430
      %v876 = vunpack.c.h.b16 %v430
      %v877 = vunpack.c.l.b16 %v431
      %v878 = vunpack.c.h.b16 %v431
      %v879 = vunpack.c.l.b16 %v432
      %v880 = vunpack.c.h.b16 %v432
      %v881 = vunpack.c.l.b16 %v433
      %v882 = vunpack.c.h.b16 %v433
      %v883 = vunpack.c.l.b16 %v434
      %v884 = vunpack.c.h.b16 %v434
      %v885 = vunpack.c.l.b16 %v435
      %v886 = vunpack.c.h.b16 %v435
      %v887 = vunpack.c.l.b16 %v436
      %v888 = vunpack.c.h.b16 %v436
      %v889 = vunpack.c.l.b16 %v437
      %v890 = vunpack.c.h.b16 %v437
      %v891 = vunpack.c.l.b16 %v438
      %v892 = vunpack.c.h.b16 %v438
      %v893 = vunpack.c.l.b16 %v439
      %v894 = vunpack.c.h.b16 %v439
      %v895 = vunpack.c.l.b16 %v440
      %v896 = vunpack.c.h.b16 %v440
      %v897 = vunpack.c.l.b16 %v441
      %v898 = vunpack.c.h.b16 %v441
      %v899 = vunpack.c.l.b16 %v442
      %v900 = vunpack.c.h.b16 %v442
      %v901 = vunpack.c.l.b16 %v443
      %v902 = vunpack.c.h.b16 %v443
      %v903 = vunpack.c.l.b16 %v444
      %v904 = vunpack.c.h.b16 %v444
      %v905 = vunpack.c.l.b16 %v445
      %v906 = vunpack.c.h.b16 %v445
      %v907 = vunpack.c.l.b16 %v446
      %v908 = vunpack.c.h.b16 %v446
      %v909 = vunpack.c.l.b16 %v447
      %v910 = vunpack.c.h.b16 %v447
      %v911 = vunpack.c.l.b16 %v448
      %v912 = vunpack.c.h.b16 %v448
      %v913 = vunpack.c.l.b16 %v449
      %v914 = vunpack.c.h.b16 %v449
      %v915 = vunpack.c.l.b16 %v450
      %v916 = vunpack.c.h.b16 %v450
      %v917 = vunpack.c.l.b16 %v451
      %v918 = vunpack.c.h.b16 %v451
      %v919 = vunpack.c.l.b16 %v452
      %v920 = vunpack.c.h.b16 %v452
      %v921 = vunpack.c.l.b16 %v453
      %v922 = vunpack.c.h.b16 %v453
      %v923 = vunpack.c.l.b16 %v454
      %v924 = vunpack.c.h.b16 %v454
      %v925 = vunpack.c.l.b16 %v455
      %v926 = vunpack.c.h.b16 %v455
      %v927 = vunpack.c.l.b16 %v456
      %v928 = vunpack.c.h.b16 %v456
      %v929 = vunpack.c.l.b16 %v457
      %v930 = vunpack.c.h.b16 %v457
      %v931 = vunpack.c.l.b16 %v458
      %v932 = vunpack.c.h.b16 %v458
      %v933 = vunpack.c.l.b16 %v459
      %v934 = vunpack.c.h.b16 %v459
      %v935 = vunpack.c.l.b16 %v460
      %v936 = vunpack.c.h.b16 %v460
      %v937 = vunpack.c.l.b16 %v461
      %v938 = vunpack.c.h.b16 %v461
      %v939 = vunpack.c.l.b16 %v462
      %v940 = vunpack.c.h.b16 %v462
      %v941 = vunpack.c.l.b16 %v463
      %v942 = vunpack.c.h.b16 %v463
      %v943 = vunpack.c.l.b16 %v464
      %v944 = vunpack.c.h.b16 %v464
      %v945 = vunpack.c.l.b16 %v465
      %v946 = vunpack.c.h.b16 %v465
      %v947 = vunpack.c.l.b16 %v466
      %v948 = vunpack.c.h.b16 %v466
      %v949 = vunpack.c.l.b16 %v467
      %v950 = vunpack.c.h.b16 %v467
      %v951 = vunpack.c.l.b16 %v468
      %v952 = vunpack.c.h.b16 %v468
      %v953 = vunpack.c.l.b16 %v469
      %v954 = vunpack.c.h.b16 %v469
      %v955 = vunpack.c.l.b16 %v470
      %v956 = vunpack.c.h.b16 %v470
      %v957 = vunpack.c.l.b16 %v471
      %v958 = vunpack.c.h.b16 %v471
      %v959 = vunpack.c.l.b16 %v472
      %v960 = vunpack.c.h.b16 %v472
      %v961 = vunpack.c.l.b16 %v473
      %v962 = vunpack.c.h.b16 %v473
      %v963 = vunpack.c.l.b16 %v474
      %v964 = vunpack.c.h.b16 %v474
      %v965 = vunpack.c.l.b16 %v475
      %v966 = vunpack.c.h.b16 %v475
      %v967 = vunpack.c.l.b16 %v476
      %v968 = vunpack.c.h.b16 %v476
      %v969 = vunpack.c.l.b16 %v477
      %v970 = vunpack.c.h.b16 %v477
      %v971 = vunpack.c.l.b16 %v478
      %v972 = vunpack.c.h.b16 %v478
      %v973 = vunpack.c.l.b16 %v479
      %v974 = vunpack.c.h.b16 %v479
      %v975 = vunpack.c.l.b16 %v480
      %v976 = vunpack.c.h.b16 %v480
      %v977 = vunpack.c.l.b16 %v481
      %v978 = vunpack.c.h.b16 %v481
      %v979 = vunpack.c.l.b16 %v482
      %v980 = vunpack.c.h.b16 %v482
      %v981 = vunpack.c.l.b16 %v483
      %v982 = vunpack.c.h.b16 %v483
      %v983 = vunpack.c.l.b16 %v484
      %v984 = vunpack.c.h.b16 %v484
      %v985 = vunpack.c.l.b16 %v485
      %v986 = vunpack.c.h.b16 %v485
      %v987 = vunpack.c.l.b16 %v486
      %v988 = vunpack.c.h.b16 %v486
      %v989 = vunpack.c.l.b16 %v487
      %v990 = vunpack.c.h.b16 %v487
      %v991 = vunpack.c.l.b16 %v488
      %v992 = vunpack.c.h.b16 %v488
      %v993 = vunpack.c.l.b16 %v489
      %v994 = vunpack.c.h.b16 %v489
      %v995 = vunpack.c.l.b16 %v490
      %v996 = vunpack.c.h.b16 %v490
      %v997 = vunpack.c.l.b16 %v491
      %v998 = vunpack.c.h.b16 %v491
      %v999 = vunpack.c.l.b16 %v492
      %v1000 = vunpack.c.h.b16 %v492
      %v1001 = vunpack.c.l.b16 %v493
      %v1002 = vunpack.c.h.b16 %v493
      %v1003 = vunpack.c.l.b16 %v494
      %v1004 = vunpack.c.h.b16 %v494
      %v1005 = vunpack.c.l.b16 %v495
      %v1006 = vunpack.c.h.b16 %v495
      %v1007 = vunpack.c.l.b16 %v496
      %v1008 = vunpack.c.h.b16 %v496
      %v1009 = vunpack.c.l.b16 %v497
      %v1010 = vunpack.c.h.b16 %v497
      %v1011 = vunpack.c.l.b16 %v498
      %v1012 = vunpack.c.h.b16 %v498
      %v1013 = vunpack.c.l.b16 %v499
      %v1014 = vunpack.c.h.b16 %v499
      %v1015 = vunpack.c.l.b16 %v500
      %v1016 = vunpack.c.h.b16 %v500
      %v1017 = vunpack.c.l.b16 %v501
      %v1018 = vunpack.c.h.b16 %v501
      %v1019 = vunpack.c.l.b16 %v502
      %v1020 = vunpack.c.h.b16 %v502
      %v1021 = vunpack.c.l.b16 %v503
      %v1022 = vunpack.c.h.b16 %v503
      %v1023 = vunpack.c.l.b16 %v504
      %v1024 = vunpack.c.h.b16 %v504
      %v1025 = vunpack.c.l.b16 %v505
      %v1026 = vunpack.c.h.b16 %v505
      %v1027 = vunpack.c.l.b16 %v506
      %v1028 = vunpack.c.h.b16 %v506
      %v1029 = vunpack.c.l.b16 %v507
      %v1030 = vunpack.c.h.b16 %v507
      %v1031 = vunpack.c.l.b16 %v508
      %v1032 = vunpack.c.h.b16 %v508
      %v1033 = vunpack.c.l.b16 %v509
      %v1034 = vunpack.c.h.b16 %v509
      %v1035 = vunpack.c.l.b16 %v510
      %v1036 = vunpack.c.h.b16 %v510
      %v1037 = vunpack.c.l.b16 %v511
      %v1038 = vunpack.c.h.b16 %v511
      %v1039 = vunpack.c.l.b16 %v512
      %v1040 = vunpack.c.h.b16 %v512
      %v1041 = vunpack.c.l.b16 %v513
      %v1042 = vunpack.c.h.b16 %v513
      %v1043 = vunpack.c.l.b16 %v514
      %v1044 = vunpack.c.h.b16 %v514
      %v1045 = vunpack.c.l.b16 %v515
      %v1046 = vunpack.c.h.b16 %v515
      %v1047 = vunpack.c.l.b16 %v516
      %v1048 = vunpack.c.h.b16 %v516
      %v1049 = vunpack.c.l.b16 %v517
      %v1050 = vunpack.c.h.b16 %v517
      %v1051 = vunpack.c.l.b16 %v518
      %v1052 = vunpack.c.h.b16 %v518
      %v1053 = vunpack.c.l.b16 %v519
      %v1054 = vunpack.c.h.b16 %v519
      %v1055 = vunpack.c.l.b16 %v520
      %v1056 = vunpack.c.h.b16 %v520
      %v1057 = vunpack.c.l.b16 %v521
      %v1058 = vunpack.c.h.b16 %v521
      %v1059 = vunpack.c.l.b16 %v522
      %v1060 = vunpack.c.h.b16 %v522
      %v1061 = vunpack.c.l.b16 %v523
      %v1062 = vunpack.c.h.b16 %v523
      %v1063 = vunpack.c.l.b16 %v524
      %v1064 = vunpack.c.h.b16 %v524
      %v1065 = vunpack.c.l.b16 %v525
      %v1066 = vunpack.c.h.b16 %v525
      %v1067 = vunpack.c.l.b16 %v526
      %v1068 = vunpack.c.h.b16 %v526
      %v1069 = vunpack.c.l.b16 %v527
      %v1070 = vunpack.c.h.b16 %v527
      %v1071 = vunpack.c.l.b16 %v528
      %v1072 = vunpack.c.h.b16 %v528
      %v1073 = vunpack.c.l.b16 %v529
      %v1074 = vunpack.c.h.b16 %v529
      %v1075 = vunpack.c.l.b16 %v530
      %v1076 = vunpack.c.h.b16 %v530
      %v1077 = vunpack.c.l.b16 %v531
      %v1078 = vunpack.c.h.b16 %v531
      %v1079 = vunpack.c.l.b16 %v532
      %v1080 = vunpack.c.h.b16 %v532
      %v1081 = vunpack.c.l.b16 %v533
      %v1082 = vunpack.c.h.b16 %v533
      %v1083 = vunpack.c.l.b16 %v534
      %v1084 = vunpack.c.h.b16 %v534
      %v1085 = vunpack.c.l.b16 %v535
      %v1086 = vunpack.c.h.b16 %v535
      %v1087 = vunpack.c.l.b16 %v536
      %v1088 = vunpack.c.h.b16 %v536
      %v1089 = vunpack.c.l.b16 %v537
      %v1090 = vunpack.c.h.b16 %v537
      %v1091 = vunpack.c.l.b16 %v538
      %v1092 = vunpack.c.h.b16 %v538
      %v1093 = vunpack.c.l.b16 %v539
      %v1094 = vunpack.c.h.b16 %v539
      %v1095 = vunpack.c.l.b16 %v540
      %v1096 = vunpack.c.h.b16 %v540
      %v1097 = vunpack.c.l.b16 %v541
      %v1098 = vunpack.c.h.b16 %v541
      %v1099 = vunpack.c.l.b16 %v542
      %v1100 = vunpack.c.h.b16 %v542
      %v1101 = vunpack.c.l.b16 %v543
      %v1102 = vunpack.c.h.b16 %v543
      %v1103 = vunpack.c.l.b16 %v544
      %v1104 = vunpack.c.h.b16 %v544
      %v1105 = vunpack.c.l.b16 %v545
      %v1106 = vunpack.c.h.b16 %v545
      %v1107 = vunpack.c.l.b16 %v546
      %v1108 = vunpack.c.h.b16 %v546
      %v1109 = vunpack.c.l.b16 %v547
      %v1110 = vunpack.c.h.b16 %v547
      %v1111 = vunpack.c.l.b16 %v548
      %v1112 = vunpack.c.h.b16 %v548
      %v1113 = vunpack.c.l.b16 %v549
      %v1114 = vunpack.c.h.b16 %v549
      %v1115 = vunpack.c.l.b16 %v550
      %v1116 = vunpack.c.h.b16 %v550
      %v1117 = vunpack.c.l.b16 %v551
      %v1118 = vunpack.c.h.b16 %v551
      %v1119 = vunpack.c.l.b16 %v552
      %v1120 = vunpack.c.h.b16 %v552
      %v1121 = vunpack.c.l.b16 %v553
      %v1122 = vunpack.c.h.b16 %v553
      %v1123 = vunpack.c.l.b16 %v554
      %v1124 = vunpack.c.h.b16 %v554
      %v1125 = vunpack.c.l.b16 %v555
      %v1126 = vunpack.c.h.b16 %v555
      %v1127 = vunpack.c.l.b16 %v556
      %v1128 = vunpack.c.h.b16 %v556
      %v1129 = vunpack.c.l.b16 %v557
      %v1130 = vunpack.c.h.b16 %v557
      %v1131 = vunpack.c.l.b16 %v558
      %v1132 = vunpack.c.h.b16 %v558
      %v1133 = vunpack.c.l.b16 %v559
      %v1134 = vunpack.c.h.b16 %v559
      %v1135 = vunpack.c.l.b16 %v560
      %v1136 = vunpack.c.h.b16 %v560
      %v1137 = vpack.c.b16 %v757, %v753
      %v1138 = vpack.c.b16 %v758, %v754
      %v1139 = vpack.c.b16 %v759, %v755
      %v1140 = vpack.c.b16 %v760, %v756
      %v1141 = vpack.c.b16 %v765, %v761
      %v1142 = vpack.c.b16 %v766, %v762
      %v1143 = vpack.c.b16 %v767, %v763
      %v1144 = vpack.c.b16 %v768, %v764
      %v1145 = vpack.c.b16 %v773, %v769
      %v1146 = vpack.c.b16 %v774, %v770
      %v1147 = vpack.c.b16 %v775, %v771
      %v1148 = vpack.c.b16 %v776, %v772
      %v1149 = vpack.c.b16 %v781, %v777
      %v1150 = vpack.c.b16 %v782, %v778
      %v1151 = vpack.c.b16 %v783, %v779
      %v1152 = vpack.c.b16 %v784, %v780
      %v1153 = vpack.c.b16 %v789, %v785
      %v1154 = vpack.c.b16 %v790, %v786
      %v1155 = vpack.c.b16 %v791, %v787
      %v1156 = vpack.c.b16 %v792, %v788
      %v1157 = vpack.c.b16 %v797, %v793
      %v1158 = vpack.c.b16 %v798, %v794
      %v1159 = vpack.c.b16 %v799, %v795
      %v1160 = vpack.c.b16 %v800, %v796
      %v1161 = vpack.c.b16 %v805, %v801
      %v1162 = vpack.c.b16 %v806, %v802
      %v1163 = vpack.c.b16 %v807, %v803
      %v1164 = vpack.c.b16 %v808, %v804
      %v1165 = vpack.c.b16 %v813, %v809
      %v1166 = vpack.c.b16 %v814, %v810
      %v1167 = vpack.c.b16 %v815, %v811
      %v1168 = vpack.c.b16 %v816, %v812
      %v1169 = vpack.c.b16 %v821, %v817
      %v1170 = vpack.c.b16 %v822, %v818
      %v1171 = vpack.c.b16 %v823, %v819
      %v1172 = vpack.c.b16 %v824, %v820
      %v1173 = vpack.c.b16 %v829, %v825
      %v1174 = vpack.c.b16 %v830, %v826
      %v1175 = vpack.c.b16 %v831, %v827
      %v1176 = vpack.c.b16 %v832, %v828
      %v1177 = vpack.c.b16 %v837, %v833
      %v1178 = vpack.c.b16 %v838, %v834
      %v1179 = vpack.c.b16 %v839, %v835
      %v1180 = vpack.c.b16 %v840, %v836
      %v1181 = vpack.c.b16 %v845, %v841
      %v1182 = vpack.c.b16 %v846, %v842
      %v1183 = vpack.c.b16 %v847, %v843
      %v1184 = vpack.c.b16 %v848, %v844
      %v1185 = vpack.c.b16 %v853, %v849
      %v1186 = vpack.c.b16 %v854, %v850
      %v1187 = vpack.c.b16 %v855, %v851
      %v1188 = vpack.c.b16 %v856, %v852
      %v1189 = vpack.c.b16 %v861, %v857
      %v1190 = vpack.c.b16 %v862, %v858
      %v1191 = vpack.c.b16 %v863, %v859
      %v1192 = vpack.c.b16 %v864, %v860
      %v1193 = vpack.c.b16 %v869, %v865
      %v1194 = vpack.c.b16 %v870, %v866
      %v1195 = vpack.c.b16 %v871, %v867
      %v1196 = vpack.c.b16 %v872, %v868
      %v1197 = vpack.c.b16 %v877, %v873
      %v1198 = vpack.c.b16 %v878, %v874
      %v1199 = vpack.c.b16 %v879, %v875
      %v1200 = vpack.c.b16 %v880, %v876
      %v1201 = vpack.c.b16 %v885, %v881
      %v1202 = vpack.c.b16 %v886, %v882
      %v1203 = vpack.c.b16 %v887, %v883
      %v1204 = vpack.c.b16 %v888, %v884
      %v1205 = vpack.c.b16 %v893, %v889
      %v1206 = vpack.c.b16 %v894, %v890
      %v1207 = vpack.c.b16 %v895, %v891
      %v1208 = vpack.c.b16 %v896, %v892
      %v1209 = vpack.c.b16 %v901, %v897
      %v1210 = vpack.c.b16 %v902, %v898
      %v1211 = vpack.c.b16 %v903, %v899
      %v1212 = vpack.c.b16 %v904, %v900
      %v1213 = vpack.c.b16 %v909, %v905
      %v1214 = vpack.c.b16 %v910, %v906
      %v1215 = vpack.c.b16 %v911, %v907
      %v1216 = vpack.c.b16 %v912, %v908
      %v1217 = vpack.c.b16 %v917, %v913
      %v1218 = vpack.c.b16 %v918, %v914
      %v1219 = vpack.c.b16 %v919, %v915
      %v1220 = vpack.c.b16 %v920, %v916
      %v1221 = vpack.c.b16 %v925, %v921
      %v1222 = vpack.c.b16 %v926, %v922
      %v1223 = vpack.c.b16 %v927, %v923
      %v1224 = vpack.c.b16 %v928, %v924
      %v1225 = vpack.c.b16 %v933, %v929
      %v1226 = vpack.c.b16 %v934, %v930
      %v1227 = vpack.c.b16 %v935, %v931
      %v1228 = vpack.c.b16 %v936, %v932
      %v1229 = vpack.c.b16 %v941, %v937
      %v1230 = vpack.c.b16 %v942, %v938
      %v1231 = vpack.c.b16 %v943, %v939
      %v1232 = vpack.c.b16 %v944, %v940
      %v1233 = vpack.c.b16 %v949, %v945
      %v1234 = vpack.c.b16 %v950, %v946
      %v1235 = vpack.c.b16 %v951, %v947
      %v1236 = vpack.c.b16 %v952, %v948
      %v1237 = vpack.c.b16 %v957, %v953
      %v1238 = vpack.c.b16 %v958, %v954
      %v1239 = vpack.c.b16 %v959, %v955
      %v1240 = vpack.c.b16 %v960, %v956
      %v1241 = vpack.c.b16 %v965, %v961
      %v1242 = vpack.c.b16 %v966, %v962
      %v1243 = vpack.c.b16 %v967, %v963
      %v1244 = vpack.c.b16 %v968, %v964
      %v1245 = vpack.c.b16 %v973, %v969
      %v1246 = vpack.c.b16 %v974, %v970
      %v1247 = vpack.c.b16 %v975, %v971
      %v1248 = vpack.c.b16 %v976, %v972
      %v1249 = vpack.c.b16 %v981, %v977
      %v1250 = vpack.c.b16 %v982, %v978
      %v1251 = vpack.c.b16 %v983, %v979
      %v1252 = vpack.c.b16 %v984, %v980
      %v1253 = vpack.c.b16 %v989, %v985
      %v1254 = vpack.c.b16 %v990, %v986
      %v1255 = vpack.c.b16 %v991, %v987
      %v1256 = vpack.c.b16 %v992, %v988
      %v1257 = vpack.c.b16 %v997, %v993
      %v1258 = vpack.c.b16 %v998, %v994
      %v1259 = vpack.c.b16 %v999, %v995
      %v1260 = vpack.c.b16 %v1000, %v996
      %v1261 = vpack.c.b16 %v1005, %v1001
      %v1262 = vpack.c.b16 %v1006, %v1002
      %v1263 = vpack.c.b16 %v1007, %v1003
      %v1264 = vpack.c.b16 %v1008, %v1004
      %v1265 = vpack.c.b16 %v1013, %v1009
      %v1266 = vpack.c.b16 %v1014, %v1010
      %v1267 = vpack.c.b16 %v1015, %v1011
      %v1268 = vpack.c.b16 %v1016, %v1012
      %v1269 = vpack.c.b16 %v1021, %v1017
      %v1270 = vpack.c.b16 %v1022, %v1018
      %v1271 = vpack.c.b16 %v1023, %v1019
      %v1272 = vpack.c.b16 %v1024, %v1020
      %v1273 = vpack.c.b16 %v1029, %v1025
      %v1274 = vpack.c.b16 %v1030, %v1026
      %v1275 = vpack.c.b16 %v1031, %v1027
      %v1276 = vpack.c.b16 %v1032, %v1028
      %v1277 = vpack.c.b16 %v1037, %v1033
      %v1278 = vpack.c.b16 %v1038, %v1034
      %v1279 = vpack.c.b16 %v1039, %v1035
      %v1280 = vpack.c.b16 %v1040, %v1036
      %v1281 = vpack.c.b16 %v1045, %v1041
      %v1282 = vpack.c.b16 %v1046, %v1042
      %v1283 = vpack.c.b16 %v1047, %v1043
      %v1284 = vpack.c.b16 %v1048, %v1044
      %v1285 = vpack.c.b16 %v1053, %v1049
      %v1286 = vpack.c.b16 %v1054, %v1050
      %v1287 = vpack.c.b16 %v1055, %v1051
      %v1288 = vpack.c.b16 %v1056, %v1052
      %v1289 = vpack.c.b16 %v1061, %v1057
      %v1290 = vpack.c.b16 %v1062, %v1058
      %v1291 = vpack.c.b16 %v1063, %v1059
      %v1292 = vpack.c.b16 %v1064, %v1060
      %v1293 = vpack.c.b16 %v1069, %v1065
      %v1294 = vpack.c.b16 %v1070, %v1066
      %v1295 = vpack.c.b16 %v1071, %v1067
      %v1296 = vpack.c.b16 %v1072, %v1068
      %v1297 = vpack.c.b16 %v1077, %v1073
      %v1298 = vpack.c.b16 %v1078, %v1074
      %v1299 = vpack.c.b16 %v1079, %v1075
      %v1300 = vpack.c.b16 %v1080, %v1076
      %v1301 = vpack.c.b16 %v1085, %v1081
      %v1302 = vpack.c.b16 %v1086, %v1082
      %v1303 = vpack.c.b16 %v1087, %v1083
      %v1304 = vpack.c.b16 %v1088, %v1084
      %v1305 = vpack.c.b16 %v1093, %v1089
      %v1306 = vpack.c.b16 %v1094, %v1090
      %v1307 = vpack.c.b16 %v1095, %v1091
      %v1308 = vpack.c.b16 %v1096, %v1092
      %v1309 = vpack.c.b16 %v1101, %v1097
      %v1310 = vpack.c.b16 %v1102, %v1098
      %v1311 = vpack.c.b16 %v1103, %v1099
      %v1312 = vpack.c.b16 %v1104, %v1100
      %v1313 = vpack.c.b16 %v1109, %v1105
      %v1314 = vpack.c.b16 %v1110, %v1106
      %v1315 = vpack.c.b16 %v1111, %v1107
      %v1316 = vpack.c.b16 %v1112, %v1108
      %v1317 = vpack.c.b16 %v1117, %v1113
      %v1318 = vpack.c.b16 %v1118, %v1114
      %v1319 = vpack.c.b16 %v1119, %v1115
      %v1320 = vpack.c.b16 %v1120, %v1116
      %v1321 = vpack.c.b16 %v1125, %v1121
      %v1322 = vpack.c.b16 %v1126, %v1122
      %v1323 = vpack.c.b16 %v1127, %v1123
      %v1324 = vpack.c.b16 %v1128, %v1124
      %v1325 = vpack.c.b16 %v1133, %v1129
      %v1326 = vpack.c.b16 %v1134, %v1130
      %v1327 = vpack.c.b16 %v1135, %v1131
      %v1328 = vpack.c.b16 %v1136, %v1132
      %1521 = vmatprep.subr.bf16.mxu0 %v1166
      %1522 = vmatpush1.bf16.msra.mxu0 %v1165
      %1523 = vmatprep.subr.bf16.mxu0 %v1162
      %1524 = vmatpush1.bf16.msra.mxu0 %v1161
      %1525 = vmatprep.subr.bf16.mxu0 %v1158
      %1526 = vmatpush1.bf16.msra.mxu0 %v1157
      %1527 = vmatprep.subr.bf16.mxu0 %v1154
      %1528 = vmatpush1.bf16.msra.mxu0 %v1153
      %1529 = vmatprep.subr.bf16.mxu0 %v1150
      %1530 = vmatpush1.bf16.msra.mxu0 %v1149
      %1531 = vmatprep.subr.bf16.mxu0 %v1146
      %1532 = vmatpush1.bf16.msra.mxu0 %v1145
      %1533 = vmatprep.subr.bf16.mxu0 %v1142
      %1534 = vmatpush1.bf16.msra.mxu0 %v1141
      %1535 = vmatprep.subr.bf16.mxu0 %v1138
      %1536 = vmatpush1.bf16.msra.mxu0 %v1137
      %1537 = vmatprep.subr.bf16.mxu0 %v1198
      %1538 = vmatpush2.bf16.msra.mxu0 %v1197
      %1539 = vmatprep.subr.bf16.mxu0 %v1194
      %1540 = vmatpush2.bf16.msra.mxu0 %v1193
      %1541 = vmatprep.subr.bf16.mxu0 %v1190
      %1542 = vmatpush2.bf16.msra.mxu0 %v1189
      %1543 = vmatprep.subr.bf16.mxu0 %v1186
      %1544 = vmatpush2.bf16.msra.mxu0 %v1185
      %1545 = vmatprep.subr.bf16.mxu0 %v1182
      %1546 = vmatpush2.bf16.msra.mxu0 %v1181
      %1547 = vmatprep.subr.bf16.mxu0 %v1178
      %1548 = vmatpush2.bf16.msra.mxu0 %v1177
      %1549 = vmatprep.subr.bf16.mxu0 %v1174
      %1550 = vmatpush2.bf16.msra.mxu0 %v1173
      %1551 = vmatprep.subr.bf16.mxu0 %v1170
      %1552 = vmatpush2.bf16.msra.mxu0 %v1169
      %1553 = vmatprep.mubr.bf16.mxu0 %v358
      %1554 = vmatmul.mubr.bf16.gmra.mxu0 %v357
      %v1555 = vpop.f32.mrf.mxu0
      %v1556 = vadd.f32 0.0, %v1555
      %v1557 = vpop.f32.mrf.mxu0
      %v1558 = vadd.f32 0.0, %v1557
      %v1559 = vpop.f32.mrf.mxu0
      %v1560 = vadd.f32 0.0, %v1559
      %v1561 = vpop.f32.mrf.mxu0
      %v1562 = vadd.f32 0.0, %v1561
      %1563 = vmatprep.mubr.bf16.mxu0 %v364
      %1564 = vmatmul.mubr.bf16.gmra.mxu0 %v363
      %v1565 = vpop.f32.mrf.mxu0
      %v1566 = vadd.f32 0.0, %v1565
      %v1567 = vpop.f32.mrf.mxu0
      %v1568 = vadd.f32 0.0, %v1567
      %v1569 = vpop.f32.mrf.mxu0
      %v1570 = vadd.f32 0.0, %v1569
      %v1571 = vpop.f32.mrf.mxu0
      %v1572 = vadd.f32 0.0, %v1571
      %1573 = vdwg.mxu0
      %1574 = vmatprep.subr.bf16.mxu0 %v1230
      %1575 = vmatpush1.bf16.msra.mxu0 %v1229
      %1576 = vmatprep.subr.bf16.mxu0 %v1226
      %1577 = vmatpush1.bf16.msra.mxu0 %v1225
      %1578 = vmatprep.subr.bf16.mxu0 %v1222
      %1579 = vmatpush1.bf16.msra.mxu0 %v1221
      %1580 = vmatprep.subr.bf16.mxu0 %v1218
      %1581 = vmatpush1.bf16.msra.mxu0 %v1217
      %1582 = vmatprep.subr.bf16.mxu0 %v1214
      %1583 = vmatpush1.bf16.msra.mxu0 %v1213
      %1584 = vmatprep.subr.bf16.mxu0 %v1210
      %1585 = vmatpush1.bf16.msra.mxu0 %v1209
      %1586 = vmatprep.subr.bf16.mxu0 %v1206
      %1587 = vmatpush1.bf16.msra.mxu0 %v1205
      %1588 = vmatprep.subr.bf16.mxu0 %v1202
      %1589 = vmatpush1.bf16.msra.mxu0 %v1201
      %1590 = vmatprep.subr.bf16.mxu0 %v1262
      %1591 = vmatpush2.bf16.msra.mxu0 %v1261
      %1592 = vmatprep.subr.bf16.mxu0 %v1258
      %1593 = vmatpush2.bf16.msra.mxu0 %v1257
      %1594 = vmatprep.subr.bf16.mxu0 %v1254
      %1595 = vmatpush2.bf16.msra.mxu0 %v1253
      %1596 = vmatprep.subr.bf16.mxu0 %v1250
      %1597 = vmatpush2.bf16.msra.mxu0 %v1249
      %1598 = vmatprep.subr.bf16.mxu0 %v1246
      %1599 = vmatpush2.bf16.msra.mxu0 %v1245
      %1600 = vmatprep.subr.bf16.mxu0 %v1242
      %1601 = vmatpush2.bf16.msra.mxu0 %v1241
      %1602 = vmatprep.subr.bf16.mxu0 %v1238
      %1603 = vmatpush2.bf16.msra.mxu0 %v1237
      %1604 = vmatprep.subr.bf16.mxu0 %v1234
      %1605 = vmatpush2.bf16.msra.mxu0 %v1233
      %1606 = vmatprep.mubr.bf16.mxu0 %v360
      %1607 = vmatmul.mubr.bf16.gmra.mxu0 %v359
      %v1608 = vpop.f32.mrf.mxu0
      %v1609 = vadd.f32 %v1556, %v1608
      %v1610 = vpop.f32.mrf.mxu0
      %v1611 = vadd.f32 %v1558, %v1610
      %v1612 = vpop.f32.mrf.mxu0
      %v1613 = vadd.f32 %v1560, %v1612
      %v1614 = vpop.f32.mrf.mxu0
      %v1615 = vadd.f32 %v1562, %v1614
      %1616 = vmatprep.mubr.bf16.mxu0 %v366
      %1617 = vmatmul.mubr.bf16.gmra.mxu0 %v365
      %v1618 = vpop.f32.mrf.mxu0
      %v1619 = vadd.f32 %v1566, %v1618
      %v1620 = vpop.f32.mrf.mxu0
      %v1621 = vadd.f32 %v1568, %v1620
      %v1622 = vpop.f32.mrf.mxu0
      %v1623 = vadd.f32 %v1570, %v1622
      %v1624 = vpop.f32.mrf.mxu0
      %v1625 = vadd.f32 %v1572, %v1624
      %1626 = vdwg.mxu0
      %1627 = vmatprep.subr.bf16.mxu0 %v1294
      %1628 = vmatpush1.bf16.msra.mxu0 %v1293
      %1629 = vmatprep.subr.bf16.mxu0 %v1290
      %1630 = vmatpush1.bf16.msra.mxu0 %v1289
      %1631 = vmatprep.subr.bf16.mxu0 %v1286
      %1632 = vmatpush1.bf16.msra.mxu0 %v1285
      %1633 = vmatprep.subr.bf16.mxu0 %v1282
      %1634 = vmatpush1.bf16.msra.mxu0 %v1281
      %1635 = vmatprep.subr.bf16.mxu0 %v1278
      %1636 = vmatpush1.bf16.msra.mxu0 %v1277
      %1637 = vmatprep.subr.bf16.mxu0 %v1274
      %1638 = vmatpush1.bf16.msra.mxu0 %v1273
      %1639 = vmatprep.subr.bf16.mxu0 %v1270
      %1640 = vmatpush1.bf16.msra.mxu0 %v1269
      %1641 = vmatprep.subr.bf16.mxu0 %v1266
      %1642 = vmatpush1.bf16.msra.mxu0 %v1265
      %1643 = vmatprep.subr.bf16.mxu0 %v1326
      %1644 = vmatpush2.bf16.msra.mxu0 %v1325
      %1645 = vmatprep.subr.bf16.mxu0 %v1322
      %1646 = vmatpush2.bf16.msra.mxu0 %v1321
      %1647 = vmatprep.subr.bf16.mxu0 %v1318
      %1648 = vmatpush2.bf16.msra.mxu0 %v1317
      %1649 = vmatprep.subr.bf16.mxu0 %v1314
      %1650 = vmatpush2.bf16.msra.mxu0 %v1313
      %1651 = vmatprep.subr.bf16.mxu0 %v1310
      %1652 = vmatpush2.bf16.msra.mxu0 %v1309
      %1653 = vmatprep.subr.bf16.mxu0 %v1306
      %1654 = vmatpush2.bf16.msra.mxu0 %v1305
      %1655 = vmatprep.subr.bf16.mxu0 %v1302
      %1656 = vmatpush2.bf16.msra.mxu0 %v1301
      %1657 = vmatprep.subr.bf16.mxu0 %v1298
      %1658 = vmatpush2.bf16.msra.mxu0 %v1297
      %1659 = vmatprep.mubr.bf16.mxu0 %v362
      %1660 = vmatmul.mubr.bf16.gmra.mxu0 %v361
      %v1661 = vpop.f32.mrf.mxu0
      %v1662 = vadd.f32 %v1609, %v1661
      %v1663 = vpop.f32.mrf.mxu0
      %v1664 = vadd.f32 %v1611, %v1663
      %v1665 = vpop.f32.mrf.mxu0
      %v1666 = vadd.f32 %v1613, %v1665
      %v1667 = vpop.f32.mrf.mxu0
      %v1668 = vadd.f32 %v1615, %v1667
      %1669 = vmatprep.mubr.bf16.mxu0 %v368
      %1670 = vmatmul.mubr.bf16.gmra.mxu0 %v367
      %v1671 = vpop.f32.mrf.mxu0
      %v1672 = vadd.f32 %v1619, %v1671
      %v1673 = vpop.f32.mrf.mxu0
      %v1674 = vadd.f32 %v1621, %v1673
      %v1675 = vpop.f32.mrf.mxu0
      %v1676 = vadd.f32 %v1623, %v1675
      %v1677 = vpop.f32.mrf.mxu0
      %v1678 = vadd.f32 %v1625, %v1677
      %1679 = vdwg.mxu0
      %1680 = vmatprep.subr.bf16.mxu0 %v1168
      %1681 = vmatpush1.bf16.msra.mxu0 %v1167
      %1682 = vmatprep.subr.bf16.mxu0 %v1164
      %1683 = vmatpush1.bf16.msra.mxu0 %v1163
      %1684 = vmatprep.subr.bf16.mxu0 %v1160
      %1685 = vmatpush1.bf16.msra.mxu0 %v1159
      %1686 = vmatprep.subr.bf16.mxu0 %v1156
      %1687 = vmatpush1.bf16.msra.mxu0 %v1155
      %1688 = vmatprep.subr.bf16.mxu0 %v1152
      %1689 = vmatpush1.bf16.msra.mxu0 %v1151
      %1690 = vmatprep.subr.bf16.mxu0 %v1148
      %1691 = vmatpush1.bf16.msra.mxu0 %v1147
      %1692 = vmatprep.subr.bf16.mxu0 %v1144
      %1693 = vmatpush1.bf16.msra.mxu0 %v1143
      %1694 = vmatprep.subr.bf16.mxu0 %v1140
      %1695 = vmatpush1.bf16.msra.mxu0 %v1139
      %1696 = vmatprep.subr.bf16.mxu0 %v1200
      %1697 = vmatpush2.bf16.msra.mxu0 %v1199
      %1698 = vmatprep.subr.bf16.mxu0 %v1196
      %1699 = vmatpush2.bf16.msra.mxu0 %v1195
      %1700 = vmatprep.subr.bf16.mxu0 %v1192
      %1701 = vmatpush2.bf16.msra.mxu0 %v1191
      %1702 = vmatprep.subr.bf16.mxu0 %v1188
      %1703 = vmatpush2.bf16.msra.mxu0 %v1187
      %1704 = vmatprep.subr.bf16.mxu0 %v1184
      %1705 = vmatpush2.bf16.msra.mxu0 %v1183
      %1706 = vmatprep.subr.bf16.mxu0 %v1180
      %1707 = vmatpush2.bf16.msra.mxu0 %v1179
      %1708 = vmatprep.subr.bf16.mxu0 %v1176
      %1709 = vmatpush2.bf16.msra.mxu0 %v1175
      %1710 = vmatprep.subr.bf16.mxu0 %v1172
      %1711 = vmatpush2.bf16.msra.mxu0 %v1171
      %1712 = vmatprep.mubr.bf16.mxu0 %v358
      %1713 = vmatmul.mubr.bf16.gmra.mxu0 %v357
      %v1714 = vpop.f32.mrf.mxu0
      %v1715 = vadd.f32 0.0, %v1714
      %v1716 = vpop.f32.mrf.mxu0
      %v1717 = vadd.f32 0.0, %v1716
      %v1718 = vpop.f32.mrf.mxu0
      %v1719 = vadd.f32 0.0, %v1718
      %v1720 = vpop.f32.mrf.mxu0
      %v1721 = vadd.f32 0.0, %v1720
      %1722 = vmatprep.mubr.bf16.mxu0 %v364
      %1723 = vmatmul.mubr.bf16.gmra.mxu0 %v363
      %v1724 = vpop.f32.mrf.mxu0
      %v1725 = vadd.f32 0.0, %v1724
      %v1726 = vpop.f32.mrf.mxu0
      %v1727 = vadd.f32 0.0, %v1726
      %v1728 = vpop.f32.mrf.mxu0
      %v1729 = vadd.f32 0.0, %v1728
      %v1730 = vpop.f32.mrf.mxu0
      %v1731 = vadd.f32 0.0, %v1730
      %1732 = vdwg.mxu0
      %1733 = vmatprep.subr.bf16.mxu0 %v1232
      %1734 = vmatpush1.bf16.msra.mxu0 %v1231
      %1735 = vmatprep.subr.bf16.mxu0 %v1228
      %1736 = vmatpush1.bf16.msra.mxu0 %v1227
      %1737 = vmatprep.subr.bf16.mxu0 %v1224
      %1738 = vmatpush1.bf16.msra.mxu0 %v1223
      %1739 = vmatprep.subr.bf16.mxu0 %v1220
      %1740 = vmatpush1.bf16.msra.mxu0 %v1219
      %1741 = vmatprep.subr.bf16.mxu0 %v1216
      %1742 = vmatpush1.bf16.msra.mxu0 %v1215
      %1743 = vmatprep.subr.bf16.mxu0 %v1212
      %1744 = vmatpush1.bf16.msra.mxu0 %v1211
      %1745 = vmatprep.subr.bf16.mxu0 %v1208
      %1746 = vmatpush1.bf16.msra.mxu0 %v1207
      %1747 = vmatprep.subr.bf16.mxu0 %v1204
      %1748 = vmatpush1.bf16.msra.mxu0 %v1203
      %1749 = vmatprep.subr.bf16.mxu0 %v1264
      %1750 = vmatpush2.bf16.msra.mxu0 %v1263
      %1751 = vmatprep.subr.bf16.mxu0 %v1260
      %1752 = vmatpush2.bf16.msra.mxu0 %v1259
      %1753 = vmatprep.subr.bf16.mxu0 %v1256
      %1754 = vmatpush2.bf16.msra.mxu0 %v1255
      %1755 = vmatprep.subr.bf16.mxu0 %v1252
      %1756 = vmatpush2.bf16.msra.mxu0 %v1251
      %1757 = vmatprep.subr.bf16.mxu0 %v1248
      %1758 = vmatpush2.bf16.msra.mxu0 %v1247
      %1759 = vmatprep.subr.bf16.mxu0 %v1244
      %1760 = vmatpush2.bf16.msra.mxu0 %v1243
      %1761 = vmatprep.subr.bf16.mxu0 %v1240
      %1762 = vmatpush2.bf16.msra.mxu0 %v1239
      %1763 = vmatprep.subr.bf16.mxu0 %v1236
      %1764 = vmatpush2.bf16.msra.mxu0 %v1235
      %1765 = vmatprep.mubr.bf16.mxu0 %v360
      %1766 = vmatmul.mubr.bf16.gmra.mxu0 %v359
      %v1767 = vpop.f32.mrf.mxu0
      %v1768 = vadd.f32 %v1715, %v1767
      %v1769 = vpop.f32.mrf.mxu0
      %v1770 = vadd.f32 %v1717, %v1769
      %v1771 = vpop.f32.mrf.mxu0
      %v1772 = vadd.f32 %v1719, %v1771
      %v1773 = vpop.f32.mrf.mxu0
      %v1774 = vadd.f32 %v1721, %v1773
      %1775 = vmatprep.mubr.bf16.mxu0 %v366
      %1776 = vmatmul.mubr.bf16.gmra.mxu0 %v365
      %v1777 = vpop.f32.mrf.mxu0
      %v1778 = vadd.f32 %v1725, %v1777
      %v1779 = vpop.f32.mrf.mxu0
      %v1780 = vadd.f32 %v1727, %v1779
      %v1781 = vpop.f32.mrf.mxu0
      %v1782 = vadd.f32 %v1729, %v1781
      %v1783 = vpop.f32.mrf.mxu0
      %v1784 = vadd.f32 %v1731, %v1783
      %1785 = vdwg.mxu0
      %1786 = vmatprep.subr.bf16.mxu0 %v1296
      %1787 = vmatpush1.bf16.msra.mxu0 %v1295
      %1788 = vmatprep.subr.bf16.mxu0 %v1292
      %1789 = vmatpush1.bf16.msra.mxu0 %v1291
      %1790 = vmatprep.subr.bf16.mxu0 %v1288
      %1791 = vmatpush1.bf16.msra.mxu0 %v1287
      %1792 = vmatprep.subr.bf16.mxu0 %v1284
      %1793 = vmatpush1.bf16.msra.mxu0 %v1283
      %1794 = vmatprep.subr.bf16.mxu0 %v1280
      %1795 = vmatpush1.bf16.msra.mxu0 %v1279
      %1796 = vmatprep.subr.bf16.mxu0 %v1276
      %1797 = vmatpush1.bf16.msra.mxu0 %v1275
      %1798 = vmatprep.subr.bf16.mxu0 %v1272
      %1799 = vmatpush1.bf16.msra.mxu0 %v1271
      %1800 = vmatprep.subr.bf16.mxu0 %v1268
      %1801 = vmatpush1.bf16.msra.mxu0 %v1267
      %1802 = vmatprep.subr.bf16.mxu0 %v1328
      %1803 = vmatpush2.bf16.msra.mxu0 %v1327
      %1804 = vmatprep.subr.bf16.mxu0 %v1324
      %1805 = vmatpush2.bf16.msra.mxu0 %v1323
      %1806 = vmatprep.subr.bf16.mxu0 %v1320
      %1807 = vmatpush2.bf16.msra.mxu0 %v1319
      %1808 = vmatprep.subr.bf16.mxu0 %v1316
      %1809 = vmatpush2.bf16.msra.mxu0 %v1315
      %1810 = vmatprep.subr.bf16.mxu0 %v1312
      %1811 = vmatpush2.bf16.msra.mxu0 %v1311
      %1812 = vmatprep.subr.bf16.mxu0 %v1308
      %1813 = vmatpush2.bf16.msra.mxu0 %v1307
      %1814 = vmatprep.subr.bf16.mxu0 %v1304
      %1815 = vmatpush2.bf16.msra.mxu0 %v1303
      %1816 = vmatprep.subr.bf16.mxu0 %v1300
      %1817 = vmatpush2.bf16.msra.mxu0 %v1299
      %1818 = vmatprep.mubr.bf16.mxu0 %v362
      %1819 = vmatmul.mubr.bf16.gmra.mxu0 %v361
      %v1820 = vpop.f32.mrf.mxu0
      %v1821 = vadd.f32 %v1768, %v1820
      %v1822 = vpop.f32.mrf.mxu0
      %v1823 = vadd.f32 %v1770, %v1822
      %v1824 = vpop.f32.mrf.mxu0
      %v1825 = vadd.f32 %v1772, %v1824
      %v1826 = vpop.f32.mrf.mxu0
      %v1827 = vadd.f32 %v1774, %v1826
      %1828 = vmatprep.mubr.bf16.mxu0 %v368
      %1829 = vmatmul.mubr.bf16.gmra.mxu0 %v367
      %v1830 = vpop.f32.mrf.mxu0
      %v1831 = vadd.f32 %v1778, %v1830
      %v1832 = vpop.f32.mrf.mxu0
      %v1833 = vadd.f32 %v1780, %v1832
      %v1834 = vpop.f32.mrf.mxu0
      %v1835 = vadd.f32 %v1782, %v1834
      %v1836 = vpop.f32.mrf.mxu0
      %v1837 = vadd.f32 %v1784, %v1836
      %1838 = vdwg.mxu0
      %v1839 = vadd.f32 %v317, %v1662
      %v1840 = vadd.f32 %v318, %v1664
      %v1841 = vadd.f32 %v319, %v1821
      %v1842 = vadd.f32 %v320, %v1823
      %v1843 = vadd.f32 %v321, %v1666
      %v1844 = vadd.f32 %v322, %v1668
      %v1845 = vadd.f32 %v323, %v1825
      %v1846 = vadd.f32 %v324, %v1827
      %v1847 = vadd.f32 %v325, %v1672
      %v1848 = vadd.f32 %v326, %v1674
      %v1849 = vadd.f32 %v327, %v1831
      %v1850 = vadd.f32 %v328, %v1833
      %v1851 = vadd.f32 %v329, %v1676
      %v1852 = vadd.f32 %v330, %v1678
      %v1853 = vadd.f32 %v331, %v1835
      %v1854 = vadd.f32 %v332, %v1837
      %v1855 = vxor.u32 %v1839, 2147483648
      %v1856 = vxor.u32 %v1843, 2147483648
      %v1857 = vxor.u32 %v1847, 2147483648
      %v1858 = vxor.u32 %v1851, 2147483648
      %v1859 = vmul.f32 %v1855, 1.442695
      %v1860 = vpow.pop %v1859
      %v1861 = vmul.f32 %v1856, 1.442695
      %v1862 = vpow.pop %v1861
      %v1863 = vmul.f32 %v1857, 1.442695
      %v1864 = vpow.pop %v1863
      %v1865 = vmul.f32 %v1858, 1.442695
      %v1866 = vpow.pop %v1865
      %v1867 = vadd.f32 %v1860, 1.0
      %v1868 = vadd.f32 %v1862, 1.0
      %v1869 = vadd.f32 %v1864, 1.0
      %v1870 = vadd.f32 %v1866, 1.0
      %v1871 = vrcp.pop %v1867
      %v1872 = vmul.f32 1.0, %v1871
      %v1873 = vrcp.pop %v1868
      %v1874 = vmul.f32 1.0, %v1873
      %v1875 = vrcp.pop %v1869
      %v1876 = vmul.f32 1.0, %v1875
      %v1877 = vrcp.pop %v1870
      %v1878 = vmul.f32 1.0, %v1877
      %v1879 = vxor.u32 %v1840, 2147483648
      %v1880 = vxor.u32 %v1844, 2147483648
      %v1881 = vxor.u32 %v1848, 2147483648
      %v1882 = vxor.u32 %v1852, 2147483648
      %v1883 = vmul.f32 %v1879, 1.442695
      %v1884 = vpow.pop %v1883
      %v1885 = vmul.f32 %v1880, 1.442695
      %v1886 = vpow.pop %v1885
      %v1887 = vmul.f32 %v1881, 1.442695
      %v1888 = vpow.pop %v1887
      %v1889 = vmul.f32 %v1882, 1.442695
      %v1890 = vpow.pop %v1889
      %v1891 = vadd.f32 %v1884, 1.0
      %v1892 = vadd.f32 %v1886, 1.0
      %v1893 = vadd.f32 %v1888, 1.0
      %v1894 = vadd.f32 %v1890, 1.0
      %v1895 = vrcp.pop %v1891
      %v1896 = vmul.f32 1.0, %v1895
      %v1897 = vrcp.pop %v1892
      %v1898 = vmul.f32 1.0, %v1897
      %v1899 = vrcp.pop %v1893
      %v1900 = vmul.f32 1.0, %v1899
      %v1901 = vrcp.pop %v1894
      %v1902 = vmul.f32 1.0, %v1901
      %v1903 = vtanh.pop %v1841
      %v1904 = vtanh.pop %v1845
      %v1905 = vtanh.pop %v1849
      %v1906 = vtanh.pop %v1853
      %v1907 = vmul.f32 %v1896, %v349
      %v1908 = vmul.f32 %v1898, %v350
      %v1909 = vmul.f32 %v1900, %v351
      %v1910 = vmul.f32 %v1902, %v352
      %v1911 = vmul.f32 %v1872, %v1903
      %v1912 = vmul.f32 %v1874, %v1904
      %v1913 = vmul.f32 %v1876, %v1905
      %v1914 = vmul.f32 %v1878, %v1906
      %v1915 = vadd.f32 %v1907, %v1911
      %v1916 = vadd.f32 %v1908, %v1912
      %v1917 = vadd.f32 %v1909, %v1913
      %v1918 = vadd.f32 %v1910, %v1914
      %1919 = vst [vmem:[#allocation3 + $0x1] sm:$0xff] %v1915
      %1920 = vst [vmem:[#allocation3 + $0x9] sm:$0xff] %v1916
      %1921 = vst [vmem:[#allocation3 + $0x19] sm:$0xff] %v1917
      %1922 = vst [vmem:[#allocation3 + $0x21] sm:$0xff] %v1918
      %v1923 = vld [vmem:[#allocation3] sm:$0xff]
      %v1924 = vld [vmem:[#allocation3 + $0x8] sm:$0xff]
      %v1925 = vld [vmem:[#allocation3 + $0x18] sm:$0xff]
      %v1926 = vld [vmem:[#allocation3 + $0x20] sm:$0xff]
      %v1927 = vld [vmem:[#allocation3 + $0x1] sm:$0xff]
      %v1928 = vld [vmem:[#allocation3 + $0x9] sm:$0xff]
      %v1929 = vld [vmem:[#allocation3 + $0x19] sm:$0xff]
      %v1930 = vld [vmem:[#allocation3 + $0x21] sm:$0xff]
      %v1931 = vld [vmem:[#allocation3 + $0x2] sm:$0xff]
      %v1932 = vld [vmem:[#allocation3 + $0xa] sm:$0xff]
      %v1933 = vld [vmem:[#allocation3 + $0x1a] sm:$0xff]
      %v1934 = vld [vmem:[#allocation3 + $0x22] sm:$0xff]
      %v1935 = vpack.c.bf16 %v1924, %v1923
      %v1936 = vpack.c.bf16 %v1928, %v1927
      %v1937 = vpack.c.bf16 %v1932, %v1931
      %v1938 = vpack.c.bf16 %v1926, %v1925
      %v1939 = vpack.c.bf16 %v1930, %v1929
      %v1940 = vpack.c.bf16 %v1934, %v1933
      %v1941 = vld [vmem:[%s2] sm:$0xf]
      %v1942 = vld [vmem:[%s2 + $0x4] sm:$0xf]
      %v1943 = vld [vmem:[%s2 + $0x8] sm:$0xf]
      %v1944 = vld [vmem:[%s2 + $0xc] sm:$0xf]
      %v1945 = vld [vmem:[%s2 + $0x10] sm:$0xf]
      %v1946 = vld [vmem:[%s2 + $0x14] sm:$0xf]
      %v1947 = vld [vmem:[%s2 + $0x18] sm:$0xf]
      %v1948 = vld [vmem:[%s2 + $0x1c] sm:$0xf]
      %v1949 = vld [vmem:[%s2 + $0x20] sm:$0xf]
      %v1950 = vld [vmem:[%s2 + $0x24] sm:$0xf]
      %v1951 = vld [vmem:[%s2 + $0x28] sm:$0xf]
      %v1952 = vld [vmem:[%s2 + $0x2c] sm:$0xf]
      %v1953 = vld [vmem:[%s2 + $0x30] sm:$0xf]
      %v1954 = vld [vmem:[%s2 + $0x34] sm:$0xf]
      %v1955 = vld [vmem:[%s2 + $0x38] sm:$0xf]
      %v1956 = vld [vmem:[%s2 + $0x3c] sm:$0xf]
      %v1957 = vld [vmem:[%s2 + $0x40] sm:$0xf]
      %v1958 = vld [vmem:[%s2 + $0x44] sm:$0xf]
      %v1959 = vld [vmem:[%s2 + $0x48] sm:$0xf]
      %v1960 = vld [vmem:[%s2 + $0x4c] sm:$0xf]
      %v1961 = vld [vmem:[%s2 + $0x50] sm:$0xf]
      %v1962 = vld [vmem:[%s2 + $0x54] sm:$0xf]
      %v1963 = vld [vmem:[%s2 + $0x58] sm:$0xf]
      %v1964 = vld [vmem:[%s2 + $0x5c] sm:$0xf]
      %v1965 = vld [vmem:[%s2 + $0x60] sm:$0xf]
      %v1966 = vld [vmem:[%s2 + $0x64] sm:$0xf]
      %v1967 = vld [vmem:[%s2 + $0x68] sm:$0xf]
      %v1968 = vld [vmem:[%s2 + $0x6c] sm:$0xf]
      %v1969 = vld [vmem:[%s2 + $0x70] sm:$0xf]
      %v1970 = vld [vmem:[%s2 + $0x74] sm:$0xf]
      %v1971 = vld [vmem:[%s2 + $0x78] sm:$0xf]
      %v1972 = vld [vmem:[%s2 + $0x7c] sm:$0xf]
      %v1973 = vld [vmem:[%s2 + $0x80] sm:$0xf]
      %v1974 = vld [vmem:[%s2 + $0x84] sm:$0xf]
      %v1975 = vld [vmem:[%s2 + $0x88] sm:$0xf]
      %v1976 = vld [vmem:[%s2 + $0x8c] sm:$0xf]
      %v1977 = vld [vmem:[%s2 + $0x90] sm:$0xf]
      %v1978 = vld [vmem:[%s2 + $0x94] sm:$0xf]
      %v1979 = vld [vmem:[%s2 + $0x98] sm:$0xf]
      %v1980 = vld [vmem:[%s2 + $0x9c] sm:$0xf]
      %v1981 = vld [vmem:[%s2 + $0xa0] sm:$0xf]
      %v1982 = vld [vmem:[%s2 + $0xa4] sm:$0xf]
      %v1983 = vld [vmem:[%s2 + $0xa8] sm:$0xf]
      %v1984 = vld [vmem:[%s2 + $0xac] sm:$0xf]
      %v1985 = vld [vmem:[%s2 + $0xb0] sm:$0xf]
      %v1986 = vld [vmem:[%s2 + $0xb4] sm:$0xf]
      %v1987 = vld [vmem:[%s2 + $0xb8] sm:$0xf]
      %v1988 = vld [vmem:[%s2 + $0xbc] sm:$0xf]
      %v2037 = vunpack.c.l.b16 %v1941
      %v2038 = vunpack.c.l.b16 %v1942
      %v2039 = vunpack.c.l.b16 %v1943
      %v2040 = vunpack.c.l.b16 %v1944
      %v2041 = vunpack.c.l.b16 %v1945
      %v2042 = vunpack.c.l.b16 %v1946
      %v2043 = vunpack.c.l.b16 %v1947
      %v2044 = vunpack.c.l.b16 %v1948
      %v2045 = vunpack.c.l.b16 %v1949
      %v2046 = vunpack.c.l.b16 %v1950
      %v2047 = vunpack.c.l.b16 %v1951
      %v2048 = vunpack.c.l.b16 %v1952
      %v2049 = vunpack.c.l.b16 %v1953
      %v2050 = vunpack.c.l.b16 %v1954
      %v2051 = vunpack.c.l.b16 %v1955
      %v2052 = vunpack.c.l.b16 %v1956
      %v2053 = vunpack.c.l.b16 %v1957
      %v2054 = vunpack.c.l.b16 %v1958
      %v2055 = vunpack.c.l.b16 %v1959
      %v2056 = vunpack.c.l.b16 %v1960
      %v2057 = vunpack.c.l.b16 %v1961
      %v2058 = vunpack.c.l.b16 %v1962
      %v2059 = vunpack.c.l.b16 %v1963
      %v2060 = vunpack.c.l.b16 %v1964
      %v2061 = vunpack.c.l.b16 %v1965
      %v2062 = vunpack.c.l.b16 %v1966
      %v2063 = vunpack.c.l.b16 %v1967
      %v2064 = vunpack.c.l.b16 %v1968
      %v2065 = vunpack.c.l.b16 %v1969
      %v2066 = vunpack.c.l.b16 %v1970
      %v2067 = vunpack.c.l.b16 %v1971
      %v2068 = vunpack.c.l.b16 %v1972
      %v2069 = vunpack.c.l.b16 %v1973
      %v2070 = vunpack.c.l.b16 %v1974
      %v2071 = vunpack.c.l.b16 %v1975
      %v2072 = vunpack.c.l.b16 %v1976
      %v2073 = vunpack.c.l.b16 %v1977
      %v2074 = vunpack.c.l.b16 %v1978
      %v2075 = vunpack.c.l.b16 %v1979
      %v2076 = vunpack.c.l.b16 %v1980
      %v2077 = vunpack.c.l.b16 %v1981
      %v2078 = vunpack.c.l.b16 %v1982
      %v2079 = vunpack.c.l.b16 %v1983
      %v2080 = vunpack.c.l.b16 %v1984
      %v2081 = vunpack.c.l.b16 %v1985
      %v2082 = vunpack.c.l.b16 %v1986
      %v2083 = vunpack.c.l.b16 %v1987
      %v2084 = vunpack.c.l.b16 %v1988
      %v2085 = vpack.c.b16 %v2038, %v2037
      %v2086 = vpack.c.b16 %v2040, %v2039
      %v2087 = vpack.c.b16 %v2042, %v2041
      %v2088 = vpack.c.b16 %v2044, %v2043
      %v2089 = vpack.c.b16 %v2046, %v2045
      %v2090 = vpack.c.b16 %v2048, %v2047
      %v2091 = vpack.c.b16 %v2050, %v2049
      %v2092 = vpack.c.b16 %v2052, %v2051
      %v2093 = vpack.c.b16 %v2054, %v2053
      %v2094 = vpack.c.b16 %v2056, %v2055
      %v2095 = vpack.c.b16 %v2058, %v2057
      %v2096 = vpack.c.b16 %v2060, %v2059
      %v2097 = vpack.c.b16 %v2062, %v2061
      %v2098 = vpack.c.b16 %v2064, %v2063
      %v2099 = vpack.c.b16 %v2066, %v2065
      %v2100 = vpack.c.b16 %v2068, %v2067
      %v2101 = vpack.c.b16 %v2070, %v2069
      %v2102 = vpack.c.b16 %v2072, %v2071
      %v2103 = vpack.c.b16 %v2074, %v2073
      %v2104 = vpack.c.b16 %v2076, %v2075
      %v2105 = vpack.c.b16 %v2078, %v2077
      %v2106 = vpack.c.b16 %v2080, %v2079
      %v2107 = vpack.c.b16 %v2082, %v2081
      %v2108 = vpack.c.b16 %v2084, %v2083
      %2133 = vmatprep.subr.bf16.mxu0 0
      %2134 = vmatpush1.bf16.msra.mxu0 %v2092
      %2135 = vmatprep.subr.bf16.mxu0 0
      %2136 = vmatpush1.bf16.msra.mxu0 %v2091
      %2137 = vmatprep.subr.bf16.mxu0 0
      %2138 = vmatpush1.bf16.msra.mxu0 %v2090
      %2139 = vmatprep.subr.bf16.mxu0 0
      %2140 = vmatpush1.bf16.msra.mxu0 %v2089
      %2141 = vmatprep.subr.bf16.mxu0 0
      %2142 = vmatpush1.bf16.msra.mxu0 %v2088
      %2143 = vmatprep.subr.bf16.mxu0 0
      %2144 = vmatpush1.bf16.msra.mxu0 %v2087
      %2145 = vmatprep.subr.bf16.mxu0 0
      %2146 = vmatpush1.bf16.msra.mxu0 %v2086
      %2147 = vmatprep.subr.bf16.mxu0 0
      %2148 = vmatpush1.bf16.msra.mxu0 %v2085
      %2149 = vmatprep.subr.bf16.mxu0 0
      %2150 = vmatpush2.bf16.msra.mxu0 %v2100
      %2151 = vmatprep.subr.bf16.mxu0 0
      %2152 = vmatpush2.bf16.msra.mxu0 %v2099
      %2153 = vmatprep.subr.bf16.mxu0 0
      %2154 = vmatpush2.bf16.msra.mxu0 %v2098
      %2155 = vmatprep.subr.bf16.mxu0 0
      %2156 = vmatpush2.bf16.msra.mxu0 %v2097
      %2157 = vmatprep.subr.bf16.mxu0 0
      %2158 = vmatpush2.bf16.msra.mxu0 %v2096
      %2159 = vmatprep.subr.bf16.mxu0 0
      %2160 = vmatpush2.bf16.msra.mxu0 %v2095
      %2161 = vmatprep.subr.bf16.mxu0 0
      %2162 = vmatpush2.bf16.msra.mxu0 %v2094
      %2163 = vmatprep.subr.bf16.mxu0 0
      %2164 = vmatpush2.bf16.msra.mxu0 %v2093
      %2165 = vmatprep.mubr.bf16.mxu0 %v1936
      %2166 = vmatmul.mubr.bf16.gmra.mxu0 %v1935
      %v2167 = vpop.f32.mrf.mxu0
      %v2168 = vadd.f32 0.0, %v2167
      %v2169 = vpop.f32.mrf.mxu0
      %v2170 = vpop.f32.mrf.mxu0
      %v2171 = vadd.f32 0.0, %v2170
      %v2172 = vpop.f32.mrf.mxu0
      %2173 = vmatprep.mubr.bf16.mxu0 %v1939
      %2174 = vmatmul.mubr.bf16.gmra.mxu0 %v1938
      %v2175 = vpop.f32.mrf.mxu0
      %v2176 = vadd.f32 0.0, %v2175
      %v2177 = vpop.f32.mrf.mxu0
      %v2178 = vpop.f32.mrf.mxu0
      %v2179 = vadd.f32 0.0, %v2178
      %v2180 = vpop.f32.mrf.mxu0
      %2181 = vdwg.mxu0
      %2182 = vmatprep.subr.bf16.mxu0 0
      %2183 = vmatpush1.bf16.msra.mxu0 %v2108
      %2184 = vmatprep.subr.bf16.mxu0 0
      %2185 = vmatpush1.bf16.msra.mxu0 %v2107
      %2186 = vmatprep.subr.bf16.mxu0 0
      %2187 = vmatpush1.bf16.msra.mxu0 %v2106
      %2188 = vmatprep.subr.bf16.mxu0 0
      %2189 = vmatpush1.bf16.msra.mxu0 %v2105
      %2190 = vmatprep.subr.bf16.mxu0 0
      %2191 = vmatpush1.bf16.msra.mxu0 %v2104
      %2192 = vmatprep.subr.bf16.mxu0 0
      %2193 = vmatpush1.bf16.msra.mxu0 %v2103
      %2194 = vmatprep.subr.bf16.mxu0 0
      %2195 = vmatpush1.bf16.msra.mxu0 %v2102
      %2196 = vmatprep.subr.bf16.mxu0 0
      %2197 = vmatpush1.bf16.msra.mxu0 %v2101
      %2198 = vmatprep.subr.bf16.mxu0 0
      %2199 = vmatpush2.bf16.msra.mxu0 0
      %2200 = vmatprep.subr.bf16.mxu0 0
      %2201 = vmatpush2.bf16.msra.mxu0 0
      %2202 = vmatprep.subr.bf16.mxu0 0
      %2203 = vmatpush2.bf16.msra.mxu0 0
      %2204 = vmatprep.subr.bf16.mxu0 0
      %2205 = vmatpush2.bf16.msra.mxu0 0
      %2206 = vmatprep.subr.bf16.mxu0 0
      %2207 = vmatpush2.bf16.msra.mxu0 0
      %2208 = vmatprep.subr.bf16.mxu0 0
      %2209 = vmatpush2.bf16.msra.mxu0 0
      %2210 = vmatprep.subr.bf16.mxu0 0
      %2211 = vmatpush2.bf16.msra.mxu0 0
      %2212 = vmatprep.subr.bf16.mxu0 0
      %2213 = vmatpush2.bf16.msra.mxu0 0
      %2214 = vmatprep.mubr.bf16.mxu0 0
      %2215 = vmatmul.mubr.bf16.gmra.mxu0 %v1937
      %v2216 = vpop.f32.mrf.mxu0
      %v2217 = vadd.f32 %v2168, %v2216
      %v2218 = vpop.f32.mrf.mxu0
      %v2219 = vpop.f32.mrf.mxu0
      %v2220 = vadd.f32 %v2171, %v2219
      %v2221 = vpop.f32.mrf.mxu0
      %2222 = vmatprep.mubr.bf16.mxu0 0
      %2223 = vmatmul.mubr.bf16.gmra.mxu0 %v1940
      %v2224 = vpop.f32.mrf.mxu0
      %v2225 = vadd.f32 %v2176, %v2224
      %v2226 = vpop.f32.mrf.mxu0
      %v2227 = vpop.f32.mrf.mxu0
      %v2228 = vadd.f32 %v2179, %v2227
      %v2229 = vpop.f32.mrf.mxu0
      %2230 = vdwg.mxu0
      %v2231 = vadd.f32 %v1842, %v2217
      %v2232 = vadd.f32 %v1846, %v2220
      %v2233 = vadd.f32 %v1850, %v2225
      %v2234 = vadd.f32 %v1854, %v2228
      %v2235 = vxor.u32 %v2231, 2147483648
      %v2236 = vxor.u32 %v2232, 2147483648
      %v2237 = vxor.u32 %v2233, 2147483648
      %v2238 = vxor.u32 %v2234, 2147483648
      %v2239 = vmul.f32 %v2235, 1.442695
      %v2240 = vpow.pop %v2239
      %v2241 = vmul.f32 %v2236, 1.442695
      %v2242 = vpow.pop %v2241
      %v2243 = vmul.f32 %v2237, 1.442695
      %v2244 = vpow.pop %v2243
      %v2245 = vmul.f32 %v2238, 1.442695
      %v2246 = vpow.pop %v2245
      %v2247 = vadd.f32 %v2240, 1.0
      %v2248 = vadd.f32 %v2242, 1.0
      %v2249 = vadd.f32 %v2244, 1.0
      %v2250 = vadd.f32 %v2246, 1.0
      %v2251 = vrcp.pop %v2247
      %v2252 = vmul.f32 1.0, %v2251
      %v2253 = vrcp.pop %v2248
      %v2254 = vmul.f32 1.0, %v2253
      %v2255 = vrcp.pop %v2249
      %v2256 = vmul.f32 1.0, %v2255
      %v2257 = vrcp.pop %v2250
      %v2258 = vmul.f32 1.0, %v2257
      %v2259 = vtanh.pop %v1915
      %v2260 = vtanh.pop %v1916
      %v2261 = vtanh.pop %v1917
      %v2262 = vtanh.pop %v1918
      %v2263 = vmul.f32 %v2252, %v2259
      %v2264 = vmul.f32 %v2254, %v2260
      %v2265 = vmul.f32 %v2256, %v2261
      %v2266 = vmul.f32 %v2258, %v2262
      %2267 = vst [vmem:[#allocation2 + $0x1] sm:$0xff] %v2263
      %2268 = vst [vmem:[#allocation2 + $0x9] sm:$0xff] %v2264
      %2269 = vst [vmem:[#allocation2 + $0x19] sm:$0xff] %v2265
      %2270 = vst [vmem:[#allocation2 + $0x21] sm:$0xff] %v2266
      %2271 = vst [vmem:[%s284] sm:$0xff] %v2263
      %2272 = vst [vmem:[%s284 + $0x8] sm:$0xff] %v2264
      %2273 = vst [vmem:[%s284 + $0x10] sm:$0xff] %v2265
      %2274 = vst [vmem:[%s284 + $0x18] sm:$0xff] %v2266
      %p2275 = scmp.eq.s32.totalorder %s22, 7
      // Predicated region
      $region37: #{_lambda_.7} parent=31 // pred_check
        %p2276 = pneg %p2275
      $region38: #{_lambda_.7} parent=31 // pred_check_branch
        %2278 = sbr.rel (%p2276) target = $region40
      $region39: #{_lambda_.7} parent=31 // pred_region
        %2279 = vst [vmem:[%s291] sm:$0xff] %v2263
        %2280 = vst [vmem:[%s291 + $0x8] sm:$0xff] %v2264
        %2281 = vst [vmem:[%s291 + $0x10] sm:$0xff] %v2265
        %2282 = vst [vmem:[%s291 + $0x18] sm:$0xff] %v2266
        %2283 = vst [vmem:[%s298] sm:$0xff] %v1915
        %2284 = vst [vmem:[%s298 + $0x8] sm:$0xff] %v1916
        %2285 = vst [vmem:[%s298 + $0x10] sm:$0xff] %v1917
        %2286 = vst [vmem:[%s298 + $0x18] sm:$0xff] %v1918
      $region40: #{_lambda_.7} parent=31 // pred_fallthru
        _
      %s2287 = smul.u32 2, %s21
      %p2288 = scmp.lt.s32.totalorder %s22, 7
      %s2289 = scalar_select %p2288, %s22, 7
      %p2290 = scmp.lt.s32.totalorder %s2287, 1
      %s2291 = scalar_select %p2290, %s2287, 1
      %s2292 = smul.addr %s2291, 2
      %s2293 = smul.addr %s2289, 4
      %s2294 = sadd.s32 %s2292, %s2293
      %s2295 = smul.addr %s2294, 8
      %s2296 = scalar_lea.vmem %s3, %s2295
      %s2297 = smul.u32 2, %s21
      %p2298 = scmp.lt.s32.totalorder %s2297, 1
      %s2299 = scalar_select %p2298, %s2297, 1
      %s2300 = smul.addr %s2299, 2
      %s2301 = smul.addr %s2300, 8
      %s2302 = scalar_lea.vmem %s4, %s2301
      %s2303 = smul.u32 2, %s21
      %p2304 = scmp.lt.s32.totalorder %s2303, 1
      %s2305 = scalar_select %p2304, %s2303, 1
      %s2306 = smul.addr %s2305, 2
      %s2307 = smul.addr %s2306, 8
      %s2308 = scalar_lea.vmem %s5, %s2307
      // Predicated region
      $region41: #{_lambda_.7} parent=31 // pred_check
        %p2309 = pneg %p119
      $region42: #{_lambda_.7} parent=31 // pred_check_branch
        %2311 = sbr.rel (%p2309) target = $region44
      $region43: #{_lambda_.7} parent=31 // pred_region
        %s2312 = smul.u32 2, %s21
      $region44: #{_lambda_.7} parent=31 // pred_fallthru
        _
      // Predicated region
      $region45: #{_lambda_.7} parent=31 // pred_check
        %p2313 = pneg %p145
      $region46: #{_lambda_.7} parent=31 // pred_check_branch
        %2315 = sbr.rel (%p2313) target = $region48
      $region47: #{_lambda_.7} parent=31 // pred_region
        %s2316 = smul.u32 2, %s21
      $region48: #{_lambda_.7} parent=31 // pred_fallthru
        _
      // Predicated region
      $region49: #{_lambda_.7} parent=31 // pred_check
        %p2317 = pneg %p171
      $region50: #{_lambda_.7} parent=31 // pred_check_branch
        %2319 = sbr.rel (%p2317) target = $region52
      $region51: #{_lambda_.7} parent=31 // pred_region
        %s2320 = smul.u32 2, %s21
      $region52: #{_lambda_.7} parent=31 // pred_fallthru
        _
      // Predicated region
      $region53: #{_lambda_.7} parent=31 // pred_check
        %p2321 = pneg %p145
      $region54: #{_lambda_.7} parent=31 // pred_check_branch
        %2323 = sbr.rel (%p2321) target = $region56
      $region55: #{_lambda_.7} parent=31 // pred_region
        %s2324 = smul.u32 2, %s21
        %p2325 = scmp.lt.s32.totalorder %s2324, 1
        %s2326 = scalar_select %p2325, %s2324, 1
        %s2327 = smul.addr %s2326, 2
        %s2328 = smul.addr %s2327, 8
        %s2329 = scalar_lea.vmem %s4, %s2328
      $region56: #{_lambda_.7} parent=31 // pred_fallthru
        _
      // Predicated region
      $region57: #{_lambda_.7} parent=31 // pred_check
        %p2330 = pneg %p171
      $region58: #{_lambda_.7} parent=31 // pred_check_branch
        %2332 = sbr.rel (%p2330) target = $region60
      $region59: #{_lambda_.7} parent=31 // pred_region
        %s2333 = smul.u32 2, %s21
        %p2334 = scmp.lt.s32.totalorder %s2333, 1
        %s2335 = scalar_select %p2334, %s2333, 1
        %s2336 = smul.addr %s2335, 2
        %s2337 = smul.addr %s2336, 8
        %s2338 = scalar_lea.vmem %s5, %s2337
      $region60: #{_lambda_.7} parent=31 // pred_fallthru
        _
    $region32: #{_lambda_.7} parent=5 // pred_fallthru
      _
    %p2339 = scmp.le.s32.totalorder 2, %s12
    // Predicated region
    $region61: #{_lambda_.7} parent=5 // pred_check
      %p2340 = pneg %p2339
    $region62: #{_lambda_.7} parent=5 // pred_check_branch
      %2342 = sbr.rel (%p2340) target = $region64
    $region63: #{_lambda_.7} parent=5 // pred_region
      %s2343 = ssub.s32 %s12, 2
      // Predicated region
      $region65: #{_lambda_.7} parent=63 // pred_check
        %p2344 = pneg %p125
      $region66: #{_lambda_.7} parent=63 // pred_check_branch
        %2346 = sbr.rel (%p2344) target = $region68
      $region67: #{_lambda_.7} parent=63 // pred_region
        %s2347 = smul.u32 2, %s23
        %p2348 = scmp.lt.s32.totalorder %s24, 7
        %s2349 = scalar_select %p2348, %s24, 7
        %p2350 = scmp.lt.s32.totalorder %s2347, 1
        %s2351 = scalar_select %p2350, %s2347, 1
        %s2352 = smul.addr %s2351, 2
        %s2353 = smul.addr %s2349, 4
        %s2354 = sadd.s32 %s2352, %s2353
        %s2355 = smul.addr %s2354, 8
        %s2356 = scalar_lea.vmem %s3, %s2355
      $region68: #{_lambda_.7} parent=63 // pred_fallthru
        _
    $region64: #{_lambda_.7} parent=5 // pred_fallthru
      _
  $region6: #{_lambda_.7} parent=0 // loop_footer
    %s16 = sadd.s32 1, %s12
  $region7: #{_lambda_.7} parent=0 // loop_footer_branch
    %11 = sbr.rel target = $region3
  $region8: #{_lambda_.7} parent=0 // loop_exit
    _

</llo_original>
